<compile_context>
chip_gen: v7x
topology: tpu7x:2x2x1
jax: 0.10.0
libtpu: 0.0.40
codegen_flags: <defaults>
</compile_context>

<pallas_src>
import functools

import jax
import jax.numpy as jnp
from jax.experimental import pallas as pl
from jax.experimental.pallas import tpu as pltpu

LANE = 128


def _round_up(x, m):
    return ((x + m - 1) // m) * m


# ----------------------------- Pallas kernels -------------------------------

def _matmul_bn_kernel(a_ref, b_ref, s_ref, c_ref, o_ref, *, relu):
    acc = jnp.dot(a_ref[...], b_ref[...], preferred_element_type=jnp.float32)
    out = acc * s_ref[...] + c_ref[...]
    if relu:
        out = jnp.maximum(out, 0.0)
    o_ref[...] = out.astype(o_ref.dtype)


def _matmul_bn_res_kernel(a_ref, b_ref, s_ref, c_ref, r_ref, o_ref, *, relu):
    acc = jnp.dot(a_ref[...], b_ref[...], preferred_element_type=jnp.float32)
    out = acc * s_ref[...] + c_ref[...] + r_ref[...]
    if relu:
        out = jnp.maximum(out, 0.0)
    o_ref[...] = out.astype(o_ref.dtype)


def _l1_sum_kernel(x_ref, y_ref, o_ref, acc_ref):
    # acc_ref: (8, 128) f32 VMEM scratch, resident across the grid.
    @pl.when(pl.program_id(0) == 0)
    def _():
        acc_ref[...] = jnp.zeros_like(acc_ref)

    d = jnp.abs(x_ref[...] - y_ref[...])
    tm, c = d.shape
    # Fold sublanes 8-at-a-time: pure VPU adds, no cross-lane reduce in the loop.
    acc_ref[...] += jnp.sum(d.reshape(tm // 8, 8, c), axis=0)

    @pl.when(pl.program_id(0) == pl.num_programs(0) - 1)
    def _():
        o_ref[...] = jnp.sum(acc_ref[...], keepdims=True)


# ------------------------------ Pallas wrappers ------------------------------

def matmul_bn(a_bf16, w_bf16, scale, shift, *, relu, residual=None):
    """(M,K)bf16 @ (K,Cp)bf16 with fused f32 per-column affine (+residual, ReLU).

    Cp (output columns) is a multiple of 128 -> lane-dense stores.
    """
    M, K = a_bf16.shape
    Cp = w_bf16.shape[1]

    tm = 512 if M >= 1024 else 128
    Mp = _round_up(M, tm)

    def pad_rows(x):
        return jnp.pad(x, ((0, Mp - M), (0, 0))) if Mp != M else x

    a_p = pad_rows(a_bf16)
    scale2 = scale.reshape(1, Cp).astype(jnp.float32)
    shift2 = shift.reshape(1, Cp).astype(jnp.float32)

    in_specs = [
        pl.BlockSpec((tm, K), lambda i: (i, 0)),
        pl.BlockSpec((K, Cp), lambda i: (0, 0)),   # weights resident across grid
        pl.BlockSpec((1, Cp), lambda i: (0, 0)),
        pl.BlockSpec((1, Cp), lambda i: (0, 0)),
    ]
    args = [a_p, w_bf16, scale2, shift2]
    if residual is not None:
        in_specs.append(pl.BlockSpec((tm, Cp), lambda i: (i, 0)))
        args.append(pad_rows(residual.astype(jnp.float32)))
        kern = functools.partial(_matmul_bn_res_kernel, relu=relu)
    else:
        kern = functools.partial(_matmul_bn_kernel, relu=relu)

    out = pl.pallas_call(
        kern,
        out_shape=jax.ShapeDtypeStruct((Mp, Cp), jnp.float32),
        grid=(Mp // tm,),
        in_specs=in_specs,
        out_specs=pl.BlockSpec((tm, Cp), lambda i: (i, 0)),
        compiler_params=pltpu.CompilerParams(dimension_semantics=("parallel",)),
    )(*args)
    return out[:M]


def conv_bn(x_nhwc, w_oihw, gamma, beta, mean, var, *, stride, pad, relu,
            residual_nhwc=None, eps=1e-5):
    """Conv2d (no bias) + eval-mode BatchNorm (+ReLU, +residual) as one Pallas GEMM.

    Input activations may carry a channel axis zero-padded to a 128 multiple; the
    real channel count is taken from the weight tensor and padding channels are
    sliced away when building the im2col patches (keeps K minimal).  The output
    channel axis is zero-padded to a 128 multiple for lane-dense stores.
    """
    Cout, Cin, KH, KW = w_oihw.shape
    N, H, W, _ = x_nhwc.shape
    x_real = x_nhwc[..., :Cin]
    xp = jnp.pad(x_real, ((0, 0), (pad, pad), (pad, pad), (0, 0)))
    OH = (H + 2 * pad - KH) // stride + 1
    OW = (W + 2 * pad - KW) // stride + 1

    # TODO(synk): fuse the im2col into the GEMM (tap-axis accumulation reading the
    # padded NHWC input directly) to drop the KH*KW x activation duplication in HBM.
    cols = []
    for i in range(KH):
        for j in range(KW):
            cols.append(xp[:, i:i + stride * OH:stride, j:j + stride * OW:stride, :])
    patches = (jnp.concatenate(cols, axis=-1)
               .reshape(N * OH * OW, KH * KW * Cin)
               .astype(jnp.bfloat16))

    Cp = _round_up(Cout, LANE)
    wm = jnp.transpose(w_oihw, (2, 3, 1, 0)).reshape(KH * KW * Cin, Cout)
    wm = jnp.pad(wm, ((0, 0), (0, Cp - Cout))).astype(jnp.bfloat16)
    scale = gamma / jnp.sqrt(var + eps)
    shift = beta - mean * scale
    scale = jnp.pad(scale, (0, Cp - Cout))
    shift = jnp.pad(shift, (0, Cp - Cout))

    res = None
    if residual_nhwc is not None:
        res = residual_nhwc.reshape(N * OH * OW, Cp)

    out = matmul_bn(patches, wm, scale, shift, relu=relu, residual=res)
    return out.reshape(N, OH, OW, Cp)


def maxpool3x3_s2_p1(x_nhwc):
    """MaxPool2d(3, 2, 1): jnp.maximum tree over the 9 strided windows.

    Intentionally left to XLA fusion (per perf review) — avoids materializing a
    9x stacked tensor in HBM and badly-shaped Pallas blocks.
    """
    N, H, W, C = x_nhwc.shape
    k, stride, pad = 3, 2, 1
    xp = jnp.pad(x_nhwc, ((0, 0), (pad, pad), (pad, pad), (0, 0)),
                 constant_values=-jnp.inf)
    OH = (H + 2 * pad - k) // stride + 1
    OW = (W + 2 * pad - k) // stride + 1
    out = None
    for i in range(k):
        for j in range(k):
            win = xp[:, i:i + stride * OH:stride, j:j + stride * OW:stride, :]
            out = win if out is None else jnp.maximum(out, win)
    return out


def l1_loss_concat(z_nhwc, c_real):
    """Mean |x - y| where x / y are the first / second halves of the batch axis.

    Padded channels are identically zero in both halves and padded rows are zero,
    so they add nothing to the sum; the mean divides by the real element count.
    """
    N2, H, W, Cp = z_nhwc.shape
    B = N2 // 2
    M = B * H * W
    x2 = z_nhwc[:B].reshape(M, Cp)
    y2 = z_nhwc[B:].reshape(M, Cp)

    tm = 512 if M > 1024 else _round_up(max(M, 8), 8)
    Mp = _round_up(M, tm)
    if Mp != M:
        x2 = jnp.pad(x2, ((0, Mp - M), (0, 0)))
        y2 = jnp.pad(y2, ((0, Mp - M), (0, 0)))

    total = pl.pallas_call(
        _l1_sum_kernel,
        out_shape=jax.ShapeDtypeStruct((1, 1), jnp.float32),
        grid=(Mp // tm,),
        in_specs=[pl.BlockSpec((tm, Cp), lambda i: (i, 0)),
                  pl.BlockSpec((tm, Cp), lambda i: (i, 0))],
        out_specs=pl.BlockSpec((1, 1), lambda i: (0, 0)),
        scratch_shapes=[pltpu.VMEM((8, Cp), jnp.float32)],
        compiler_params=pltpu.CompilerParams(dimension_semantics=("arbitrary",)),
    )(x2, y2)
    return total[0, 0] / (M * c_real)


# ----------------------------- model definition ------------------------------

def _make_bn(key, c):
    k1, k2, k3, k4 = jax.random.split(key, 4)
    return dict(
        gamma=jax.random.uniform(k1, (c,), jnp.float32, 0.5, 1.5),
        beta=0.1 * jax.random.normal(k2, (c,), jnp.float32),
        mean=0.1 * jax.random.normal(k3, (c,), jnp.float32),
        var=jax.random.uniform(k4, (c,), jnp.float32, 0.5, 1.5),
    )


def _make_conv(key, cout, cin, kh, kw):
    fan_in = cin * kh * kw
    return (jax.random.normal(key, (cout, cin, kh, kw), jnp.float32)
            * (2.0 / fan_in) ** 0.5)


def make_params(key, base_width=16):
    keys = iter(jax.random.split(key, 128))
    p = {}
    p["conv1"] = _make_conv(next(keys), base_width, 3, 7, 7)
    p["bn1"] = _make_bn(next(keys), base_width)

    widths = [base_width, 2 * base_width, 4 * base_width, 8 * base_width]
    strides = [1, 2, 2, 2]
    layers = []
    cin = base_width
    for w, s in zip(widths, strides):
        blocks = []
        for b in range(2):  # ResNet-18: two BasicBlocks per layer
            stride = s if b == 0 else 1
            blk = dict(
                stride=stride,
                conv1=_make_conv(next(keys), w, cin, 3, 3),
                bn1=_make_bn(next(keys), w),
                conv2=_make_conv(next(keys), w, w, 3, 3),
                bn2=_make_bn(next(keys), w),
            )
            if stride != 1 or cin != w:
                blk["down_conv"] = _make_conv(next(keys), w, cin, 1, 1)
                blk["down_bn"] = _make_bn(next(keys), w)
            blocks.append(blk)
            cin = w
        layers.append(blocks)
    p["layers"] = layers
    return p


def basic_block(p, x):
    identity = x
    out = conv_bn(x, p["conv1"], **p["bn1"], stride=p["stride"], pad=1, relu=True)
    if "down_conv" in p:
        identity = conv_bn(x, p["down_conv"], **p["down_bn"],
                           stride=p["stride"], pad=0, relu=False)
    # relu-after-add, matching PyTorch BasicBlock.
    out = conv_bn(out, p["conv2"], **p["bn2"], stride=1, pad=1, relu=True,
                  residual_nhwc=identity)
    return out


def resnet_perceptual_loss(params, inp_nchw, tgt_nchw):
    # Single backbone pass: input and target are batch-concatenated so every conv
    # GEMM sees 2x the rows and the number of pallas_call launches is halved.
    z = jnp.concatenate([inp_nchw, tgt_nchw], axis=0)
    x = jnp.transpose(z, (0, 2, 3, 1))  # NCHW -> NHWC
    x = conv_bn(x, params["conv1"], **params["bn1"], stride=2, pad=3, relu=True)
    x = maxpool3x3_s2_p1(x)

    loss = jnp.float32(0.0)
    for layer in params["layers"]:
        for blk in layer:
            x = basic_block(blk, x)
        c_real = layer[-1]["conv2"].shape[0]
        loss = loss + l1_loss_concat(x, c_real)
    return loss


# ---------------------------------- main -------------------------------------

if __name__ == "__main__":
    key = jax.random.PRNGKey(0)
    kp, ki, kt = jax.random.split(key, 3)

    params = make_params(kp, base_width=16)

    # Small, ImageNet-like input: batch=2, RGB, 32x32 spatial.
    inp = jax.random.normal(ki, (2, 3, 32, 32), jnp.float32)
    tgt = jax.random.normal(kt, (2, 3, 32, 32), jnp.float32)

    loss_fn = jax.jit(lambda a, b: resnet_perceptual_loss(params, a, b))
    loss = loss_fn(inp, tgt)
    jax.block_until_ready(loss)

    assert loss.shape == () and jnp.isfinite(loss)
    print("KERNEL_OK")
</pallas_src>

<mosaic_0001>
module attributes {stable_mosaic.version = 11 : i64} {
  func.func @_matmul_bn_kernel(%arg0: i32, %arg1: memref<512x147xbf16, #tpu.memory_space<vmem>>, %arg2: memref<147x128xbf16, #tpu.memory_space<vmem>>, %arg3: memref<1x128xf32, #tpu.memory_space<vmem>>, %arg4: memref<1x128xf32, #tpu.memory_space<vmem>>, %arg5: memref<512x128xf32, #tpu.memory_space<vmem>>) attributes {dimension_semantics = [#tpu.dimension_semantics<parallel>], iteration_bounds = array<i64: 2>, scalar_prefetch = 0 : i64, scratch_operands = 0 : i64, tpu.core_type = #tpu.core_type<tc>, window_params = [{transform_indices = @transform_0, window_bounds = array<i64: 512, 147>}, {pipeline_mode = #tpu.pipeline_mode<synchronous>, transform_indices = @transform_1, window_bounds = array<i64: 147, 128>}, {pipeline_mode = #tpu.pipeline_mode<synchronous>, transform_indices = @transform_2, window_bounds = array<i64: 1, 128>}, {pipeline_mode = #tpu.pipeline_mode<synchronous>, transform_indices = @transform_3, window_bounds = array<i64: 1, 128>}, {transform_indices = @transform_4, window_bounds = array<i64: 512, 128>}]} {
    %c0 = arith.constant 0 : index
    %c0_0 = arith.constant 0 : index
    %0 = vector.load %arg1[%c0, %c0_0] : memref<512x147xbf16, #tpu.memory_space<vmem>>, vector<512x147xbf16>
    %c0_1 = arith.constant 0 : index
    %c0_2 = arith.constant 0 : index
    %1 = vector.load %arg2[%c0_1, %c0_2] : memref<147x128xbf16, #tpu.memory_space<vmem>>, vector<147x128xbf16>
    %cst = arith.constant dense<0.000000e+00> : vector<512x128xf32>
    %2 = tpu.matmul %0, %1, %cst {dimension_numbers = #tpu.dot_dimension_numbers<[1], [0], [0], [1], [0, 0, 1, 1], [], []>} : vector<512x147xbf16>, vector<147x128xbf16>, vector<512x128xf32> -> vector<512x128xf32>
    %c0_3 = arith.constant 0 : index
    %c0_4 = arith.constant 0 : index
    %3 = vector.load %arg3[%c0_3, %c0_4] : memref<1x128xf32, #tpu.memory_space<vmem>>, vector<1x128xf32>
    %4 = vector.broadcast %3 : vector<1x128xf32> to vector<512x128xf32>
    %5 = arith.mulf %2, %4 : vector<512x128xf32>
    %c0_5 = arith.constant 0 : index
    %c0_6 = arith.constant 0 : index
    %6 = vector.load %arg4[%c0_5, %c0_6] : memref<1x128xf32, #tpu.memory_space<vmem>>, vector<1x128xf32>
    %7 = vector.broadcast %6 : vector<1x128xf32> to vector<512x128xf32>
    %8 = arith.addf %5, %7 : vector<512x128xf32>
    %cst_7 = arith.constant 0.000000e+00 : f32
    %9 = vector.broadcast %cst_7 : f32 to vector<512x128xf32>
    %10 = arith.maximumf %8, %9 : vector<512x128xf32>
    %c0_8 = arith.constant 0 : index
    %c0_9 = arith.constant 0 : index
    %11 = vector.load %arg5[%c0_8, %c0_9] : memref<512x128xf32, #tpu.memory_space<vmem>>, vector<512x128xf32>
    tpu.vector_store %arg5[%c0_8, %c0_9], %10 {strides = array<i32>} : memref<512x128xf32, #tpu.memory_space<vmem>>, vector<512x128xf32>,
    return
  }
  func.func @transform_0(%arg0: i32) -> (i32, i32) {
    %c0_i32 = arith.constant 0 : i32
    %c0_i32_0 = arith.constant 0 : i32
    return %arg0, %c0_i32 : i32, i32
  }
  func.func @transform_1(%arg0: i32) -> (i32, i32) {
    %c0_i32 = arith.constant 0 : i32
    %c0_i32_0 = arith.constant 0 : i32
    %c0_i32_1 = arith.constant 0 : i32
    return %c0_i32, %c0_i32_0 : i32, i32
  }
  func.func @transform_2(%arg0: i32) -> (i32, i32) {
    %c0_i32 = arith.constant 0 : i32
    %c0_i32_0 = arith.constant 0 : i32
    %c0_i32_1 = arith.constant 0 : i32
    return %c0_i32, %c0_i32_0 : i32, i32
  }
  func.func @transform_3(%arg0: i32) -> (i32, i32) {
    %c0_i32 = arith.constant 0 : i32
    %c0_i32_0 = arith.constant 0 : i32
    %c0_i32_1 = arith.constant 0 : i32
    return %c0_i32, %c0_i32_0 : i32, i32
  }
  func.func @transform_4(%arg0: i32) -> (i32, i32) {
    %c0_i32 = arith.constant 0 : i32
    %c0_i32_0 = arith.constant 0 : i32
    return %arg0, %c0_i32 : i32, i32
  }
}

module attributes {stable_mosaic.version = 11 : i64} {
  func.func @_matmul_bn_kernel(%arg0: i32, %arg1: memref<128x144xbf16, #tpu.memory_space<vmem>>, %arg2: memref<144x128xbf16, #tpu.memory_space<vmem>>, %arg3: memref<1x128xf32, #tpu.memory_space<vmem>>, %arg4: memref<1x128xf32, #tpu.memory_space<vmem>>, %arg5: memref<128x128xf32, #tpu.memory_space<vmem>>) attributes {dimension_semantics = [#tpu.dimension_semantics<parallel>], iteration_bounds = array<i64: 2>, scalar_prefetch = 0 : i64, scratch_operands = 0 : i64, tpu.core_type = #tpu.core_type<tc>, window_params = [{transform_indices = @transform_0, window_bounds = array<i64: 128, 144>}, {pipeline_mode = #tpu.pipeline_mode<synchronous>, transform_indices = @transform_1, window_bounds = array<i64: 144, 128>}, {pipeline_mode = #tpu.pipeline_mode<synchronous>, transform_indices = @transform_2, window_bounds = array<i64: 1, 128>}, {pipeline_mode = #tpu.pipeline_mode<synchronous>, transform_indices = @transform_3, window_bounds = array<i64: 1, 128>}, {transform_indices = @transform_4, window_bounds = array<i64: 128, 128>}]} {
    %c0 = arith.constant 0 : index
    %c0_0 = arith.constant 0 : index
    %0 = vector.load %arg1[%c0, %c0_0] : memref<128x144xbf16, #tpu.memory_space<vmem>>, vector<128x144xbf16>
    %c0_1 = arith.constant 0 : index
    %c0_2 = arith.constant 0 : index
    %1 = vector.load %arg2[%c0_1, %c0_2] : memref<144x128xbf16, #tpu.memory_space<vmem>>, vector<144x128xbf16>
    %cst = arith.constant dense<0.000000e+00> : vector<128x128xf32>
    %2 = tpu.matmul %0, %1, %cst {dimension_numbers = #tpu.dot_dimension_numbers<[1], [0], [0], [1], [0, 0, 1, 1], [], []>} : vector<128x144xbf16>, vector<144x128xbf16>, vector<128x128xf32> -> vector<128x128xf32>
    %c0_3 = arith.constant 0 : index
    %c0_4 = arith.constant 0 : index
    %3 = vector.load %arg3[%c0_3, %c0_4] : memref<1x128xf32, #tpu.memory_space<vmem>>, vector<1x128xf32>
    %4 = vector.broadcast %3 : vector<1x128xf32> to vector<128x128xf32>
    %5 = arith.mulf %2, %4 : vector<128x128xf32>
    %c0_5 = arith.constant 0 : index
    %c0_6 = arith.constant 0 : index
    %6 = vector.load %arg4[%c0_5, %c0_6] : memref<1x128xf32, #tpu.memory_space<vmem>>, vector<1x128xf32>
    %7 = vector.broadcast %6 : vector<1x128xf32> to vector<128x128xf32>
    %8 = arith.addf %5, %7 : vector<128x128xf32>
    %cst_7 = arith.constant 0.000000e+00 : f32
    %9 = vector.broadcast %cst_7 : f32 to vector<128x128xf32>
    %10 = arith.maximumf %8, %9 : vector<128x128xf32>
    %c0_8 = arith.constant 0 : index
    %c0_9 = arith.constant 0 : index
    %11 = vector.load %arg5[%c0_8, %c0_9] : memref<128x128xf32, #tpu.memory_space<vmem>>, vector<128x128xf32>
    tpu.vector_store %arg5[%c0_8, %c0_9], %10 {strides = array<i32>} : memref<128x128xf32, #tpu.memory_space<vmem>>, vector<128x128xf32>,
    return
  }
  func.func @transform_0(%arg0: i32) -> (i32, i32) {
    %c0_i32 = arith.constant 0 : i32
    %c0_i32_0 = arith.constant 0 : i32
    return %arg0, %c0_i32 : i32, i32
  }
  func.func @transform_1(%arg0: i32) -> (i32, i32) {
    %c0_i32 = arith.constant 0 : i32
    %c0_i32_0 = arith.constant 0 : i32
    %c0_i32_1 = arith.constant 0 : i32
    return %c0_i32, %c0_i32_0 : i32, i32
  }
  func.func @transform_2(%arg0: i32) -> (i32, i32) {
    %c0_i32 = arith.constant 0 : i32
    %c0_i32_0 = arith.constant 0 : i32
    %c0_i32_1 = arith.constant 0 : i32
    return %c0_i32, %c0_i32_0 : i32, i32
  }
  func.func @transform_3(%arg0: i32) -> (i32, i32) {
    %c0_i32 = arith.constant 0 : i32
    %c0_i32_0 = arith.constant 0 : i32
    %c0_i32_1 = arith.constant 0 : i32
    return %c0_i32, %c0_i32_0 : i32, i32
  }
  func.func @transform_4(%arg0: i32) -> (i32, i32) {
    %c0_i32 = arith.constant 0 : i32
    %c0_i32_0 = arith.constant 0 : i32
    return %arg0, %c0_i32 : i32, i32
  }
}

module attributes {stable_mosaic.version = 11 : i64} {
  func.func @_matmul_bn_res_kernel(%arg0: i32, %arg1: memref<128x144xbf16, #tpu.memory_space<vmem>>, %arg2: memref<144x128xbf16, #tpu.memory_space<vmem>>, %arg3: memref<1x128xf32, #tpu.memory_space<vmem>>, %arg4: memref<1x128xf32, #tpu.memory_space<vmem>>, %arg5: memref<128x128xf32, #tpu.memory_space<vmem>>, %arg6: memref<128x128xf32, #tpu.memory_space<vmem>>) attributes {dimension_semantics = [#tpu.dimension_semantics<parallel>], iteration_bounds = array<i64: 2>, scalar_prefetch = 0 : i64, scratch_operands = 0 : i64, tpu.core_type = #tpu.core_type<tc>, window_params = [{transform_indices = @transform_0, window_bounds = array<i64: 128, 144>}, {pipeline_mode = #tpu.pipeline_mode<synchronous>, transform_indices = @transform_1, window_bounds = array<i64: 144, 128>}, {pipeline_mode = #tpu.pipeline_mode<synchronous>, transform_indices = @transform_2, window_bounds = array<i64: 1, 128>}, {pipeline_mode = #tpu.pipeline_mode<synchronous>, transform_indices = @transform_3, window_bounds = array<i64: 1, 128>}, {transform_indices = @transform_4, window_bounds = array<i64: 128, 128>}, {transform_indices = @transform_5, window_bounds = array<i64: 128, 128>}]} {
    %c0 = arith.constant 0 : index
    %c0_0 = arith.constant 0 : index
    %0 = vector.load %arg1[%c0, %c0_0] : memref<128x144xbf16, #tpu.memory_space<vmem>>, vector<128x144xbf16>
    %c0_1 = arith.constant 0 : index
    %c0_2 = arith.constant 0 : index
    %1 = vector.load %arg2[%c0_1, %c0_2] : memref<144x128xbf16, #tpu.memory_space<vmem>>, vector<144x128xbf16>
    %cst = arith.constant dense<0.000000e+00> : vector<128x128xf32>
    %2 = tpu.matmul %0, %1, %cst {dimension_numbers = #tpu.dot_dimension_numbers<[1], [0], [0], [1], [0, 0, 1, 1], [], []>} : vector<128x144xbf16>, vector<144x128xbf16>, vector<128x128xf32> -> vector<128x128xf32>
    %c0_3 = arith.constant 0 : index
    %c0_4 = arith.constant 0 : index
    %3 = vector.load %arg3[%c0_3, %c0_4] : memref<1x128xf32, #tpu.memory_space<vmem>>, vector<1x128xf32>
    %4 = vector.broadcast %3 : vector<1x128xf32> to vector<128x128xf32>
    %5 = arith.mulf %2, %4 : vector<128x128xf32>
    %c0_5 = arith.constant 0 : index
    %c0_6 = arith.constant 0 : index
    %6 = vector.load %arg4[%c0_5, %c0_6] : memref<1x128xf32, #tpu.memory_space<vmem>>, vector<1x128xf32>
    %7 = vector.broadcast %6 : vector<1x128xf32> to vector<128x128xf32>
    %8 = arith.addf %5, %7 : vector<128x128xf32>
    %c0_7 = arith.constant 0 : index
    %c0_8 = arith.constant 0 : index
    %9 = vector.load %arg5[%c0_7, %c0_8] : memref<128x128xf32, #tpu.memory_space<vmem>>, vector<128x128xf32>
    %10 = arith.addf %8, %9 : vector<128x128xf32>
    %cst_9 = arith.constant 0.000000e+00 : f32
    %11 = vector.broadcast %cst_9 : f32 to vector<128x128xf32>
    %12 = arith.maximumf %10, %11 : vector<128x128xf32>
    %c0_10 = arith.constant 0 : index
    %c0_11 = arith.constant 0 : index
    %13 = vector.load %arg6[%c0_10, %c0_11] : memref<128x128xf32, #tpu.memory_space<vmem>>, vector<128x128xf32>
    tpu.vector_store %arg6[%c0_10, %c0_11], %12 {strides = array<i32>} : memref<128x128xf32, #tpu.memory_space<vmem>>, vector<128x128xf32>,
    return
  }
  func.func @transform_0(%arg0: i32) -> (i32, i32) {
    %c0_i32 = arith.constant 0 : i32
    %c0_i32_0 = arith.constant 0 : i32
    return %arg0, %c0_i32 : i32, i32
  }
  func.func @transform_1(%arg0: i32) -> (i32, i32) {
    %c0_i32 = arith.constant 0 : i32
    %c0_i32_0 = arith.constant 0 : i32
    %c0_i32_1 = arith.constant 0 : i32
    return %c0_i32, %c0_i32_0 : i32, i32
  }
  func.func @transform_2(%arg0: i32) -> (i32, i32) {
    %c0_i32 = arith.constant 0 : i32
    %c0_i32_0 = arith.constant 0 : i32
    %c0_i32_1 = arith.constant 0 : i32
    return %c0_i32, %c0_i32_0 : i32, i32
  }
  func.func @transform_3(%arg0: i32) -> (i32, i32) {
    %c0_i32 = arith.constant 0 : i32
    %c0_i32_0 = arith.constant 0 : i32
    %c0_i32_1 = arith.constant 0 : i32
    return %c0_i32, %c0_i32_0 : i32, i32
  }
  func.func @transform_4(%arg0: i32) -> (i32, i32) {
    %c0_i32 = arith.constant 0 : i32
    %c0_i32_0 = arith.constant 0 : i32
    return %arg0, %c0_i32 : i32, i32
  }
  func.func @transform_5(%arg0: i32) -> (i32, i32) {
    %c0_i32 = arith.constant 0 : i32
    %c0_i32_0 = arith.constant 0 : i32
    return %arg0, %c0_i32 : i32, i32
  }
}

module attributes {stable_mosaic.version = 11 : i64} {
  func.func @_matmul_bn_kernel(%arg0: i32, %arg1: memref<128x144xbf16, #tpu.memory_space<vmem>>, %arg2: memref<144x128xbf16, #tpu.memory_space<vmem>>, %arg3: memref<1x128xf32, #tpu.memory_space<vmem>>, %arg4: memref<1x128xf32, #tpu.memory_space<vmem>>, %arg5: memref<128x128xf32, #tpu.memory_space<vmem>>) attributes {dimension_semantics = [#tpu.dimension_semantics<parallel>], iteration_bounds = array<i64: 1>, scalar_prefetch = 0 : i64, scratch_operands = 0 : i64, tpu.core_type = #tpu.core_type<tc>, window_params = [{transform_indices = @transform_0, window_bounds = array<i64: 128, 144>}, {pipeline_mode = #tpu.pipeline_mode<synchronous>, transform_indices = @transform_1, window_bounds = array<i64: 144, 128>}, {pipeline_mode = #tpu.pipeline_mode<synchronous>, transform_indices = @transform_2, window_bounds = array<i64: 1, 128>}, {pipeline_mode = #tpu.pipeline_mode<synchronous>, transform_indices = @transform_3, window_bounds = array<i64: 1, 128>}, {transform_indices = @transform_4, window_bounds = array<i64: 128, 128>}]} {
    %c0 = arith.constant 0 : index
    %c0_0 = arith.constant 0 : index
    %0 = vector.load %arg1[%c0, %c0_0] : memref<128x144xbf16, #tpu.memory_space<vmem>>, vector<128x144xbf16>
    %c0_1 = arith.constant 0 : index
    %c0_2 = arith.constant 0 : index
    %1 = vector.load %arg2[%c0_1, %c0_2] : memref<144x128xbf16, #tpu.memory_space<vmem>>, vector<144x128xbf16>
    %cst = arith.constant dense<0.000000e+00> : vector<128x128xf32>
    %2 = tpu.matmul %0, %1, %cst {dimension_numbers = #tpu.dot_dimension_numbers<[1], [0], [0], [1], [0, 0, 1, 1], [], []>} : vector<128x144xbf16>, vector<144x128xbf16>, vector<128x128xf32> -> vector<128x128xf32>
    %c0_3 = arith.constant 0 : index
    %c0_4 = arith.constant 0 : index
    %3 = vector.load %arg3[%c0_3, %c0_4] : memref<1x128xf32, #tpu.memory_space<vmem>>, vector<1x128xf32>
    %4 = vector.broadcast %3 : vector<1x128xf32> to vector<128x128xf32>
    %5 = arith.mulf %2, %4 : vector<128x128xf32>
    %c0_5 = arith.constant 0 : index
    %c0_6 = arith.constant 0 : index
    %6 = vector.load %arg4[%c0_5, %c0_6] : memref<1x128xf32, #tpu.memory_space<vmem>>, vector<1x128xf32>
    %7 = vector.broadcast %6 : vector<1x128xf32> to vector<128x128xf32>
    %8 = arith.addf %5, %7 : vector<128x128xf32>
    %cst_7 = arith.constant 0.000000e+00 : f32
    %9 = vector.broadcast %cst_7 : f32 to vector<128x128xf32>
    %10 = arith.maximumf %8, %9 : vector<128x128xf32>
    %c0_8 = arith.constant 0 : index
    %c0_9 = arith.constant 0 : index
    %11 = vector.load %arg5[%c0_8, %c0_9] : memref<128x128xf32, #tpu.memory_space<vmem>>, vector<128x128xf32>
    tpu.vector_store %arg5[%c0_8, %c0_9], %10 {strides = array<i32>} : memref<128x128xf32, #tpu.memory_space<vmem>>, vector<128x128xf32>,
    return
  }
  func.func @transform_0(%arg0: i32) -> (i32, i32) {
    %c0_i32 = arith.constant 0 : i32
    %c0_i32_0 = arith.constant 0 : i32
    return %arg0, %c0_i32 : i32, i32
  }
  func.func @transform_1(%arg0: i32) -> (i32, i32) {
    %c0_i32 = arith.constant 0 : i32
    %c0_i32_0 = arith.constant 0 : i32
    %c0_i32_1 = arith.constant 0 : i32
    return %c0_i32, %c0_i32_0 : i32, i32
  }
  func.func @transform_2(%arg0: i32) -> (i32, i32) {
    %c0_i32 = arith.constant 0 : i32
    %c0_i32_0 = arith.constant 0 : i32
    %c0_i32_1 = arith.constant 0 : i32
    return %c0_i32, %c0_i32_0 : i32, i32
  }
  func.func @transform_3(%arg0: i32) -> (i32, i32) {
    %c0_i32 = arith.constant 0 : i32
    %c0_i32_0 = arith.constant 0 : i32
    %c0_i32_1 = arith.constant 0 : i32
    return %c0_i32, %c0_i32_0 : i32, i32
  }
  func.func @transform_4(%arg0: i32) -> (i32, i32) {
    %c0_i32 = arith.constant 0 : i32
    %c0_i32_0 = arith.constant 0 : i32
    return %arg0, %c0_i32 : i32, i32
  }
}

module attributes {stable_mosaic.version = 11 : i64} {
  func.func @_matmul_bn_kernel(%arg0: i32, %arg1: memref<128x16xbf16, #tpu.memory_space<vmem>>, %arg2: memref<16x128xbf16, #tpu.memory_space<vmem>>, %arg3: memref<1x128xf32, #tpu.memory_space<vmem>>, %arg4: memref<1x128xf32, #tpu.memory_space<vmem>>, %arg5: memref<128x128xf32, #tpu.memory_space<vmem>>) attributes {dimension_semantics = [#tpu.dimension_semantics<parallel>], iteration_bounds = array<i64: 1>, scalar_prefetch = 0 : i64, scratch_operands = 0 : i64, tpu.core_type = #tpu.core_type<tc>, window_params = [{transform_indices = @transform_0, window_bounds = array<i64: 128, 16>}, {pipeline_mode = #tpu.pipeline_mode<synchronous>, transform_indices = @transform_1, window_bounds = array<i64: 16, 128>}, {pipeline_mode = #tpu.pipeline_mode<synchronous>, transform_indices = @transform_2, window_bounds = array<i64: 1, 128>}, {pipeline_mode = #tpu.pipeline_mode<synchronous>, transform_indices = @transform_3, window_bounds = array<i64: 1, 128>}, {transform_indices = @transform_4, window_bounds = array<i64: 128, 128>}]} {
    %c0 = arith.constant 0 : index
    %c0_0 = arith.constant 0 : index
    %0 = vector.load %arg1[%c0, %c0_0] : memref<128x16xbf16, #tpu.memory_space<vmem>>, vector<128x16xbf16>
    %c0_1 = arith.constant 0 : index
    %c0_2 = arith.constant 0 : index
    %1 = vector.load %arg2[%c0_1, %c0_2] : memref<16x128xbf16, #tpu.memory_space<vmem>>, vector<16x128xbf16>
    %cst = arith.constant dense<0.000000e+00> : vector<128x128xf32>
    %2 = tpu.matmul %0, %1, %cst {dimension_numbers = #tpu.dot_dimension_numbers<[1], [0], [0], [1], [0, 0, 1, 1], [], []>} : vector<128x16xbf16>, vector<16x128xbf16>, vector<128x128xf32> -> vector<128x128xf32>
    %c0_3 = arith.constant 0 : index
    %c0_4 = arith.constant 0 : index
    %3 = vector.load %arg3[%c0_3, %c0_4] : memref<1x128xf32, #tpu.memory_space<vmem>>, vector<1x128xf32>
    %4 = vector.broadcast %3 : vector<1x128xf32> to vector<128x128xf32>
    %5 = arith.mulf %2, %4 : vector<128x128xf32>
    %c0_5 = arith.constant 0 : index
    %c0_6 = arith.constant 0 : index
    %6 = vector.load %arg4[%c0_5, %c0_6] : memref<1x128xf32, #tpu.memory_space<vmem>>, vector<1x128xf32>
    %7 = vector.broadcast %6 : vector<1x128xf32> to vector<128x128xf32>
    %8 = arith.addf %5, %7 : vector<128x128xf32>
    %c0_7 = arith.constant 0 : index
    %c0_8 = arith.constant 0 : index
    %9 = vector.load %arg5[%c0_7, %c0_8] : memref<128x128xf32, #tpu.memory_space<vmem>>, vector<128x128xf32>
    tpu.vector_store %arg5[%c0_7, %c0_8], %8 {strides = array<i32>} : memref<128x128xf32, #tpu.memory_space<vmem>>, vector<128x128xf32>,
    return
  }
  func.func @transform_0(%arg0: i32) -> (i32, i32) {
    %c0_i32 = arith.constant 0 : i32
    %c0_i32_0 = arith.constant 0 : i32
    return %arg0, %c0_i32 : i32, i32
  }
  func.func @transform_1(%arg0: i32) -> (i32, i32) {
    %c0_i32 = arith.constant 0 : i32
    %c0_i32_0 = arith.constant 0 : i32
    %c0_i32_1 = arith.constant 0 : i32
    return %c0_i32, %c0_i32_0 : i32, i32
  }
  func.func @transform_2(%arg0: i32) -> (i32, i32) {
    %c0_i32 = arith.constant 0 : i32
    %c0_i32_0 = arith.constant 0 : i32
    %c0_i32_1 = arith.constant 0 : i32
    return %c0_i32, %c0_i32_0 : i32, i32
  }
  func.func @transform_3(%arg0: i32) -> (i32, i32) {
    %c0_i32 = arith.constant 0 : i32
    %c0_i32_0 = arith.constant 0 : i32
    %c0_i32_1 = arith.constant 0 : i32
    return %c0_i32, %c0_i32_0 : i32, i32
  }
  func.func @transform_4(%arg0: i32) -> (i32, i32) {
    %c0_i32 = arith.constant 0 : i32
    %c0_i32_0 = arith.constant 0 : i32
    return %arg0, %c0_i32 : i32, i32
  }
}

module attributes {stable_mosaic.version = 11 : i64} {
  func.func @_matmul_bn_res_kernel(%arg0: i32, %arg1: memref<128x288xbf16, #tpu.memory_space<vmem>>, %arg2: memref<288x128xbf16, #tpu.memory_space<vmem>>, %arg3: memref<1x128xf32, #tpu.memory_space<vmem>>, %arg4: memref<1x128xf32, #tpu.memory_space<vmem>>, %arg5: memref<128x128xf32, #tpu.memory_space<vmem>>, %arg6: memref<128x128xf32, #tpu.memory_space<vmem>>) attributes {dimension_semantics = [#tpu.dimension_semantics<parallel>], iteration_bounds = array<i64: 1>, scalar_prefetch = 0 : i64, scratch_operands = 0 : i64, tpu.core_type = #tpu.core_type<tc>, window_params = [{transform_indices = @transform_0, window_bounds = array<i64: 128, 288>}, {pipeline_mode = #tpu.pipeline_mode<synchronous>, transform_indices = @transform_1, window_bounds = array<i64: 288, 128>}, {pipeline_mode = #tpu.pipeline_mode<synchronous>, transform_indices = @transform_2, window_bounds = array<i64: 1, 128>}, {pipeline_mode = #tpu.pipeline_mode<synchronous>, transform_indices = @transform_3, window_bounds = array<i64: 1, 128>}, {transform_indices = @transform_4, window_bounds = array<i64: 128, 128>}, {transform_indices = @transform_5, window_bounds = array<i64: 128, 128>}]} {
    %c0 = arith.constant 0 : index
    %c0_0 = arith.constant 0 : index
    %0 = vector.load %arg1[%c0, %c0_0] : memref<128x288xbf16, #tpu.memory_space<vmem>>, vector<128x288xbf16>
    %c0_1 = arith.constant 0 : index
    %c0_2 = arith.constant 0 : index
    %1 = vector.load %arg2[%c0_1, %c0_2] : memref<288x128xbf16, #tpu.memory_space<vmem>>, vector<288x128xbf16>
    %cst = arith.constant dense<0.000000e+00> : vector<128x128xf32>
    %2 = tpu.matmul %0, %1, %cst {dimension_numbers = #tpu.dot_dimension_numbers<[1], [0], [0], [1], [0, 0, 1, 1], [], []>} : vector<128x288xbf16>, vector<288x128xbf16>, vector<128x128xf32> -> vector<128x128xf32>
    %c0_3 = arith.constant 0 : index
    %c0_4 = arith.constant 0 : index
    %3 = vector.load %arg3[%c0_3, %c0_4] : memref<1x128xf32, #tpu.memory_space<vmem>>, vector<1x128xf32>
    %4 = vector.broadcast %3 : vector<1x128xf32> to vector<128x128xf32>
    %5 = arith.mulf %2, %4 : vector<128x128xf32>
    %c0_5 = arith.constant 0 : index
    %c0_6 = arith.constant 0 : index
    %6 = vector.load %arg4[%c0_5, %c0_6] : memref<1x128xf32, #tpu.memory_space<vmem>>, vector<1x128xf32>
    %7 = vector.broadcast %6 : vector<1x128xf32> to vector<128x128xf32>
    %8 = arith.addf %5, %7 : vector<128x128xf32>
    %c0_7 = arith.constant 0 : index
    %c0_8 = arith.constant 0 : index
    %9 = vector.load %arg5[%c0_7, %c0_8] : memref<128x128xf32, #tpu.memory_space<vmem>>, vector<128x128xf32>
    %10 = arith.addf %8, %9 : vector<128x128xf32>
    %cst_9 = arith.constant 0.000000e+00 : f32
    %11 = vector.broadcast %cst_9 : f32 to vector<128x128xf32>
    %12 = arith.maximumf %10, %11 : vector<128x128xf32>
    %c0_10 = arith.constant 0 : index
    %c0_11 = arith.constant 0 : index
    %13 = vector.load %arg6[%c0_10, %c0_11] : memref<128x128xf32, #tpu.memory_space<vmem>>, vector<128x128xf32>
    tpu.vector_store %arg6[%c0_10, %c0_11], %12 {strides = array<i32>} : memref<128x128xf32, #tpu.memory_space<vmem>>, vector<128x128xf32>,
    return
  }
  func.func @transform_0(%arg0: i32) -> (i32, i32) {
    %c0_i32 = arith.constant 0 : i32
    %c0_i32_0 = arith.constant 0 : i32
    return %arg0, %c0_i32 : i32, i32
  }
  func.func @transform_1(%arg0: i32) -> (i32, i32) {
    %c0_i32 = arith.constant 0 : i32
    %c0_i32_0 = arith.constant 0 : i32
    %c0_i32_1 = arith.constant 0 : i32
    return %c0_i32, %c0_i32_0 : i32, i32
  }
  func.func @transform_2(%arg0: i32) -> (i32, i32) {
    %c0_i32 = arith.constant 0 : i32
    %c0_i32_0 = arith.constant 0 : i32
    %c0_i32_1 = arith.constant 0 : i32
    return %c0_i32, %c0_i32_0 : i32, i32
  }
  func.func @transform_3(%arg0: i32) -> (i32, i32) {
    %c0_i32 = arith.constant 0 : i32
    %c0_i32_0 = arith.constant 0 : i32
    %c0_i32_1 = arith.constant 0 : i32
    return %c0_i32, %c0_i32_0 : i32, i32
  }
  func.func @transform_4(%arg0: i32) -> (i32, i32) {
    %c0_i32 = arith.constant 0 : i32
    %c0_i32_0 = arith.constant 0 : i32
    return %arg0, %c0_i32 : i32, i32
  }
  func.func @transform_5(%arg0: i32) -> (i32, i32) {
    %c0_i32 = arith.constant 0 : i32
    %c0_i32_0 = arith.constant 0 : i32
    return %arg0, %c0_i32 : i32, i32
  }
}

module attributes {stable_mosaic.version = 11 : i64} {
  func.func @_matmul_bn_kernel(%arg0: i32, %arg1: memref<128x288xbf16, #tpu.memory_space<vmem>>, %arg2: memref<288x128xbf16, #tpu.memory_space<vmem>>, %arg3: memref<1x128xf32, #tpu.memory_space<vmem>>, %arg4: memref<1x128xf32, #tpu.memory_space<vmem>>, %arg5: memref<128x128xf32, #tpu.memory_space<vmem>>) attributes {dimension_semantics = [#tpu.dimension_semantics<parallel>], iteration_bounds = array<i64: 1>, scalar_prefetch = 0 : i64, scratch_operands = 0 : i64, tpu.core_type = #tpu.core_type<tc>, window_params = [{transform_indices = @transform_0, window_bounds = array<i64: 128, 288>}, {pipeline_mode = #tpu.pipeline_mode<synchronous>, transform_indices = @transform_1, window_bounds = array<i64: 288, 128>}, {pipeline_mode = #tpu.pipeline_mode<synchronous>, transform_indices = @transform_2, window_bounds = array<i64: 1, 128>}, {pipeline_mode = #tpu.pipeline_mode<synchronous>, transform_indices = @transform_3, window_bounds = array<i64: 1, 128>}, {transform_indices = @transform_4, window_bounds = array<i64: 128, 128>}]} {
    %c0 = arith.constant 0 : index
    %c0_0 = arith.constant 0 : index
    %0 = vector.load %arg1[%c0, %c0_0] : memref<128x288xbf16, #tpu.memory_space<vmem>>, vector<128x288xbf16>
    %c0_1 = arith.constant 0 : index
    %c0_2 = arith.constant 0 : index
    %1 = vector.load %arg2[%c0_1, %c0_2] : memref<288x128xbf16, #tpu.memory_space<vmem>>, vector<288x128xbf16>
    %cst = arith.constant dense<0.000000e+00> : vector<128x128xf32>
    %2 = tpu.matmul %0, %1, %cst {dimension_numbers = #tpu.dot_dimension_numbers<[1], [0], [0], [1], [0, 0, 1, 1], [], []>} : vector<128x288xbf16>, vector<288x128xbf16>, vector<128x128xf32> -> vector<128x128xf32>
    %c0_3 = arith.constant 0 : index
    %c0_4 = arith.constant 0 : index
    %3 = vector.load %arg3[%c0_3, %c0_4] : memref<1x128xf32, #tpu.memory_space<vmem>>, vector<1x128xf32>
    %4 = vector.broadcast %3 : vector<1x128xf32> to vector<128x128xf32>
    %5 = arith.mulf %2, %4 : vector<128x128xf32>
    %c0_5 = arith.constant 0 : index
    %c0_6 = arith.constant 0 : index
    %6 = vector.load %arg4[%c0_5, %c0_6] : memref<1x128xf32, #tpu.memory_space<vmem>>, vector<1x128xf32>
    %7 = vector.broadcast %6 : vector<1x128xf32> to vector<128x128xf32>
    %8 = arith.addf %5, %7 : vector<128x128xf32>
    %cst_7 = arith.constant 0.000000e+00 : f32
    %9 = vector.broadcast %cst_7 : f32 to vector<128x128xf32>
    %10 = arith.maximumf %8, %9 : vector<128x128xf32>
    %c0_8 = arith.constant 0 : index
    %c0_9 = arith.constant 0 : index
    %11 = vector.load %arg5[%c0_8, %c0_9] : memref<128x128xf32, #tpu.memory_space<vmem>>, vector<128x128xf32>
    tpu.vector_store %arg5[%c0_8, %c0_9], %10 {strides = array<i32>} : memref<128x128xf32, #tpu.memory_space<vmem>>, vector<128x128xf32>,
    return
  }
  func.func @transform_0(%arg0: i32) -> (i32, i32) {
    %c0_i32 = arith.constant 0 : i32
    %c0_i32_0 = arith.constant 0 : i32
    return %arg0, %c0_i32 : i32, i32
  }
  func.func @transform_1(%arg0: i32) -> (i32, i32) {
    %c0_i32 = arith.constant 0 : i32
    %c0_i32_0 = arith.constant 0 : i32
    %c0_i32_1 = arith.constant 0 : i32
    return %c0_i32, %c0_i32_0 : i32, i32
  }
  func.func @transform_2(%arg0: i32) -> (i32, i32) {
    %c0_i32 = arith.constant 0 : i32
    %c0_i32_0 = arith.constant 0 : i32
    %c0_i32_1 = arith.constant 0 : i32
    return %c0_i32, %c0_i32_0 : i32, i32
  }
  func.func @transform_3(%arg0: i32) -> (i32, i32) {
    %c0_i32 = arith.constant 0 : i32
    %c0_i32_0 = arith.constant 0 : i32
    %c0_i32_1 = arith.constant 0 : i32
    return %c0_i32, %c0_i32_0 : i32, i32
  }
  func.func @transform_4(%arg0: i32) -> (i32, i32) {
    %c0_i32 = arith.constant 0 : i32
    %c0_i32_0 = arith.constant 0 : i32
    return %arg0, %c0_i32 : i32, i32
  }
}

module attributes {stable_mosaic.version = 11 : i64} {
  func.func @_matmul_bn_kernel(%arg0: i32, %arg1: memref<128x32xbf16, #tpu.memory_space<vmem>>, %arg2: memref<32x128xbf16, #tpu.memory_space<vmem>>, %arg3: memref<1x128xf32, #tpu.memory_space<vmem>>, %arg4: memref<1x128xf32, #tpu.memory_space<vmem>>, %arg5: memref<128x128xf32, #tpu.memory_space<vmem>>) attributes {dimension_semantics = [#tpu.dimension_semantics<parallel>], iteration_bounds = array<i64: 1>, scalar_prefetch = 0 : i64, scratch_operands = 0 : i64, tpu.core_type = #tpu.core_type<tc>, window_params = [{transform_indices = @transform_0, window_bounds = array<i64: 128, 32>}, {pipeline_mode = #tpu.pipeline_mode<synchronous>, transform_indices = @transform_1, window_bounds = array<i64: 32, 128>}, {pipeline_mode = #tpu.pipeline_mode<synchronous>, transform_indices = @transform_2, window_bounds = array<i64: 1, 128>}, {pipeline_mode = #tpu.pipeline_mode<synchronous>, transform_indices = @transform_3, window_bounds = array<i64: 1, 128>}, {transform_indices = @transform_4, window_bounds = array<i64: 128, 128>}]} {
    %c0 = arith.constant 0 : index
    %c0_0 = arith.constant 0 : index
    %0 = vector.load %arg1[%c0, %c0_0] : memref<128x32xbf16, #tpu.memory_space<vmem>>, vector<128x32xbf16>
    %c0_1 = arith.constant 0 : index
    %c0_2 = arith.constant 0 : index
    %1 = vector.load %arg2[%c0_1, %c0_2] : memref<32x128xbf16, #tpu.memory_space<vmem>>, vector<32x128xbf16>
    %cst = arith.constant dense<0.000000e+00> : vector<128x128xf32>
    %2 = tpu.matmul %0, %1, %cst {dimension_numbers = #tpu.dot_dimension_numbers<[1], [0], [0], [1], [0, 0, 1, 1], [], []>} : vector<128x32xbf16>, vector<32x128xbf16>, vector<128x128xf32> -> vector<128x128xf32>
    %c0_3 = arith.constant 0 : index
    %c0_4 = arith.constant 0 : index
    %3 = vector.load %arg3[%c0_3, %c0_4] : memref<1x128xf32, #tpu.memory_space<vmem>>, vector<1x128xf32>
    %4 = vector.broadcast %3 : vector<1x128xf32> to vector<128x128xf32>
    %5 = arith.mulf %2, %4 : vector<128x128xf32>
    %c0_5 = arith.constant 0 : index
    %c0_6 = arith.constant 0 : index
    %6 = vector.load %arg4[%c0_5, %c0_6] : memref<1x128xf32, #tpu.memory_space<vmem>>, vector<1x128xf32>
    %7 = vector.broadcast %6 : vector<1x128xf32> to vector<128x128xf32>
    %8 = arith.addf %5, %7 : vector<128x128xf32>
    %c0_7 = arith.constant 0 : index
    %c0_8 = arith.constant 0 : index
    %9 = vector.load %arg5[%c0_7, %c0_8] : memref<128x128xf32, #tpu.memory_space<vmem>>, vector<128x128xf32>
    tpu.vector_store %arg5[%c0_7, %c0_8], %8 {strides = array<i32>} : memref<128x128xf32, #tpu.memory_space<vmem>>, vector<128x128xf32>,
    return
  }
  func.func @transform_0(%arg0: i32) -> (i32, i32) {
    %c0_i32 = arith.constant 0 : i32
    %c0_i32_0 = arith.constant 0 : i32
    return %arg0, %c0_i32 : i32, i32
  }
  func.func @transform_1(%arg0: i32) -> (i32, i32) {
    %c0_i32 = arith.constant 0 : i32
    %c0_i32_0 = arith.constant 0 : i32
    %c0_i32_1 = arith.constant 0 : i32
    return %c0_i32, %c0_i32_0 : i32, i32
  }
  func.func @transform_2(%arg0: i32) -> (i32, i32) {
    %c0_i32 = arith.constant 0 : i32
    %c0_i32_0 = arith.constant 0 : i32
    %c0_i32_1 = arith.constant 0 : i32
    return %c0_i32, %c0_i32_0 : i32, i32
  }
  func.func @transform_3(%arg0: i32) -> (i32, i32) {
    %c0_i32 = arith.constant 0 : i32
    %c0_i32_0 = arith.constant 0 : i32
    %c0_i32_1 = arith.constant 0 : i32
    return %c0_i32, %c0_i32_0 : i32, i32
  }
  func.func @transform_4(%arg0: i32) -> (i32, i32) {
    %c0_i32 = arith.constant 0 : i32
    %c0_i32_0 = arith.constant 0 : i32
    return %arg0, %c0_i32 : i32, i32
  }
}

module attributes {stable_mosaic.version = 11 : i64} {
  func.func @_matmul_bn_res_kernel(%arg0: i32, %arg1: memref<128x576xbf16, #tpu.memory_space<vmem>>, %arg2: memref<576x128xbf16, #tpu.memory_space<vmem>>, %arg3: memref<1x128xf32, #tpu.memory_space<vmem>>, %arg4: memref<1x128xf32, #tpu.memory_space<vmem>>, %arg5: memref<128x128xf32, #tpu.memory_space<vmem>>, %arg6: memref<128x128xf32, #tpu.memory_space<vmem>>) attributes {dimension_semantics = [#tpu.dimension_semantics<parallel>], iteration_bounds = array<i64: 1>, scalar_prefetch = 0 : i64, scratch_operands = 0 : i64, tpu.core_type = #tpu.core_type<tc>, window_params = [{transform_indices = @transform_0, window_bounds = array<i64: 128, 576>}, {pipeline_mode = #tpu.pipeline_mode<synchronous>, transform_indices = @transform_1, window_bounds = array<i64: 576, 128>}, {pipeline_mode = #tpu.pipeline_mode<synchronous>, transform_indices = @transform_2, window_bounds = array<i64: 1, 128>}, {pipeline_mode = #tpu.pipeline_mode<synchronous>, transform_indices = @transform_3, window_bounds = array<i64: 1, 128>}, {transform_indices = @transform_4, window_bounds = array<i64: 128, 128>}, {transform_indices = @transform_5, window_bounds = array<i64: 128, 128>}]} {
    %c0 = arith.constant 0 : index
    %c0_0 = arith.constant 0 : index
    %0 = vector.load %arg1[%c0, %c0_0] : memref<128x576xbf16, #tpu.memory_space<vmem>>, vector<128x576xbf16>
    %c0_1 = arith.constant 0 : index
    %c0_2 = arith.constant 0 : index
    %1 = vector.load %arg2[%c0_1, %c0_2] : memref<576x128xbf16, #tpu.memory_space<vmem>>, vector<576x128xbf16>
    %cst = arith.constant dense<0.000000e+00> : vector<128x128xf32>
    %2 = tpu.matmul %0, %1, %cst {dimension_numbers = #tpu.dot_dimension_numbers<[1], [0], [0], [1], [0, 0, 1, 1], [], []>} : vector<128x576xbf16>, vector<576x128xbf16>, vector<128x128xf32> -> vector<128x128xf32>
    %c0_3 = arith.constant 0 : index
    %c0_4 = arith.constant 0 : index
    %3 = vector.load %arg3[%c0_3, %c0_4] : memref<1x128xf32, #tpu.memory_space<vmem>>, vector<1x128xf32>
    %4 = vector.broadcast %3 : vector<1x128xf32> to vector<128x128xf32>
    %5 = arith.mulf %2, %4 : vector<128x128xf32>
    %c0_5 = arith.constant 0 : index
    %c0_6 = arith.constant 0 : index
    %6 = vector.load %arg4[%c0_5, %c0_6] : memref<1x128xf32, #tpu.memory_space<vmem>>, vector<1x128xf32>
    %7 = vector.broadcast %6 : vector<1x128xf32> to vector<128x128xf32>
    %8 = arith.addf %5, %7 : vector<128x128xf32>
    %c0_7 = arith.constant 0 : index
    %c0_8 = arith.constant 0 : index
    %9 = vector.load %arg5[%c0_7, %c0_8] : memref<128x128xf32, #tpu.memory_space<vmem>>, vector<128x128xf32>
    %10 = arith.addf %8, %9 : vector<128x128xf32>
    %cst_9 = arith.constant 0.000000e+00 : f32
    %11 = vector.broadcast %cst_9 : f32 to vector<128x128xf32>
    %12 = arith.maximumf %10, %11 : vector<128x128xf32>
    %c0_10 = arith.constant 0 : index
    %c0_11 = arith.constant 0 : index
    %13 = vector.load %arg6[%c0_10, %c0_11] : memref<128x128xf32, #tpu.memory_space<vmem>>, vector<128x128xf32>
    tpu.vector_store %arg6[%c0_10, %c0_11], %12 {strides = array<i32>} : memref<128x128xf32, #tpu.memory_space<vmem>>, vector<128x128xf32>,
    return
  }
  func.func @transform_0(%arg0: i32) -> (i32, i32) {
    %c0_i32 = arith.constant 0 : i32
    %c0_i32_0 = arith.constant 0 : i32
    return %arg0, %c0_i32 : i32, i32
  }
  func.func @transform_1(%arg0: i32) -> (i32, i32) {
    %c0_i32 = arith.constant 0 : i32
    %c0_i32_0 = arith.constant 0 : i32
    %c0_i32_1 = arith.constant 0 : i32
    return %c0_i32, %c0_i32_0 : i32, i32
  }
  func.func @transform_2(%arg0: i32) -> (i32, i32) {
    %c0_i32 = arith.constant 0 : i32
    %c0_i32_0 = arith.constant 0 : i32
    %c0_i32_1 = arith.constant 0 : i32
    return %c0_i32, %c0_i32_0 : i32, i32
  }
  func.func @transform_3(%arg0: i32) -> (i32, i32) {
    %c0_i32 = arith.constant 0 : i32
    %c0_i32_0 = arith.constant 0 : i32
    %c0_i32_1 = arith.constant 0 : i32
    return %c0_i32, %c0_i32_0 : i32, i32
  }
  func.func @transform_4(%arg0: i32) -> (i32, i32) {
    %c0_i32 = arith.constant 0 : i32
    %c0_i32_0 = arith.constant 0 : i32
    return %arg0, %c0_i32 : i32, i32
  }
  func.func @transform_5(%arg0: i32) -> (i32, i32) {
    %c0_i32 = arith.constant 0 : i32
    %c0_i32_0 = arith.constant 0 : i32
    return %arg0, %c0_i32 : i32, i32
  }
}

module attributes {stable_mosaic.version = 11 : i64} {
  func.func @_matmul_bn_kernel(%arg0: i32, %arg1: memref<128x576xbf16, #tpu.memory_space<vmem>>, %arg2: memref<576x128xbf16, #tpu.memory_space<vmem>>, %arg3: memref<1x128xf32, #tpu.memory_space<vmem>>, %arg4: memref<1x128xf32, #tpu.memory_space<vmem>>, %arg5: memref<128x128xf32, #tpu.memory_space<vmem>>) attributes {dimension_semantics = [#tpu.dimension_semantics<parallel>], iteration_bounds = array<i64: 1>, scalar_prefetch = 0 : i64, scratch_operands = 0 : i64, tpu.core_type = #tpu.core_type<tc>, window_params = [{transform_indices = @transform_0, window_bounds = array<i64: 128, 576>}, {pipeline_mode = #tpu.pipeline_mode<synchronous>, transform_indices = @transform_1, window_bounds = array<i64: 576, 128>}, {pipeline_mode = #tpu.pipeline_mode<synchronous>, transform_indices = @transform_2, window_bounds = array<i64: 1, 128>}, {pipeline_mode = #tpu.pipeline_mode<synchronous>, transform_indices = @transform_3, window_bounds = array<i64: 1, 128>}, {transform_indices = @transform_4, window_bounds = array<i64: 128, 128>}]} {
    %c0 = arith.constant 0 : index
    %c0_0 = arith.constant 0 : index
    %0 = vector.load %arg1[%c0, %c0_0] : memref<128x576xbf16, #tpu.memory_space<vmem>>, vector<128x576xbf16>
    %c0_1 = arith.constant 0 : index
    %c0_2 = arith.constant 0 : index
    %1 = vector.load %arg2[%c0_1, %c0_2] : memref<576x128xbf16, #tpu.memory_space<vmem>>, vector<576x128xbf16>
    %cst = arith.constant dense<0.000000e+00> : vector<128x128xf32>
    %2 = tpu.matmul %0, %1, %cst {dimension_numbers = #tpu.dot_dimension_numbers<[1], [0], [0], [1], [0, 0, 1, 1], [], []>} : vector<128x576xbf16>, vector<576x128xbf16>, vector<128x128xf32> -> vector<128x128xf32>
    %c0_3 = arith.constant 0 : index
    %c0_4 = arith.constant 0 : index
    %3 = vector.load %arg3[%c0_3, %c0_4] : memref<1x128xf32, #tpu.memory_space<vmem>>, vector<1x128xf32>
    %4 = vector.broadcast %3 : vector<1x128xf32> to vector<128x128xf32>
    %5 = arith.mulf %2, %4 : vector<128x128xf32>
    %c0_5 = arith.constant 0 : index
    %c0_6 = arith.constant 0 : index
    %6 = vector.load %arg4[%c0_5, %c0_6] : memref<1x128xf32, #tpu.memory_space<vmem>>, vector<1x128xf32>
    %7 = vector.broadcast %6 : vector<1x128xf32> to vector<128x128xf32>
    %8 = arith.addf %5, %7 : vector<128x128xf32>
    %cst_7 = arith.constant 0.000000e+00 : f32
    %9 = vector.broadcast %cst_7 : f32 to vector<128x128xf32>
    %10 = arith.maximumf %8, %9 : vector<128x128xf32>
    %c0_8 = arith.constant 0 : index
    %c0_9 = arith.constant 0 : index
    %11 = vector.load %arg5[%c0_8, %c0_9] : memref<128x128xf32, #tpu.memory_space<vmem>>, vector<128x128xf32>
    tpu.vector_store %arg5[%c0_8, %c0_9], %10 {strides = array<i32>} : memref<128x128xf32, #tpu.memory_space<vmem>>, vector<128x128xf32>,
    return
  }
  func.func @transform_0(%arg0: i32) -> (i32, i32) {
    %c0_i32 = arith.constant 0 : i32
    %c0_i32_0 = arith.constant 0 : i32
    return %arg0, %c0_i32 : i32, i32
  }
  func.func @transform_1(%arg0: i32) -> (i32, i32) {
    %c0_i32 = arith.constant 0 : i32
    %c0_i32_0 = arith.constant 0 : i32
    %c0_i32_1 = arith.constant 0 : i32
    return %c0_i32, %c0_i32_0 : i32, i32
  }
  func.func @transform_2(%arg0: i32) -> (i32, i32) {
    %c0_i32 = arith.constant 0 : i32
    %c0_i32_0 = arith.constant 0 : i32
    %c0_i32_1 = arith.constant 0 : i32
    return %c0_i32, %c0_i32_0 : i32, i32
  }
  func.func @transform_3(%arg0: i32) -> (i32, i32) {
    %c0_i32 = arith.constant 0 : i32
    %c0_i32_0 = arith.constant 0 : i32
    %c0_i32_1 = arith.constant 0 : i32
    return %c0_i32, %c0_i32_0 : i32, i32
  }
  func.func @transform_4(%arg0: i32) -> (i32, i32) {
    %c0_i32 = arith.constant 0 : i32
    %c0_i32_0 = arith.constant 0 : i32
    return %arg0, %c0_i32 : i32, i32
  }
}

module attributes {stable_mosaic.version = 11 : i64} {
  func.func @_matmul_bn_kernel(%arg0: i32, %arg1: memref<128x64xbf16, #tpu.memory_space<vmem>>, %arg2: memref<64x128xbf16, #tpu.memory_space<vmem>>, %arg3: memref<1x128xf32, #tpu.memory_space<vmem>>, %arg4: memref<1x128xf32, #tpu.memory_space<vmem>>, %arg5: memref<128x128xf32, #tpu.memory_space<vmem>>) attributes {dimension_semantics = [#tpu.dimension_semantics<parallel>], iteration_bounds = array<i64: 1>, scalar_prefetch = 0 : i64, scratch_operands = 0 : i64, tpu.core_type = #tpu.core_type<tc>, window_params = [{transform_indices = @transform_0, window_bounds = array<i64: 128, 64>}, {pipeline_mode = #tpu.pipeline_mode<synchronous>, transform_indices = @transform_1, window_bounds = array<i64: 64, 128>}, {pipeline_mode = #tpu.pipeline_mode<synchronous>, transform_indices = @transform_2, window_bounds = array<i64: 1, 128>}, {pipeline_mode = #tpu.pipeline_mode<synchronous>, transform_indices = @transform_3, window_bounds = array<i64: 1, 128>}, {transform_indices = @transform_4, window_bounds = array<i64: 128, 128>}]} {
    %c0 = arith.constant 0 : index
    %c0_0 = arith.constant 0 : index
    %0 = vector.load %arg1[%c0, %c0_0] : memref<128x64xbf16, #tpu.memory_space<vmem>>, vector<128x64xbf16>
    %c0_1 = arith.constant 0 : index
    %c0_2 = arith.constant 0 : index
    %1 = vector.load %arg2[%c0_1, %c0_2] : memref<64x128xbf16, #tpu.memory_space<vmem>>, vector<64x128xbf16>
    %cst = arith.constant dense<0.000000e+00> : vector<128x128xf32>
    %2 = tpu.matmul %0, %1, %cst {dimension_numbers = #tpu.dot_dimension_numbers<[1], [0], [0], [1], [0, 0, 1, 1], [], []>} : vector<128x64xbf16>, vector<64x128xbf16>, vector<128x128xf32> -> vector<128x128xf32>
    %c0_3 = arith.constant 0 : index
    %c0_4 = arith.constant 0 : index
    %3 = vector.load %arg3[%c0_3, %c0_4] : memref<1x128xf32, #tpu.memory_space<vmem>>, vector<1x128xf32>
    %4 = vector.broadcast %3 : vector<1x128xf32> to vector<128x128xf32>
    %5 = arith.mulf %2, %4 : vector<128x128xf32>
    %c0_5 = arith.constant 0 : index
    %c0_6 = arith.constant 0 : index
    %6 = vector.load %arg4[%c0_5, %c0_6] : memref<1x128xf32, #tpu.memory_space<vmem>>, vector<1x128xf32>
    %7 = vector.broadcast %6 : vector<1x128xf32> to vector<128x128xf32>
    %8 = arith.addf %5, %7 : vector<128x128xf32>
    %c0_7 = arith.constant 0 : index
    %c0_8 = arith.constant 0 : index
    %9 = vector.load %arg5[%c0_7, %c0_8] : memref<128x128xf32, #tpu.memory_space<vmem>>, vector<128x128xf32>
    tpu.vector_store %arg5[%c0_7, %c0_8], %8 {strides = array<i32>} : memref<128x128xf32, #tpu.memory_space<vmem>>, vector<128x128xf32>,
    return
  }
  func.func @transform_0(%arg0: i32) -> (i32, i32) {
    %c0_i32 = arith.constant 0 : i32
    %c0_i32_0 = arith.constant 0 : i32
    return %arg0, %c0_i32 : i32, i32
  }
  func.func @transform_1(%arg0: i32) -> (i32, i32) {
    %c0_i32 = arith.constant 0 : i32
    %c0_i32_0 = arith.constant 0 : i32
    %c0_i32_1 = arith.constant 0 : i32
    return %c0_i32, %c0_i32_0 : i32, i32
  }
  func.func @transform_2(%arg0: i32) -> (i32, i32) {
    %c0_i32 = arith.constant 0 : i32
    %c0_i32_0 = arith.constant 0 : i32
    %c0_i32_1 = arith.constant 0 : i32
    return %c0_i32, %c0_i32_0 : i32, i32
  }
  func.func @transform_3(%arg0: i32) -> (i32, i32) {
    %c0_i32 = arith.constant 0 : i32
    %c0_i32_0 = arith.constant 0 : i32
    %c0_i32_1 = arith.constant 0 : i32
    return %c0_i32, %c0_i32_0 : i32, i32
  }
  func.func @transform_4(%arg0: i32) -> (i32, i32) {
    %c0_i32 = arith.constant 0 : i32
    %c0_i32_0 = arith.constant 0 : i32
    return %arg0, %c0_i32 : i32, i32
  }
}

module attributes {stable_mosaic.version = 11 : i64} {
  func.func @_matmul_bn_res_kernel(%arg0: i32, %arg1: memref<128x1152xbf16, #tpu.memory_space<vmem>>, %arg2: memref<1152x128xbf16, #tpu.memory_space<vmem>>, %arg3: memref<1x128xf32, #tpu.memory_space<vmem>>, %arg4: memref<1x128xf32, #tpu.memory_space<vmem>>, %arg5: memref<128x128xf32, #tpu.memory_space<vmem>>, %arg6: memref<128x128xf32, #tpu.memory_space<vmem>>) attributes {dimension_semantics = [#tpu.dimension_semantics<parallel>], iteration_bounds = array<i64: 1>, scalar_prefetch = 0 : i64, scratch_operands = 0 : i64, tpu.core_type = #tpu.core_type<tc>, window_params = [{transform_indices = @transform_0, window_bounds = array<i64: 128, 1152>}, {pipeline_mode = #tpu.pipeline_mode<synchronous>, transform_indices = @transform_1, window_bounds = array<i64: 1152, 128>}, {pipeline_mode = #tpu.pipeline_mode<synchronous>, transform_indices = @transform_2, window_bounds = array<i64: 1, 128>}, {pipeline_mode = #tpu.pipeline_mode<synchronous>, transform_indices = @transform_3, window_bounds = array<i64: 1, 128>}, {transform_indices = @transform_4, window_bounds = array<i64: 128, 128>}, {transform_indices = @transform_5, window_bounds = array<i64: 128, 128>}]} {
    %c0 = arith.constant 0 : index
    %c0_0 = arith.constant 0 : index
    %0 = vector.load %arg1[%c0, %c0_0] : memref<128x1152xbf16, #tpu.memory_space<vmem>>, vector<128x1152xbf16>
    %c0_1 = arith.constant 0 : index
    %c0_2 = arith.constant 0 : index
    %1 = vector.load %arg2[%c0_1, %c0_2] : memref<1152x128xbf16, #tpu.memory_space<vmem>>, vector<1152x128xbf16>
    %cst = arith.constant dense<0.000000e+00> : vector<128x128xf32>
    %2 = tpu.matmul %0, %1, %cst {dimension_numbers = #tpu.dot_dimension_numbers<[1], [0], [0], [1], [0, 0, 1, 1], [], []>} : vector<128x1152xbf16>, vector<1152x128xbf16>, vector<128x128xf32> -> vector<128x128xf32>
    %c0_3 = arith.constant 0 : index
    %c0_4 = arith.constant 0 : index
    %3 = vector.load %arg3[%c0_3, %c0_4] : memref<1x128xf32, #tpu.memory_space<vmem>>, vector<1x128xf32>
    %4 = vector.broadcast %3 : vector<1x128xf32> to vector<128x128xf32>
    %5 = arith.mulf %2, %4 : vector<128x128xf32>
    %c0_5 = arith.constant 0 : index
    %c0_6 = arith.constant 0 : index
    %6 = vector.load %arg4[%c0_5, %c0_6] : memref<1x128xf32, #tpu.memory_space<vmem>>, vector<1x128xf32>
    %7 = vector.broadcast %6 : vector<1x128xf32> to vector<128x128xf32>
    %8 = arith.addf %5, %7 : vector<128x128xf32>
    %c0_7 = arith.constant 0 : index
    %c0_8 = arith.constant 0 : index
    %9 = vector.load %arg5[%c0_7, %c0_8] : memref<128x128xf32, #tpu.memory_space<vmem>>, vector<128x128xf32>
    %10 = arith.addf %8, %9 : vector<128x128xf32>
    %cst_9 = arith.constant 0.000000e+00 : f32
    %11 = vector.broadcast %cst_9 : f32 to vector<128x128xf32>
    %12 = arith.maximumf %10, %11 : vector<128x128xf32>
    %c0_10 = arith.constant 0 : index
    %c0_11 = arith.constant 0 : index
    %13 = vector.load %arg6[%c0_10, %c0_11] : memref<128x128xf32, #tpu.memory_space<vmem>>, vector<128x128xf32>
    tpu.vector_store %arg6[%c0_10, %c0_11], %12 {strides = array<i32>} : memref<128x128xf32, #tpu.memory_space<vmem>>, vector<128x128xf32>,
    return
  }
  func.func @transform_0(%arg0: i32) -> (i32, i32) {
    %c0_i32 = arith.constant 0 : i32
    %c0_i32_0 = arith.constant 0 : i32
    return %arg0, %c0_i32 : i32, i32
  }
  func.func @transform_1(%arg0: i32) -> (i32, i32) {
    %c0_i32 = arith.constant 0 : i32
    %c0_i32_0 = arith.constant 0 : i32
    %c0_i32_1 = arith.constant 0 : i32
    return %c0_i32, %c0_i32_0 : i32, i32
  }
  func.func @transform_2(%arg0: i32) -> (i32, i32) {
    %c0_i32 = arith.constant 0 : i32
    %c0_i32_0 = arith.constant 0 : i32
    %c0_i32_1 = arith.constant 0 : i32
    return %c0_i32, %c0_i32_0 : i32, i32
  }
  func.func @transform_3(%arg0: i32) -> (i32, i32) {
    %c0_i32 = arith.constant 0 : i32
    %c0_i32_0 = arith.constant 0 : i32
    %c0_i32_1 = arith.constant 0 : i32
    return %c0_i32, %c0_i32_0 : i32, i32
  }
  func.func @transform_4(%arg0: i32) -> (i32, i32) {
    %c0_i32 = arith.constant 0 : i32
    %c0_i32_0 = arith.constant 0 : i32
    return %arg0, %c0_i32 : i32, i32
  }
  func.func @transform_5(%arg0: i32) -> (i32, i32) {
    %c0_i32 = arith.constant 0 : i32
    %c0_i32_0 = arith.constant 0 : i32
    return %arg0, %c0_i32 : i32, i32
  }
}

module attributes {stable_mosaic.version = 11 : i64} {
  func.func @_matmul_bn_kernel(%arg0: i32, %arg1: memref<128x1152xbf16, #tpu.memory_space<vmem>>, %arg2: memref<1152x128xbf16, #tpu.memory_space<vmem>>, %arg3: memref<1x128xf32, #tpu.memory_space<vmem>>, %arg4: memref<1x128xf32, #tpu.memory_space<vmem>>, %arg5: memref<128x128xf32, #tpu.memory_space<vmem>>) attributes {dimension_semantics = [#tpu.dimension_semantics<parallel>], iteration_bounds = array<i64: 1>, scalar_prefetch = 0 : i64, scratch_operands = 0 : i64, tpu.core_type = #tpu.core_type<tc>, window_params = [{transform_indices = @transform_0, window_bounds = array<i64: 128, 1152>}, {pipeline_mode = #tpu.pipeline_mode<synchronous>, transform_indices = @transform_1, window_bounds = array<i64: 1152, 128>}, {pipeline_mode = #tpu.pipeline_mode<synchronous>, transform_indices = @transform_2, window_bounds = array<i64: 1, 128>}, {pipeline_mode = #tpu.pipeline_mode<synchronous>, transform_indices = @transform_3, window_bounds = array<i64: 1, 128>}, {transform_indices = @transform_4, window_bounds = array<i64: 128, 128>}]} {
    %c0 = arith.constant 0 : index
    %c0_0 = arith.constant 0 : index
    %0 = vector.load %arg1[%c0, %c0_0] : memref<128x1152xbf16, #tpu.memory_space<vmem>>, vector<128x1152xbf16>
    %c0_1 = arith.constant 0 : index
    %c0_2 = arith.constant 0 : index
    %1 = vector.load %arg2[%c0_1, %c0_2] : memref<1152x128xbf16, #tpu.memory_space<vmem>>, vector<1152x128xbf16>
    %cst = arith.constant dense<0.000000e+00> : vector<128x128xf32>
    %2 = tpu.matmul %0, %1, %cst {dimension_numbers = #tpu.dot_dimension_numbers<[1], [0], [0], [1], [0, 0, 1, 1], [], []>} : vector<128x1152xbf16>, vector<1152x128xbf16>, vector<128x128xf32> -> vector<128x128xf32>
    %c0_3 = arith.constant 0 : index
    %c0_4 = arith.constant 0 : index
    %3 = vector.load %arg3[%c0_3, %c0_4] : memref<1x128xf32, #tpu.memory_space<vmem>>, vector<1x128xf32>
    %4 = vector.broadcast %3 : vector<1x128xf32> to vector<128x128xf32>
    %5 = arith.mulf %2, %4 : vector<128x128xf32>
    %c0_5 = arith.constant 0 : index
    %c0_6 = arith.constant 0 : index
    %6 = vector.load %arg4[%c0_5, %c0_6] : memref<1x128xf32, #tpu.memory_space<vmem>>, vector<1x128xf32>
    %7 = vector.broadcast %6 : vector<1x128xf32> to vector<128x128xf32>
    %8 = arith.addf %5, %7 : vector<128x128xf32>
    %cst_7 = arith.constant 0.000000e+00 : f32
    %9 = vector.broadcast %cst_7 : f32 to vector<128x128xf32>
    %10 = arith.maximumf %8, %9 : vector<128x128xf32>
    %c0_8 = arith.constant 0 : index
    %c0_9 = arith.constant 0 : index
    %11 = vector.load %arg5[%c0_8, %c0_9] : memref<128x128xf32, #tpu.memory_space<vmem>>, vector<128x128xf32>
    tpu.vector_store %arg5[%c0_8, %c0_9], %10 {strides = array<i32>} : memref<128x128xf32, #tpu.memory_space<vmem>>, vector<128x128xf32>,
    return
  }
  func.func @transform_0(%arg0: i32) -> (i32, i32) {
    %c0_i32 = arith.constant 0 : i32
    %c0_i32_0 = arith.constant 0 : i32
    return %arg0, %c0_i32 : i32, i32
  }
  func.func @transform_1(%arg0: i32) -> (i32, i32) {
    %c0_i32 = arith.constant 0 : i32
    %c0_i32_0 = arith.constant 0 : i32
    %c0_i32_1 = arith.constant 0 : i32
    return %c0_i32, %c0_i32_0 : i32, i32
  }
  func.func @transform_2(%arg0: i32) -> (i32, i32) {
    %c0_i32 = arith.constant 0 : i32
    %c0_i32_0 = arith.constant 0 : i32
    %c0_i32_1 = arith.constant 0 : i32
    return %c0_i32, %c0_i32_0 : i32, i32
  }
  func.func @transform_3(%arg0: i32) -> (i32, i32) {
    %c0_i32 = arith.constant 0 : i32
    %c0_i32_0 = arith.constant 0 : i32
    %c0_i32_1 = arith.constant 0 : i32
    return %c0_i32, %c0_i32_0 : i32, i32
  }
  func.func @transform_4(%arg0: i32) -> (i32, i32) {
    %c0_i32 = arith.constant 0 : i32
    %c0_i32_0 = arith.constant 0 : i32
    return %arg0, %c0_i32 : i32, i32
  }
}

module attributes {stable_mosaic.version = 11 : i64} {
  func.func @_l1_sum_kernel(%arg0: i32, %arg1: memref<8x128xf32, #tpu.memory_space<vmem>>, %arg2: memref<8x128xf32, #tpu.memory_space<vmem>>, %arg3: memref<1x1xf32, #tpu.memory_space<vmem>>, %arg4: memref<8x128xf32, #tpu.memory_space<vmem>>) attributes {dimension_semantics = [#tpu.dimension_semantics<arbitrary>], iteration_bounds = array<i64: 1>, scalar_prefetch = 0 : i64, scratch_operands = 1 : i64, tpu.core_type = #tpu.core_type<tc>, window_params = [{transform_indices = @transform_0, window_bounds = array<i64: 8, 128>}, {transform_indices = @transform_1, window_bounds = array<i64: 8, 128>}, {pipeline_mode = #tpu.pipeline_mode<synchronous>, transform_indices = @transform_2, window_bounds = array<i64: 1, 1>}]} {
    %c0_i32 = arith.constant 0 : i32
    %0 = arith.cmpi eq, %arg0, %c0_i32 : i32
    %1 = arith.extui %0 : i1 to i32
    %c0_i32_0 = arith.constant 0 : i32
    %2 = arith.cmpi ne, %1, %c0_i32_0 : i32
    scf.if %2 {
      %cst_10 = arith.constant 0.000000e+00 : f32
      %15 = vector.broadcast %cst_10 : f32 to vector<8x128xf32>
      %c0_11 = arith.constant 0 : index
      %c0_12 = arith.constant 0 : index
      %16 = vector.load %arg4[%c0_11, %c0_12] : memref<8x128xf32, #tpu.memory_space<vmem>>, vector<8x128xf32>
      tpu.vector_store %arg4[%c0_11, %c0_12], %15 {strides = array<i32>} : memref<8x128xf32, #tpu.memory_space<vmem>>, vector<8x128xf32>,
    } else {
    }
    %c0 = arith.constant 0 : index
    %c0_1 = arith.constant 0 : index
    %3 = vector.load %arg1[%c0, %c0_1] : memref<8x128xf32, #tpu.memory_space<vmem>>, vector<8x128xf32>
    %c0_2 = arith.constant 0 : index
    %c0_3 = arith.constant 0 : index
    %4 = vector.load %arg2[%c0_2, %c0_3] : memref<8x128xf32, #tpu.memory_space<vmem>>, vector<8x128xf32>
    %5 = arith.subf %3, %4 : vector<8x128xf32>
    %6 = math.absf %5 : vector<8x128xf32>
    %c0_4 = arith.constant 0 : index
    %c0_5 = arith.constant 0 : index
    %7 = vector.load %arg4[%c0_4, %c0_5] : memref<8x128xf32, #tpu.memory_space<vmem>>, vector<8x128xf32>
    %8 = vector.shape_cast %6 : vector<8x128xf32> to vector<1x8x128xf32>
    %cst = arith.constant dense<0.000000e+00> : vector<8x128xf32>
    %9 = vector.multi_reduction <add>, %8, %cst [0] : vector<1x8x128xf32> to vector<8x128xf32>
    %10 = arith.addf %7, %9 : vector<8x128xf32>
    %c0_6 = arith.constant 0 : index
    %c0_7 = arith.constant 0 : index
    %11 = vector.load %arg4[%c0_6, %c0_7] : memref<8x128xf32, #tpu.memory_space<vmem>>, vector<8x128xf32>
    tpu.vector_store %arg4[%c0_6, %c0_7], %10 {strides = array<i32>} : memref<8x128xf32, #tpu.memory_space<vmem>>, vector<8x128xf32>,
    %c0_i32_8 = arith.constant 0 : i32
    %12 = arith.cmpi eq, %arg0, %c0_i32_8 : i32
    %13 = arith.extui %12 : i1 to i32
    %c0_i32_9 = arith.constant 0 : i32
    %14 = arith.cmpi ne, %13, %c0_i32_9 : i32
    scf.if %14 {
      %c0_10 = arith.constant 0 : index
      %c0_11 = arith.constant 0 : index
      %15 = vector.load %arg4[%c0_10, %c0_11] : memref<8x128xf32, #tpu.memory_space<vmem>>, vector<8x128xf32>
      %16 = vector.shape_cast %15 : vector<8x128xf32> to vector<1x8x128xf32>
      %cst_12 = arith.constant dense<0.000000e+00> : vector<1xf32>
      %17 = vector.multi_reduction <add>, %16, %cst_12 [1, 2] : vector<1x8x128xf32> to vector<1xf32>
      %18 = vector.shape_cast %17 : vector<1xf32> to vector<1x1x1xf32>
      %19 = vector.extract %18[0, 0, 0] : f32 from vector<1x1x1xf32>
      %20 = vector.broadcast %19 : f32 to vector<1x1xf32>
      %c0_13 = arith.constant 0 : index
      %c0_14 = arith.constant 0 : index
      %21 = vector.load %arg3[%c0_13, %c0_14] : memref<1x1xf32, #tpu.memory_space<vmem>>, vector<1x1xf32>
      tpu.vector_store %arg3[%c0_13, %c0_14], %20 {strides = array<i32>} : memref<1x1xf32, #tpu.memory_space<vmem>>, vector<1x1xf32>,
    } else {
    }
    return
  }
  func.func @transform_0(%arg0: i32) -> (i32, i32) {
    %c0_i32 = arith.constant 0 : i32
    %c0_i32_0 = arith.constant 0 : i32
    return %arg0, %c0_i32 : i32, i32
  }
  func.func @transform_1(%arg0: i32) -> (i32, i32) {
    %c0_i32 = arith.constant 0 : i32
    %c0_i32_0 = arith.constant 0 : i32
    return %arg0, %c0_i32 : i32, i32
  }
  func.func @transform_2(%arg0: i32) -> (i32, i32) {
    %c0_i32 = arith.constant 0 : i32
    %c0_i32_0 = arith.constant 0 : i32
    %c0_i32_1 = arith.constant 0 : i32
    return %c0_i32, %c0_i32_0 : i32, i32
  }
}

module attributes {stable_mosaic.version = 11 : i64} {
  func.func @_l1_sum_kernel(%arg0: i32, %arg1: memref<32x128xf32, #tpu.memory_space<vmem>>, %arg2: memref<32x128xf32, #tpu.memory_space<vmem>>, %arg3: memref<1x1xf32, #tpu.memory_space<vmem>>, %arg4: memref<8x128xf32, #tpu.memory_space<vmem>>) attributes {dimension_semantics = [#tpu.dimension_semantics<arbitrary>], iteration_bounds = array<i64: 1>, scalar_prefetch = 0 : i64, scratch_operands = 1 : i64, tpu.core_type = #tpu.core_type<tc>, window_params = [{transform_indices = @transform_0, window_bounds = array<i64: 32, 128>}, {transform_indices = @transform_1, window_bounds = array<i64: 32, 128>}, {pipeline_mode = #tpu.pipeline_mode<synchronous>, transform_indices = @transform_2, window_bounds = array<i64: 1, 1>}]} {
    %c0_i32 = arith.constant 0 : i32
    %0 = arith.cmpi eq, %arg0, %c0_i32 : i32
    %1 = arith.extui %0 : i1 to i32
    %c0_i32_0 = arith.constant 0 : i32
    %2 = arith.cmpi ne, %1, %c0_i32_0 : i32
    scf.if %2 {
      %cst_10 = arith.constant 0.000000e+00 : f32
      %15 = vector.broadcast %cst_10 : f32 to vector<8x128xf32>
      %c0_11 = arith.constant 0 : index
      %c0_12 = arith.constant 0 : index
      %16 = vector.load %arg4[%c0_11, %c0_12] : memref<8x128xf32, #tpu.memory_space<vmem>>, vector<8x128xf32>
      tpu.vector_store %arg4[%c0_11, %c0_12], %15 {strides = array<i32>} : memref<8x128xf32, #tpu.memory_space<vmem>>, vector<8x128xf32>,
    } else {
    }
    %c0 = arith.constant 0 : index
    %c0_1 = arith.constant 0 : index
    %3 = vector.load %arg1[%c0, %c0_1] : memref<32x128xf32, #tpu.memory_space<vmem>>, vector<32x128xf32>
    %c0_2 = arith.constant 0 : index
    %c0_3 = arith.constant 0 : index
    %4 = vector.load %arg2[%c0_2, %c0_3] : memref<32x128xf32, #tpu.memory_space<vmem>>, vector<32x128xf32>
    %5 = arith.subf %3, %4 : vector<32x128xf32>
    %6 = math.absf %5 : vector<32x128xf32>
    %c0_4 = arith.constant 0 : index
    %c0_5 = arith.constant 0 : index
    %7 = vector.load %arg4[%c0_4, %c0_5] : memref<8x128xf32, #tpu.memory_space<vmem>>, vector<8x128xf32>
    %8 = vector.shape_cast %6 : vector<32x128xf32> to vector<4x8x128xf32>
    %cst = arith.constant dense<0.000000e+00> : vector<8x128xf32>
    %9 = vector.multi_reduction <add>, %8, %cst [0] : vector<4x8x128xf32> to vector<8x128xf32>
    %10 = arith.addf %7, %9 : vector<8x128xf32>
    %c0_6 = arith.constant 0 : index
    %c0_7 = arith.constant 0 : index
    %11 = vector.load %arg4[%c0_6, %c0_7] : memref<8x128xf32, #tpu.memory_space<vmem>>, vector<8x128xf32>
    tpu.vector_store %arg4[%c0_6, %c0_7], %10 {strides = array<i32>} : memref<8x128xf32, #tpu.memory_space<vmem>>, vector<8x128xf32>,
    %c0_i32_8 = arith.constant 0 : i32
    %12 = arith.cmpi eq, %arg0, %c0_i32_8 : i32
    %13 = arith.extui %12 : i1 to i32
    %c0_i32_9 = arith.constant 0 : i32
    %14 = arith.cmpi ne, %13, %c0_i32_9 : i32
    scf.if %14 {
      %c0_10 = arith.constant 0 : index
      %c0_11 = arith.constant 0 : index
      %15 = vector.load %arg4[%c0_10, %c0_11] : memref<8x128xf32, #tpu.memory_space<vmem>>, vector<8x128xf32>
      %16 = vector.shape_cast %15 : vector<8x128xf32> to vector<1x8x128xf32>
      %cst_12 = arith.constant dense<0.000000e+00> : vector<1xf32>
      %17 = vector.multi_reduction <add>, %16, %cst_12 [1, 2] : vector<1x8x128xf32> to vector<1xf32>
      %18 = vector.shape_cast %17 : vector<1xf32> to vector<1x1x1xf32>
      %19 = vector.extract %18[0, 0, 0] : f32 from vector<1x1x1xf32>
      %20 = vector.broadcast %19 : f32 to vector<1x1xf32>
      %c0_13 = arith.constant 0 : index
      %c0_14 = arith.constant 0 : index
      %21 = vector.load %arg3[%c0_13, %c0_14] : memref<1x1xf32, #tpu.memory_space<vmem>>, vector<1x1xf32>
      tpu.vector_store %arg3[%c0_13, %c0_14], %20 {strides = array<i32>} : memref<1x1xf32, #tpu.memory_space<vmem>>, vector<1x1xf32>,
    } else {
    }
    return
  }
  func.func @transform_0(%arg0: i32) -> (i32, i32) {
    %c0_i32 = arith.constant 0 : i32
    %c0_i32_0 = arith.constant 0 : i32
    return %arg0, %c0_i32 : i32, i32
  }
  func.func @transform_1(%arg0: i32) -> (i32, i32) {
    %c0_i32 = arith.constant 0 : i32
    %c0_i32_0 = arith.constant 0 : i32
    return %arg0, %c0_i32 : i32, i32
  }
  func.func @transform_2(%arg0: i32) -> (i32, i32) {
    %c0_i32 = arith.constant 0 : i32
    %c0_i32_0 = arith.constant 0 : i32
    %c0_i32_1 = arith.constant 0 : i32
    return %c0_i32, %c0_i32_0 : i32, i32
  }
}

module attributes {stable_mosaic.version = 11 : i64} {
  func.func @_l1_sum_kernel(%arg0: i32, %arg1: memref<128x128xf32, #tpu.memory_space<vmem>>, %arg2: memref<128x128xf32, #tpu.memory_space<vmem>>, %arg3: memref<1x1xf32, #tpu.memory_space<vmem>>, %arg4: memref<8x128xf32, #tpu.memory_space<vmem>>) attributes {dimension_semantics = [#tpu.dimension_semantics<arbitrary>], iteration_bounds = array<i64: 1>, scalar_prefetch = 0 : i64, scratch_operands = 1 : i64, tpu.core_type = #tpu.core_type<tc>, window_params = [{transform_indices = @transform_0, window_bounds = array<i64: 128, 128>}, {transform_indices = @transform_1, window_bounds = array<i64: 128, 128>}, {pipeline_mode = #tpu.pipeline_mode<synchronous>, transform_indices = @transform_2, window_bounds = array<i64: 1, 1>}]} {
    %c0_i32 = arith.constant 0 : i32
    %0 = arith.cmpi eq, %arg0, %c0_i32 : i32
    %1 = arith.extui %0 : i1 to i32
    %c0_i32_0 = arith.constant 0 : i32
    %2 = arith.cmpi ne, %1, %c0_i32_0 : i32
    scf.if %2 {
      %cst_10 = arith.constant 0.000000e+00 : f32
      %15 = vector.broadcast %cst_10 : f32 to vector<8x128xf32>
      %c0_11 = arith.constant 0 : index
      %c0_12 = arith.constant 0 : index
      %16 = vector.load %arg4[%c0_11, %c0_12] : memref<8x128xf32, #tpu.memory_space<vmem>>, vector<8x128xf32>
      tpu.vector_store %arg4[%c0_11, %c0_12], %15 {strides = array<i32>} : memref<8x128xf32, #tpu.memory_space<vmem>>, vector<8x128xf32>,
    } else {
    }
    %c0 = arith.constant 0 : index
    %c0_1 = arith.constant 0 : index
    %3 = vector.load %arg1[%c0, %c0_1] : memref<128x128xf32, #tpu.memory_space<vmem>>, vector<128x128xf32>
    %c0_2 = arith.constant 0 : index
    %c0_3 = arith.constant 0 : index
    %4 = vector.load %arg2[%c0_2, %c0_3] : memref<128x128xf32, #tpu.memory_space<vmem>>, vector<128x128xf32>
    %5 = arith.subf %3, %4 : vector<128x128xf32>
    %6 = math.absf %5 : vector<128x128xf32>
    %c0_4 = arith.constant 0 : index
    %c0_5 = arith.constant 0 : index
    %7 = vector.load %arg4[%c0_4, %c0_5] : memref<8x128xf32, #tpu.memory_space<vmem>>, vector<8x128xf32>
    %8 = vector.shape_cast %6 : vector<128x128xf32> to vector<16x8x128xf32>
    %cst = arith.constant dense<0.000000e+00> : vector<8x128xf32>
    %9 = vector.multi_reduction <add>, %8, %cst [0] : vector<16x8x128xf32> to vector<8x128xf32>
    %10 = arith.addf %7, %9 : vector<8x128xf32>
    %c0_6 = arith.constant 0 : index
    %c0_7 = arith.constant 0 : index
    %11 = vector.load %arg4[%c0_6, %c0_7] : memref<8x128xf32, #tpu.memory_space<vmem>>, vector<8x128xf32>
    tpu.vector_store %arg4[%c0_6, %c0_7], %10 {strides = array<i32>} : memref<8x128xf32, #tpu.memory_space<vmem>>, vector<8x128xf32>,
    %c0_i32_8 = arith.constant 0 : i32
    %12 = arith.cmpi eq, %arg0, %c0_i32_8 : i32
    %13 = arith.extui %12 : i1 to i32
    %c0_i32_9 = arith.constant 0 : i32
    %14 = arith.cmpi ne, %13, %c0_i32_9 : i32
    scf.if %14 {
      %c0_10 = arith.constant 0 : index
      %c0_11 = arith.constant 0 : index
      %15 = vector.load %arg4[%c0_10, %c0_11] : memref<8x128xf32, #tpu.memory_space<vmem>>, vector<8x128xf32>
      %16 = vector.shape_cast %15 : vector<8x128xf32> to vector<1x8x128xf32>
      %cst_12 = arith.constant dense<0.000000e+00> : vector<1xf32>
      %17 = vector.multi_reduction <add>, %16, %cst_12 [1, 2] : vector<1x8x128xf32> to vector<1xf32>
      %18 = vector.shape_cast %17 : vector<1xf32> to vector<1x1x1xf32>
      %19 = vector.extract %18[0, 0, 0] : f32 from vector<1x1x1xf32>
      %20 = vector.broadcast %19 : f32 to vector<1x1xf32>
      %c0_13 = arith.constant 0 : index
      %c0_14 = arith.constant 0 : index
      %21 = vector.load %arg3[%c0_13, %c0_14] : memref<1x1xf32, #tpu.memory_space<vmem>>, vector<1x1xf32>
      tpu.vector_store %arg3[%c0_13, %c0_14], %20 {strides = array<i32>} : memref<1x1xf32, #tpu.memory_space<vmem>>, vector<1x1xf32>,
    } else {
    }
    return
  }
  func.func @transform_0(%arg0: i32) -> (i32, i32) {
    %c0_i32 = arith.constant 0 : i32
    %c0_i32_0 = arith.constant 0 : i32
    return %arg0, %c0_i32 : i32, i32
  }
  func.func @transform_1(%arg0: i32) -> (i32, i32) {
    %c0_i32 = arith.constant 0 : i32
    %c0_i32_0 = arith.constant 0 : i32
    return %arg0, %c0_i32 : i32, i32
  }
  func.func @transform_2(%arg0: i32) -> (i32, i32) {
    %c0_i32 = arith.constant 0 : i32
    %c0_i32_0 = arith.constant 0 : i32
    %c0_i32_1 = arith.constant 0 : i32
    return %c0_i32, %c0_i32_0 : i32, i32
  }
}

</mosaic_0001>

<llo_original>
// kernel: _lambda_.24
$region0: #{_lambda_.24}
  #allocation0 [shape = 'u32[]', space=smem, size = 0x4, offset = 0x4, fixed_abs, tag = 'smem constant byte address 0x4 - core index']
  #allocation1 [shape = 'u32[144,128]{1,0:T(1,128)}', space=vmem, size = 0x12000, scoped, tag = 'internal scratch']
  %s0 = inlined_call_operand.vmem [shape: bf16[1024,147], index: 0, kind: input, shape index: {}]
  %s1 = inlined_call_operand.vmem [shape: bf16[147,128], index: 1, kind: input, shape index: {}]
  %s2 = inlined_call_operand.vmem [shape: f32[1,128], index: 2, kind: input, shape index: {}]
  %s3 = inlined_call_operand.vmem [shape: f32[1,128], index: 3, kind: input, shape index: {}]
  %s4 = inlined_call_operand.vmem [shape: f32[1024,128], index: 4, kind: output, shape index: {}]
  %s5 = sld [smem:[#allocation0]]
  $region49: #{_lambda_.24} parent=0
    _
  %s7 = ssub.s32 1, %s5
  %s8 = scalar_select 0, %s7, %s5
  loop: start=0, step=1, limit=4
  $region2: #{_lambda_.24} parent=0 // loop_pre_header
    _
  $region3: #{_lambda_.24} parent=0 // loop_header
    %s10 = sphi 0, %s14
    %p11 = scmp.ge.s32.totalorder %s10, 4
    %s20 = sphi 0, %s22
    %s23 = sphi 0, %s20
    %s24 = sphi 0, %s23
    %s40 = sphi 0, %s24
    %s44 = sphi 0, %s44
    %s46 = sphi 0, %s44
    %s47 = sphi 0, %s46
    %s61 = sphi 0, %s47
    %s65 = sphi 0, %s65
    %s67 = sphi 0, %s65
    %s68 = sphi 0, %s67
    %s82 = sphi 0, %s68
    %s86 = sphi 0, %s86
    %s88 = sphi 0, %s86
    %s89 = sphi 0, %s88
    %s103 = sphi 0, %s89
    %s109 = sphi 0, %s111
    %s112 = sphi 0, %s109
    %s113 = sphi 0, %s112
    %s129 = sphi 0, %s113
  $region4: #{_lambda_.24} parent=0 // loop_header_branch
    %13 = sbr.rel (%p11) target = $region8
  $region5: #{_lambda_.24} parent=0 // loop_body
    %s15 = ssub.s32 %s10, 1
    %s16 = ssub.s32 %s10, 2
    %s17 = sadd.s32 %s10, 1
    %s18 = ssub.s32 %s10, %s17
    %p19 = scmp.eq.s32.totalorder %s18, 0
    %s21 = sadd.s32 %s20, 1
    %s22 = scalar_select %p19, %s20, %s21
    %p25 = pneg %p19
    %p26 = scmp.eq.s32.totalorder %s10, 1
    %p27 = por %p25, %p26
    %p28 = scmp.ne.s32.totalorder %s20, %s23
    %p29 = scmp.eq.s32.totalorder %s10, 0
    %p30 = por %p28, %p29
    %p31 = scmp.ne.s32.totalorder %s20, %s23
    %p32 = scmp.eq.s32.totalorder %s15, 1
    %p33 = por %p31, %p32
    %p34 = scmp.ne.s32.totalorder %s23, %s24
    %p35 = scmp.eq.s32.totalorder %s15, 0
    %p36 = por %p34, %p35
    %p37 = scmp.ne.s32.totalorder %s23, %s24
    %p38 = scmp.eq.s32.totalorder %s16, 1
    %p39 = por %p37, %p38
    %p41 = scmp.ne.s32.totalorder %s24, %s40
    %p42 = scmp.eq.s32.totalorder %s16, 0
    %p43 = por %p41, %p42
    %s45 = sadd.s32 %s44, 1
    %p48 = scmp.eq.s32.totalorder %s10, 1
    %p49 = scmp.ne.s32.totalorder %s44, %s46
    %p50 = scmp.eq.s32.totalorder %s10, 0
    %p51 = por %p49, %p50
    %p52 = scmp.ne.s32.totalorder %s44, %s46
    %p53 = scmp.eq.s32.totalorder %s15, 1
    %p54 = por %p52, %p53
    %p55 = scmp.ne.s32.totalorder %s46, %s47
    %p56 = scmp.eq.s32.totalorder %s15, 0
    %p57 = por %p55, %p56
    %p58 = scmp.ne.s32.totalorder %s46, %s47
    %p59 = scmp.eq.s32.totalorder %s16, 1
    %p60 = por %p58, %p59
    %p62 = scmp.ne.s32.totalorder %s47, %s61
    %p63 = scmp.eq.s32.totalorder %s16, 0
    %p64 = por %p62, %p63
    %s66 = sadd.s32 %s65, 1
    %p69 = scmp.eq.s32.totalorder %s10, 1
    %p70 = scmp.ne.s32.totalorder %s65, %s67
    %p71 = scmp.eq.s32.totalorder %s10, 0
    %p72 = por %p70, %p71
    %p73 = scmp.ne.s32.totalorder %s65, %s67
    %p74 = scmp.eq.s32.totalorder %s15, 1
    %p75 = por %p73, %p74
    %p76 = scmp.ne.s32.totalorder %s67, %s68
    %p77 = scmp.eq.s32.totalorder %s15, 0
    %p78 = por %p76, %p77
    %p79 = scmp.ne.s32.totalorder %s67, %s68
    %p80 = scmp.eq.s32.totalorder %s16, 1
    %p81 = por %p79, %p80
    %p83 = scmp.ne.s32.totalorder %s68, %s82
    %p84 = scmp.eq.s32.totalorder %s16, 0
    %p85 = por %p83, %p84
    %s87 = sadd.s32 %s86, 1
    %p90 = scmp.eq.s32.totalorder %s10, 1
    %p91 = scmp.ne.s32.totalorder %s86, %s88
    %p92 = scmp.eq.s32.totalorder %s10, 0
    %p93 = por %p91, %p92
    %p94 = scmp.ne.s32.totalorder %s86, %s88
    %p95 = scmp.eq.s32.totalorder %s15, 1
    %p96 = por %p94, %p95
    %p97 = scmp.ne.s32.totalorder %s88, %s89
    %p98 = scmp.eq.s32.totalorder %s15, 0
    %p99 = por %p97, %p98
    %p100 = scmp.ne.s32.totalorder %s88, %s89
    %p101 = scmp.eq.s32.totalorder %s16, 1
    %p102 = por %p100, %p101
    %p104 = scmp.ne.s32.totalorder %s89, %s103
    %p105 = scmp.eq.s32.totalorder %s16, 0
    %p106 = por %p104, %p105
    %s107 = ssub.s32 %s10, %s17
    %p108 = scmp.eq.s32.totalorder %s107, 0
    %s110 = sadd.s32 %s109, 1
    %s111 = scalar_select %p108, %s109, %s110
    %p114 = pneg %p108
    %p115 = scmp.eq.s32.totalorder %s10, 1
    %p116 = por %p114, %p115
    %p117 = scmp.ne.s32.totalorder %s109, %s112
    %p118 = scmp.eq.s32.totalorder %s10, 0
    %p119 = por %p117, %p118
    %p120 = scmp.ne.s32.totalorder %s109, %s112
    %p121 = scmp.eq.s32.totalorder %s15, 1
    %p122 = por %p120, %p121
    %p123 = scmp.ne.s32.totalorder %s112, %s113
    %p124 = scmp.eq.s32.totalorder %s15, 0
    %p125 = por %p123, %p124
    %p126 = scmp.ne.s32.totalorder %s112, %s113
    %p127 = scmp.eq.s32.totalorder %s16, 1
    %p128 = por %p126, %p127
    %p130 = scmp.ne.s32.totalorder %s113, %s129
    %p131 = scmp.eq.s32.totalorder %s16, 0
    %p132 = por %p130, %p131
    %p133 = scmp.le.s32.totalorder 1, %s10
    %p134 = scmp.lt.s32.totalorder %s10, 3
    %p135 = pnand %p133, %p134
    %p136 = pneg %p135
    // Predicated region
    $region9: #{_lambda_.24} parent=5 // pred_check
      _
    $region10: #{_lambda_.24} parent=5 // pred_check_branch
      %138 = sbr.rel (%p135) target = $region12
    $region11: #{_lambda_.24} parent=5 // pred_region
      %s139 = ssub.s32 %s10, 1
      // Predicated region
      $region13: #{_lambda_.24} parent=11 // pred_check
        %p140 = pneg %p57
      $region14: #{_lambda_.24} parent=11 // pred_check_branch
        %142 = sbr.rel (%p140) target = $region16
      $region15: #{_lambda_.24} parent=11 // pred_region
        _
      $region16: #{_lambda_.24} parent=11 // pred_fallthru
        _
      // Predicated region
      $region17: #{_lambda_.24} parent=11 // pred_check
        %p143 = pneg %p78
      $region18: #{_lambda_.24} parent=11 // pred_check_branch
        %145 = sbr.rel (%p143) target = $region20
      $region19: #{_lambda_.24} parent=11 // pred_region
        _
      $region20: #{_lambda_.24} parent=11 // pred_fallthru
        _
      // Predicated region
      $region21: #{_lambda_.24} parent=11 // pred_check
        %p146 = pneg %p99
      $region22: #{_lambda_.24} parent=11 // pred_check_branch
        %148 = sbr.rel (%p146) target = $region24
      $region23: #{_lambda_.24} parent=11 // pred_region
        _
      $region24: #{_lambda_.24} parent=11 // pred_fallthru
        _
    $region12: #{_lambda_.24} parent=5 // pred_fallthru
      _
    %p149 = scmp.lt.s32.totalorder %s10, 2
    // Predicated region
    $region25: #{_lambda_.24} parent=5 // pred_check
      %p150 = pneg %p149
    $region26: #{_lambda_.24} parent=5 // pred_check_branch
      %152 = sbr.rel (%p150) target = $region28
    $region27: #{_lambda_.24} parent=5 // pred_region
      // Predicated region
      $region29: #{_lambda_.24} parent=27 // pred_check
        %p153 = pneg %p30
      $region30: #{_lambda_.24} parent=27 // pred_check_branch
        %155 = sbr.rel (%p153) target = $region32
      $region31: #{_lambda_.24} parent=27 // pred_region
        %s156 = smul.u32 64, %s10
        %p157 = scmp.lt.s32.totalorder %s156, 127
        %s158 = scalar_select %p157, %s156, 127
        %s159 = smul.addr %s158, 2
        %s160 = smul.addr %s159, 4
        %s161 = scalar_lea.vmem %s0, %s160
        %s162 = smul.u32 64, %s10
      $region32: #{_lambda_.24} parent=27 // pred_fallthru
        _
    $region28: #{_lambda_.24} parent=5 // pred_fallthru
      _
    %p163 = scmp.le.s32.totalorder 1, %s10
    %p164 = scmp.lt.s32.totalorder %s10, 3
    %p165 = pnand %p163, %p164
    %p166 = pneg %p165
    // Predicated region
    $region33: #{_lambda_.24} parent=5 // pred_check
      _
    $region34: #{_lambda_.24} parent=5 // pred_check_branch
      %168 = sbr.rel (%p165) target = $region36
    $region35: #{_lambda_.24} parent=5 // pred_region
      %s169 = ssub.s32 %s10, 1
      %s170 = smul.u32 64, %s15
      %p171 = scmp.lt.s32.totalorder %s170, 127
      %s172 = scalar_select %p171, %s170, 127
      %s173 = smul.addr %s172, 2
      %s174 = smul.addr %s173, 4
      %s175 = scalar_lea.vmem %s0, %s174
      %p176 = pneg %p36
      %p177 = pneg %p33
      %p178 = pneg %p57
      %p179 = pneg %p54
      %p180 = pneg %p78
      %p181 = pneg %p75
      %p182 = pneg %p99
      %p183 = pneg %p96
      %p184 = pneg %p125
      %p185 = pneg %p122
      %s186 = smul.u32 64, %s15
      %p187 = scmp.lt.s32.totalorder %s186, 127
      %s188 = scalar_select %p187, %s186, 127
      %s189 = smul.addr %s188, 8
      %s190 = scalar_lea.vmem %s4, %s189
      %s191 = smul.u32 64, %s15
      %p192 = scmp.lt.s32.totalorder %s191, 127
      %s193 = scalar_select %p192, %s191, 127
      %s194 = smul.addr %s193, 2
      %s195 = smul.addr %s194, 4
      %s196 = scalar_lea.vmem %s0, %s195
      %s197 = smul.u32 64, %s15
      %s198 = smul.u32 64, %s15
      %p199 = scmp.lt.s32.totalorder %s198, 127
      %s200 = scalar_select %p199, %s198, 127
      %s201 = smul.addr %s200, 8
      %s202 = scalar_lea.vmem %s4, %s201
      %s203 = smul.u32 64, %s15
      %v205 = vld [vmem:[%s196] sm:$0xff]
      %v206 = vld [vmem:[%s196 + $0x8] sm:$0xff]
      %v207 = vld [vmem:[%s196 + $0x10] sm:$0xff]
      %v208 = vld [vmem:[%s196 + $0x18] sm:$0xff]
      %v209 = vld [vmem:[%s196 + $0x20] sm:$0xff]
      %v210 = vld [vmem:[%s196 + $0x28] sm:$0xff]
      %v211 = vld [vmem:[%s196 + $0x30] sm:$0xff]
      %v212 = vld [vmem:[%s196 + $0x38] sm:$0xff]
      %v213 = vld [vmem:[%s196 + $0x40] sm:$0xff]
      %v214 = vld [vmem:[%s196 + $0x48] sm:$0xff]
      %v215 = vld [vmem:[%s196 + $0x50] sm:$0xff]
      %v216 = vld [vmem:[%s196 + $0x58] sm:$0xff]
      %v217 = vld [vmem:[%s196 + $0x60] sm:$0xff]
      %v218 = vld [vmem:[%s196 + $0x68] sm:$0xff]
      %v219 = vld [vmem:[%s196 + $0x70] sm:$0xff]
      %v220 = vld [vmem:[%s196 + $0x78] sm:$0xff]
      %v221 = vld [vmem:[%s196 + $0x80] sm:$0xff]
      %v222 = vld [vmem:[%s196 + $0x88] sm:$0xff]
      %v223 = vld [vmem:[%s196 + $0x90] sm:$0xff]
      %v224 = vld [vmem:[%s196 + $0x98] sm:$0xff]
      %v225 = vld [vmem:[%s196 + $0xa0] sm:$0xff]
      %v226 = vld [vmem:[%s196 + $0xa8] sm:$0xff]
      %v227 = vld [vmem:[%s196 + $0xb0] sm:$0xff]
      %v228 = vld [vmem:[%s196 + $0xb8] sm:$0xff]
      %v229 = vld [vmem:[%s196 + $0xc0] sm:$0xff]
      %v230 = vld [vmem:[%s196 + $0xc8] sm:$0xff]
      %v231 = vld [vmem:[%s196 + $0xd0] sm:$0xff]
      %v232 = vld [vmem:[%s196 + $0xd8] sm:$0xff]
      %v233 = vld [vmem:[%s196 + $0xe0] sm:$0xff]
      %v234 = vld [vmem:[%s196 + $0xe8] sm:$0xff]
      %v235 = vld [vmem:[%s196 + $0xf0] sm:$0xff]
      %v236 = vld [vmem:[%s196 + $0xf8] sm:$0xff]
      %v237 = vld [vmem:[%s196 + $0x100] sm:$0xff]
      %v238 = vld [vmem:[%s196 + $0x108] sm:$0xff]
      %v239 = vld [vmem:[%s196 + $0x110] sm:$0xff]
      %v240 = vld [vmem:[%s196 + $0x118] sm:$0xff]
      %v241 = vld [vmem:[%s196 + $0x120] sm:$0xff]
      %v242 = vld [vmem:[%s196 + $0x128] sm:$0xff]
      %v243 = vld [vmem:[%s196 + $0x130] sm:$0xff]
      %v244 = vld [vmem:[%s196 + $0x138] sm:$0xff]
      %v245 = vld [vmem:[%s196 + $0x140] sm:$0xff]
      %v246 = vld [vmem:[%s196 + $0x148] sm:$0xff]
      %v247 = vld [vmem:[%s196 + $0x150] sm:$0xff]
      %v248 = vld [vmem:[%s196 + $0x158] sm:$0xff]
      %v249 = vld [vmem:[%s196 + $0x160] sm:$0xff]
      %v250 = vld [vmem:[%s196 + $0x168] sm:$0xff]
      %v251 = vld [vmem:[%s196 + $0x170] sm:$0xff]
      %v252 = vld [vmem:[%s196 + $0x178] sm:$0xff]
      %v253 = vld [vmem:[%s196 + $0x180] sm:$0xff]
      %v254 = vld [vmem:[%s196 + $0x188] sm:$0xff]
      %v255 = vld [vmem:[%s196 + $0x190] sm:$0xff]
      %v256 = vld [vmem:[%s196 + $0x198] sm:$0xff]
      %v257 = vld [vmem:[%s196 + $0x1a0] sm:$0xff]
      %v258 = vld [vmem:[%s196 + $0x1a8] sm:$0xff]
      %v259 = vld [vmem:[%s196 + $0x1b0] sm:$0xff]
      %v260 = vld [vmem:[%s196 + $0x1b8] sm:$0xff]
      %v261 = vld [vmem:[%s196 + $0x1c0] sm:$0xff]
      %v262 = vld [vmem:[%s196 + $0x1c8] sm:$0xff]
      %v263 = vld [vmem:[%s196 + $0x1d0] sm:$0xff]
      %v264 = vld [vmem:[%s196 + $0x1d8] sm:$0xff]
      %v265 = vld [vmem:[%s196 + $0x1e0] sm:$0xff]
      %v266 = vld [vmem:[%s196 + $0x1e8] sm:$0xff]
      %v267 = vld [vmem:[%s196 + $0x1f0] sm:$0xff]
      %v268 = vld [vmem:[%s196 + $0x1f8] sm:$0xff]
      %v269 = vld [vmem:[%s1] sm:$0xf]
      %v270 = vld [vmem:[%s1 + $0x4] sm:$0xf]
      %v271 = vld [vmem:[%s1 + $0x8] sm:$0xf]
      %v272 = vld [vmem:[%s1 + $0xc] sm:$0xf]
      %v273 = vld [vmem:[%s1 + $0x10] sm:$0xf]
      %v274 = vld [vmem:[%s1 + $0x14] sm:$0xf]
      %v275 = vld [vmem:[%s1 + $0x18] sm:$0xf]
      %v276 = vld [vmem:[%s1 + $0x1c] sm:$0xf]
      %v277 = vld [vmem:[%s1 + $0x20] sm:$0xf]
      %v278 = vld [vmem:[%s1 + $0x24] sm:$0xf]
      %v279 = vld [vmem:[%s1 + $0x28] sm:$0xf]
      %v280 = vld [vmem:[%s1 + $0x2c] sm:$0xf]
      %v281 = vld [vmem:[%s1 + $0x30] sm:$0xf]
      %v282 = vld [vmem:[%s1 + $0x34] sm:$0xf]
      %v283 = vld [vmem:[%s1 + $0x38] sm:$0xf]
      %v284 = vld [vmem:[%s1 + $0x3c] sm:$0xf]
      %v285 = vld [vmem:[%s1 + $0x40] sm:$0xf]
      %v286 = vld [vmem:[%s1 + $0x44] sm:$0xf]
      %v287 = vld [vmem:[%s1 + $0x48] sm:$0x3]
      %v352 = vunpack.c.l.b16 %v205
      %v353 = vunpack.c.h.b16 %v205
      %v354 = vunpack.c.l.b16 %v206
      %v355 = vunpack.c.h.b16 %v206
      %v356 = vunpack.c.l.b16 %v207
      %v357 = vunpack.c.h.b16 %v207
      %v358 = vunpack.c.l.b16 %v208
      %v359 = vunpack.c.h.b16 %v208
      %v360 = vunpack.c.l.b16 %v209
      %v361 = vunpack.c.h.b16 %v209
      %v362 = vunpack.c.l.b16 %v210
      %v363 = vunpack.c.h.b16 %v210
      %v364 = vunpack.c.l.b16 %v211
      %v365 = vunpack.c.h.b16 %v211
      %v366 = vunpack.c.l.b16 %v212
      %v367 = vunpack.c.h.b16 %v212
      %v368 = vunpack.c.l.b16 %v213
      %v369 = vunpack.c.h.b16 %v213
      %v370 = vunpack.c.l.b16 %v214
      %v371 = vunpack.c.h.b16 %v214
      %v372 = vunpack.c.l.b16 %v215
      %v373 = vunpack.c.h.b16 %v215
      %v374 = vunpack.c.l.b16 %v216
      %v375 = vunpack.c.h.b16 %v216
      %v376 = vunpack.c.l.b16 %v217
      %v377 = vunpack.c.h.b16 %v217
      %v378 = vunpack.c.l.b16 %v218
      %v379 = vunpack.c.h.b16 %v218
      %v380 = vunpack.c.l.b16 %v219
      %v381 = vunpack.c.h.b16 %v219
      %v382 = vunpack.c.l.b16 %v220
      %v383 = vunpack.c.h.b16 %v220
      %v384 = vunpack.c.l.b16 %v221
      %v385 = vunpack.c.h.b16 %v221
      %v386 = vunpack.c.l.b16 %v222
      %v387 = vunpack.c.h.b16 %v222
      %v388 = vunpack.c.l.b16 %v223
      %v389 = vunpack.c.h.b16 %v223
      %v390 = vunpack.c.l.b16 %v224
      %v391 = vunpack.c.h.b16 %v224
      %v392 = vunpack.c.l.b16 %v225
      %v393 = vunpack.c.h.b16 %v225
      %v394 = vunpack.c.l.b16 %v226
      %v395 = vunpack.c.h.b16 %v226
      %v396 = vunpack.c.l.b16 %v227
      %v397 = vunpack.c.h.b16 %v227
      %v398 = vunpack.c.l.b16 %v228
      %v399 = vunpack.c.h.b16 %v228
      %v400 = vunpack.c.l.b16 %v229
      %v401 = vunpack.c.h.b16 %v229
      %v402 = vunpack.c.l.b16 %v230
      %v403 = vunpack.c.h.b16 %v230
      %v404 = vunpack.c.l.b16 %v231
      %v405 = vunpack.c.h.b16 %v231
      %v406 = vunpack.c.l.b16 %v232
      %v407 = vunpack.c.h.b16 %v232
      %v408 = vunpack.c.l.b16 %v233
      %v409 = vunpack.c.h.b16 %v233
      %v410 = vunpack.c.l.b16 %v234
      %v411 = vunpack.c.h.b16 %v234
      %v412 = vunpack.c.l.b16 %v235
      %v413 = vunpack.c.h.b16 %v235
      %v414 = vunpack.c.l.b16 %v236
      %v415 = vunpack.c.h.b16 %v236
      %v416 = vunpack.c.l.b16 %v237
      %v417 = vunpack.c.h.b16 %v237
      %v418 = vunpack.c.l.b16 %v238
      %v419 = vunpack.c.h.b16 %v238
      %v420 = vunpack.c.l.b16 %v239
      %v421 = vunpack.c.h.b16 %v239
      %v422 = vunpack.c.l.b16 %v240
      %v423 = vunpack.c.h.b16 %v240
      %v424 = vunpack.c.l.b16 %v241
      %v425 = vunpack.c.h.b16 %v241
      %v426 = vunpack.c.l.b16 %v242
      %v427 = vunpack.c.h.b16 %v242
      %v428 = vunpack.c.l.b16 %v243
      %v429 = vunpack.c.h.b16 %v243
      %v430 = vunpack.c.l.b16 %v244
      %v431 = vunpack.c.h.b16 %v244
      %v432 = vunpack.c.l.b16 %v245
      %v433 = vunpack.c.h.b16 %v245
      %v434 = vunpack.c.l.b16 %v246
      %v435 = vunpack.c.h.b16 %v246
      %v436 = vunpack.c.l.b16 %v247
      %v437 = vunpack.c.h.b16 %v247
      %v438 = vunpack.c.l.b16 %v248
      %v439 = vunpack.c.h.b16 %v248
      %v440 = vunpack.c.l.b16 %v249
      %v441 = vunpack.c.h.b16 %v249
      %v442 = vunpack.c.l.b16 %v250
      %v443 = vunpack.c.h.b16 %v250
      %v444 = vunpack.c.l.b16 %v251
      %v445 = vunpack.c.h.b16 %v251
      %v446 = vunpack.c.l.b16 %v252
      %v447 = vunpack.c.h.b16 %v252
      %v448 = vunpack.c.l.b16 %v253
      %v449 = vunpack.c.h.b16 %v253
      %v450 = vunpack.c.l.b16 %v254
      %v451 = vunpack.c.h.b16 %v254
      %v452 = vunpack.c.l.b16 %v255
      %v453 = vunpack.c.h.b16 %v255
      %v454 = vunpack.c.l.b16 %v256
      %v455 = vunpack.c.h.b16 %v256
      %v456 = vunpack.c.l.b16 %v257
      %v457 = vunpack.c.h.b16 %v257
      %v458 = vunpack.c.l.b16 %v258
      %v459 = vunpack.c.h.b16 %v258
      %v460 = vunpack.c.l.b16 %v259
      %v461 = vunpack.c.h.b16 %v259
      %v462 = vunpack.c.l.b16 %v260
      %v463 = vunpack.c.h.b16 %v260
      %v464 = vunpack.c.l.b16 %v261
      %v465 = vunpack.c.h.b16 %v261
      %v466 = vunpack.c.l.b16 %v262
      %v467 = vunpack.c.h.b16 %v262
      %v468 = vunpack.c.l.b16 %v263
      %v469 = vunpack.c.h.b16 %v263
      %v470 = vunpack.c.l.b16 %v264
      %v471 = vunpack.c.h.b16 %v264
      %v472 = vunpack.c.l.b16 %v265
      %v473 = vunpack.c.h.b16 %v265
      %v474 = vunpack.c.l.b16 %v266
      %v475 = vunpack.c.h.b16 %v266
      %v476 = vunpack.c.l.b16 %v267
      %v477 = vunpack.c.h.b16 %v267
      %v478 = vunpack.c.l.b16 %v268
      %v479 = vunpack.c.h.b16 %v268
      %v480 = vpack.c.b16 %v354, %v352
      %v481 = vpack.c.b16 %v355, %v353
      %v482 = vpack.c.b16 %v358, %v356
      %v483 = vpack.c.b16 %v359, %v357
      %v484 = vpack.c.b16 %v362, %v360
      %v485 = vpack.c.b16 %v363, %v361
      %v486 = vpack.c.b16 %v366, %v364
      %v487 = vpack.c.b16 %v367, %v365
      %v488 = vpack.c.b16 %v370, %v368
      %v489 = vpack.c.b16 %v371, %v369
      %v490 = vpack.c.b16 %v374, %v372
      %v491 = vpack.c.b16 %v375, %v373
      %v492 = vpack.c.b16 %v378, %v376
      %v493 = vpack.c.b16 %v379, %v377
      %v494 = vpack.c.b16 %v382, %v380
      %v495 = vpack.c.b16 %v383, %v381
      %v496 = vpack.c.b16 %v386, %v384
      %v497 = vpack.c.b16 %v387, %v385
      %v498 = vpack.c.b16 %v390, %v388
      %v499 = vpack.c.b16 %v391, %v389
      %v500 = vpack.c.b16 %v394, %v392
      %v501 = vpack.c.b16 %v395, %v393
      %v502 = vpack.c.b16 %v398, %v396
      %v503 = vpack.c.b16 %v399, %v397
      %v504 = vpack.c.b16 %v402, %v400
      %v505 = vpack.c.b16 %v403, %v401
      %v506 = vpack.c.b16 %v406, %v404
      %v507 = vpack.c.b16 %v407, %v405
      %v508 = vpack.c.b16 %v410, %v408
      %v509 = vpack.c.b16 %v411, %v409
      %v510 = vpack.c.b16 %v414, %v412
      %v511 = vpack.c.b16 %v415, %v413
      %v512 = vpack.c.b16 %v418, %v416
      %v513 = vpack.c.b16 %v419, %v417
      %v514 = vpack.c.b16 %v422, %v420
      %v515 = vpack.c.b16 %v423, %v421
      %v516 = vpack.c.b16 %v426, %v424
      %v517 = vpack.c.b16 %v427, %v425
      %v518 = vpack.c.b16 %v430, %v428
      %v519 = vpack.c.b16 %v431, %v429
      %v520 = vpack.c.b16 %v434, %v432
      %v521 = vpack.c.b16 %v435, %v433
      %v522 = vpack.c.b16 %v438, %v436
      %v523 = vpack.c.b16 %v439, %v437
      %v524 = vpack.c.b16 %v442, %v440
      %v525 = vpack.c.b16 %v443, %v441
      %v526 = vpack.c.b16 %v446, %v444
      %v527 = vpack.c.b16 %v447, %v445
      %v528 = vpack.c.b16 %v450, %v448
      %v529 = vpack.c.b16 %v451, %v449
      %v530 = vpack.c.b16 %v454, %v452
      %v531 = vpack.c.b16 %v455, %v453
      %v532 = vpack.c.b16 %v458, %v456
      %v533 = vpack.c.b16 %v459, %v457
      %v534 = vpack.c.b16 %v462, %v460
      %v535 = vpack.c.b16 %v463, %v461
      %v536 = vpack.c.b16 %v466, %v464
      %v537 = vpack.c.b16 %v467, %v465
      %v538 = vpack.c.b16 %v470, %v468
      %v539 = vpack.c.b16 %v471, %v469
      %v540 = vpack.c.b16 %v474, %v472
      %v541 = vpack.c.b16 %v475, %v473
      %v542 = vpack.c.b16 %v478, %v476
      %v543 = vpack.c.b16 %v479, %v477
      %v595 = vunpack.c.l.b16 %v269
      %v596 = vunpack.c.l.b16 %v270
      %v597 = vunpack.c.l.b16 %v271
      %v598 = vunpack.c.l.b16 %v272
      %v599 = vunpack.c.l.b16 %v273
      %v600 = vunpack.c.l.b16 %v274
      %v601 = vunpack.c.l.b16 %v275
      %v602 = vunpack.c.l.b16 %v276
      %v603 = vunpack.c.l.b16 %v277
      %v604 = vunpack.c.l.b16 %v278
      %v605 = vunpack.c.l.b16 %v279
      %v606 = vunpack.c.l.b16 %v280
      %v607 = vunpack.c.l.b16 %v281
      %v608 = vunpack.c.l.b16 %v282
      %v609 = vunpack.c.l.b16 %v283
      %v610 = vunpack.c.l.b16 %v284
      %v611 = vunpack.c.l.b16 %v285
      %v612 = vunpack.c.l.b16 %v286
      %v613 = vunpack.c.l.b16 %v287
      %v614 = vpack.c.b16 %v596, %v595
      %v615 = vpack.c.b16 %v598, %v597
      %v616 = vpack.c.b16 %v600, %v599
      %v617 = vpack.c.b16 %v602, %v601
      %v618 = vpack.c.b16 %v604, %v603
      %v619 = vpack.c.b16 %v606, %v605
      %v620 = vpack.c.b16 %v608, %v607
      %v621 = vpack.c.b16 %v610, %v609
      %v622 = vpack.c.b16 %v612, %v611
      %v623 = vpack.c.b16 %v613, %v613
      %vm633 = vcmask 154624
      %v635 = vsel %vm633, %v481, 0
      %v638 = vsel %vm633, %v483, 0
      %v641 = vsel %vm633, %v485, 0
      %v644 = vsel %vm633, %v487, 0
      %v647 = vsel %vm633, %v489, 0
      %v650 = vsel %vm633, %v491, 0
      %v653 = vsel %vm633, %v493, 0
      %v656 = vsel %vm633, %v495, 0
      %v659 = vsel %vm633, %v497, 0
      %v662 = vsel %vm633, %v499, 0
      %v665 = vsel %vm633, %v501, 0
      %v668 = vsel %vm633, %v503, 0
      %v671 = vsel %vm633, %v505, 0
      %v674 = vsel %vm633, %v507, 0
      %v677 = vsel %vm633, %v509, 0
      %v680 = vsel %vm633, %v511, 0
      %v683 = vsel %vm633, %v513, 0
      %v686 = vsel %vm633, %v515, 0
      %v689 = vsel %vm633, %v517, 0
      %v692 = vsel %vm633, %v519, 0
      %v695 = vsel %vm633, %v521, 0
      %v698 = vsel %vm633, %v523, 0
      %v701 = vsel %vm633, %v525, 0
      %v704 = vsel %vm633, %v527, 0
      %v707 = vsel %vm633, %v529, 0
      %v710 = vsel %vm633, %v531, 0
      %v713 = vsel %vm633, %v533, 0
      %v716 = vsel %vm633, %v535, 0
      %v719 = vsel %vm633, %v537, 0
      %v722 = vsel %vm633, %v539, 0
      %v725 = vsel %vm633, %v541, 0
      %v728 = vsel %vm633, %v543, 0
      %vm730 = vcmask 1040384
      %vm731 = vcmask 1041408
      %v732 = vsel %vm730, 4294967295, 65535
      %v733 = vsel %vm731, %v732, 0
      %v735 = vand.u32 %v623, %v733
      %737 = vmatprep.subr.bf16.mxu0 0
      %738 = vmatpush1.bf16.msra.mxu0 %v614
      %739 = vmatprep.subr.bf16.mxu0 0
      %740 = vmatpush1.bf16.msra.mxu0 %v615
      %741 = vmatprep.subr.bf16.mxu0 0
      %742 = vmatpush1.bf16.msra.mxu0 %v616
      %743 = vmatprep.subr.bf16.mxu0 0
      %744 = vmatpush1.bf16.msra.mxu0 %v617
      %745 = vmatprep.subr.bf16.mxu0 0
      %746 = vmatpush1.bf16.msra.mxu0 %v618
      %747 = vmatprep.subr.bf16.mxu0 0
      %748 = vmatpush1.bf16.msra.mxu0 %v619
      %749 = vmatprep.subr.bf16.mxu0 0
      %750 = vmatpush1.bf16.msra.mxu0 %v620
      %751 = vmatprep.subr.bf16.mxu0 0
      %752 = vmatpush1.bf16.msra.mxu0 %v621
      %753 = vmatprep.subr.bf16.mxu0 0
      %754 = vmatpush1.bf16.msra.mxu0 %v622
      %755 = vmatprep.subr.bf16.mxu0 0
      %756 = vmatpush1.bf16.msra.mxu0 %v735
      %757 = vmatprep.subr.bf16.mxu0 0
      %758 = vmatpush1.bf16.msra.mxu0 0
      %759 = vmatprep.subr.bf16.mxu0 0
      %760 = vmatpush1.bf16.msra.mxu0 0
      %761 = vmatprep.subr.bf16.mxu0 0
      %762 = vmatpush1.bf16.msra.mxu0 0
      %763 = vmatprep.subr.bf16.mxu0 0
      %764 = vmatpush1.bf16.msra.mxu0 0
      %765 = vmatprep.subr.bf16.mxu0 0
      %766 = vmatpush1.bf16.msra.mxu0 0
      %767 = vmatprep.subr.bf16.mxu0 0
      %768 = vmatpush1.bf16.msra.mxu0 0
      %769 = vmatprep.mubr.bf16.mxu0 %v635
      %770 = vmatmul.mubr.bf16.gmra.mrb[0].mxu0 %v480
      %v771 = vpop.f32.mrb[0].mxu0
      %v772 = vadd.f32 0.0, %v771
      %v773 = vpop.f32.mrb[0].mxu0
      %v774 = vpop.f32.mrb[0].mxu0
      %v775 = vadd.f32 0.0, %v774
      %v776 = vpop.f32.mrb[0].mxu0
      %777 = vmatprep.mubr.bf16.mxu0 %v638
      %778 = vmatmul.mubr.bf16.gmra.mrb[0].mxu0 %v482
      %v779 = vpop.f32.mrb[0].mxu0
      %v780 = vadd.f32 0.0, %v779
      %v781 = vpop.f32.mrb[0].mxu0
      %v782 = vpop.f32.mrb[0].mxu0
      %v783 = vadd.f32 0.0, %v782
      %v784 = vpop.f32.mrb[0].mxu0
      %785 = vmatprep.mubr.bf16.mxu0 %v641
      %786 = vmatmul.mubr.bf16.gmra.mrb[0].mxu0 %v484
      %v787 = vpop.f32.mrb[0].mxu0
      %v788 = vadd.f32 0.0, %v787
      %v789 = vpop.f32.mrb[0].mxu0
      %v790 = vpop.f32.mrb[0].mxu0
      %v791 = vadd.f32 0.0, %v790
      %v792 = vpop.f32.mrb[0].mxu0
      %793 = vmatprep.mubr.bf16.mxu0 %v644
      %794 = vmatmul.mubr.bf16.gmra.mrb[0].mxu0 %v486
      %v795 = vpop.f32.mrb[0].mxu0
      %v796 = vadd.f32 0.0, %v795
      %v797 = vpop.f32.mrb[0].mxu0
      %v798 = vpop.f32.mrb[0].mxu0
      %v799 = vadd.f32 0.0, %v798
      %v800 = vpop.f32.mrb[0].mxu0
      %801 = vmatprep.mubr.bf16.mxu0 %v647
      %802 = vmatmul.mubr.bf16.gmra.mrb[0].mxu0 %v488
      %v803 = vpop.f32.mrb[0].mxu0
      %v804 = vadd.f32 0.0, %v803
      %v805 = vpop.f32.mrb[0].mxu0
      %v806 = vpop.f32.mrb[0].mxu0
      %v807 = vadd.f32 0.0, %v806
      %v808 = vpop.f32.mrb[0].mxu0
      %809 = vmatprep.mubr.bf16.mxu0 %v650
      %810 = vmatmul.mubr.bf16.gmra.mrb[0].mxu0 %v490
      %v811 = vpop.f32.mrb[0].mxu0
      %v812 = vadd.f32 0.0, %v811
      %v813 = vpop.f32.mrb[0].mxu0
      %v814 = vpop.f32.mrb[0].mxu0
      %v815 = vadd.f32 0.0, %v814
      %v816 = vpop.f32.mrb[0].mxu0
      %817 = vmatprep.mubr.bf16.mxu0 %v653
      %818 = vmatmul.mubr.bf16.gmra.mrb[0].mxu0 %v492
      %v819 = vpop.f32.mrb[0].mxu0
      %v820 = vadd.f32 0.0, %v819
      %v821 = vpop.f32.mrb[0].mxu0
      %v822 = vpop.f32.mrb[0].mxu0
      %v823 = vadd.f32 0.0, %v822
      %v824 = vpop.f32.mrb[0].mxu0
      %825 = vmatprep.mubr.bf16.mxu0 %v656
      %826 = vmatmul.mubr.bf16.gmra.mrb[0].mxu0 %v494
      %v827 = vpop.f32.mrb[0].mxu0
      %v828 = vadd.f32 0.0, %v827
      %v829 = vpop.f32.mrb[0].mxu0
      %v830 = vpop.f32.mrb[0].mxu0
      %v831 = vadd.f32 0.0, %v830
      %v832 = vpop.f32.mrb[0].mxu0
      %833 = vmatprep.mubr.bf16.mxu0 %v659
      %834 = vmatmul.mubr.bf16.gmra.mrb[0].mxu0 %v496
      %v835 = vpop.f32.mrb[0].mxu0
      %v836 = vadd.f32 0.0, %v835
      %v837 = vpop.f32.mrb[0].mxu0
      %v838 = vpop.f32.mrb[0].mxu0
      %v839 = vadd.f32 0.0, %v838
      %v840 = vpop.f32.mrb[0].mxu0
      %841 = vmatprep.mubr.bf16.mxu0 %v662
      %842 = vmatmul.mubr.bf16.gmra.mrb[0].mxu0 %v498
      %v843 = vpop.f32.mrb[0].mxu0
      %v844 = vadd.f32 0.0, %v843
      %v845 = vpop.f32.mrb[0].mxu0
      %v846 = vpop.f32.mrb[0].mxu0
      %v847 = vadd.f32 0.0, %v846
      %v848 = vpop.f32.mrb[0].mxu0
      %849 = vmatprep.mubr.bf16.mxu0 %v665
      %850 = vmatmul.mubr.bf16.gmra.mrb[0].mxu0 %v500
      %v851 = vpop.f32.mrb[0].mxu0
      %v852 = vadd.f32 0.0, %v851
      %v853 = vpop.f32.mrb[0].mxu0
      %v854 = vpop.f32.mrb[0].mxu0
      %v855 = vadd.f32 0.0, %v854
      %v856 = vpop.f32.mrb[0].mxu0
      %857 = vmatprep.mubr.bf16.mxu0 %v668
      %858 = vmatmul.mubr.bf16.gmra.mrb[0].mxu0 %v502
      %v859 = vpop.f32.mrb[0].mxu0
      %v860 = vadd.f32 0.0, %v859
      %v861 = vpop.f32.mrb[0].mxu0
      %v862 = vpop.f32.mrb[0].mxu0
      %v863 = vadd.f32 0.0, %v862
      %v864 = vpop.f32.mrb[0].mxu0
      %865 = vmatprep.mubr.bf16.mxu0 %v671
      %866 = vmatmul.mubr.bf16.gmra.mrb[0].mxu0 %v504
      %v867 = vpop.f32.mrb[0].mxu0
      %v868 = vadd.f32 0.0, %v867
      %v869 = vpop.f32.mrb[0].mxu0
      %v870 = vpop.f32.mrb[0].mxu0
      %v871 = vadd.f32 0.0, %v870
      %v872 = vpop.f32.mrb[0].mxu0
      %873 = vmatprep.mubr.bf16.mxu0 %v674
      %874 = vmatmul.mubr.bf16.gmra.mrb[0].mxu0 %v506
      %v875 = vpop.f32.mrb[0].mxu0
      %v876 = vadd.f32 0.0, %v875
      %v877 = vpop.f32.mrb[0].mxu0
      %v878 = vpop.f32.mrb[0].mxu0
      %v879 = vadd.f32 0.0, %v878
      %v880 = vpop.f32.mrb[0].mxu0
      %881 = vmatprep.mubr.bf16.mxu0 %v677
      %882 = vmatmul.mubr.bf16.gmra.mrb[0].mxu0 %v508
      %v883 = vpop.f32.mrb[0].mxu0
      %v884 = vadd.f32 0.0, %v883
      %v885 = vpop.f32.mrb[0].mxu0
      %v886 = vpop.f32.mrb[0].mxu0
      %v887 = vadd.f32 0.0, %v886
      %v888 = vpop.f32.mrb[0].mxu0
      %889 = vmatprep.mubr.bf16.mxu0 %v680
      %890 = vmatmul.mubr.bf16.gmra.mrb[0].mxu0 %v510
      %v891 = vpop.f32.mrb[0].mxu0
      %v892 = vadd.f32 0.0, %v891
      %v893 = vpop.f32.mrb[0].mxu0
      %v894 = vpop.f32.mrb[0].mxu0
      %v895 = vadd.f32 0.0, %v894
      %v896 = vpop.f32.mrb[0].mxu0
      %897 = vmatprep.mubr.bf16.mxu0 %v683
      %898 = vmatmul.mubr.bf16.gmra.mrb[0].mxu0 %v512
      %v899 = vpop.f32.mrb[0].mxu0
      %v900 = vadd.f32 0.0, %v899
      %v901 = vpop.f32.mrb[0].mxu0
      %v902 = vpop.f32.mrb[0].mxu0
      %v903 = vadd.f32 0.0, %v902
      %v904 = vpop.f32.mrb[0].mxu0
      %905 = vmatprep.mubr.bf16.mxu0 %v686
      %906 = vmatmul.mubr.bf16.gmra.mrb[0].mxu0 %v514
      %v907 = vpop.f32.mrb[0].mxu0
      %v908 = vadd.f32 0.0, %v907
      %v909 = vpop.f32.mrb[0].mxu0
      %v910 = vpop.f32.mrb[0].mxu0
      %v911 = vadd.f32 0.0, %v910
      %v912 = vpop.f32.mrb[0].mxu0
      %913 = vmatprep.mubr.bf16.mxu0 %v689
      %914 = vmatmul.mubr.bf16.gmra.mrb[0].mxu0 %v516
      %v915 = vpop.f32.mrb[0].mxu0
      %v916 = vadd.f32 0.0, %v915
      %v917 = vpop.f32.mrb[0].mxu0
      %v918 = vpop.f32.mrb[0].mxu0
      %v919 = vadd.f32 0.0, %v918
      %v920 = vpop.f32.mrb[0].mxu0
      %921 = vmatprep.mubr.bf16.mxu0 %v692
      %922 = vmatmul.mubr.bf16.gmra.mrb[0].mxu0 %v518
      %v923 = vpop.f32.mrb[0].mxu0
      %v924 = vadd.f32 0.0, %v923
      %v925 = vpop.f32.mrb[0].mxu0
      %v926 = vpop.f32.mrb[0].mxu0
      %v927 = vadd.f32 0.0, %v926
      %v928 = vpop.f32.mrb[0].mxu0
      %929 = vmatprep.mubr.bf16.mxu0 %v695
      %930 = vmatmul.mubr.bf16.gmra.mrb[0].mxu0 %v520
      %v931 = vpop.f32.mrb[0].mxu0
      %v932 = vadd.f32 0.0, %v931
      %v933 = vpop.f32.mrb[0].mxu0
      %v934 = vpop.f32.mrb[0].mxu0
      %v935 = vadd.f32 0.0, %v934
      %v936 = vpop.f32.mrb[0].mxu0
      %937 = vmatprep.mubr.bf16.mxu0 %v698
      %938 = vmatmul.mubr.bf16.gmra.mrb[0].mxu0 %v522
      %v939 = vpop.f32.mrb[0].mxu0
      %v940 = vadd.f32 0.0, %v939
      %v941 = vpop.f32.mrb[0].mxu0
      %v942 = vpop.f32.mrb[0].mxu0
      %v943 = vadd.f32 0.0, %v942
      %v944 = vpop.f32.mrb[0].mxu0
      %945 = vmatprep.mubr.bf16.mxu0 %v701
      %946 = vmatmul.mubr.bf16.gmra.mrb[0].mxu0 %v524
      %v947 = vpop.f32.mrb[0].mxu0
      %v948 = vadd.f32 0.0, %v947
      %v949 = vpop.f32.mrb[0].mxu0
      %v950 = vpop.f32.mrb[0].mxu0
      %v951 = vadd.f32 0.0, %v950
      %v952 = vpop.f32.mrb[0].mxu0
      %953 = vmatprep.mubr.bf16.mxu0 %v704
      %954 = vmatmul.mubr.bf16.gmra.mrb[0].mxu0 %v526
      %v955 = vpop.f32.mrb[0].mxu0
      %v956 = vadd.f32 0.0, %v955
      %v957 = vpop.f32.mrb[0].mxu0
      %v958 = vpop.f32.mrb[0].mxu0
      %v959 = vadd.f32 0.0, %v958
      %v960 = vpop.f32.mrb[0].mxu0
      %961 = vmatprep.mubr.bf16.mxu0 %v707
      %962 = vmatmul.mubr.bf16.gmra.mrb[0].mxu0 %v528
      %v963 = vpop.f32.mrb[0].mxu0
      %v964 = vadd.f32 0.0, %v963
      %v965 = vpop.f32.mrb[0].mxu0
      %v966 = vpop.f32.mrb[0].mxu0
      %v967 = vadd.f32 0.0, %v966
      %v968 = vpop.f32.mrb[0].mxu0
      %969 = vmatprep.mubr.bf16.mxu0 %v710
      %970 = vmatmul.mubr.bf16.gmra.mrb[0].mxu0 %v530
      %v971 = vpop.f32.mrb[0].mxu0
      %v972 = vadd.f32 0.0, %v971
      %v973 = vpop.f32.mrb[0].mxu0
      %v974 = vpop.f32.mrb[0].mxu0
      %v975 = vadd.f32 0.0, %v974
      %v976 = vpop.f32.mrb[0].mxu0
      %977 = vmatprep.mubr.bf16.mxu0 %v713
      %978 = vmatmul.mubr.bf16.gmra.mrb[0].mxu0 %v532
      %v979 = vpop.f32.mrb[0].mxu0
      %v980 = vadd.f32 0.0, %v979
      %v981 = vpop.f32.mrb[0].mxu0
      %v982 = vpop.f32.mrb[0].mxu0
      %v983 = vadd.f32 0.0, %v982
      %v984 = vpop.f32.mrb[0].mxu0
      %985 = vmatprep.mubr.bf16.mxu0 %v716
      %986 = vmatmul.mubr.bf16.gmra.mrb[0].mxu0 %v534
      %v987 = vpop.f32.mrb[0].mxu0
      %v988 = vadd.f32 0.0, %v987
      %v989 = vpop.f32.mrb[0].mxu0
      %v990 = vpop.f32.mrb[0].mxu0
      %v991 = vadd.f32 0.0, %v990
      %v992 = vpop.f32.mrb[0].mxu0
      %993 = vmatprep.mubr.bf16.mxu0 %v719
      %994 = vmatmul.mubr.bf16.gmra.mrb[0].mxu0 %v536
      %v995 = vpop.f32.mrb[0].mxu0
      %v996 = vadd.f32 0.0, %v995
      %v997 = vpop.f32.mrb[0].mxu0
      %v998 = vpop.f32.mrb[0].mxu0
      %v999 = vadd.f32 0.0, %v998
      %v1000 = vpop.f32.mrb[0].mxu0
      %1001 = vmatprep.mubr.bf16.mxu0 %v722
      %1002 = vmatmul.mubr.bf16.gmra.mrb[0].mxu0 %v538
      %v1003 = vpop.f32.mrb[0].mxu0
      %v1004 = vadd.f32 0.0, %v1003
      %v1005 = vpop.f32.mrb[0].mxu0
      %v1006 = vpop.f32.mrb[0].mxu0
      %v1007 = vadd.f32 0.0, %v1006
      %v1008 = vpop.f32.mrb[0].mxu0
      %1009 = vmatprep.mubr.bf16.mxu0 %v725
      %1010 = vmatmul.mubr.bf16.gmra.mrb[0].mxu0 %v540
      %v1011 = vpop.f32.mrb[0].mxu0
      %v1012 = vadd.f32 0.0, %v1011
      %v1013 = vpop.f32.mrb[0].mxu0
      %v1014 = vpop.f32.mrb[0].mxu0
      %v1015 = vadd.f32 0.0, %v1014
      %v1016 = vpop.f32.mrb[0].mxu0
      %1017 = vmatprep.mubr.bf16.mxu0 %v728
      %1018 = vmatmul.mubr.bf16.gmra.mrb[0].mxu0 %v542
      %v1019 = vpop.f32.mrb[0].mxu0
      %v1020 = vadd.f32 0.0, %v1019
      %v1021 = vpop.f32.mrb[0].mxu0
      %v1022 = vpop.f32.mrb[0].mxu0
      %v1023 = vadd.f32 0.0, %v1022
      %v1024 = vpop.f32.mrb[0].mxu0
      %1025 = vdwg.mxu0
      %v1026 = vld [vmem:[%s2] sm:$0x1]
      %v1028 = vlaneseq
      %v1029 = vshrl.u32 %v1028, 7
      %v1030 = vsub.s32 0, %v1029
      %v1031 = vrot.slane %v1026, %v1030
      %v1033 = vmul.f32 %v772, %v1031
      %v1034 = vmul.f32 %v775, %v1031
      %v1035 = vmul.f32 %v780, %v1031
      %v1036 = vmul.f32 %v783, %v1031
      %v1037 = vmul.f32 %v788, %v1031
      %v1038 = vmul.f32 %v791, %v1031
      %v1039 = vmul.f32 %v796, %v1031
      %v1040 = vmul.f32 %v799, %v1031
      %v1041 = vmul.f32 %v804, %v1031
      %v1042 = vmul.f32 %v807, %v1031
      %v1043 = vmul.f32 %v812, %v1031
      %v1044 = vmul.f32 %v815, %v1031
      %v1045 = vmul.f32 %v820, %v1031
      %v1046 = vmul.f32 %v823, %v1031
      %v1047 = vmul.f32 %v828, %v1031
      %v1048 = vmul.f32 %v831, %v1031
      %v1049 = vmul.f32 %v836, %v1031
      %v1050 = vmul.f32 %v839, %v1031
      %v1051 = vmul.f32 %v844, %v1031
      %v1052 = vmul.f32 %v847, %v1031
      %v1053 = vmul.f32 %v852, %v1031
      %v1054 = vmul.f32 %v855, %v1031
      %v1055 = vmul.f32 %v860, %v1031
      %v1056 = vmul.f32 %v863, %v1031
      %v1057 = vmul.f32 %v868, %v1031
      %v1058 = vmul.f32 %v871, %v1031
      %v1059 = vmul.f32 %v876, %v1031
      %v1060 = vmul.f32 %v879, %v1031
      %v1061 = vmul.f32 %v884, %v1031
      %v1062 = vmul.f32 %v887, %v1031
      %v1063 = vmul.f32 %v892, %v1031
      %v1064 = vmul.f32 %v895, %v1031
      %v1065 = vmul.f32 %v900, %v1031
      %v1066 = vmul.f32 %v903, %v1031
      %v1067 = vmul.f32 %v908, %v1031
      %v1068 = vmul.f32 %v911, %v1031
      %v1069 = vmul.f32 %v916, %v1031
      %v1070 = vmul.f32 %v919, %v1031
      %v1071 = vmul.f32 %v924, %v1031
      %v1072 = vmul.f32 %v927, %v1031
      %v1073 = vmul.f32 %v932, %v1031
      %v1074 = vmul.f32 %v935, %v1031
      %v1075 = vmul.f32 %v940, %v1031
      %v1076 = vmul.f32 %v943, %v1031
      %v1077 = vmul.f32 %v948, %v1031
      %v1078 = vmul.f32 %v951, %v1031
      %v1079 = vmul.f32 %v956, %v1031
      %v1080 = vmul.f32 %v959, %v1031
      %v1081 = vmul.f32 %v964, %v1031
      %v1082 = vmul.f32 %v967, %v1031
      %v1083 = vmul.f32 %v972, %v1031
      %v1084 = vmul.f32 %v975, %v1031
      %v1085 = vmul.f32 %v980, %v1031
      %v1086 = vmul.f32 %v983, %v1031
      %v1087 = vmul.f32 %v988, %v1031
      %v1088 = vmul.f32 %v991, %v1031
      %v1089 = vmul.f32 %v996, %v1031
      %v1090 = vmul.f32 %v999, %v1031
      %v1091 = vmul.f32 %v1004, %v1031
      %v1092 = vmul.f32 %v1007, %v1031
      %v1093 = vmul.f32 %v1012, %v1031
      %v1094 = vmul.f32 %v1015, %v1031
      %v1095 = vmul.f32 %v1020, %v1031
      %v1096 = vmul.f32 %v1023, %v1031
      %v1097 = vld [vmem:[%s3] sm:$0x1]
      %v1099 = vlaneseq
      %v1100 = vshrl.u32 %v1099, 7
      %v1101 = vsub.s32 0, %v1100
      %v1102 = vrot.slane %v1097, %v1101
      %v1104 = vadd.f32 %v1033, %v1102
      %v1105 = vadd.f32 %v1034, %v1102
      %v1106 = vadd.f32 %v1035, %v1102
      %v1107 = vadd.f32 %v1036, %v1102
      %v1108 = vadd.f32 %v1037, %v1102
      %v1109 = vadd.f32 %v1038, %v1102
      %v1110 = vadd.f32 %v1039, %v1102
      %v1111 = vadd.f32 %v1040, %v1102
      %v1112 = vadd.f32 %v1041, %v1102
      %v1113 = vadd.f32 %v1042, %v1102
      %v1114 = vadd.f32 %v1043, %v1102
      %v1115 = vadd.f32 %v1044, %v1102
      %v1116 = vadd.f32 %v1045, %v1102
      %v1117 = vadd.f32 %v1046, %v1102
      %v1118 = vadd.f32 %v1047, %v1102
      %v1119 = vadd.f32 %v1048, %v1102
      %v1120 = vadd.f32 %v1049, %v1102
      %v1121 = vadd.f32 %v1050, %v1102
      %v1122 = vadd.f32 %v1051, %v1102
      %v1123 = vadd.f32 %v1052, %v1102
      %v1124 = vadd.f32 %v1053, %v1102
      %v1125 = vadd.f32 %v1054, %v1102
      %v1126 = vadd.f32 %v1055, %v1102
      %v1127 = vadd.f32 %v1056, %v1102
      %v1128 = vadd.f32 %v1057, %v1102
      %v1129 = vadd.f32 %v1058, %v1102
      %v1130 = vadd.f32 %v1059, %v1102
      %v1131 = vadd.f32 %v1060, %v1102
      %v1132 = vadd.f32 %v1061, %v1102
      %v1133 = vadd.f32 %v1062, %v1102
      %v1134 = vadd.f32 %v1063, %v1102
      %v1135 = vadd.f32 %v1064, %v1102
      %v1136 = vadd.f32 %v1065, %v1102
      %v1137 = vadd.f32 %v1066, %v1102
      %v1138 = vadd.f32 %v1067, %v1102
      %v1139 = vadd.f32 %v1068, %v1102
      %v1140 = vadd.f32 %v1069, %v1102
      %v1141 = vadd.f32 %v1070, %v1102
      %v1142 = vadd.f32 %v1071, %v1102
      %v1143 = vadd.f32 %v1072, %v1102
      %v1144 = vadd.f32 %v1073, %v1102
      %v1145 = vadd.f32 %v1074, %v1102
      %v1146 = vadd.f32 %v1075, %v1102
      %v1147 = vadd.f32 %v1076, %v1102
      %v1148 = vadd.f32 %v1077, %v1102
      %v1149 = vadd.f32 %v1078, %v1102
      %v1150 = vadd.f32 %v1079, %v1102
      %v1151 = vadd.f32 %v1080, %v1102
      %v1152 = vadd.f32 %v1081, %v1102
      %v1153 = vadd.f32 %v1082, %v1102
      %v1154 = vadd.f32 %v1083, %v1102
      %v1155 = vadd.f32 %v1084, %v1102
      %v1156 = vadd.f32 %v1085, %v1102
      %v1157 = vadd.f32 %v1086, %v1102
      %v1158 = vadd.f32 %v1087, %v1102
      %v1159 = vadd.f32 %v1088, %v1102
      %v1160 = vadd.f32 %v1089, %v1102
      %v1161 = vadd.f32 %v1090, %v1102
      %v1162 = vadd.f32 %v1091, %v1102
      %v1163 = vadd.f32 %v1092, %v1102
      %v1164 = vadd.f32 %v1093, %v1102
      %v1165 = vadd.f32 %v1094, %v1102
      %v1166 = vadd.f32 %v1095, %v1102
      %v1167 = vadd.f32 %v1096, %v1102
      %v1168 = vmax.f32 %v1104, 0.0
      %v1169 = vmax.f32 %v1105, 0.0
      %v1170 = vmax.f32 %v1106, 0.0
      %v1171 = vmax.f32 %v1107, 0.0
      %v1172 = vmax.f32 %v1108, 0.0
      %v1173 = vmax.f32 %v1109, 0.0
      %v1174 = vmax.f32 %v1110, 0.0
      %v1175 = vmax.f32 %v1111, 0.0
      %v1176 = vmax.f32 %v1112, 0.0
      %v1177 = vmax.f32 %v1113, 0.0
      %v1178 = vmax.f32 %v1114, 0.0
      %v1179 = vmax.f32 %v1115, 0.0
      %v1180 = vmax.f32 %v1116, 0.0
      %v1181 = vmax.f32 %v1117, 0.0
      %v1182 = vmax.f32 %v1118, 0.0
      %v1183 = vmax.f32 %v1119, 0.0
      %v1184 = vmax.f32 %v1120, 0.0
      %v1185 = vmax.f32 %v1121, 0.0
      %v1186 = vmax.f32 %v1122, 0.0
      %v1187 = vmax.f32 %v1123, 0.0
      %v1188 = vmax.f32 %v1124, 0.0
      %v1189 = vmax.f32 %v1125, 0.0
      %v1190 = vmax.f32 %v1126, 0.0
      %v1191 = vmax.f32 %v1127, 0.0
      %v1192 = vmax.f32 %v1128, 0.0
      %v1193 = vmax.f32 %v1129, 0.0
      %v1194 = vmax.f32 %v1130, 0.0
      %v1195 = vmax.f32 %v1131, 0.0
      %v1196 = vmax.f32 %v1132, 0.0
      %v1197 = vmax.f32 %v1133, 0.0
      %v1198 = vmax.f32 %v1134, 0.0
      %v1199 = vmax.f32 %v1135, 0.0
      %v1200 = vmax.f32 %v1136, 0.0
      %v1201 = vmax.f32 %v1137, 0.0
      %v1202 = vmax.f32 %v1138, 0.0
      %v1203 = vmax.f32 %v1139, 0.0
      %v1204 = vmax.f32 %v1140, 0.0
      %v1205 = vmax.f32 %v1141, 0.0
      %v1206 = vmax.f32 %v1142, 0.0
      %v1207 = vmax.f32 %v1143, 0.0
      %v1208 = vmax.f32 %v1144, 0.0
      %v1209 = vmax.f32 %v1145, 0.0
      %v1210 = vmax.f32 %v1146, 0.0
      %v1211 = vmax.f32 %v1147, 0.0
      %v1212 = vmax.f32 %v1148, 0.0
      %v1213 = vmax.f32 %v1149, 0.0
      %v1214 = vmax.f32 %v1150, 0.0
      %v1215 = vmax.f32 %v1151, 0.0
      %v1216 = vmax.f32 %v1152, 0.0
      %v1217 = vmax.f32 %v1153, 0.0
      %v1218 = vmax.f32 %v1154, 0.0
      %v1219 = vmax.f32 %v1155, 0.0
      %v1220 = vmax.f32 %v1156, 0.0
      %v1221 = vmax.f32 %v1157, 0.0
      %v1222 = vmax.f32 %v1158, 0.0
      %v1223 = vmax.f32 %v1159, 0.0
      %v1224 = vmax.f32 %v1160, 0.0
      %v1225 = vmax.f32 %v1161, 0.0
      %v1226 = vmax.f32 %v1162, 0.0
      %v1227 = vmax.f32 %v1163, 0.0
      %v1228 = vmax.f32 %v1164, 0.0
      %v1229 = vmax.f32 %v1165, 0.0
      %v1230 = vmax.f32 %v1166, 0.0
      %v1231 = vmax.f32 %v1167, 0.0
      %1232 = vst [vmem:[%s202] sm:$0xff] %v1168
      %1233 = vst [vmem:[%s202 + $0x8] sm:$0xff] %v1169
      %1234 = vst [vmem:[%s202 + $0x10] sm:$0xff] %v1170
      %1235 = vst [vmem:[%s202 + $0x18] sm:$0xff] %v1171
      %1236 = vst [vmem:[%s202 + $0x20] sm:$0xff] %v1172
      %1237 = vst [vmem:[%s202 + $0x28] sm:$0xff] %v1173
      %1238 = vst [vmem:[%s202 + $0x30] sm:$0xff] %v1174
      %1239 = vst [vmem:[%s202 + $0x38] sm:$0xff] %v1175
      %1240 = vst [vmem:[%s202 + $0x40] sm:$0xff] %v1176
      %1241 = vst [vmem:[%s202 + $0x48] sm:$0xff] %v1177
      %1242 = vst [vmem:[%s202 + $0x50] sm:$0xff] %v1178
      %1243 = vst [vmem:[%s202 + $0x58] sm:$0xff] %v1179
      %1244 = vst [vmem:[%s202 + $0x60] sm:$0xff] %v1180
      %1245 = vst [vmem:[%s202 + $0x68] sm:$0xff] %v1181
      %1246 = vst [vmem:[%s202 + $0x70] sm:$0xff] %v1182
      %1247 = vst [vmem:[%s202 + $0x78] sm:$0xff] %v1183
      %1248 = vst [vmem:[%s202 + $0x80] sm:$0xff] %v1184
      %1249 = vst [vmem:[%s202 + $0x88] sm:$0xff] %v1185
      %1250 = vst [vmem:[%s202 + $0x90] sm:$0xff] %v1186
      %1251 = vst [vmem:[%s202 + $0x98] sm:$0xff] %v1187
      %1252 = vst [vmem:[%s202 + $0xa0] sm:$0xff] %v1188
      %1253 = vst [vmem:[%s202 + $0xa8] sm:$0xff] %v1189
      %1254 = vst [vmem:[%s202 + $0xb0] sm:$0xff] %v1190
      %1255 = vst [vmem:[%s202 + $0xb8] sm:$0xff] %v1191
      %1256 = vst [vmem:[%s202 + $0xc0] sm:$0xff] %v1192
      %1257 = vst [vmem:[%s202 + $0xc8] sm:$0xff] %v1193
      %1258 = vst [vmem:[%s202 + $0xd0] sm:$0xff] %v1194
      %1259 = vst [vmem:[%s202 + $0xd8] sm:$0xff] %v1195
      %1260 = vst [vmem:[%s202 + $0xe0] sm:$0xff] %v1196
      %1261 = vst [vmem:[%s202 + $0xe8] sm:$0xff] %v1197
      %1262 = vst [vmem:[%s202 + $0xf0] sm:$0xff] %v1198
      %1263 = vst [vmem:[%s202 + $0xf8] sm:$0xff] %v1199
      %1264 = vst [vmem:[%s202 + $0x100] sm:$0xff] %v1200
      %1265 = vst [vmem:[%s202 + $0x108] sm:$0xff] %v1201
      %1266 = vst [vmem:[%s202 + $0x110] sm:$0xff] %v1202
      %1267 = vst [vmem:[%s202 + $0x118] sm:$0xff] %v1203
      %1268 = vst [vmem:[%s202 + $0x120] sm:$0xff] %v1204
      %1269 = vst [vmem:[%s202 + $0x128] sm:$0xff] %v1205
      %1270 = vst [vmem:[%s202 + $0x130] sm:$0xff] %v1206
      %1271 = vst [vmem:[%s202 + $0x138] sm:$0xff] %v1207
      %1272 = vst [vmem:[%s202 + $0x140] sm:$0xff] %v1208
      %1273 = vst [vmem:[%s202 + $0x148] sm:$0xff] %v1209
      %1274 = vst [vmem:[%s202 + $0x150] sm:$0xff] %v1210
      %1275 = vst [vmem:[%s202 + $0x158] sm:$0xff] %v1211
      %1276 = vst [vmem:[%s202 + $0x160] sm:$0xff] %v1212
      %1277 = vst [vmem:[%s202 + $0x168] sm:$0xff] %v1213
      %1278 = vst [vmem:[%s202 + $0x170] sm:$0xff] %v1214
      %1279 = vst [vmem:[%s202 + $0x178] sm:$0xff] %v1215
      %1280 = vst [vmem:[%s202 + $0x180] sm:$0xff] %v1216
      %1281 = vst [vmem:[%s202 + $0x188] sm:$0xff] %v1217
      %1282 = vst [vmem:[%s202 + $0x190] sm:$0xff] %v1218
      %1283 = vst [vmem:[%s202 + $0x198] sm:$0xff] %v1219
      %1284 = vst [vmem:[%s202 + $0x1a0] sm:$0xff] %v1220
      %1285 = vst [vmem:[%s202 + $0x1a8] sm:$0xff] %v1221
      %1286 = vst [vmem:[%s202 + $0x1b0] sm:$0xff] %v1222
      %1287 = vst [vmem:[%s202 + $0x1b8] sm:$0xff] %v1223
      %1288 = vst [vmem:[%s202 + $0x1c0] sm:$0xff] %v1224
      %1289 = vst [vmem:[%s202 + $0x1c8] sm:$0xff] %v1225
      %1290 = vst [vmem:[%s202 + $0x1d0] sm:$0xff] %v1226
      %1291 = vst [vmem:[%s202 + $0x1d8] sm:$0xff] %v1227
      %1292 = vst [vmem:[%s202 + $0x1e0] sm:$0xff] %v1228
      %1293 = vst [vmem:[%s202 + $0x1e8] sm:$0xff] %v1229
      %1294 = vst [vmem:[%s202 + $0x1f0] sm:$0xff] %v1230
      %1295 = vst [vmem:[%s202 + $0x1f8] sm:$0xff] %v1231
      %s1296 = smul.u32 64, %s15
      %p1297 = scmp.lt.s32.totalorder %s1296, 127
      %s1298 = scalar_select %p1297, %s1296, 127
      %s1299 = smul.addr %s1298, 8
      %s1300 = scalar_lea.vmem %s4, %s1299
      // Predicated region
      $region37: #{_lambda_.24} parent=35 // pred_check
        %p1301 = pneg %p122
      $region38: #{_lambda_.24} parent=35 // pred_check_branch
        %1303 = sbr.rel (%p1301) target = $region40
      $region39: #{_lambda_.24} parent=35 // pred_region
        %s1304 = smul.u32 64, %s15
      $region40: #{_lambda_.24} parent=35 // pred_fallthru
        _
    $region36: #{_lambda_.24} parent=5 // pred_fallthru
      _
    %p1305 = scmp.le.s32.totalorder 2, %s10
    // Predicated region
    $region41: #{_lambda_.24} parent=5 // pred_check
      %p1306 = pneg %p1305
    $region42: #{_lambda_.24} parent=5 // pred_check_branch
      %1308 = sbr.rel (%p1306) target = $region44
    $region43: #{_lambda_.24} parent=5 // pred_region
      %s1309 = ssub.s32 %s10, 2
      // Predicated region
      $region45: #{_lambda_.24} parent=43 // pred_check
        %p1310 = pneg %p128
      $region46: #{_lambda_.24} parent=43 // pred_check_branch
        %1312 = sbr.rel (%p1310) target = $region48
      $region47: #{_lambda_.24} parent=43 // pred_region
        %s1313 = smul.u32 64, %s16
        %p1314 = scmp.lt.s32.totalorder %s1313, 127
        %s1315 = scalar_select %p1314, %s1313, 127
        %s1316 = smul.addr %s1315, 8
        %s1317 = scalar_lea.vmem %s4, %s1316
      $region48: #{_lambda_.24} parent=43 // pred_fallthru
        _
    $region44: #{_lambda_.24} parent=5 // pred_fallthru
      _
  $region6: #{_lambda_.24} parent=0 // loop_footer
    %s14 = sadd.s32 1, %s10
  $region7: #{_lambda_.24} parent=0 // loop_footer_branch
    %9 = sbr.rel target = $region3
  $region8: #{_lambda_.24} parent=0 // loop_exit
    _

// kernel: _lambda_.25
$region0: #{_lambda_.25}
  #allocation0 [shape = 'u32[]', space=smem, size = 0x4, offset = 0x4, fixed_abs, tag = 'smem constant byte address 0x4 - core index']
  #allocation1 [shape = 'u32[144,128]{1,0:T(1,128)}', space=vmem, size = 0x12000, scoped, tag = 'internal scratch']
  %s0 = inlined_call_operand.vmem [shape: bf16[256,144], index: 0, kind: input, shape index: {}]
  %s1 = inlined_call_operand.vmem [shape: bf16[144,128], index: 1, kind: input, shape index: {}]
  %s2 = inlined_call_operand.vmem [shape: f32[1,128], index: 2, kind: input, shape index: {}]
  %s3 = inlined_call_operand.vmem [shape: f32[1,128], index: 3, kind: input, shape index: {}]
  %s4 = inlined_call_operand.vmem [shape: f32[256,128], index: 4, kind: output, shape index: {}]
  %s5 = sld [smem:[#allocation0]]
  $region49: #{_lambda_.25} parent=0
    _
  %s7 = ssub.s32 1, %s5
  %s8 = scalar_select 0, %s7, %s5
  loop: start=0, step=1, limit=4
  $region2: #{_lambda_.25} parent=0 // loop_pre_header
    _
  $region3: #{_lambda_.25} parent=0 // loop_header
    %s10 = sphi 0, %s14
    %p11 = scmp.ge.s32.totalorder %s10, 4
    %s20 = sphi 0, %s22
    %s23 = sphi 0, %s20
    %s24 = sphi 0, %s23
    %s40 = sphi 0, %s24
    %s44 = sphi 0, %s44
    %s46 = sphi 0, %s44
    %s47 = sphi 0, %s46
    %s61 = sphi 0, %s47
    %s65 = sphi 0, %s65
    %s67 = sphi 0, %s65
    %s68 = sphi 0, %s67
    %s82 = sphi 0, %s68
    %s86 = sphi 0, %s86
    %s88 = sphi 0, %s86
    %s89 = sphi 0, %s88
    %s103 = sphi 0, %s89
    %s109 = sphi 0, %s111
    %s112 = sphi 0, %s109
    %s113 = sphi 0, %s112
    %s129 = sphi 0, %s113
  $region4: #{_lambda_.25} parent=0 // loop_header_branch
    %13 = sbr.rel (%p11) target = $region8
  $region5: #{_lambda_.25} parent=0 // loop_body
    %s15 = ssub.s32 %s10, 1
    %s16 = ssub.s32 %s10, 2
    %s17 = sadd.s32 %s10, 1
    %s18 = ssub.s32 %s10, %s17
    %p19 = scmp.eq.s32.totalorder %s18, 0
    %s21 = sadd.s32 %s20, 1
    %s22 = scalar_select %p19, %s20, %s21
    %p25 = pneg %p19
    %p26 = scmp.eq.s32.totalorder %s10, 1
    %p27 = por %p25, %p26
    %p28 = scmp.ne.s32.totalorder %s20, %s23
    %p29 = scmp.eq.s32.totalorder %s10, 0
    %p30 = por %p28, %p29
    %p31 = scmp.ne.s32.totalorder %s20, %s23
    %p32 = scmp.eq.s32.totalorder %s15, 1
    %p33 = por %p31, %p32
    %p34 = scmp.ne.s32.totalorder %s23, %s24
    %p35 = scmp.eq.s32.totalorder %s15, 0
    %p36 = por %p34, %p35
    %p37 = scmp.ne.s32.totalorder %s23, %s24
    %p38 = scmp.eq.s32.totalorder %s16, 1
    %p39 = por %p37, %p38
    %p41 = scmp.ne.s32.totalorder %s24, %s40
    %p42 = scmp.eq.s32.totalorder %s16, 0
    %p43 = por %p41, %p42
    %s45 = sadd.s32 %s44, 1
    %p48 = scmp.eq.s32.totalorder %s10, 1
    %p49 = scmp.ne.s32.totalorder %s44, %s46
    %p50 = scmp.eq.s32.totalorder %s10, 0
    %p51 = por %p49, %p50
    %p52 = scmp.ne.s32.totalorder %s44, %s46
    %p53 = scmp.eq.s32.totalorder %s15, 1
    %p54 = por %p52, %p53
    %p55 = scmp.ne.s32.totalorder %s46, %s47
    %p56 = scmp.eq.s32.totalorder %s15, 0
    %p57 = por %p55, %p56
    %p58 = scmp.ne.s32.totalorder %s46, %s47
    %p59 = scmp.eq.s32.totalorder %s16, 1
    %p60 = por %p58, %p59
    %p62 = scmp.ne.s32.totalorder %s47, %s61
    %p63 = scmp.eq.s32.totalorder %s16, 0
    %p64 = por %p62, %p63
    %s66 = sadd.s32 %s65, 1
    %p69 = scmp.eq.s32.totalorder %s10, 1
    %p70 = scmp.ne.s32.totalorder %s65, %s67
    %p71 = scmp.eq.s32.totalorder %s10, 0
    %p72 = por %p70, %p71
    %p73 = scmp.ne.s32.totalorder %s65, %s67
    %p74 = scmp.eq.s32.totalorder %s15, 1
    %p75 = por %p73, %p74
    %p76 = scmp.ne.s32.totalorder %s67, %s68
    %p77 = scmp.eq.s32.totalorder %s15, 0
    %p78 = por %p76, %p77
    %p79 = scmp.ne.s32.totalorder %s67, %s68
    %p80 = scmp.eq.s32.totalorder %s16, 1
    %p81 = por %p79, %p80
    %p83 = scmp.ne.s32.totalorder %s68, %s82
    %p84 = scmp.eq.s32.totalorder %s16, 0
    %p85 = por %p83, %p84
    %s87 = sadd.s32 %s86, 1
    %p90 = scmp.eq.s32.totalorder %s10, 1
    %p91 = scmp.ne.s32.totalorder %s86, %s88
    %p92 = scmp.eq.s32.totalorder %s10, 0
    %p93 = por %p91, %p92
    %p94 = scmp.ne.s32.totalorder %s86, %s88
    %p95 = scmp.eq.s32.totalorder %s15, 1
    %p96 = por %p94, %p95
    %p97 = scmp.ne.s32.totalorder %s88, %s89
    %p98 = scmp.eq.s32.totalorder %s15, 0
    %p99 = por %p97, %p98
    %p100 = scmp.ne.s32.totalorder %s88, %s89
    %p101 = scmp.eq.s32.totalorder %s16, 1
    %p102 = por %p100, %p101
    %p104 = scmp.ne.s32.totalorder %s89, %s103
    %p105 = scmp.eq.s32.totalorder %s16, 0
    %p106 = por %p104, %p105
    %s107 = ssub.s32 %s10, %s17
    %p108 = scmp.eq.s32.totalorder %s107, 0
    %s110 = sadd.s32 %s109, 1
    %s111 = scalar_select %p108, %s109, %s110
    %p114 = pneg %p108
    %p115 = scmp.eq.s32.totalorder %s10, 1
    %p116 = por %p114, %p115
    %p117 = scmp.ne.s32.totalorder %s109, %s112
    %p118 = scmp.eq.s32.totalorder %s10, 0
    %p119 = por %p117, %p118
    %p120 = scmp.ne.s32.totalorder %s109, %s112
    %p121 = scmp.eq.s32.totalorder %s15, 1
    %p122 = por %p120, %p121
    %p123 = scmp.ne.s32.totalorder %s112, %s113
    %p124 = scmp.eq.s32.totalorder %s15, 0
    %p125 = por %p123, %p124
    %p126 = scmp.ne.s32.totalorder %s112, %s113
    %p127 = scmp.eq.s32.totalorder %s16, 1
    %p128 = por %p126, %p127
    %p130 = scmp.ne.s32.totalorder %s113, %s129
    %p131 = scmp.eq.s32.totalorder %s16, 0
    %p132 = por %p130, %p131
    %p133 = scmp.le.s32.totalorder 1, %s10
    %p134 = scmp.lt.s32.totalorder %s10, 3
    %p135 = pnand %p133, %p134
    %p136 = pneg %p135
    // Predicated region
    $region9: #{_lambda_.25} parent=5 // pred_check
      _
    $region10: #{_lambda_.25} parent=5 // pred_check_branch
      %138 = sbr.rel (%p135) target = $region12
    $region11: #{_lambda_.25} parent=5 // pred_region
      %s139 = ssub.s32 %s10, 1
      // Predicated region
      $region13: #{_lambda_.25} parent=11 // pred_check
        %p140 = pneg %p57
      $region14: #{_lambda_.25} parent=11 // pred_check_branch
        %142 = sbr.rel (%p140) target = $region16
      $region15: #{_lambda_.25} parent=11 // pred_region
        _
      $region16: #{_lambda_.25} parent=11 // pred_fallthru
        _
      // Predicated region
      $region17: #{_lambda_.25} parent=11 // pred_check
        %p143 = pneg %p78
      $region18: #{_lambda_.25} parent=11 // pred_check_branch
        %145 = sbr.rel (%p143) target = $region20
      $region19: #{_lambda_.25} parent=11 // pred_region
        _
      $region20: #{_lambda_.25} parent=11 // pred_fallthru
        _
      // Predicated region
      $region21: #{_lambda_.25} parent=11 // pred_check
        %p146 = pneg %p99
      $region22: #{_lambda_.25} parent=11 // pred_check_branch
        %148 = sbr.rel (%p146) target = $region24
      $region23: #{_lambda_.25} parent=11 // pred_region
        _
      $region24: #{_lambda_.25} parent=11 // pred_fallthru
        _
    $region12: #{_lambda_.25} parent=5 // pred_fallthru
      _
    %p149 = scmp.lt.s32.totalorder %s10, 2
    // Predicated region
    $region25: #{_lambda_.25} parent=5 // pred_check
      %p150 = pneg %p149
    $region26: #{_lambda_.25} parent=5 // pred_check_branch
      %152 = sbr.rel (%p150) target = $region28
    $region27: #{_lambda_.25} parent=5 // pred_region
      // Predicated region
      $region29: #{_lambda_.25} parent=27 // pred_check
        %p153 = pneg %p30
      $region30: #{_lambda_.25} parent=27 // pred_check_branch
        %155 = sbr.rel (%p153) target = $region32
      $region31: #{_lambda_.25} parent=27 // pred_region
        %s156 = smul.u32 16, %s10
        %p157 = scmp.lt.s32.totalorder %s156, 31
        %s158 = scalar_select %p157, %s156, 31
        %s159 = smul.addr %s158, 2
        %s160 = smul.addr %s159, 4
        %s161 = scalar_lea.vmem %s0, %s160
        %s162 = smul.u32 16, %s10
      $region32: #{_lambda_.25} parent=27 // pred_fallthru
        _
    $region28: #{_lambda_.25} parent=5 // pred_fallthru
      _
    %p163 = scmp.le.s32.totalorder 1, %s10
    %p164 = scmp.lt.s32.totalorder %s10, 3
    %p165 = pnand %p163, %p164
    %p166 = pneg %p165
    // Predicated region
    $region33: #{_lambda_.25} parent=5 // pred_check
      _
    $region34: #{_lambda_.25} parent=5 // pred_check_branch
      %168 = sbr.rel (%p165) target = $region36
    $region35: #{_lambda_.25} parent=5 // pred_region
      %s169 = ssub.s32 %s10, 1
      %s170 = smul.u32 16, %s15
      %p171 = scmp.lt.s32.totalorder %s170, 31
      %s172 = scalar_select %p171, %s170, 31
      %s173 = smul.addr %s172, 2
      %s174 = smul.addr %s173, 4
      %s175 = scalar_lea.vmem %s0, %s174
      %p176 = pneg %p36
      %p177 = pneg %p33
      %p178 = pneg %p57
      %p179 = pneg %p54
      %p180 = pneg %p78
      %p181 = pneg %p75
      %p182 = pneg %p99
      %p183 = pneg %p96
      %p184 = pneg %p125
      %p185 = pneg %p122
      %s186 = smul.u32 16, %s15
      %p187 = scmp.lt.s32.totalorder %s186, 31
      %s188 = scalar_select %p187, %s186, 31
      %s189 = smul.addr %s188, 8
      %s190 = scalar_lea.vmem %s4, %s189
      %s191 = smul.u32 16, %s15
      %p192 = scmp.lt.s32.totalorder %s191, 31
      %s193 = scalar_select %p192, %s191, 31
      %s194 = smul.addr %s193, 2
      %s195 = smul.addr %s194, 4
      %s196 = scalar_lea.vmem %s0, %s195
      %s197 = smul.u32 16, %s15
      %s198 = smul.u32 16, %s15
      %p199 = scmp.lt.s32.totalorder %s198, 31
      %s200 = scalar_select %p199, %s198, 31
      %s201 = smul.addr %s200, 8
      %s202 = scalar_lea.vmem %s4, %s201
      %s203 = smul.u32 16, %s15
      %v205 = vld [vmem:[%s196] sm:$0xff]
      %v206 = vld [vmem:[%s196 + $0x8] sm:$0xff]
      %v207 = vld [vmem:[%s196 + $0x10] sm:$0xff]
      %v208 = vld [vmem:[%s196 + $0x18] sm:$0xff]
      %v209 = vld [vmem:[%s196 + $0x20] sm:$0xff]
      %v210 = vld [vmem:[%s196 + $0x28] sm:$0xff]
      %v211 = vld [vmem:[%s196 + $0x30] sm:$0xff]
      %v212 = vld [vmem:[%s196 + $0x38] sm:$0xff]
      %v213 = vld [vmem:[%s196 + $0x40] sm:$0xff]
      %v214 = vld [vmem:[%s196 + $0x48] sm:$0xff]
      %v215 = vld [vmem:[%s196 + $0x50] sm:$0xff]
      %v216 = vld [vmem:[%s196 + $0x58] sm:$0xff]
      %v217 = vld [vmem:[%s196 + $0x60] sm:$0xff]
      %v218 = vld [vmem:[%s196 + $0x68] sm:$0xff]
      %v219 = vld [vmem:[%s196 + $0x70] sm:$0xff]
      %v220 = vld [vmem:[%s196 + $0x78] sm:$0xff]
      %v221 = vld [vmem:[%s1] sm:$0xf]
      %v222 = vld [vmem:[%s1 + $0x4] sm:$0xf]
      %v223 = vld [vmem:[%s1 + $0x8] sm:$0xf]
      %v224 = vld [vmem:[%s1 + $0xc] sm:$0xf]
      %v225 = vld [vmem:[%s1 + $0x10] sm:$0xf]
      %v226 = vld [vmem:[%s1 + $0x14] sm:$0xf]
      %v227 = vld [vmem:[%s1 + $0x18] sm:$0xf]
      %v228 = vld [vmem:[%s1 + $0x1c] sm:$0xf]
      %v229 = vld [vmem:[%s1 + $0x20] sm:$0xf]
      %v230 = vld [vmem:[%s1 + $0x24] sm:$0xf]
      %v231 = vld [vmem:[%s1 + $0x28] sm:$0xf]
      %v232 = vld [vmem:[%s1 + $0x2c] sm:$0xf]
      %v233 = vld [vmem:[%s1 + $0x30] sm:$0xf]
      %v234 = vld [vmem:[%s1 + $0x34] sm:$0xf]
      %v235 = vld [vmem:[%s1 + $0x38] sm:$0xf]
      %v236 = vld [vmem:[%s1 + $0x3c] sm:$0xf]
      %v237 = vld [vmem:[%s1 + $0x40] sm:$0xf]
      %v238 = vld [vmem:[%s1 + $0x44] sm:$0xf]
      %v255 = vunpack.c.l.b16 %v205
      %v256 = vunpack.c.h.b16 %v205
      %v257 = vunpack.c.l.b16 %v206
      %v258 = vunpack.c.h.b16 %v206
      %v259 = vunpack.c.l.b16 %v207
      %v260 = vunpack.c.h.b16 %v207
      %v261 = vunpack.c.l.b16 %v208
      %v262 = vunpack.c.h.b16 %v208
      %v263 = vunpack.c.l.b16 %v209
      %v264 = vunpack.c.h.b16 %v209
      %v265 = vunpack.c.l.b16 %v210
      %v266 = vunpack.c.h.b16 %v210
      %v267 = vunpack.c.l.b16 %v211
      %v268 = vunpack.c.h.b16 %v211
      %v269 = vunpack.c.l.b16 %v212
      %v270 = vunpack.c.h.b16 %v212
      %v271 = vunpack.c.l.b16 %v213
      %v272 = vunpack.c.h.b16 %v213
      %v273 = vunpack.c.l.b16 %v214
      %v274 = vunpack.c.h.b16 %v214
      %v275 = vunpack.c.l.b16 %v215
      %v276 = vunpack.c.h.b16 %v215
      %v277 = vunpack.c.l.b16 %v216
      %v278 = vunpack.c.h.b16 %v216
      %v279 = vunpack.c.l.b16 %v217
      %v280 = vunpack.c.h.b16 %v217
      %v281 = vunpack.c.l.b16 %v218
      %v282 = vunpack.c.h.b16 %v218
      %v283 = vunpack.c.l.b16 %v219
      %v284 = vunpack.c.h.b16 %v219
      %v285 = vunpack.c.l.b16 %v220
      %v286 = vunpack.c.h.b16 %v220
      %v287 = vpack.c.b16 %v257, %v255
      %v288 = vpack.c.b16 %v258, %v256
      %v289 = vpack.c.b16 %v261, %v259
      %v290 = vpack.c.b16 %v262, %v260
      %v291 = vpack.c.b16 %v265, %v263
      %v292 = vpack.c.b16 %v266, %v264
      %v293 = vpack.c.b16 %v269, %v267
      %v294 = vpack.c.b16 %v270, %v268
      %v295 = vpack.c.b16 %v273, %v271
      %v296 = vpack.c.b16 %v274, %v272
      %v297 = vpack.c.b16 %v277, %v275
      %v298 = vpack.c.b16 %v278, %v276
      %v299 = vpack.c.b16 %v281, %v279
      %v300 = vpack.c.b16 %v282, %v280
      %v301 = vpack.c.b16 %v285, %v283
      %v302 = vpack.c.b16 %v286, %v284
      %v329 = vunpack.c.l.b16 %v221
      %v330 = vunpack.c.l.b16 %v222
      %v331 = vunpack.c.l.b16 %v223
      %v332 = vunpack.c.l.b16 %v224
      %v333 = vunpack.c.l.b16 %v225
      %v334 = vunpack.c.l.b16 %v226
      %v335 = vunpack.c.l.b16 %v227
      %v336 = vunpack.c.l.b16 %v228
      %v337 = vunpack.c.l.b16 %v229
      %v338 = vunpack.c.l.b16 %v230
      %v339 = vunpack.c.l.b16 %v231
      %v340 = vunpack.c.l.b16 %v232
      %v341 = vunpack.c.l.b16 %v233
      %v342 = vunpack.c.l.b16 %v234
      %v343 = vunpack.c.l.b16 %v235
      %v344 = vunpack.c.l.b16 %v236
      %v345 = vunpack.c.l.b16 %v237
      %v346 = vunpack.c.l.b16 %v238
      %v347 = vpack.c.b16 %v330, %v329
      %v348 = vpack.c.b16 %v332, %v331
      %v349 = vpack.c.b16 %v334, %v333
      %v350 = vpack.c.b16 %v336, %v335
      %v351 = vpack.c.b16 %v338, %v337
      %v352 = vpack.c.b16 %v340, %v339
      %v353 = vpack.c.b16 %v342, %v341
      %v354 = vpack.c.b16 %v344, %v343
      %v355 = vpack.c.b16 %v346, %v345
      %vm365 = vcmask 130048
      %v367 = vsel %vm365, %v288, 0
      %v370 = vsel %vm365, %v290, 0
      %v373 = vsel %vm365, %v292, 0
      %v376 = vsel %vm365, %v294, 0
      %v379 = vsel %vm365, %v296, 0
      %v382 = vsel %vm365, %v298, 0
      %v385 = vsel %vm365, %v300, 0
      %v388 = vsel %vm365, %v302, 0
      %390 = vmatprep.subr.bf16.mxu0 0
      %391 = vmatpush1.bf16.msra.mxu0 %v347
      %392 = vmatprep.subr.bf16.mxu0 0
      %393 = vmatpush1.bf16.msra.mxu0 %v348
      %394 = vmatprep.subr.bf16.mxu0 0
      %395 = vmatpush1.bf16.msra.mxu0 %v349
      %396 = vmatprep.subr.bf16.mxu0 0
      %397 = vmatpush1.bf16.msra.mxu0 %v350
      %398 = vmatprep.subr.bf16.mxu0 0
      %399 = vmatpush1.bf16.msra.mxu0 %v351
      %400 = vmatprep.subr.bf16.mxu0 0
      %401 = vmatpush1.bf16.msra.mxu0 %v352
      %402 = vmatprep.subr.bf16.mxu0 0
      %403 = vmatpush1.bf16.msra.mxu0 %v353
      %404 = vmatprep.subr.bf16.mxu0 0
      %405 = vmatpush1.bf16.msra.mxu0 %v354
      %406 = vmatprep.subr.bf16.mxu0 0
      %407 = vmatpush1.bf16.msra.mxu0 %v355
      %408 = vmatprep.subr.bf16.mxu0 0
      %409 = vmatpush1.bf16.msra.mxu0 0
      %410 = vmatprep.subr.bf16.mxu0 0
      %411 = vmatpush1.bf16.msra.mxu0 0
      %412 = vmatprep.subr.bf16.mxu0 0
      %413 = vmatpush1.bf16.msra.mxu0 0
      %414 = vmatprep.subr.bf16.mxu0 0
      %415 = vmatpush1.bf16.msra.mxu0 0
      %416 = vmatprep.subr.bf16.mxu0 0
      %417 = vmatpush1.bf16.msra.mxu0 0
      %418 = vmatprep.subr.bf16.mxu0 0
      %419 = vmatpush1.bf16.msra.mxu0 0
      %420 = vmatprep.subr.bf16.mxu0 0
      %421 = vmatpush1.bf16.msra.mxu0 0
      %422 = vmatprep.mubr.bf16.mxu0 %v367
      %423 = vmatmul.mubr.bf16.gmra.mrb[0].mxu0 %v287
      %v424 = vpop.f32.mrb[0].mxu0
      %v425 = vadd.f32 0.0, %v424
      %v426 = vpop.f32.mrb[0].mxu0
      %v427 = vpop.f32.mrb[0].mxu0
      %v428 = vadd.f32 0.0, %v427
      %v429 = vpop.f32.mrb[0].mxu0
      %430 = vmatprep.mubr.bf16.mxu0 %v370
      %431 = vmatmul.mubr.bf16.gmra.mrb[0].mxu0 %v289
      %v432 = vpop.f32.mrb[0].mxu0
      %v433 = vadd.f32 0.0, %v432
      %v434 = vpop.f32.mrb[0].mxu0
      %v435 = vpop.f32.mrb[0].mxu0
      %v436 = vadd.f32 0.0, %v435
      %v437 = vpop.f32.mrb[0].mxu0
      %438 = vmatprep.mubr.bf16.mxu0 %v373
      %439 = vmatmul.mubr.bf16.gmra.mrb[0].mxu0 %v291
      %v440 = vpop.f32.mrb[0].mxu0
      %v441 = vadd.f32 0.0, %v440
      %v442 = vpop.f32.mrb[0].mxu0
      %v443 = vpop.f32.mrb[0].mxu0
      %v444 = vadd.f32 0.0, %v443
      %v445 = vpop.f32.mrb[0].mxu0
      %446 = vmatprep.mubr.bf16.mxu0 %v376
      %447 = vmatmul.mubr.bf16.gmra.mrb[0].mxu0 %v293
      %v448 = vpop.f32.mrb[0].mxu0
      %v449 = vadd.f32 0.0, %v448
      %v450 = vpop.f32.mrb[0].mxu0
      %v451 = vpop.f32.mrb[0].mxu0
      %v452 = vadd.f32 0.0, %v451
      %v453 = vpop.f32.mrb[0].mxu0
      %454 = vmatprep.mubr.bf16.mxu0 %v379
      %455 = vmatmul.mubr.bf16.gmra.mrb[0].mxu0 %v295
      %v456 = vpop.f32.mrb[0].mxu0
      %v457 = vadd.f32 0.0, %v456
      %v458 = vpop.f32.mrb[0].mxu0
      %v459 = vpop.f32.mrb[0].mxu0
      %v460 = vadd.f32 0.0, %v459
      %v461 = vpop.f32.mrb[0].mxu0
      %462 = vmatprep.mubr.bf16.mxu0 %v382
      %463 = vmatmul.mubr.bf16.gmra.mrb[0].mxu0 %v297
      %v464 = vpop.f32.mrb[0].mxu0
      %v465 = vadd.f32 0.0, %v464
      %v466 = vpop.f32.mrb[0].mxu0
      %v467 = vpop.f32.mrb[0].mxu0
      %v468 = vadd.f32 0.0, %v467
      %v469 = vpop.f32.mrb[0].mxu0
      %470 = vmatprep.mubr.bf16.mxu0 %v385
      %471 = vmatmul.mubr.bf16.gmra.mrb[0].mxu0 %v299
      %v472 = vpop.f32.mrb[0].mxu0
      %v473 = vadd.f32 0.0, %v472
      %v474 = vpop.f32.mrb[0].mxu0
      %v475 = vpop.f32.mrb[0].mxu0
      %v476 = vadd.f32 0.0, %v475
      %v477 = vpop.f32.mrb[0].mxu0
      %478 = vmatprep.mubr.bf16.mxu0 %v388
      %479 = vmatmul.mubr.bf16.gmra.mrb[0].mxu0 %v301
      %v480 = vpop.f32.mrb[0].mxu0
      %v481 = vadd.f32 0.0, %v480
      %v482 = vpop.f32.mrb[0].mxu0
      %v483 = vpop.f32.mrb[0].mxu0
      %v484 = vadd.f32 0.0, %v483
      %v485 = vpop.f32.mrb[0].mxu0
      %486 = vdwg.mxu0
      %v487 = vld [vmem:[%s2] sm:$0x1]
      %v489 = vlaneseq
      %v490 = vshrl.u32 %v489, 7
      %v491 = vsub.s32 0, %v490
      %v492 = vrot.slane %v487, %v491
      %v494 = vmul.f32 %v425, %v492
      %v495 = vmul.f32 %v428, %v492
      %v496 = vmul.f32 %v433, %v492
      %v497 = vmul.f32 %v436, %v492
      %v498 = vmul.f32 %v441, %v492
      %v499 = vmul.f32 %v444, %v492
      %v500 = vmul.f32 %v449, %v492
      %v501 = vmul.f32 %v452, %v492
      %v502 = vmul.f32 %v457, %v492
      %v503 = vmul.f32 %v460, %v492
      %v504 = vmul.f32 %v465, %v492
      %v505 = vmul.f32 %v468, %v492
      %v506 = vmul.f32 %v473, %v492
      %v507 = vmul.f32 %v476, %v492
      %v508 = vmul.f32 %v481, %v492
      %v509 = vmul.f32 %v484, %v492
      %v510 = vld [vmem:[%s3] sm:$0x1]
      %v512 = vlaneseq
      %v513 = vshrl.u32 %v512, 7
      %v514 = vsub.s32 0, %v513
      %v515 = vrot.slane %v510, %v514
      %v517 = vadd.f32 %v494, %v515
      %v518 = vadd.f32 %v495, %v515
      %v519 = vadd.f32 %v496, %v515
      %v520 = vadd.f32 %v497, %v515
      %v521 = vadd.f32 %v498, %v515
      %v522 = vadd.f32 %v499, %v515
      %v523 = vadd.f32 %v500, %v515
      %v524 = vadd.f32 %v501, %v515
      %v525 = vadd.f32 %v502, %v515
      %v526 = vadd.f32 %v503, %v515
      %v527 = vadd.f32 %v504, %v515
      %v528 = vadd.f32 %v505, %v515
      %v529 = vadd.f32 %v506, %v515
      %v530 = vadd.f32 %v507, %v515
      %v531 = vadd.f32 %v508, %v515
      %v532 = vadd.f32 %v509, %v515
      %v533 = vmax.f32 %v517, 0.0
      %v534 = vmax.f32 %v518, 0.0
      %v535 = vmax.f32 %v519, 0.0
      %v536 = vmax.f32 %v520, 0.0
      %v537 = vmax.f32 %v521, 0.0
      %v538 = vmax.f32 %v522, 0.0
      %v539 = vmax.f32 %v523, 0.0
      %v540 = vmax.f32 %v524, 0.0
      %v541 = vmax.f32 %v525, 0.0
      %v542 = vmax.f32 %v526, 0.0
      %v543 = vmax.f32 %v527, 0.0
      %v544 = vmax.f32 %v528, 0.0
      %v545 = vmax.f32 %v529, 0.0
      %v546 = vmax.f32 %v530, 0.0
      %v547 = vmax.f32 %v531, 0.0
      %v548 = vmax.f32 %v532, 0.0
      %549 = vst [vmem:[%s202] sm:$0xff] %v533
      %550 = vst [vmem:[%s202 + $0x8] sm:$0xff] %v534
      %551 = vst [vmem:[%s202 + $0x10] sm:$0xff] %v535
      %552 = vst [vmem:[%s202 + $0x18] sm:$0xff] %v536
      %553 = vst [vmem:[%s202 + $0x20] sm:$0xff] %v537
      %554 = vst [vmem:[%s202 + $0x28] sm:$0xff] %v538
      %555 = vst [vmem:[%s202 + $0x30] sm:$0xff] %v539
      %556 = vst [vmem:[%s202 + $0x38] sm:$0xff] %v540
      %557 = vst [vmem:[%s202 + $0x40] sm:$0xff] %v541
      %558 = vst [vmem:[%s202 + $0x48] sm:$0xff] %v542
      %559 = vst [vmem:[%s202 + $0x50] sm:$0xff] %v543
      %560 = vst [vmem:[%s202 + $0x58] sm:$0xff] %v544
      %561 = vst [vmem:[%s202 + $0x60] sm:$0xff] %v545
      %562 = vst [vmem:[%s202 + $0x68] sm:$0xff] %v546
      %563 = vst [vmem:[%s202 + $0x70] sm:$0xff] %v547
      %564 = vst [vmem:[%s202 + $0x78] sm:$0xff] %v548
      %s565 = smul.u32 16, %s15
      %p566 = scmp.lt.s32.totalorder %s565, 31
      %s567 = scalar_select %p566, %s565, 31
      %s568 = smul.addr %s567, 8
      %s569 = scalar_lea.vmem %s4, %s568
      // Predicated region
      $region37: #{_lambda_.25} parent=35 // pred_check
        %p570 = pneg %p122
      $region38: #{_lambda_.25} parent=35 // pred_check_branch
        %572 = sbr.rel (%p570) target = $region40
      $region39: #{_lambda_.25} parent=35 // pred_region
        %s573 = smul.u32 16, %s15
      $region40: #{_lambda_.25} parent=35 // pred_fallthru
        _
    $region36: #{_lambda_.25} parent=5 // pred_fallthru
      _
    %p574 = scmp.le.s32.totalorder 2, %s10
    // Predicated region
    $region41: #{_lambda_.25} parent=5 // pred_check
      %p575 = pneg %p574
    $region42: #{_lambda_.25} parent=5 // pred_check_branch
      %577 = sbr.rel (%p575) target = $region44
    $region43: #{_lambda_.25} parent=5 // pred_region
      %s578 = ssub.s32 %s10, 2
      // Predicated region
      $region45: #{_lambda_.25} parent=43 // pred_check
        %p579 = pneg %p128
      $region46: #{_lambda_.25} parent=43 // pred_check_branch
        %581 = sbr.rel (%p579) target = $region48
      $region47: #{_lambda_.25} parent=43 // pred_region
        %s582 = smul.u32 16, %s16
        %p583 = scmp.lt.s32.totalorder %s582, 31
        %s584 = scalar_select %p583, %s582, 31
        %s585 = smul.addr %s584, 8
        %s586 = scalar_lea.vmem %s4, %s585
      $region48: #{_lambda_.25} parent=43 // pred_fallthru
        _
    $region44: #{_lambda_.25} parent=5 // pred_fallthru
      _
  $region6: #{_lambda_.25} parent=0 // loop_footer
    %s14 = sadd.s32 1, %s10
  $region7: #{_lambda_.25} parent=0 // loop_footer_branch
    %9 = sbr.rel target = $region3
  $region8: #{_lambda_.25} parent=0 // loop_exit
    _

// kernel: _lambda_.26
$region0: #{_lambda_.26}
  #allocation0 [shape = 'u32[]', space=smem, size = 0x4, offset = 0x4, fixed_abs, tag = 'smem constant byte address 0x4 - core index']
  #allocation1 [shape = 'u32[144,128]{1,0:T(1,128)}', space=vmem, size = 0x12000, scoped, tag = 'internal scratch']
  %s0 = inlined_call_operand.vmem [shape: bf16[256,144], index: 0, kind: input, shape index: {}]
  %s1 = inlined_call_operand.vmem [shape: bf16[144,128], index: 1, kind: input, shape index: {}]
  %s2 = inlined_call_operand.vmem [shape: f32[1,128], index: 2, kind: input, shape index: {}]
  %s3 = inlined_call_operand.vmem [shape: f32[1,128], index: 3, kind: input, shape index: {}]
  %s4 = inlined_call_operand.vmem [shape: f32[256,128], index: 4, kind: input, shape index: {}]
  %s5 = inlined_call_operand.vmem [shape: f32[256,128], index: 5, kind: output, shape index: {}]
  %s6 = sld [smem:[#allocation0]]
  $region53: #{_lambda_.26} parent=0
    _
  %s8 = ssub.s32 1, %s6
  %s9 = scalar_select 0, %s8, %s6
  loop: start=0, step=1, limit=4
  $region2: #{_lambda_.26} parent=0 // loop_pre_header
    _
  $region3: #{_lambda_.26} parent=0 // loop_header
    %s11 = sphi 0, %s15
    %p12 = scmp.ge.s32.totalorder %s11, 4
    %s21 = sphi 0, %s23
    %s24 = sphi 0, %s21
    %s25 = sphi 0, %s24
    %s41 = sphi 0, %s25
    %s45 = sphi 0, %s45
    %s47 = sphi 0, %s45
    %s48 = sphi 0, %s47
    %s62 = sphi 0, %s48
    %s66 = sphi 0, %s66
    %s68 = sphi 0, %s66
    %s69 = sphi 0, %s68
    %s83 = sphi 0, %s69
    %s87 = sphi 0, %s87
    %s89 = sphi 0, %s87
    %s90 = sphi 0, %s89
    %s104 = sphi 0, %s90
    %s110 = sphi 0, %s112
    %s113 = sphi 0, %s110
    %s114 = sphi 0, %s113
    %s130 = sphi 0, %s114
    %s136 = sphi 0, %s138
    %s139 = sphi 0, %s136
    %s140 = sphi 0, %s139
    %s156 = sphi 0, %s140
  $region4: #{_lambda_.26} parent=0 // loop_header_branch
    %14 = sbr.rel (%p12) target = $region8
  $region5: #{_lambda_.26} parent=0 // loop_body
    %s16 = ssub.s32 %s11, 1
    %s17 = ssub.s32 %s11, 2
    %s18 = sadd.s32 %s11, 1
    %s19 = ssub.s32 %s11, %s18
    %p20 = scmp.eq.s32.totalorder %s19, 0
    %s22 = sadd.s32 %s21, 1
    %s23 = scalar_select %p20, %s21, %s22
    %p26 = pneg %p20
    %p27 = scmp.eq.s32.totalorder %s11, 1
    %p28 = por %p26, %p27
    %p29 = scmp.ne.s32.totalorder %s21, %s24
    %p30 = scmp.eq.s32.totalorder %s11, 0
    %p31 = por %p29, %p30
    %p32 = scmp.ne.s32.totalorder %s21, %s24
    %p33 = scmp.eq.s32.totalorder %s16, 1
    %p34 = por %p32, %p33
    %p35 = scmp.ne.s32.totalorder %s24, %s25
    %p36 = scmp.eq.s32.totalorder %s16, 0
    %p37 = por %p35, %p36
    %p38 = scmp.ne.s32.totalorder %s24, %s25
    %p39 = scmp.eq.s32.totalorder %s17, 1
    %p40 = por %p38, %p39
    %p42 = scmp.ne.s32.totalorder %s25, %s41
    %p43 = scmp.eq.s32.totalorder %s17, 0
    %p44 = por %p42, %p43
    %s46 = sadd.s32 %s45, 1
    %p49 = scmp.eq.s32.totalorder %s11, 1
    %p50 = scmp.ne.s32.totalorder %s45, %s47
    %p51 = scmp.eq.s32.totalorder %s11, 0
    %p52 = por %p50, %p51
    %p53 = scmp.ne.s32.totalorder %s45, %s47
    %p54 = scmp.eq.s32.totalorder %s16, 1
    %p55 = por %p53, %p54
    %p56 = scmp.ne.s32.totalorder %s47, %s48
    %p57 = scmp.eq.s32.totalorder %s16, 0
    %p58 = por %p56, %p57
    %p59 = scmp.ne.s32.totalorder %s47, %s48
    %p60 = scmp.eq.s32.totalorder %s17, 1
    %p61 = por %p59, %p60
    %p63 = scmp.ne.s32.totalorder %s48, %s62
    %p64 = scmp.eq.s32.totalorder %s17, 0
    %p65 = por %p63, %p64
    %s67 = sadd.s32 %s66, 1
    %p70 = scmp.eq.s32.totalorder %s11, 1
    %p71 = scmp.ne.s32.totalorder %s66, %s68
    %p72 = scmp.eq.s32.totalorder %s11, 0
    %p73 = por %p71, %p72
    %p74 = scmp.ne.s32.totalorder %s66, %s68
    %p75 = scmp.eq.s32.totalorder %s16, 1
    %p76 = por %p74, %p75
    %p77 = scmp.ne.s32.totalorder %s68, %s69
    %p78 = scmp.eq.s32.totalorder %s16, 0
    %p79 = por %p77, %p78
    %p80 = scmp.ne.s32.totalorder %s68, %s69
    %p81 = scmp.eq.s32.totalorder %s17, 1
    %p82 = por %p80, %p81
    %p84 = scmp.ne.s32.totalorder %s69, %s83
    %p85 = scmp.eq.s32.totalorder %s17, 0
    %p86 = por %p84, %p85
    %s88 = sadd.s32 %s87, 1
    %p91 = scmp.eq.s32.totalorder %s11, 1
    %p92 = scmp.ne.s32.totalorder %s87, %s89
    %p93 = scmp.eq.s32.totalorder %s11, 0
    %p94 = por %p92, %p93
    %p95 = scmp.ne.s32.totalorder %s87, %s89
    %p96 = scmp.eq.s32.totalorder %s16, 1
    %p97 = por %p95, %p96
    %p98 = scmp.ne.s32.totalorder %s89, %s90
    %p99 = scmp.eq.s32.totalorder %s16, 0
    %p100 = por %p98, %p99
    %p101 = scmp.ne.s32.totalorder %s89, %s90
    %p102 = scmp.eq.s32.totalorder %s17, 1
    %p103 = por %p101, %p102
    %p105 = scmp.ne.s32.totalorder %s90, %s104
    %p106 = scmp.eq.s32.totalorder %s17, 0
    %p107 = por %p105, %p106
    %s108 = ssub.s32 %s11, %s18
    %p109 = scmp.eq.s32.totalorder %s108, 0
    %s111 = sadd.s32 %s110, 1
    %s112 = scalar_select %p109, %s110, %s111
    %p115 = pneg %p109
    %p116 = scmp.eq.s32.totalorder %s11, 1
    %p117 = por %p115, %p116
    %p118 = scmp.ne.s32.totalorder %s110, %s113
    %p119 = scmp.eq.s32.totalorder %s11, 0
    %p120 = por %p118, %p119
    %p121 = scmp.ne.s32.totalorder %s110, %s113
    %p122 = scmp.eq.s32.totalorder %s16, 1
    %p123 = por %p121, %p122
    %p124 = scmp.ne.s32.totalorder %s113, %s114
    %p125 = scmp.eq.s32.totalorder %s16, 0
    %p126 = por %p124, %p125
    %p127 = scmp.ne.s32.totalorder %s113, %s114
    %p128 = scmp.eq.s32.totalorder %s17, 1
    %p129 = por %p127, %p128
    %p131 = scmp.ne.s32.totalorder %s114, %s130
    %p132 = scmp.eq.s32.totalorder %s17, 0
    %p133 = por %p131, %p132
    %s134 = ssub.s32 %s11, %s18
    %p135 = scmp.eq.s32.totalorder %s134, 0
    %s137 = sadd.s32 %s136, 1
    %s138 = scalar_select %p135, %s136, %s137
    %p141 = pneg %p135
    %p142 = scmp.eq.s32.totalorder %s11, 1
    %p143 = por %p141, %p142
    %p144 = scmp.ne.s32.totalorder %s136, %s139
    %p145 = scmp.eq.s32.totalorder %s11, 0
    %p146 = por %p144, %p145
    %p147 = scmp.ne.s32.totalorder %s136, %s139
    %p148 = scmp.eq.s32.totalorder %s16, 1
    %p149 = por %p147, %p148
    %p150 = scmp.ne.s32.totalorder %s139, %s140
    %p151 = scmp.eq.s32.totalorder %s16, 0
    %p152 = por %p150, %p151
    %p153 = scmp.ne.s32.totalorder %s139, %s140
    %p154 = scmp.eq.s32.totalorder %s17, 1
    %p155 = por %p153, %p154
    %p157 = scmp.ne.s32.totalorder %s140, %s156
    %p158 = scmp.eq.s32.totalorder %s17, 0
    %p159 = por %p157, %p158
    %p160 = scmp.le.s32.totalorder 1, %s11
    %p161 = scmp.lt.s32.totalorder %s11, 3
    %p162 = pnand %p160, %p161
    %p163 = pneg %p162
    // Predicated region
    $region9: #{_lambda_.26} parent=5 // pred_check
      _
    $region10: #{_lambda_.26} parent=5 // pred_check_branch
      %165 = sbr.rel (%p162) target = $region12
    $region11: #{_lambda_.26} parent=5 // pred_region
      %s166 = ssub.s32 %s11, 1
      // Predicated region
      $region13: #{_lambda_.26} parent=11 // pred_check
        %p167 = pneg %p58
      $region14: #{_lambda_.26} parent=11 // pred_check_branch
        %169 = sbr.rel (%p167) target = $region16
      $region15: #{_lambda_.26} parent=11 // pred_region
        _
      $region16: #{_lambda_.26} parent=11 // pred_fallthru
        _
      // Predicated region
      $region17: #{_lambda_.26} parent=11 // pred_check
        %p170 = pneg %p79
      $region18: #{_lambda_.26} parent=11 // pred_check_branch
        %172 = sbr.rel (%p170) target = $region20
      $region19: #{_lambda_.26} parent=11 // pred_region
        _
      $region20: #{_lambda_.26} parent=11 // pred_fallthru
        _
      // Predicated region
      $region21: #{_lambda_.26} parent=11 // pred_check
        %p173 = pneg %p100
      $region22: #{_lambda_.26} parent=11 // pred_check_branch
        %175 = sbr.rel (%p173) target = $region24
      $region23: #{_lambda_.26} parent=11 // pred_region
        _
      $region24: #{_lambda_.26} parent=11 // pred_fallthru
        _
    $region12: #{_lambda_.26} parent=5 // pred_fallthru
      _
    %p176 = scmp.lt.s32.totalorder %s11, 2
    // Predicated region
    $region25: #{_lambda_.26} parent=5 // pred_check
      %p177 = pneg %p176
    $region26: #{_lambda_.26} parent=5 // pred_check_branch
      %179 = sbr.rel (%p177) target = $region28
    $region27: #{_lambda_.26} parent=5 // pred_region
      // Predicated region
      $region29: #{_lambda_.26} parent=27 // pred_check
        %p180 = pneg %p31
      $region30: #{_lambda_.26} parent=27 // pred_check_branch
        %182 = sbr.rel (%p180) target = $region32
      $region31: #{_lambda_.26} parent=27 // pred_region
        %s183 = smul.u32 16, %s11
        %p184 = scmp.lt.s32.totalorder %s183, 31
        %s185 = scalar_select %p184, %s183, 31
        %s186 = smul.addr %s185, 2
        %s187 = smul.addr %s186, 4
        %s188 = scalar_lea.vmem %s0, %s187
        %s189 = smul.u32 16, %s11
      $region32: #{_lambda_.26} parent=27 // pred_fallthru
        _
      // Predicated region
      $region33: #{_lambda_.26} parent=27 // pred_check
        %p190 = pneg %p120
      $region34: #{_lambda_.26} parent=27 // pred_check_branch
        %192 = sbr.rel (%p190) target = $region36
      $region35: #{_lambda_.26} parent=27 // pred_region
        %s193 = smul.u32 16, %s11
        %p194 = scmp.lt.s32.totalorder %s193, 31
        %s195 = scalar_select %p194, %s193, 31
        %s196 = smul.addr %s195, 8
        %s197 = scalar_lea.vmem %s4, %s196
        %s198 = smul.u32 16, %s11
      $region36: #{_lambda_.26} parent=27 // pred_fallthru
        _
    $region28: #{_lambda_.26} parent=5 // pred_fallthru
      _
    %p199 = scmp.le.s32.totalorder 1, %s11
    %p200 = scmp.lt.s32.totalorder %s11, 3
    %p201 = pnand %p199, %p200
    %p202 = pneg %p201
    // Predicated region
    $region37: #{_lambda_.26} parent=5 // pred_check
      _
    $region38: #{_lambda_.26} parent=5 // pred_check_branch
      %204 = sbr.rel (%p201) target = $region40
    $region39: #{_lambda_.26} parent=5 // pred_region
      %s205 = ssub.s32 %s11, 1
      %s206 = smul.u32 16, %s16
      %p207 = scmp.lt.s32.totalorder %s206, 31
      %s208 = scalar_select %p207, %s206, 31
      %s209 = smul.addr %s208, 2
      %s210 = smul.addr %s209, 4
      %s211 = scalar_lea.vmem %s0, %s210
      %p212 = pneg %p37
      %p213 = pneg %p34
      %p214 = pneg %p58
      %p215 = pneg %p55
      %p216 = pneg %p79
      %p217 = pneg %p76
      %p218 = pneg %p100
      %p219 = pneg %p97
      %s220 = smul.u32 16, %s16
      %p221 = scmp.lt.s32.totalorder %s220, 31
      %s222 = scalar_select %p221, %s220, 31
      %s223 = smul.addr %s222, 8
      %s224 = scalar_lea.vmem %s4, %s223
      %p225 = pneg %p126
      %p226 = pneg %p123
      %p227 = pneg %p152
      %p228 = pneg %p149
      %s229 = smul.u32 16, %s16
      %p230 = scmp.lt.s32.totalorder %s229, 31
      %s231 = scalar_select %p230, %s229, 31
      %s232 = smul.addr %s231, 8
      %s233 = scalar_lea.vmem %s5, %s232
      %s234 = smul.u32 16, %s16
      %p235 = scmp.lt.s32.totalorder %s234, 31
      %s236 = scalar_select %p235, %s234, 31
      %s237 = smul.addr %s236, 2
      %s238 = smul.addr %s237, 4
      %s239 = scalar_lea.vmem %s0, %s238
      %s240 = smul.u32 16, %s16
      %s241 = smul.u32 16, %s16
      %p242 = scmp.lt.s32.totalorder %s241, 31
      %s243 = scalar_select %p242, %s241, 31
      %s244 = smul.addr %s243, 8
      %s245 = scalar_lea.vmem %s4, %s244
      %s246 = smul.u32 16, %s16
      %s247 = smul.u32 16, %s16
      %p248 = scmp.lt.s32.totalorder %s247, 31
      %s249 = scalar_select %p248, %s247, 31
      %s250 = smul.addr %s249, 8
      %s251 = scalar_lea.vmem %s5, %s250
      %s252 = smul.u32 16, %s16
      %v254 = vld [vmem:[%s239] sm:$0xff]
      %v255 = vld [vmem:[%s239 + $0x8] sm:$0xff]
      %v256 = vld [vmem:[%s239 + $0x10] sm:$0xff]
      %v257 = vld [vmem:[%s239 + $0x18] sm:$0xff]
      %v258 = vld [vmem:[%s239 + $0x20] sm:$0xff]
      %v259 = vld [vmem:[%s239 + $0x28] sm:$0xff]
      %v260 = vld [vmem:[%s239 + $0x30] sm:$0xff]
      %v261 = vld [vmem:[%s239 + $0x38] sm:$0xff]
      %v262 = vld [vmem:[%s239 + $0x40] sm:$0xff]
      %v263 = vld [vmem:[%s239 + $0x48] sm:$0xff]
      %v264 = vld [vmem:[%s239 + $0x50] sm:$0xff]
      %v265 = vld [vmem:[%s239 + $0x58] sm:$0xff]
      %v266 = vld [vmem:[%s239 + $0x60] sm:$0xff]
      %v267 = vld [vmem:[%s239 + $0x68] sm:$0xff]
      %v268 = vld [vmem:[%s239 + $0x70] sm:$0xff]
      %v269 = vld [vmem:[%s239 + $0x78] sm:$0xff]
      %v270 = vld [vmem:[%s1] sm:$0xf]
      %v271 = vld [vmem:[%s1 + $0x4] sm:$0xf]
      %v272 = vld [vmem:[%s1 + $0x8] sm:$0xf]
      %v273 = vld [vmem:[%s1 + $0xc] sm:$0xf]
      %v274 = vld [vmem:[%s1 + $0x10] sm:$0xf]
      %v275 = vld [vmem:[%s1 + $0x14] sm:$0xf]
      %v276 = vld [vmem:[%s1 + $0x18] sm:$0xf]
      %v277 = vld [vmem:[%s1 + $0x1c] sm:$0xf]
      %v278 = vld [vmem:[%s1 + $0x20] sm:$0xf]
      %v279 = vld [vmem:[%s1 + $0x24] sm:$0xf]
      %v280 = vld [vmem:[%s1 + $0x28] sm:$0xf]
      %v281 = vld [vmem:[%s1 + $0x2c] sm:$0xf]
      %v282 = vld [vmem:[%s1 + $0x30] sm:$0xf]
      %v283 = vld [vmem:[%s1 + $0x34] sm:$0xf]
      %v284 = vld [vmem:[%s1 + $0x38] sm:$0xf]
      %v285 = vld [vmem:[%s1 + $0x3c] sm:$0xf]
      %v286 = vld [vmem:[%s1 + $0x40] sm:$0xf]
      %v287 = vld [vmem:[%s1 + $0x44] sm:$0xf]
      %v304 = vunpack.c.l.b16 %v254
      %v305 = vunpack.c.h.b16 %v254
      %v306 = vunpack.c.l.b16 %v255
      %v307 = vunpack.c.h.b16 %v255
      %v308 = vunpack.c.l.b16 %v256
      %v309 = vunpack.c.h.b16 %v256
      %v310 = vunpack.c.l.b16 %v257
      %v311 = vunpack.c.h.b16 %v257
      %v312 = vunpack.c.l.b16 %v258
      %v313 = vunpack.c.h.b16 %v258
      %v314 = vunpack.c.l.b16 %v259
      %v315 = vunpack.c.h.b16 %v259
      %v316 = vunpack.c.l.b16 %v260
      %v317 = vunpack.c.h.b16 %v260
      %v318 = vunpack.c.l.b16 %v261
      %v319 = vunpack.c.h.b16 %v261
      %v320 = vunpack.c.l.b16 %v262
      %v321 = vunpack.c.h.b16 %v262
      %v322 = vunpack.c.l.b16 %v263
      %v323 = vunpack.c.h.b16 %v263
      %v324 = vunpack.c.l.b16 %v264
      %v325 = vunpack.c.h.b16 %v264
      %v326 = vunpack.c.l.b16 %v265
      %v327 = vunpack.c.h.b16 %v265
      %v328 = vunpack.c.l.b16 %v266
      %v329 = vunpack.c.h.b16 %v266
      %v330 = vunpack.c.l.b16 %v267
      %v331 = vunpack.c.h.b16 %v267
      %v332 = vunpack.c.l.b16 %v268
      %v333 = vunpack.c.h.b16 %v268
      %v334 = vunpack.c.l.b16 %v269
      %v335 = vunpack.c.h.b16 %v269
      %v336 = vpack.c.b16 %v306, %v304
      %v337 = vpack.c.b16 %v307, %v305
      %v338 = vpack.c.b16 %v310, %v308
      %v339 = vpack.c.b16 %v311, %v309
      %v340 = vpack.c.b16 %v314, %v312
      %v341 = vpack.c.b16 %v315, %v313
      %v342 = vpack.c.b16 %v318, %v316
      %v343 = vpack.c.b16 %v319, %v317
      %v344 = vpack.c.b16 %v322, %v320
      %v345 = vpack.c.b16 %v323, %v321
      %v346 = vpack.c.b16 %v326, %v324
      %v347 = vpack.c.b16 %v327, %v325
      %v348 = vpack.c.b16 %v330, %v328
      %v349 = vpack.c.b16 %v331, %v329
      %v350 = vpack.c.b16 %v334, %v332
      %v351 = vpack.c.b16 %v335, %v333
      %v378 = vunpack.c.l.b16 %v270
      %v379 = vunpack.c.l.b16 %v271
      %v380 = vunpack.c.l.b16 %v272
      %v381 = vunpack.c.l.b16 %v273
      %v382 = vunpack.c.l.b16 %v274
      %v383 = vunpack.c.l.b16 %v275
      %v384 = vunpack.c.l.b16 %v276
      %v385 = vunpack.c.l.b16 %v277
      %v386 = vunpack.c.l.b16 %v278
      %v387 = vunpack.c.l.b16 %v279
      %v388 = vunpack.c.l.b16 %v280
      %v389 = vunpack.c.l.b16 %v281
      %v390 = vunpack.c.l.b16 %v282
      %v391 = vunpack.c.l.b16 %v283
      %v392 = vunpack.c.l.b16 %v284
      %v393 = vunpack.c.l.b16 %v285
      %v394 = vunpack.c.l.b16 %v286
      %v395 = vunpack.c.l.b16 %v287
      %v396 = vpack.c.b16 %v379, %v378
      %v397 = vpack.c.b16 %v381, %v380
      %v398 = vpack.c.b16 %v383, %v382
      %v399 = vpack.c.b16 %v385, %v384
      %v400 = vpack.c.b16 %v387, %v386
      %v401 = vpack.c.b16 %v389, %v388
      %v402 = vpack.c.b16 %v391, %v390
      %v403 = vpack.c.b16 %v393, %v392
      %v404 = vpack.c.b16 %v395, %v394
      %vm414 = vcmask 130048
      %v416 = vsel %vm414, %v337, 0
      %v419 = vsel %vm414, %v339, 0
      %v422 = vsel %vm414, %v341, 0
      %v425 = vsel %vm414, %v343, 0
      %v428 = vsel %vm414, %v345, 0
      %v431 = vsel %vm414, %v347, 0
      %v434 = vsel %vm414, %v349, 0
      %v437 = vsel %vm414, %v351, 0
      %439 = vmatprep.subr.bf16.mxu0 0
      %440 = vmatpush1.bf16.msra.mxu0 %v396
      %441 = vmatprep.subr.bf16.mxu0 0
      %442 = vmatpush1.bf16.msra.mxu0 %v397
      %443 = vmatprep.subr.bf16.mxu0 0
      %444 = vmatpush1.bf16.msra.mxu0 %v398
      %445 = vmatprep.subr.bf16.mxu0 0
      %446 = vmatpush1.bf16.msra.mxu0 %v399
      %447 = vmatprep.subr.bf16.mxu0 0
      %448 = vmatpush1.bf16.msra.mxu0 %v400
      %449 = vmatprep.subr.bf16.mxu0 0
      %450 = vmatpush1.bf16.msra.mxu0 %v401
      %451 = vmatprep.subr.bf16.mxu0 0
      %452 = vmatpush1.bf16.msra.mxu0 %v402
      %453 = vmatprep.subr.bf16.mxu0 0
      %454 = vmatpush1.bf16.msra.mxu0 %v403
      %455 = vmatprep.subr.bf16.mxu0 0
      %456 = vmatpush1.bf16.msra.mxu0 %v404
      %457 = vmatprep.subr.bf16.mxu0 0
      %458 = vmatpush1.bf16.msra.mxu0 0
      %459 = vmatprep.subr.bf16.mxu0 0
      %460 = vmatpush1.bf16.msra.mxu0 0
      %461 = vmatprep.subr.bf16.mxu0 0
      %462 = vmatpush1.bf16.msra.mxu0 0
      %463 = vmatprep.subr.bf16.mxu0 0
      %464 = vmatpush1.bf16.msra.mxu0 0
      %465 = vmatprep.subr.bf16.mxu0 0
      %466 = vmatpush1.bf16.msra.mxu0 0
      %467 = vmatprep.subr.bf16.mxu0 0
      %468 = vmatpush1.bf16.msra.mxu0 0
      %469 = vmatprep.subr.bf16.mxu0 0
      %470 = vmatpush1.bf16.msra.mxu0 0
      %471 = vmatprep.mubr.bf16.mxu0 %v416
      %472 = vmatmul.mubr.bf16.gmra.mrb[0].mxu0 %v336
      %v473 = vpop.f32.mrb[0].mxu0
      %v474 = vadd.f32 0.0, %v473
      %v475 = vpop.f32.mrb[0].mxu0
      %v476 = vpop.f32.mrb[0].mxu0
      %v477 = vadd.f32 0.0, %v476
      %v478 = vpop.f32.mrb[0].mxu0
      %479 = vmatprep.mubr.bf16.mxu0 %v419
      %480 = vmatmul.mubr.bf16.gmra.mrb[0].mxu0 %v338
      %v481 = vpop.f32.mrb[0].mxu0
      %v482 = vadd.f32 0.0, %v481
      %v483 = vpop.f32.mrb[0].mxu0
      %v484 = vpop.f32.mrb[0].mxu0
      %v485 = vadd.f32 0.0, %v484
      %v486 = vpop.f32.mrb[0].mxu0
      %487 = vmatprep.mubr.bf16.mxu0 %v422
      %488 = vmatmul.mubr.bf16.gmra.mrb[0].mxu0 %v340
      %v489 = vpop.f32.mrb[0].mxu0
      %v490 = vadd.f32 0.0, %v489
      %v491 = vpop.f32.mrb[0].mxu0
      %v492 = vpop.f32.mrb[0].mxu0
      %v493 = vadd.f32 0.0, %v492
      %v494 = vpop.f32.mrb[0].mxu0
      %495 = vmatprep.mubr.bf16.mxu0 %v425
      %496 = vmatmul.mubr.bf16.gmra.mrb[0].mxu0 %v342
      %v497 = vpop.f32.mrb[0].mxu0
      %v498 = vadd.f32 0.0, %v497
      %v499 = vpop.f32.mrb[0].mxu0
      %v500 = vpop.f32.mrb[0].mxu0
      %v501 = vadd.f32 0.0, %v500
      %v502 = vpop.f32.mrb[0].mxu0
      %503 = vmatprep.mubr.bf16.mxu0 %v428
      %504 = vmatmul.mubr.bf16.gmra.mrb[0].mxu0 %v344
      %v505 = vpop.f32.mrb[0].mxu0
      %v506 = vadd.f32 0.0, %v505
      %v507 = vpop.f32.mrb[0].mxu0
      %v508 = vpop.f32.mrb[0].mxu0
      %v509 = vadd.f32 0.0, %v508
      %v510 = vpop.f32.mrb[0].mxu0
      %511 = vmatprep.mubr.bf16.mxu0 %v431
      %512 = vmatmul.mubr.bf16.gmra.mrb[0].mxu0 %v346
      %v513 = vpop.f32.mrb[0].mxu0
      %v514 = vadd.f32 0.0, %v513
      %v515 = vpop.f32.mrb[0].mxu0
      %v516 = vpop.f32.mrb[0].mxu0
      %v517 = vadd.f32 0.0, %v516
      %v518 = vpop.f32.mrb[0].mxu0
      %519 = vmatprep.mubr.bf16.mxu0 %v434
      %520 = vmatmul.mubr.bf16.gmra.mrb[0].mxu0 %v348
      %v521 = vpop.f32.mrb[0].mxu0
      %v522 = vadd.f32 0.0, %v521
      %v523 = vpop.f32.mrb[0].mxu0
      %v524 = vpop.f32.mrb[0].mxu0
      %v525 = vadd.f32 0.0, %v524
      %v526 = vpop.f32.mrb[0].mxu0
      %527 = vmatprep.mubr.bf16.mxu0 %v437
      %528 = vmatmul.mubr.bf16.gmra.mrb[0].mxu0 %v350
      %v529 = vpop.f32.mrb[0].mxu0
      %v530 = vadd.f32 0.0, %v529
      %v531 = vpop.f32.mrb[0].mxu0
      %v532 = vpop.f32.mrb[0].mxu0
      %v533 = vadd.f32 0.0, %v532
      %v534 = vpop.f32.mrb[0].mxu0
      %535 = vdwg.mxu0
      %v536 = vld [vmem:[%s2] sm:$0x1]
      %v538 = vlaneseq
      %v539 = vshrl.u32 %v538, 7
      %v540 = vsub.s32 0, %v539
      %v541 = vrot.slane %v536, %v540
      %v543 = vmul.f32 %v474, %v541
      %v544 = vmul.f32 %v477, %v541
      %v545 = vmul.f32 %v482, %v541
      %v546 = vmul.f32 %v485, %v541
      %v547 = vmul.f32 %v490, %v541
      %v548 = vmul.f32 %v493, %v541
      %v549 = vmul.f32 %v498, %v541
      %v550 = vmul.f32 %v501, %v541
      %v551 = vmul.f32 %v506, %v541
      %v552 = vmul.f32 %v509, %v541
      %v553 = vmul.f32 %v514, %v541
      %v554 = vmul.f32 %v517, %v541
      %v555 = vmul.f32 %v522, %v541
      %v556 = vmul.f32 %v525, %v541
      %v557 = vmul.f32 %v530, %v541
      %v558 = vmul.f32 %v533, %v541
      %v559 = vld [vmem:[%s3] sm:$0x1]
      %v561 = vlaneseq
      %v562 = vshrl.u32 %v561, 7
      %v563 = vsub.s32 0, %v562
      %v564 = vrot.slane %v559, %v563
      %v566 = vadd.f32 %v543, %v564
      %v567 = vadd.f32 %v544, %v564
      %v568 = vadd.f32 %v545, %v564
      %v569 = vadd.f32 %v546, %v564
      %v570 = vadd.f32 %v547, %v564
      %v571 = vadd.f32 %v548, %v564
      %v572 = vadd.f32 %v549, %v564
      %v573 = vadd.f32 %v550, %v564
      %v574 = vadd.f32 %v551, %v564
      %v575 = vadd.f32 %v552, %v564
      %v576 = vadd.f32 %v553, %v564
      %v577 = vadd.f32 %v554, %v564
      %v578 = vadd.f32 %v555, %v564
      %v579 = vadd.f32 %v556, %v564
      %v580 = vadd.f32 %v557, %v564
      %v581 = vadd.f32 %v558, %v564
      %v582 = vld [vmem:[%s245] sm:$0xff]
      %v583 = vld [vmem:[%s245 + $0x8] sm:$0xff]
      %v584 = vld [vmem:[%s245 + $0x10] sm:$0xff]
      %v585 = vld [vmem:[%s245 + $0x18] sm:$0xff]
      %v586 = vld [vmem:[%s245 + $0x20] sm:$0xff]
      %v587 = vld [vmem:[%s245 + $0x28] sm:$0xff]
      %v588 = vld [vmem:[%s245 + $0x30] sm:$0xff]
      %v589 = vld [vmem:[%s245 + $0x38] sm:$0xff]
      %v590 = vld [vmem:[%s245 + $0x40] sm:$0xff]
      %v591 = vld [vmem:[%s245 + $0x48] sm:$0xff]
      %v592 = vld [vmem:[%s245 + $0x50] sm:$0xff]
      %v593 = vld [vmem:[%s245 + $0x58] sm:$0xff]
      %v594 = vld [vmem:[%s245 + $0x60] sm:$0xff]
      %v595 = vld [vmem:[%s245 + $0x68] sm:$0xff]
      %v596 = vld [vmem:[%s245 + $0x70] sm:$0xff]
      %v597 = vld [vmem:[%s245 + $0x78] sm:$0xff]
      %v598 = vadd.f32 %v566, %v582
      %v599 = vadd.f32 %v567, %v583
      %v600 = vadd.f32 %v568, %v584
      %v601 = vadd.f32 %v569, %v585
      %v602 = vadd.f32 %v570, %v586
      %v603 = vadd.f32 %v571, %v587
      %v604 = vadd.f32 %v572, %v588
      %v605 = vadd.f32 %v573, %v589
      %v606 = vadd.f32 %v574, %v590
      %v607 = vadd.f32 %v575, %v591
      %v608 = vadd.f32 %v576, %v592
      %v609 = vadd.f32 %v577, %v593
      %v610 = vadd.f32 %v578, %v594
      %v611 = vadd.f32 %v579, %v595
      %v612 = vadd.f32 %v580, %v596
      %v613 = vadd.f32 %v581, %v597
      %v614 = vmax.f32 %v598, 0.0
      %v615 = vmax.f32 %v599, 0.0
      %v616 = vmax.f32 %v600, 0.0
      %v617 = vmax.f32 %v601, 0.0
      %v618 = vmax.f32 %v602, 0.0
      %v619 = vmax.f32 %v603, 0.0
      %v620 = vmax.f32 %v604, 0.0
      %v621 = vmax.f32 %v605, 0.0
      %v622 = vmax.f32 %v606, 0.0
      %v623 = vmax.f32 %v607, 0.0
      %v624 = vmax.f32 %v608, 0.0
      %v625 = vmax.f32 %v609, 0.0
      %v626 = vmax.f32 %v610, 0.0
      %v627 = vmax.f32 %v611, 0.0
      %v628 = vmax.f32 %v612, 0.0
      %v629 = vmax.f32 %v613, 0.0
      %630 = vst [vmem:[%s251] sm:$0xff] %v614
      %631 = vst [vmem:[%s251 + $0x8] sm:$0xff] %v615
      %632 = vst [vmem:[%s251 + $0x10] sm:$0xff] %v616
      %633 = vst [vmem:[%s251 + $0x18] sm:$0xff] %v617
      %634 = vst [vmem:[%s251 + $0x20] sm:$0xff] %v618
      %635 = vst [vmem:[%s251 + $0x28] sm:$0xff] %v619
      %636 = vst [vmem:[%s251 + $0x30] sm:$0xff] %v620
      %637 = vst [vmem:[%s251 + $0x38] sm:$0xff] %v621
      %638 = vst [vmem:[%s251 + $0x40] sm:$0xff] %v622
      %639 = vst [vmem:[%s251 + $0x48] sm:$0xff] %v623
      %640 = vst [vmem:[%s251 + $0x50] sm:$0xff] %v624
      %641 = vst [vmem:[%s251 + $0x58] sm:$0xff] %v625
      %642 = vst [vmem:[%s251 + $0x60] sm:$0xff] %v626
      %643 = vst [vmem:[%s251 + $0x68] sm:$0xff] %v627
      %644 = vst [vmem:[%s251 + $0x70] sm:$0xff] %v628
      %645 = vst [vmem:[%s251 + $0x78] sm:$0xff] %v629
      %s646 = smul.u32 16, %s16
      %p647 = scmp.lt.s32.totalorder %s646, 31
      %s648 = scalar_select %p647, %s646, 31
      %s649 = smul.addr %s648, 8
      %s650 = scalar_lea.vmem %s5, %s649
      // Predicated region
      $region41: #{_lambda_.26} parent=39 // pred_check
        %p651 = pneg %p149
      $region42: #{_lambda_.26} parent=39 // pred_check_branch
        %653 = sbr.rel (%p651) target = $region44
      $region43: #{_lambda_.26} parent=39 // pred_region
        %s654 = smul.u32 16, %s16
      $region44: #{_lambda_.26} parent=39 // pred_fallthru
        _
    $region40: #{_lambda_.26} parent=5 // pred_fallthru
      _
    %p655 = scmp.le.s32.totalorder 2, %s11
    // Predicated region
    $region45: #{_lambda_.26} parent=5 // pred_check
      %p656 = pneg %p655
    $region46: #{_lambda_.26} parent=5 // pred_check_branch
      %658 = sbr.rel (%p656) target = $region48
    $region47: #{_lambda_.26} parent=5 // pred_region
      %s659 = ssub.s32 %s11, 2
      // Predicated region
      $region49: #{_lambda_.26} parent=47 // pred_check
        %p660 = pneg %p155
      $region50: #{_lambda_.26} parent=47 // pred_check_branch
        %662 = sbr.rel (%p660) target = $region52
      $region51: #{_lambda_.26} parent=47 // pred_region
        %s663 = smul.u32 16, %s17
        %p664 = scmp.lt.s32.totalorder %s663, 31
        %s665 = scalar_select %p664, %s663, 31
        %s666 = smul.addr %s665, 8
        %s667 = scalar_lea.vmem %s5, %s666
      $region52: #{_lambda_.26} parent=47 // pred_fallthru
        _
    $region48: #{_lambda_.26} parent=5 // pred_fallthru
      _
  $region6: #{_lambda_.26} parent=0 // loop_footer
    %s15 = sadd.s32 1, %s11
  $region7: #{_lambda_.26} parent=0 // loop_footer_branch
    %10 = sbr.rel target = $region3
  $region8: #{_lambda_.26} parent=0 // loop_exit
    _

// kernel: _lambda_.30
$region0: #{_lambda_.30}
  #allocation0 [shape = 'u32[]', space=smem, size = 0x4, offset = 0x4, fixed_abs, tag = 'smem constant byte address 0x4 - core index']
  #allocation1 [shape = 'u32[144,128]{1,0:T(1,128)}', space=vmem, size = 0x12000, scoped, tag = 'internal scratch']
  %s0 = inlined_call_operand.vmem [shape: bf16[128,144], index: 0, kind: input, shape index: {}]
  %s1 = inlined_call_operand.vmem [shape: bf16[144,128], index: 1, kind: input, shape index: {}]
  %s2 = inlined_call_operand.vmem [shape: f32[1,128], index: 2, kind: input, shape index: {}]
  %s3 = inlined_call_operand.vmem [shape: f32[1,128], index: 3, kind: input, shape index: {}]
  %s4 = inlined_call_operand.vmem [shape: f32[128,128], index: 4, kind: output, shape index: {}]
  %s5 = sld [smem:[#allocation0]]
  $region26: #{_lambda_.30} parent=0
    _
  %s7 = ssub.s32 1, %s5
  %s8 = scalar_select 0, %s7, %s5
  // Predicated region
  $region2: #{_lambda_.30} parent=0 // pred_check
    _
  $region3: #{_lambda_.30} parent=0 // pred_check_branch
    %10 = sbr.rel (0) target = $region5
  $region4: #{_lambda_.30} parent=0 // pred_region
    _
  $region5: #{_lambda_.30} parent=0 // pred_fallthru
    _
  // Predicated region
  $region6: #{_lambda_.30} parent=0 // pred_check
    _
  $region7: #{_lambda_.30} parent=0 // pred_check_branch
    %12 = sbr.rel (0) target = $region9
  $region8: #{_lambda_.30} parent=0 // pred_region
    _
  $region9: #{_lambda_.30} parent=0 // pred_fallthru
    _
  // Predicated region
  $region10: #{_lambda_.30} parent=0 // pred_check
    _
  $region11: #{_lambda_.30} parent=0 // pred_check_branch
    %14 = sbr.rel (0) target = $region13
  $region12: #{_lambda_.30} parent=0 // pred_region
    _
  $region13: #{_lambda_.30} parent=0 // pred_fallthru
    _
  // Predicated region
  $region14: #{_lambda_.30} parent=0 // pred_check
    _
  $region15: #{_lambda_.30} parent=0 // pred_check_branch
    %16 = sbr.rel (0) target = $region17
  $region16: #{_lambda_.30} parent=0 // pred_region
    _
  $region17: #{_lambda_.30} parent=0 // pred_fallthru
    _
  %v18 = vld [vmem:[%s0] sm:$0xff]
  %v19 = vld [vmem:[%s0 + $0x8] sm:$0xff]
  %v20 = vld [vmem:[%s0 + $0x10] sm:$0xff]
  %v21 = vld [vmem:[%s0 + $0x18] sm:$0xff]
  %v22 = vld [vmem:[%s0 + $0x20] sm:$0xff]
  %v23 = vld [vmem:[%s0 + $0x28] sm:$0xff]
  %v24 = vld [vmem:[%s0 + $0x30] sm:$0xff]
  %v25 = vld [vmem:[%s0 + $0x38] sm:$0xff]
  %v26 = vld [vmem:[%s0 + $0x40] sm:$0xff]
  %v27 = vld [vmem:[%s0 + $0x48] sm:$0xff]
  %v28 = vld [vmem:[%s0 + $0x50] sm:$0xff]
  %v29 = vld [vmem:[%s0 + $0x58] sm:$0xff]
  %v30 = vld [vmem:[%s0 + $0x60] sm:$0xff]
  %v31 = vld [vmem:[%s0 + $0x68] sm:$0xff]
  %v32 = vld [vmem:[%s0 + $0x70] sm:$0xff]
  %v33 = vld [vmem:[%s0 + $0x78] sm:$0xff]
  %v34 = vld [vmem:[%s1] sm:$0xf]
  %v35 = vld [vmem:[%s1 + $0x4] sm:$0xf]
  %v36 = vld [vmem:[%s1 + $0x8] sm:$0xf]
  %v37 = vld [vmem:[%s1 + $0xc] sm:$0xf]
  %v38 = vld [vmem:[%s1 + $0x10] sm:$0xf]
  %v39 = vld [vmem:[%s1 + $0x14] sm:$0xf]
  %v40 = vld [vmem:[%s1 + $0x18] sm:$0xf]
  %v41 = vld [vmem:[%s1 + $0x1c] sm:$0xf]
  %v42 = vld [vmem:[%s1 + $0x20] sm:$0xf]
  %v43 = vld [vmem:[%s1 + $0x24] sm:$0xf]
  %v44 = vld [vmem:[%s1 + $0x28] sm:$0xf]
  %v45 = vld [vmem:[%s1 + $0x2c] sm:$0xf]
  %v46 = vld [vmem:[%s1 + $0x30] sm:$0xf]
  %v47 = vld [vmem:[%s1 + $0x34] sm:$0xf]
  %v48 = vld [vmem:[%s1 + $0x38] sm:$0xf]
  %v49 = vld [vmem:[%s1 + $0x3c] sm:$0xf]
  %v50 = vld [vmem:[%s1 + $0x40] sm:$0xf]
  %v51 = vld [vmem:[%s1 + $0x44] sm:$0xf]
  %v68 = vunpack.c.l.b16 %v18
  %v69 = vunpack.c.h.b16 %v18
  %v70 = vunpack.c.l.b16 %v19
  %v71 = vunpack.c.h.b16 %v19
  %v72 = vunpack.c.l.b16 %v20
  %v73 = vunpack.c.h.b16 %v20
  %v74 = vunpack.c.l.b16 %v21
  %v75 = vunpack.c.h.b16 %v21
  %v76 = vunpack.c.l.b16 %v22
  %v77 = vunpack.c.h.b16 %v22
  %v78 = vunpack.c.l.b16 %v23
  %v79 = vunpack.c.h.b16 %v23
  %v80 = vunpack.c.l.b16 %v24
  %v81 = vunpack.c.h.b16 %v24
  %v82 = vunpack.c.l.b16 %v25
  %v83 = vunpack.c.h.b16 %v25
  %v84 = vunpack.c.l.b16 %v26
  %v85 = vunpack.c.h.b16 %v26
  %v86 = vunpack.c.l.b16 %v27
  %v87 = vunpack.c.h.b16 %v27
  %v88 = vunpack.c.l.b16 %v28
  %v89 = vunpack.c.h.b16 %v28
  %v90 = vunpack.c.l.b16 %v29
  %v91 = vunpack.c.h.b16 %v29
  %v92 = vunpack.c.l.b16 %v30
  %v93 = vunpack.c.h.b16 %v30
  %v94 = vunpack.c.l.b16 %v31
  %v95 = vunpack.c.h.b16 %v31
  %v96 = vunpack.c.l.b16 %v32
  %v97 = vunpack.c.h.b16 %v32
  %v98 = vunpack.c.l.b16 %v33
  %v99 = vunpack.c.h.b16 %v33
  %v100 = vpack.c.b16 %v70, %v68
  %v101 = vpack.c.b16 %v71, %v69
  %v102 = vpack.c.b16 %v74, %v72
  %v103 = vpack.c.b16 %v75, %v73
  %v104 = vpack.c.b16 %v78, %v76
  %v105 = vpack.c.b16 %v79, %v77
  %v106 = vpack.c.b16 %v82, %v80
  %v107 = vpack.c.b16 %v83, %v81
  %v108 = vpack.c.b16 %v86, %v84
  %v109 = vpack.c.b16 %v87, %v85
  %v110 = vpack.c.b16 %v90, %v88
  %v111 = vpack.c.b16 %v91, %v89
  %v112 = vpack.c.b16 %v94, %v92
  %v113 = vpack.c.b16 %v95, %v93
  %v114 = vpack.c.b16 %v98, %v96
  %v115 = vpack.c.b16 %v99, %v97
  %v142 = vunpack.c.l.b16 %v34
  %v143 = vunpack.c.l.b16 %v35
  %v144 = vunpack.c.l.b16 %v36
  %v145 = vunpack.c.l.b16 %v37
  %v146 = vunpack.c.l.b16 %v38
  %v147 = vunpack.c.l.b16 %v39
  %v148 = vunpack.c.l.b16 %v40
  %v149 = vunpack.c.l.b16 %v41
  %v150 = vunpack.c.l.b16 %v42
  %v151 = vunpack.c.l.b16 %v43
  %v152 = vunpack.c.l.b16 %v44
  %v153 = vunpack.c.l.b16 %v45
  %v154 = vunpack.c.l.b16 %v46
  %v155 = vunpack.c.l.b16 %v47
  %v156 = vunpack.c.l.b16 %v48
  %v157 = vunpack.c.l.b16 %v49
  %v158 = vunpack.c.l.b16 %v50
  %v159 = vunpack.c.l.b16 %v51
  %v160 = vpack.c.b16 %v143, %v142
  %v161 = vpack.c.b16 %v145, %v144
  %v162 = vpack.c.b16 %v147, %v146
  %v163 = vpack.c.b16 %v149, %v148
  %v164 = vpack.c.b16 %v151, %v150
  %v165 = vpack.c.b16 %v153, %v152
  %v166 = vpack.c.b16 %v155, %v154
  %v167 = vpack.c.b16 %v157, %v156
  %v168 = vpack.c.b16 %v159, %v158
  %vm178 = vcmask 130048
  %v180 = vsel %vm178, %v101, 0
  %v183 = vsel %vm178, %v103, 0
  %v186 = vsel %vm178, %v105, 0
  %v189 = vsel %vm178, %v107, 0
  %v192 = vsel %vm178, %v109, 0
  %v195 = vsel %vm178, %v111, 0
  %v198 = vsel %vm178, %v113, 0
  %v201 = vsel %vm178, %v115, 0
  %203 = vmatprep.subr.bf16.mxu0 0
  %204 = vmatpush1.bf16.msra.mxu0 %v160
  %205 = vmatprep.subr.bf16.mxu0 0
  %206 = vmatpush1.bf16.msra.mxu0 %v161
  %207 = vmatprep.subr.bf16.mxu0 0
  %208 = vmatpush1.bf16.msra.mxu0 %v162
  %209 = vmatprep.subr.bf16.mxu0 0
  %210 = vmatpush1.bf16.msra.mxu0 %v163
  %211 = vmatprep.subr.bf16.mxu0 0
  %212 = vmatpush1.bf16.msra.mxu0 %v164
  %213 = vmatprep.subr.bf16.mxu0 0
  %214 = vmatpush1.bf16.msra.mxu0 %v165
  %215 = vmatprep.subr.bf16.mxu0 0
  %216 = vmatpush1.bf16.msra.mxu0 %v166
  %217 = vmatprep.subr.bf16.mxu0 0
  %218 = vmatpush1.bf16.msra.mxu0 %v167
  %219 = vmatprep.subr.bf16.mxu0 0
  %220 = vmatpush1.bf16.msra.mxu0 %v168
  %221 = vmatprep.subr.bf16.mxu0 0
  %222 = vmatpush1.bf16.msra.mxu0 0
  %223 = vmatprep.subr.bf16.mxu0 0
  %224 = vmatpush1.bf16.msra.mxu0 0
  %225 = vmatprep.subr.bf16.mxu0 0
  %226 = vmatpush1.bf16.msra.mxu0 0
  %227 = vmatprep.subr.bf16.mxu0 0
  %228 = vmatpush1.bf16.msra.mxu0 0
  %229 = vmatprep.subr.bf16.mxu0 0
  %230 = vmatpush1.bf16.msra.mxu0 0
  %231 = vmatprep.subr.bf16.mxu0 0
  %232 = vmatpush1.bf16.msra.mxu0 0
  %233 = vmatprep.subr.bf16.mxu0 0
  %234 = vmatpush1.bf16.msra.mxu0 0
  %235 = vmatprep.mubr.bf16.mxu0 %v180
  %236 = vmatmul.mubr.bf16.gmra.mrb[0].mxu0 %v100
  %v237 = vpop.f32.mrb[0].mxu0
  %v238 = vadd.f32 0.0, %v237
  %v239 = vpop.f32.mrb[0].mxu0
  %v240 = vpop.f32.mrb[0].mxu0
  %v241 = vadd.f32 0.0, %v240
  %v242 = vpop.f32.mrb[0].mxu0
  %243 = vmatprep.mubr.bf16.mxu0 %v183
  %244 = vmatmul.mubr.bf16.gmra.mrb[0].mxu0 %v102
  %v245 = vpop.f32.mrb[0].mxu0
  %v246 = vadd.f32 0.0, %v245
  %v247 = vpop.f32.mrb[0].mxu0
  %v248 = vpop.f32.mrb[0].mxu0
  %v249 = vadd.f32 0.0, %v248
  %v250 = vpop.f32.mrb[0].mxu0
  %251 = vmatprep.mubr.bf16.mxu0 %v186
  %252 = vmatmul.mubr.bf16.gmra.mrb[0].mxu0 %v104
  %v253 = vpop.f32.mrb[0].mxu0
  %v254 = vadd.f32 0.0, %v253
  %v255 = vpop.f32.mrb[0].mxu0
  %v256 = vpop.f32.mrb[0].mxu0
  %v257 = vadd.f32 0.0, %v256
  %v258 = vpop.f32.mrb[0].mxu0
  %259 = vmatprep.mubr.bf16.mxu0 %v189
  %260 = vmatmul.mubr.bf16.gmra.mrb[0].mxu0 %v106
  %v261 = vpop.f32.mrb[0].mxu0
  %v262 = vadd.f32 0.0, %v261
  %v263 = vpop.f32.mrb[0].mxu0
  %v264 = vpop.f32.mrb[0].mxu0
  %v265 = vadd.f32 0.0, %v264
  %v266 = vpop.f32.mrb[0].mxu0
  %267 = vmatprep.mubr.bf16.mxu0 %v192
  %268 = vmatmul.mubr.bf16.gmra.mrb[0].mxu0 %v108
  %v269 = vpop.f32.mrb[0].mxu0
  %v270 = vadd.f32 0.0, %v269
  %v271 = vpop.f32.mrb[0].mxu0
  %v272 = vpop.f32.mrb[0].mxu0
  %v273 = vadd.f32 0.0, %v272
  %v274 = vpop.f32.mrb[0].mxu0
  %275 = vmatprep.mubr.bf16.mxu0 %v195
  %276 = vmatmul.mubr.bf16.gmra.mrb[0].mxu0 %v110
  %v277 = vpop.f32.mrb[0].mxu0
  %v278 = vadd.f32 0.0, %v277
  %v279 = vpop.f32.mrb[0].mxu0
  %v280 = vpop.f32.mrb[0].mxu0
  %v281 = vadd.f32 0.0, %v280
  %v282 = vpop.f32.mrb[0].mxu0
  %283 = vmatprep.mubr.bf16.mxu0 %v198
  %284 = vmatmul.mubr.bf16.gmra.mrb[0].mxu0 %v112
  %v285 = vpop.f32.mrb[0].mxu0
  %v286 = vadd.f32 0.0, %v285
  %v287 = vpop.f32.mrb[0].mxu0
  %v288 = vpop.f32.mrb[0].mxu0
  %v289 = vadd.f32 0.0, %v288
  %v290 = vpop.f32.mrb[0].mxu0
  %291 = vmatprep.mubr.bf16.mxu0 %v201
  %292 = vmatmul.mubr.bf16.gmra.mrb[0].mxu0 %v114
  %v293 = vpop.f32.mrb[0].mxu0
  %v294 = vadd.f32 0.0, %v293
  %v295 = vpop.f32.mrb[0].mxu0
  %v296 = vpop.f32.mrb[0].mxu0
  %v297 = vadd.f32 0.0, %v296
  %v298 = vpop.f32.mrb[0].mxu0
  %299 = vdwg.mxu0
  %v300 = vld [vmem:[%s2] sm:$0x1]
  %v302 = vlaneseq
  %v303 = vshrl.u32 %v302, 7
  %v304 = vsub.s32 0, %v303
  %v305 = vrot.slane %v300, %v304
  %v307 = vmul.f32 %v238, %v305
  %v308 = vmul.f32 %v241, %v305
  %v309 = vmul.f32 %v246, %v305
  %v310 = vmul.f32 %v249, %v305
  %v311 = vmul.f32 %v254, %v305
  %v312 = vmul.f32 %v257, %v305
  %v313 = vmul.f32 %v262, %v305
  %v314 = vmul.f32 %v265, %v305
  %v315 = vmul.f32 %v270, %v305
  %v316 = vmul.f32 %v273, %v305
  %v317 = vmul.f32 %v278, %v305
  %v318 = vmul.f32 %v281, %v305
  %v319 = vmul.f32 %v286, %v305
  %v320 = vmul.f32 %v289, %v305
  %v321 = vmul.f32 %v294, %v305
  %v322 = vmul.f32 %v297, %v305
  %v323 = vld [vmem:[%s3] sm:$0x1]
  %v325 = vlaneseq
  %v326 = vshrl.u32 %v325, 7
  %v327 = vsub.s32 0, %v326
  %v328 = vrot.slane %v323, %v327
  %v330 = vadd.f32 %v307, %v328
  %v331 = vadd.f32 %v308, %v328
  %v332 = vadd.f32 %v309, %v328
  %v333 = vadd.f32 %v310, %v328
  %v334 = vadd.f32 %v311, %v328
  %v335 = vadd.f32 %v312, %v328
  %v336 = vadd.f32 %v313, %v328
  %v337 = vadd.f32 %v314, %v328
  %v338 = vadd.f32 %v315, %v328
  %v339 = vadd.f32 %v316, %v328
  %v340 = vadd.f32 %v317, %v328
  %v341 = vadd.f32 %v318, %v328
  %v342 = vadd.f32 %v319, %v328
  %v343 = vadd.f32 %v320, %v328
  %v344 = vadd.f32 %v321, %v328
  %v345 = vadd.f32 %v322, %v328
  %v346 = vmax.f32 %v330, 0.0
  %v347 = vmax.f32 %v331, 0.0
  %v348 = vmax.f32 %v332, 0.0
  %v349 = vmax.f32 %v333, 0.0
  %v350 = vmax.f32 %v334, 0.0
  %v351 = vmax.f32 %v335, 0.0
  %v352 = vmax.f32 %v336, 0.0
  %v353 = vmax.f32 %v337, 0.0
  %v354 = vmax.f32 %v338, 0.0
  %v355 = vmax.f32 %v339, 0.0
  %v356 = vmax.f32 %v340, 0.0
  %v357 = vmax.f32 %v341, 0.0
  %v358 = vmax.f32 %v342, 0.0
  %v359 = vmax.f32 %v343, 0.0
  %v360 = vmax.f32 %v344, 0.0
  %v361 = vmax.f32 %v345, 0.0
  %362 = vst [vmem:[%s4] sm:$0xff] %v346
  %363 = vst [vmem:[%s4 + $0x8] sm:$0xff] %v347
  %364 = vst [vmem:[%s4 + $0x10] sm:$0xff] %v348
  %365 = vst [vmem:[%s4 + $0x18] sm:$0xff] %v349
  %366 = vst [vmem:[%s4 + $0x20] sm:$0xff] %v350
  %367 = vst [vmem:[%s4 + $0x28] sm:$0xff] %v351
  %368 = vst [vmem:[%s4 + $0x30] sm:$0xff] %v352
  %369 = vst [vmem:[%s4 + $0x38] sm:$0xff] %v353
  %370 = vst [vmem:[%s4 + $0x40] sm:$0xff] %v354
  %371 = vst [vmem:[%s4 + $0x48] sm:$0xff] %v355
  %372 = vst [vmem:[%s4 + $0x50] sm:$0xff] %v356
  %373 = vst [vmem:[%s4 + $0x58] sm:$0xff] %v357
  %374 = vst [vmem:[%s4 + $0x60] sm:$0xff] %v358
  %375 = vst [vmem:[%s4 + $0x68] sm:$0xff] %v359
  %376 = vst [vmem:[%s4 + $0x70] sm:$0xff] %v360
  %377 = vst [vmem:[%s4 + $0x78] sm:$0xff] %v361
  // Predicated region
  $region18: #{_lambda_.30} parent=0 // pred_check
    _
  $region19: #{_lambda_.30} parent=0 // pred_check_branch
    %379 = sbr.rel (0) target = $region21
  $region20: #{_lambda_.30} parent=0 // pred_region
    _
  $region21: #{_lambda_.30} parent=0 // pred_fallthru
    _
  // Predicated region
  $region22: #{_lambda_.30} parent=0 // pred_check
    _
  $region23: #{_lambda_.30} parent=0 // pred_check_branch
    %381 = sbr.rel (0) target = $region25
  $region24: #{_lambda_.30} parent=0 // pred_region
    _
  $region25: #{_lambda_.30} parent=0 // pred_fallthru
    _

// kernel: _lambda_.31
$region0: #{_lambda_.31}
  #allocation0 [shape = 'u32[]', space=smem, size = 0x4, offset = 0x4, fixed_abs, tag = 'smem constant byte address 0x4 - core index']
  #allocation1 [shape = 'u32[144,128]{1,0:T(1,128)}', space=vmem, size = 0x12000, scoped, tag = 'internal scratch']
  %s0 = inlined_call_operand.vmem [shape: bf16[128,16], index: 0, kind: input, shape index: {}]
  %s1 = inlined_call_operand.vmem [shape: bf16[16,128], index: 1, kind: input, shape index: {}]
  %s2 = inlined_call_operand.vmem [shape: f32[1,128], index: 2, kind: input, shape index: {}]
  %s3 = inlined_call_operand.vmem [shape: f32[1,128], index: 3, kind: input, shape index: {}]
  %s4 = inlined_call_operand.vmem [shape: f32[128,128], index: 4, kind: output, shape index: {}]
  %s5 = sld [smem:[#allocation0]]
  $region26: #{_lambda_.31} parent=0
    _
  %s7 = ssub.s32 1, %s5
  %s8 = scalar_select 0, %s7, %s5
  // Predicated region
  $region2: #{_lambda_.31} parent=0 // pred_check
    _
  $region3: #{_lambda_.31} parent=0 // pred_check_branch
    %10 = sbr.rel (0) target = $region5
  $region4: #{_lambda_.31} parent=0 // pred_region
    _
  $region5: #{_lambda_.31} parent=0 // pred_fallthru
    _
  // Predicated region
  $region6: #{_lambda_.31} parent=0 // pred_check
    _
  $region7: #{_lambda_.31} parent=0 // pred_check_branch
    %12 = sbr.rel (0) target = $region9
  $region8: #{_lambda_.31} parent=0 // pred_region
    _
  $region9: #{_lambda_.31} parent=0 // pred_fallthru
    _
  // Predicated region
  $region10: #{_lambda_.31} parent=0 // pred_check
    _
  $region11: #{_lambda_.31} parent=0 // pred_check_branch
    %14 = sbr.rel (0) target = $region13
  $region12: #{_lambda_.31} parent=0 // pred_region
    _
  $region13: #{_lambda_.31} parent=0 // pred_fallthru
    _
  // Predicated region
  $region14: #{_lambda_.31} parent=0 // pred_check
    _
  $region15: #{_lambda_.31} parent=0 // pred_check_branch
    %16 = sbr.rel (0) target = $region17
  $region16: #{_lambda_.31} parent=0 // pred_region
    _
  $region17: #{_lambda_.31} parent=0 // pred_fallthru
    _
  %v18 = vld [vmem:[%s0] sm:$0xf]
  %v19 = vld [vmem:[%s0 + $0x4] sm:$0xf]
  %v20 = vld [vmem:[%s0 + $0x8] sm:$0xf]
  %v21 = vld [vmem:[%s0 + $0xc] sm:$0xf]
  %v22 = vld [vmem:[%s0 + $0x10] sm:$0xf]
  %v23 = vld [vmem:[%s0 + $0x14] sm:$0xf]
  %v24 = vld [vmem:[%s0 + $0x18] sm:$0xf]
  %v25 = vld [vmem:[%s0 + $0x1c] sm:$0xf]
  %v26 = vld [vmem:[%s0 + $0x20] sm:$0xf]
  %v27 = vld [vmem:[%s0 + $0x24] sm:$0xf]
  %v28 = vld [vmem:[%s0 + $0x28] sm:$0xf]
  %v29 = vld [vmem:[%s0 + $0x2c] sm:$0xf]
  %v30 = vld [vmem:[%s0 + $0x30] sm:$0xf]
  %v31 = vld [vmem:[%s0 + $0x34] sm:$0xf]
  %v32 = vld [vmem:[%s0 + $0x38] sm:$0xf]
  %v33 = vld [vmem:[%s0 + $0x3c] sm:$0xf]
  %v34 = vld [vmem:[%s1] sm:$0xf]
  %v35 = vld [vmem:[%s1 + $0x4] sm:$0xf]
  %v52 = vunpack.c.l.b16 %v18
  %v53 = vunpack.c.l.b16 %v19
  %v54 = vunpack.c.l.b16 %v20
  %v55 = vunpack.c.l.b16 %v21
  %v56 = vunpack.c.l.b16 %v22
  %v57 = vunpack.c.l.b16 %v23
  %v58 = vunpack.c.l.b16 %v24
  %v59 = vunpack.c.l.b16 %v25
  %v60 = vunpack.c.l.b16 %v26
  %v61 = vunpack.c.l.b16 %v27
  %v62 = vunpack.c.l.b16 %v28
  %v63 = vunpack.c.l.b16 %v29
  %v64 = vunpack.c.l.b16 %v30
  %v65 = vunpack.c.l.b16 %v31
  %v66 = vunpack.c.l.b16 %v32
  %v67 = vunpack.c.l.b16 %v33
  %v68 = vpack.c.b16 %v53, %v52
  %v69 = vpack.c.b16 %v55, %v54
  %v70 = vpack.c.b16 %v57, %v56
  %v71 = vpack.c.b16 %v59, %v58
  %v72 = vpack.c.b16 %v61, %v60
  %v73 = vpack.c.b16 %v63, %v62
  %v74 = vpack.c.b16 %v65, %v64
  %v75 = vpack.c.b16 %v67, %v66
  %v78 = vunpack.c.l.b16 %v34
  %v79 = vunpack.c.l.b16 %v35
  %v80 = vpack.c.b16 %v79, %v78
  %vm82 = vcmask 130048
  %v84 = vsel %vm82, %v68, 0
  %v87 = vsel %vm82, %v69, 0
  %v90 = vsel %vm82, %v70, 0
  %v93 = vsel %vm82, %v71, 0
  %v96 = vsel %vm82, %v72, 0
  %v99 = vsel %vm82, %v73, 0
  %v102 = vsel %vm82, %v74, 0
  %v105 = vsel %vm82, %v75, 0
  %107 = vmatprep.subr.bf16.mxu0 0
  %108 = vmatpush1.bf16.msra.mxu0 %v80
  %109 = vmatprep.subr.bf16.mxu0 0
  %110 = vmatpush1.bf16.msra.mxu0 0
  %111 = vmatprep.subr.bf16.mxu0 0
  %112 = vmatpush1.bf16.msra.mxu0 0
  %113 = vmatprep.subr.bf16.mxu0 0
  %114 = vmatpush1.bf16.msra.mxu0 0
  %115 = vmatprep.subr.bf16.mxu0 0
  %116 = vmatpush1.bf16.msra.mxu0 0
  %117 = vmatprep.subr.bf16.mxu0 0
  %118 = vmatpush1.bf16.msra.mxu0 0
  %119 = vmatprep.subr.bf16.mxu0 0
  %120 = vmatpush1.bf16.msra.mxu0 0
  %121 = vmatprep.subr.bf16.mxu0 0
  %122 = vmatpush1.bf16.msra.mxu0 0
  %123 = vmatprep.subr.bf16.mxu0 0
  %124 = vmatpush1.bf16.msra.mxu0 0
  %125 = vmatprep.subr.bf16.mxu0 0
  %126 = vmatpush1.bf16.msra.mxu0 0
  %127 = vmatprep.subr.bf16.mxu0 0
  %128 = vmatpush1.bf16.msra.mxu0 0
  %129 = vmatprep.subr.bf16.mxu0 0
  %130 = vmatpush1.bf16.msra.mxu0 0
  %131 = vmatprep.subr.bf16.mxu0 0
  %132 = vmatpush1.bf16.msra.mxu0 0
  %133 = vmatprep.subr.bf16.mxu0 0
  %134 = vmatpush1.bf16.msra.mxu0 0
  %135 = vmatprep.subr.bf16.mxu0 0
  %136 = vmatpush1.bf16.msra.mxu0 0
  %137 = vmatprep.subr.bf16.mxu0 0
  %138 = vmatpush1.bf16.msra.mxu0 0
  %139 = vmatprep.mubr.bf16.mxu0 0
  %140 = vmatmul.mubr.bf16.gmra.mrb[0].mxu0 %v84
  %v141 = vpop.f32.mrb[0].mxu0
  %v142 = vadd.f32 0.0, %v141
  %v143 = vpop.f32.mrb[0].mxu0
  %v144 = vpop.f32.mrb[0].mxu0
  %v145 = vadd.f32 0.0, %v144
  %v146 = vpop.f32.mrb[0].mxu0
  %147 = vmatprep.mubr.bf16.mxu0 0
  %148 = vmatmul.mubr.bf16.gmra.mrb[0].mxu0 %v87
  %v149 = vpop.f32.mrb[0].mxu0
  %v150 = vadd.f32 0.0, %v149
  %v151 = vpop.f32.mrb[0].mxu0
  %v152 = vpop.f32.mrb[0].mxu0
  %v153 = vadd.f32 0.0, %v152
  %v154 = vpop.f32.mrb[0].mxu0
  %155 = vmatprep.mubr.bf16.mxu0 0
  %156 = vmatmul.mubr.bf16.gmra.mrb[0].mxu0 %v90
  %v157 = vpop.f32.mrb[0].mxu0
  %v158 = vadd.f32 0.0, %v157
  %v159 = vpop.f32.mrb[0].mxu0
  %v160 = vpop.f32.mrb[0].mxu0
  %v161 = vadd.f32 0.0, %v160
  %v162 = vpop.f32.mrb[0].mxu0
  %163 = vmatprep.mubr.bf16.mxu0 0
  %164 = vmatmul.mubr.bf16.gmra.mrb[0].mxu0 %v93
  %v165 = vpop.f32.mrb[0].mxu0
  %v166 = vadd.f32 0.0, %v165
  %v167 = vpop.f32.mrb[0].mxu0
  %v168 = vpop.f32.mrb[0].mxu0
  %v169 = vadd.f32 0.0, %v168
  %v170 = vpop.f32.mrb[0].mxu0
  %171 = vmatprep.mubr.bf16.mxu0 0
  %172 = vmatmul.mubr.bf16.gmra.mrb[0].mxu0 %v96
  %v173 = vpop.f32.mrb[0].mxu0
  %v174 = vadd.f32 0.0, %v173
  %v175 = vpop.f32.mrb[0].mxu0
  %v176 = vpop.f32.mrb[0].mxu0
  %v177 = vadd.f32 0.0, %v176
  %v178 = vpop.f32.mrb[0].mxu0
  %179 = vmatprep.mubr.bf16.mxu0 0
  %180 = vmatmul.mubr.bf16.gmra.mrb[0].mxu0 %v99
  %v181 = vpop.f32.mrb[0].mxu0
  %v182 = vadd.f32 0.0, %v181
  %v183 = vpop.f32.mrb[0].mxu0
  %v184 = vpop.f32.mrb[0].mxu0
  %v185 = vadd.f32 0.0, %v184
  %v186 = vpop.f32.mrb[0].mxu0
  %187 = vmatprep.mubr.bf16.mxu0 0
  %188 = vmatmul.mubr.bf16.gmra.mrb[0].mxu0 %v102
  %v189 = vpop.f32.mrb[0].mxu0
  %v190 = vadd.f32 0.0, %v189
  %v191 = vpop.f32.mrb[0].mxu0
  %v192 = vpop.f32.mrb[0].mxu0
  %v193 = vadd.f32 0.0, %v192
  %v194 = vpop.f32.mrb[0].mxu0
  %195 = vmatprep.mubr.bf16.mxu0 0
  %196 = vmatmul.mubr.bf16.gmra.mrb[0].mxu0 %v105
  %v197 = vpop.f32.mrb[0].mxu0
  %v198 = vadd.f32 0.0, %v197
  %v199 = vpop.f32.mrb[0].mxu0
  %v200 = vpop.f32.mrb[0].mxu0
  %v201 = vadd.f32 0.0, %v200
  %v202 = vpop.f32.mrb[0].mxu0
  %203 = vdwg.mxu0
  %v204 = vld [vmem:[%s2] sm:$0x1]
  %v206 = vlaneseq
  %v207 = vshrl.u32 %v206, 7
  %v208 = vsub.s32 0, %v207
  %v209 = vrot.slane %v204, %v208
  %v211 = vmul.f32 %v142, %v209
  %v212 = vmul.f32 %v145, %v209
  %v213 = vmul.f32 %v150, %v209
  %v214 = vmul.f32 %v153, %v209
  %v215 = vmul.f32 %v158, %v209
  %v216 = vmul.f32 %v161, %v209
  %v217 = vmul.f32 %v166, %v209
  %v218 = vmul.f32 %v169, %v209
  %v219 = vmul.f32 %v174, %v209
  %v220 = vmul.f32 %v177, %v209
  %v221 = vmul.f32 %v182, %v209
  %v222 = vmul.f32 %v185, %v209
  %v223 = vmul.f32 %v190, %v209
  %v224 = vmul.f32 %v193, %v209
  %v225 = vmul.f32 %v198, %v209
  %v226 = vmul.f32 %v201, %v209
  %v227 = vld [vmem:[%s3] sm:$0x1]
  %v229 = vlaneseq
  %v230 = vshrl.u32 %v229, 7
  %v231 = vsub.s32 0, %v230
  %v232 = vrot.slane %v227, %v231
  %v234 = vadd.f32 %v211, %v232
  %v235 = vadd.f32 %v212, %v232
  %v236 = vadd.f32 %v213, %v232
  %v237 = vadd.f32 %v214, %v232
  %v238 = vadd.f32 %v215, %v232
  %v239 = vadd.f32 %v216, %v232
  %v240 = vadd.f32 %v217, %v232
  %v241 = vadd.f32 %v218, %v232
  %v242 = vadd.f32 %v219, %v232
  %v243 = vadd.f32 %v220, %v232
  %v244 = vadd.f32 %v221, %v232
  %v245 = vadd.f32 %v222, %v232
  %v246 = vadd.f32 %v223, %v232
  %v247 = vadd.f32 %v224, %v232
  %v248 = vadd.f32 %v225, %v232
  %v249 = vadd.f32 %v226, %v232
  %250 = vst [vmem:[%s4] sm:$0xff] %v234
  %251 = vst [vmem:[%s4 + $0x8] sm:$0xff] %v235
  %252 = vst [vmem:[%s4 + $0x10] sm:$0xff] %v236
  %253 = vst [vmem:[%s4 + $0x18] sm:$0xff] %v237
  %254 = vst [vmem:[%s4 + $0x20] sm:$0xff] %v238
  %255 = vst [vmem:[%s4 + $0x28] sm:$0xff] %v239
  %256 = vst [vmem:[%s4 + $0x30] sm:$0xff] %v240
  %257 = vst [vmem:[%s4 + $0x38] sm:$0xff] %v241
  %258 = vst [vmem:[%s4 + $0x40] sm:$0xff] %v242
  %259 = vst [vmem:[%s4 + $0x48] sm:$0xff] %v243
  %260 = vst [vmem:[%s4 + $0x50] sm:$0xff] %v244
  %261 = vst [vmem:[%s4 + $0x58] sm:$0xff] %v245
  %262 = vst [vmem:[%s4 + $0x60] sm:$0xff] %v246
  %263 = vst [vmem:[%s4 + $0x68] sm:$0xff] %v247
  %264 = vst [vmem:[%s4 + $0x70] sm:$0xff] %v248
  %265 = vst [vmem:[%s4 + $0x78] sm:$0xff] %v249
  // Predicated region
  $region18: #{_lambda_.31} parent=0 // pred_check
    _
  $region19: #{_lambda_.31} parent=0 // pred_check_branch
    %267 = sbr.rel (0) target = $region21
  $region20: #{_lambda_.31} parent=0 // pred_region
    _
  $region21: #{_lambda_.31} parent=0 // pred_fallthru
    _
  // Predicated region
  $region22: #{_lambda_.31} parent=0 // pred_check
    _
  $region23: #{_lambda_.31} parent=0 // pred_check_branch
    %269 = sbr.rel (0) target = $region25
  $region24: #{_lambda_.31} parent=0 // pred_region
    _
  $region25: #{_lambda_.31} parent=0 // pred_fallthru
    _

// kernel: _lambda_.32
$region0: #{_lambda_.32}
  #allocation0 [shape = 'u32[]', space=smem, size = 0x4, offset = 0x4, fixed_abs, tag = 'smem constant byte address 0x4 - core index']
  #allocation1 [shape = 'u32[144,128]{1,0:T(1,128)}', space=vmem, size = 0x12000, scoped, tag = 'internal scratch']
  %s0 = inlined_call_operand.vmem [shape: bf16[128,288], index: 0, kind: input, shape index: {}]
  %s1 = inlined_call_operand.vmem [shape: bf16[288,128], index: 1, kind: input, shape index: {}]
  %s2 = inlined_call_operand.vmem [shape: f32[1,128], index: 2, kind: input, shape index: {}]
  %s3 = inlined_call_operand.vmem [shape: f32[1,128], index: 3, kind: input, shape index: {}]
  %s4 = inlined_call_operand.vmem [shape: f32[128,128], index: 4, kind: input, shape index: {}]
  %s5 = inlined_call_operand.vmem [shape: f32[128,128], index: 5, kind: output, shape index: {}]
  %s6 = sld [smem:[#allocation0]]
  $region30: #{_lambda_.32} parent=0
    _
  %s8 = ssub.s32 1, %s6
  %s9 = scalar_select 0, %s8, %s6
  // Predicated region
  $region2: #{_lambda_.32} parent=0 // pred_check
    _
  $region3: #{_lambda_.32} parent=0 // pred_check_branch
    %11 = sbr.rel (0) target = $region5
  $region4: #{_lambda_.32} parent=0 // pred_region
    _
  $region5: #{_lambda_.32} parent=0 // pred_fallthru
    _
  // Predicated region
  $region6: #{_lambda_.32} parent=0 // pred_check
    _
  $region7: #{_lambda_.32} parent=0 // pred_check_branch
    %13 = sbr.rel (0) target = $region9
  $region8: #{_lambda_.32} parent=0 // pred_region
    _
  $region9: #{_lambda_.32} parent=0 // pred_fallthru
    _
  // Predicated region
  $region10: #{_lambda_.32} parent=0 // pred_check
    _
  $region11: #{_lambda_.32} parent=0 // pred_check_branch
    %15 = sbr.rel (0) target = $region13
  $region12: #{_lambda_.32} parent=0 // pred_region
    _
  $region13: #{_lambda_.32} parent=0 // pred_fallthru
    _
  // Predicated region
  $region14: #{_lambda_.32} parent=0 // pred_check
    _
  $region15: #{_lambda_.32} parent=0 // pred_check_branch
    %17 = sbr.rel (0) target = $region17
  $region16: #{_lambda_.32} parent=0 // pred_region
    _
  $region17: #{_lambda_.32} parent=0 // pred_fallthru
    _
  // Predicated region
  $region18: #{_lambda_.32} parent=0 // pred_check
    _
  $region19: #{_lambda_.32} parent=0 // pred_check_branch
    %19 = sbr.rel (0) target = $region21
  $region20: #{_lambda_.32} parent=0 // pred_region
    _
  $region21: #{_lambda_.32} parent=0 // pred_fallthru
    _
  %v21 = vld [vmem:[%s0] sm:$0xff]
  %v22 = vld [vmem:[%s0 + $0x8] sm:$0xf]
  %v23 = vld [vmem:[%s0 + $0xc] sm:$0xff]
  %v24 = vld [vmem:[%s0 + $0x14] sm:$0xf]
  %v25 = vld [vmem:[%s0 + $0x18] sm:$0xff]
  %v26 = vld [vmem:[%s0 + $0x20] sm:$0xf]
  %v27 = vld [vmem:[%s0 + $0x24] sm:$0xff]
  %v28 = vld [vmem:[%s0 + $0x2c] sm:$0xf]
  %v29 = vld [vmem:[%s0 + $0x30] sm:$0xff]
  %v30 = vld [vmem:[%s0 + $0x38] sm:$0xf]
  %v31 = vld [vmem:[%s0 + $0x3c] sm:$0xff]
  %v32 = vld [vmem:[%s0 + $0x44] sm:$0xf]
  %v33 = vld [vmem:[%s0 + $0x48] sm:$0xff]
  %v34 = vld [vmem:[%s0 + $0x50] sm:$0xf]
  %v35 = vld [vmem:[%s0 + $0x54] sm:$0xff]
  %v36 = vld [vmem:[%s0 + $0x5c] sm:$0xf]
  %v37 = vld [vmem:[%s0 + $0x60] sm:$0xff]
  %v38 = vld [vmem:[%s0 + $0x68] sm:$0xf]
  %v39 = vld [vmem:[%s0 + $0x6c] sm:$0xff]
  %v40 = vld [vmem:[%s0 + $0x74] sm:$0xf]
  %v41 = vld [vmem:[%s0 + $0x78] sm:$0xff]
  %v42 = vld [vmem:[%s0 + $0x80] sm:$0xf]
  %v43 = vld [vmem:[%s0 + $0x84] sm:$0xff]
  %v44 = vld [vmem:[%s0 + $0x8c] sm:$0xf]
  %v45 = vld [vmem:[%s0 + $0x90] sm:$0xff]
  %v46 = vld [vmem:[%s0 + $0x98] sm:$0xf]
  %v47 = vld [vmem:[%s0 + $0x9c] sm:$0xff]
  %v48 = vld [vmem:[%s0 + $0xa4] sm:$0xf]
  %v49 = vld [vmem:[%s0 + $0xa8] sm:$0xff]
  %v50 = vld [vmem:[%s0 + $0xb0] sm:$0xf]
  %v51 = vld [vmem:[%s0 + $0xb4] sm:$0xff]
  %v52 = vld [vmem:[%s0 + $0xbc] sm:$0xf]
  %v53 = vld [vmem:[%s1] sm:$0xf]
  %v54 = vld [vmem:[%s1 + $0x4] sm:$0xf]
  %v55 = vld [vmem:[%s1 + $0x8] sm:$0xf]
  %v56 = vld [vmem:[%s1 + $0xc] sm:$0xf]
  %v57 = vld [vmem:[%s1 + $0x10] sm:$0xf]
  %v58 = vld [vmem:[%s1 + $0x14] sm:$0xf]
  %v59 = vld [vmem:[%s1 + $0x18] sm:$0xf]
  %v60 = vld [vmem:[%s1 + $0x1c] sm:$0xf]
  %v61 = vld [vmem:[%s1 + $0x20] sm:$0xf]
  %v62 = vld [vmem:[%s1 + $0x24] sm:$0xf]
  %v63 = vld [vmem:[%s1 + $0x28] sm:$0xf]
  %v64 = vld [vmem:[%s1 + $0x2c] sm:$0xf]
  %v65 = vld [vmem:[%s1 + $0x30] sm:$0xf]
  %v66 = vld [vmem:[%s1 + $0x34] sm:$0xf]
  %v67 = vld [vmem:[%s1 + $0x38] sm:$0xf]
  %v68 = vld [vmem:[%s1 + $0x3c] sm:$0xf]
  %v69 = vld [vmem:[%s1 + $0x40] sm:$0xf]
  %v70 = vld [vmem:[%s1 + $0x44] sm:$0xf]
  %v71 = vld [vmem:[%s1 + $0x48] sm:$0xf]
  %v72 = vld [vmem:[%s1 + $0x4c] sm:$0xf]
  %v73 = vld [vmem:[%s1 + $0x50] sm:$0xf]
  %v74 = vld [vmem:[%s1 + $0x54] sm:$0xf]
  %v75 = vld [vmem:[%s1 + $0x58] sm:$0xf]
  %v76 = vld [vmem:[%s1 + $0x5c] sm:$0xf]
  %v77 = vld [vmem:[%s1 + $0x60] sm:$0xf]
  %v78 = vld [vmem:[%s1 + $0x64] sm:$0xf]
  %v79 = vld [vmem:[%s1 + $0x68] sm:$0xf]
  %v80 = vld [vmem:[%s1 + $0x6c] sm:$0xf]
  %v81 = vld [vmem:[%s1 + $0x70] sm:$0xf]
  %v82 = vld [vmem:[%s1 + $0x74] sm:$0xf]
  %v83 = vld [vmem:[%s1 + $0x78] sm:$0xf]
  %v84 = vld [vmem:[%s1 + $0x7c] sm:$0xf]
  %v85 = vld [vmem:[%s1 + $0x80] sm:$0xf]
  %v86 = vld [vmem:[%s1 + $0x84] sm:$0xf]
  %v87 = vld [vmem:[%s1 + $0x88] sm:$0xf]
  %v88 = vld [vmem:[%s1 + $0x8c] sm:$0xf]
  %v121 = vunpack.c.l.b16 %v21
  %v122 = vunpack.c.h.b16 %v21
  %v123 = vunpack.c.l.b16 %v22
  %v124 = vunpack.c.l.b16 %v23
  %v125 = vunpack.c.h.b16 %v23
  %v126 = vunpack.c.l.b16 %v24
  %v127 = vunpack.c.l.b16 %v25
  %v128 = vunpack.c.h.b16 %v25
  %v129 = vunpack.c.l.b16 %v26
  %v130 = vunpack.c.l.b16 %v27
  %v131 = vunpack.c.h.b16 %v27
  %v132 = vunpack.c.l.b16 %v28
  %v133 = vunpack.c.l.b16 %v29
  %v134 = vunpack.c.h.b16 %v29
  %v135 = vunpack.c.l.b16 %v30
  %v136 = vunpack.c.l.b16 %v31
  %v137 = vunpack.c.h.b16 %v31
  %v138 = vunpack.c.l.b16 %v32
  %v139 = vunpack.c.l.b16 %v33
  %v140 = vunpack.c.h.b16 %v33
  %v141 = vunpack.c.l.b16 %v34
  %v142 = vunpack.c.l.b16 %v35
  %v143 = vunpack.c.h.b16 %v35
  %v144 = vunpack.c.l.b16 %v36
  %v145 = vunpack.c.l.b16 %v37
  %v146 = vunpack.c.h.b16 %v37
  %v147 = vunpack.c.l.b16 %v38
  %v148 = vunpack.c.l.b16 %v39
  %v149 = vunpack.c.h.b16 %v39
  %v150 = vunpack.c.l.b16 %v40
  %v151 = vunpack.c.l.b16 %v41
  %v152 = vunpack.c.h.b16 %v41
  %v153 = vunpack.c.l.b16 %v42
  %v154 = vunpack.c.l.b16 %v43
  %v155 = vunpack.c.h.b16 %v43
  %v156 = vunpack.c.l.b16 %v44
  %v157 = vunpack.c.l.b16 %v45
  %v158 = vunpack.c.h.b16 %v45
  %v159 = vunpack.c.l.b16 %v46
  %v160 = vunpack.c.l.b16 %v47
  %v161 = vunpack.c.h.b16 %v47
  %v162 = vunpack.c.l.b16 %v48
  %v163 = vunpack.c.l.b16 %v49
  %v164 = vunpack.c.h.b16 %v49
  %v165 = vunpack.c.l.b16 %v50
  %v166 = vunpack.c.l.b16 %v51
  %v167 = vunpack.c.h.b16 %v51
  %v168 = vunpack.c.l.b16 %v52
  %v169 = vpack.c.b16 %v124, %v121
  %v170 = vpack.c.b16 %v125, %v122
  %v171 = vpack.c.b16 %v126, %v123
  %v172 = vpack.c.b16 %v130, %v127
  %v173 = vpack.c.b16 %v131, %v128
  %v174 = vpack.c.b16 %v132, %v129
  %v175 = vpack.c.b16 %v136, %v133
  %v176 = vpack.c.b16 %v137, %v134
  %v177 = vpack.c.b16 %v138, %v135
  %v178 = vpack.c.b16 %v142, %v139
  %v179 = vpack.c.b16 %v143, %v140
  %v180 = vpack.c.b16 %v144, %v141
  %v181 = vpack.c.b16 %v148, %v145
  %v182 = vpack.c.b16 %v149, %v146
  %v183 = vpack.c.b16 %v150, %v147
  %v184 = vpack.c.b16 %v154, %v151
  %v185 = vpack.c.b16 %v155, %v152
  %v186 = vpack.c.b16 %v156, %v153
  %v187 = vpack.c.b16 %v160, %v157
  %v188 = vpack.c.b16 %v161, %v158
  %v189 = vpack.c.b16 %v162, %v159
  %v190 = vpack.c.b16 %v166, %v163
  %v191 = vpack.c.b16 %v167, %v164
  %v192 = vpack.c.b16 %v168, %v165
  %v245 = vunpack.c.l.b16 %v53
  %v246 = vunpack.c.l.b16 %v54
  %v247 = vunpack.c.l.b16 %v55
  %v248 = vunpack.c.l.b16 %v56
  %v249 = vunpack.c.l.b16 %v57
  %v250 = vunpack.c.l.b16 %v58
  %v251 = vunpack.c.l.b16 %v59
  %v252 = vunpack.c.l.b16 %v60
  %v253 = vunpack.c.l.b16 %v61
  %v254 = vunpack.c.l.b16 %v62
  %v255 = vunpack.c.l.b16 %v63
  %v256 = vunpack.c.l.b16 %v64
  %v257 = vunpack.c.l.b16 %v65
  %v258 = vunpack.c.l.b16 %v66
  %v259 = vunpack.c.l.b16 %v67
  %v260 = vunpack.c.l.b16 %v68
  %v261 = vunpack.c.l.b16 %v69
  %v262 = vunpack.c.l.b16 %v70
  %v263 = vunpack.c.l.b16 %v71
  %v264 = vunpack.c.l.b16 %v72
  %v265 = vunpack.c.l.b16 %v73
  %v266 = vunpack.c.l.b16 %v74
  %v267 = vunpack.c.l.b16 %v75
  %v268 = vunpack.c.l.b16 %v76
  %v269 = vunpack.c.l.b16 %v77
  %v270 = vunpack.c.l.b16 %v78
  %v271 = vunpack.c.l.b16 %v79
  %v272 = vunpack.c.l.b16 %v80
  %v273 = vunpack.c.l.b16 %v81
  %v274 = vunpack.c.l.b16 %v82
  %v275 = vunpack.c.l.b16 %v83
  %v276 = vunpack.c.l.b16 %v84
  %v277 = vunpack.c.l.b16 %v85
  %v278 = vunpack.c.l.b16 %v86
  %v279 = vunpack.c.l.b16 %v87
  %v280 = vunpack.c.l.b16 %v88
  %v281 = vpack.c.b16 %v246, %v245
  %v282 = vpack.c.b16 %v248, %v247
  %v283 = vpack.c.b16 %v250, %v249
  %v284 = vpack.c.b16 %v252, %v251
  %v285 = vpack.c.b16 %v254, %v253
  %v286 = vpack.c.b16 %v256, %v255
  %v287 = vpack.c.b16 %v258, %v257
  %v288 = vpack.c.b16 %v260, %v259
  %v289 = vpack.c.b16 %v262, %v261
  %v290 = vpack.c.b16 %v264, %v263
  %v291 = vpack.c.b16 %v266, %v265
  %v292 = vpack.c.b16 %v268, %v267
  %v293 = vpack.c.b16 %v270, %v269
  %v294 = vpack.c.b16 %v272, %v271
  %v295 = vpack.c.b16 %v274, %v273
  %v296 = vpack.c.b16 %v276, %v275
  %v297 = vpack.c.b16 %v278, %v277
  %v298 = vpack.c.b16 %v280, %v279
  %vm317 = vcmask 261120
  %v319 = vsel %vm317, %v171, 0
  %v322 = vsel %vm317, %v174, 0
  %v325 = vsel %vm317, %v177, 0
  %v328 = vsel %vm317, %v180, 0
  %v331 = vsel %vm317, %v183, 0
  %v334 = vsel %vm317, %v186, 0
  %v337 = vsel %vm317, %v189, 0
  %v340 = vsel %vm317, %v192, 0
  %342 = vmatprep.subr.bf16.mxu0 0
  %343 = vmatpush1.bf16.msra.mxu0 %v281
  %344 = vmatprep.subr.bf16.mxu0 0
  %345 = vmatpush1.bf16.msra.mxu0 %v282
  %346 = vmatprep.subr.bf16.mxu0 0
  %347 = vmatpush1.bf16.msra.mxu0 %v283
  %348 = vmatprep.subr.bf16.mxu0 0
  %349 = vmatpush1.bf16.msra.mxu0 %v284
  %350 = vmatprep.subr.bf16.mxu0 0
  %351 = vmatpush1.bf16.msra.mxu0 %v285
  %352 = vmatprep.subr.bf16.mxu0 0
  %353 = vmatpush1.bf16.msra.mxu0 %v286
  %354 = vmatprep.subr.bf16.mxu0 0
  %355 = vmatpush1.bf16.msra.mxu0 %v287
  %356 = vmatprep.subr.bf16.mxu0 0
  %357 = vmatpush1.bf16.msra.mxu0 %v288
  %358 = vmatprep.subr.bf16.mxu0 0
  %359 = vmatpush1.bf16.msra.mxu0 %v289
  %360 = vmatprep.subr.bf16.mxu0 0
  %361 = vmatpush1.bf16.msra.mxu0 %v290
  %362 = vmatprep.subr.bf16.mxu0 0
  %363 = vmatpush1.bf16.msra.mxu0 %v291
  %364 = vmatprep.subr.bf16.mxu0 0
  %365 = vmatpush1.bf16.msra.mxu0 %v292
  %366 = vmatprep.subr.bf16.mxu0 0
  %367 = vmatpush1.bf16.msra.mxu0 %v293
  %368 = vmatprep.subr.bf16.mxu0 0
  %369 = vmatpush1.bf16.msra.mxu0 %v294
  %370 = vmatprep.subr.bf16.mxu0 0
  %371 = vmatpush1.bf16.msra.mxu0 %v295
  %372 = vmatprep.subr.bf16.mxu0 0
  %373 = vmatpush1.bf16.msra.mxu0 %v296
  %374 = vmatprep.mubr.bf16.mxu0 %v170
  %375 = vmatmul.mubr.bf16.gmra.mrb[0].mxu0 %v169
  %v376 = vpop.f32.mrb[0].mxu0
  %v377 = vadd.f32 0.0, %v376
  %v378 = vpop.f32.mrb[0].mxu0
  %v379 = vpop.f32.mrb[0].mxu0
  %v380 = vadd.f32 0.0, %v379
  %v381 = vpop.f32.mrb[0].mxu0
  %382 = vmatprep.mubr.bf16.mxu0 %v173
  %383 = vmatmul.mubr.bf16.gmra.mrb[0].mxu0 %v172
  %v384 = vpop.f32.mrb[0].mxu0
  %v385 = vadd.f32 0.0, %v384
  %v386 = vpop.f32.mrb[0].mxu0
  %v387 = vpop.f32.mrb[0].mxu0
  %v388 = vadd.f32 0.0, %v387
  %v389 = vpop.f32.mrb[0].mxu0
  %390 = vmatprep.mubr.bf16.mxu0 %v176
  %391 = vmatmul.mubr.bf16.gmra.mrb[0].mxu0 %v175
  %v392 = vpop.f32.mrb[0].mxu0
  %v393 = vadd.f32 0.0, %v392
  %v394 = vpop.f32.mrb[0].mxu0
  %v395 = vpop.f32.mrb[0].mxu0
  %v396 = vadd.f32 0.0, %v395
  %v397 = vpop.f32.mrb[0].mxu0
  %398 = vmatprep.mubr.bf16.mxu0 %v179
  %399 = vmatmul.mubr.bf16.gmra.mrb[0].mxu0 %v178
  %v400 = vpop.f32.mrb[0].mxu0
  %v401 = vadd.f32 0.0, %v400
  %v402 = vpop.f32.mrb[0].mxu0
  %v403 = vpop.f32.mrb[0].mxu0
  %v404 = vadd.f32 0.0, %v403
  %v405 = vpop.f32.mrb[0].mxu0
  %406 = vmatprep.mubr.bf16.mxu0 %v182
  %407 = vmatmul.mubr.bf16.gmra.mrb[0].mxu0 %v181
  %v408 = vpop.f32.mrb[0].mxu0
  %v409 = vadd.f32 0.0, %v408
  %v410 = vpop.f32.mrb[0].mxu0
  %v411 = vpop.f32.mrb[0].mxu0
  %v412 = vadd.f32 0.0, %v411
  %v413 = vpop.f32.mrb[0].mxu0
  %414 = vmatprep.mubr.bf16.mxu0 %v185
  %415 = vmatmul.mubr.bf16.gmra.mrb[0].mxu0 %v184
  %v416 = vpop.f32.mrb[0].mxu0
  %v417 = vadd.f32 0.0, %v416
  %v418 = vpop.f32.mrb[0].mxu0
  %v419 = vpop.f32.mrb[0].mxu0
  %v420 = vadd.f32 0.0, %v419
  %v421 = vpop.f32.mrb[0].mxu0
  %422 = vmatprep.mubr.bf16.mxu0 %v188
  %423 = vmatmul.mubr.bf16.gmra.mrb[0].mxu0 %v187
  %v424 = vpop.f32.mrb[0].mxu0
  %v425 = vadd.f32 0.0, %v424
  %v426 = vpop.f32.mrb[0].mxu0
  %v427 = vpop.f32.mrb[0].mxu0
  %v428 = vadd.f32 0.0, %v427
  %v429 = vpop.f32.mrb[0].mxu0
  %430 = vmatprep.mubr.bf16.mxu0 %v191
  %431 = vmatmul.mubr.bf16.gmra.mrb[0].mxu0 %v190
  %v432 = vpop.f32.mrb[0].mxu0
  %v433 = vadd.f32 0.0, %v432
  %v434 = vpop.f32.mrb[0].mxu0
  %v435 = vpop.f32.mrb[0].mxu0
  %v436 = vadd.f32 0.0, %v435
  %v437 = vpop.f32.mrb[0].mxu0
  %438 = vdwg.mxu0
  %439 = vmatprep.subr.bf16.mxu0 0
  %440 = vmatpush1.bf16.msra.mxu0 %v297
  %441 = vmatprep.subr.bf16.mxu0 0
  %442 = vmatpush1.bf16.msra.mxu0 %v298
  %443 = vmatprep.subr.bf16.mxu0 0
  %444 = vmatpush1.bf16.msra.mxu0 0
  %445 = vmatprep.subr.bf16.mxu0 0
  %446 = vmatpush1.bf16.msra.mxu0 0
  %447 = vmatprep.subr.bf16.mxu0 0
  %448 = vmatpush1.bf16.msra.mxu0 0
  %449 = vmatprep.subr.bf16.mxu0 0
  %450 = vmatpush1.bf16.msra.mxu0 0
  %451 = vmatprep.subr.bf16.mxu0 0
  %452 = vmatpush1.bf16.msra.mxu0 0
  %453 = vmatprep.subr.bf16.mxu0 0
  %454 = vmatpush1.bf16.msra.mxu0 0
  %455 = vmatprep.subr.bf16.mxu0 0
  %456 = vmatpush1.bf16.msra.mxu0 0
  %457 = vmatprep.subr.bf16.mxu0 0
  %458 = vmatpush1.bf16.msra.mxu0 0
  %459 = vmatprep.subr.bf16.mxu0 0
  %460 = vmatpush1.bf16.msra.mxu0 0
  %461 = vmatprep.subr.bf16.mxu0 0
  %462 = vmatpush1.bf16.msra.mxu0 0
  %463 = vmatprep.subr.bf16.mxu0 0
  %464 = vmatpush1.bf16.msra.mxu0 0
  %465 = vmatprep.subr.bf16.mxu0 0
  %466 = vmatpush1.bf16.msra.mxu0 0
  %467 = vmatprep.subr.bf16.mxu0 0
  %468 = vmatpush1.bf16.msra.mxu0 0
  %469 = vmatprep.subr.bf16.mxu0 0
  %470 = vmatpush1.bf16.msra.mxu0 0
  %471 = vmatprep.mubr.bf16.mxu0 0
  %472 = vmatmul.mubr.bf16.gmra.mrb[0].mxu0 %v319
  %v473 = vpop.f32.mrb[0].mxu0
  %v474 = vadd.f32 %v377, %v473
  %v475 = vpop.f32.mrb[0].mxu0
  %v476 = vpop.f32.mrb[0].mxu0
  %v477 = vadd.f32 %v380, %v476
  %v478 = vpop.f32.mrb[0].mxu0
  %479 = vmatprep.mubr.bf16.mxu0 0
  %480 = vmatmul.mubr.bf16.gmra.mrb[0].mxu0 %v322
  %v481 = vpop.f32.mrb[0].mxu0
  %v482 = vadd.f32 %v385, %v481
  %v483 = vpop.f32.mrb[0].mxu0
  %v484 = vpop.f32.mrb[0].mxu0
  %v485 = vadd.f32 %v388, %v484
  %v486 = vpop.f32.mrb[0].mxu0
  %487 = vmatprep.mubr.bf16.mxu0 0
  %488 = vmatmul.mubr.bf16.gmra.mrb[0].mxu0 %v325
  %v489 = vpop.f32.mrb[0].mxu0
  %v490 = vadd.f32 %v393, %v489
  %v491 = vpop.f32.mrb[0].mxu0
  %v492 = vpop.f32.mrb[0].mxu0
  %v493 = vadd.f32 %v396, %v492
  %v494 = vpop.f32.mrb[0].mxu0
  %495 = vmatprep.mubr.bf16.mxu0 0
  %496 = vmatmul.mubr.bf16.gmra.mrb[0].mxu0 %v328
  %v497 = vpop.f32.mrb[0].mxu0
  %v498 = vadd.f32 %v401, %v497
  %v499 = vpop.f32.mrb[0].mxu0
  %v500 = vpop.f32.mrb[0].mxu0
  %v501 = vadd.f32 %v404, %v500
  %v502 = vpop.f32.mrb[0].mxu0
  %503 = vmatprep.mubr.bf16.mxu0 0
  %504 = vmatmul.mubr.bf16.gmra.mrb[0].mxu0 %v331
  %v505 = vpop.f32.mrb[0].mxu0
  %v506 = vadd.f32 %v409, %v505
  %v507 = vpop.f32.mrb[0].mxu0
  %v508 = vpop.f32.mrb[0].mxu0
  %v509 = vadd.f32 %v412, %v508
  %v510 = vpop.f32.mrb[0].mxu0
  %511 = vmatprep.mubr.bf16.mxu0 0
  %512 = vmatmul.mubr.bf16.gmra.mrb[0].mxu0 %v334
  %v513 = vpop.f32.mrb[0].mxu0
  %v514 = vadd.f32 %v417, %v513
  %v515 = vpop.f32.mrb[0].mxu0
  %v516 = vpop.f32.mrb[0].mxu0
  %v517 = vadd.f32 %v420, %v516
  %v518 = vpop.f32.mrb[0].mxu0
  %519 = vmatprep.mubr.bf16.mxu0 0
  %520 = vmatmul.mubr.bf16.gmra.mrb[0].mxu0 %v337
  %v521 = vpop.f32.mrb[0].mxu0
  %v522 = vadd.f32 %v425, %v521
  %v523 = vpop.f32.mrb[0].mxu0
  %v524 = vpop.f32.mrb[0].mxu0
  %v525 = vadd.f32 %v428, %v524
  %v526 = vpop.f32.mrb[0].mxu0
  %527 = vmatprep.mubr.bf16.mxu0 0
  %528 = vmatmul.mubr.bf16.gmra.mrb[0].mxu0 %v340
  %v529 = vpop.f32.mrb[0].mxu0
  %v530 = vadd.f32 %v433, %v529
  %v531 = vpop.f32.mrb[0].mxu0
  %v532 = vpop.f32.mrb[0].mxu0
  %v533 = vadd.f32 %v436, %v532
  %v534 = vpop.f32.mrb[0].mxu0
  %535 = vdwg.mxu0
  %v536 = vld [vmem:[%s2] sm:$0x1]
  %v538 = vlaneseq
  %v539 = vshrl.u32 %v538, 7
  %v540 = vsub.s32 0, %v539
  %v541 = vrot.slane %v536, %v540
  %v543 = vmul.f32 %v474, %v541
  %v544 = vmul.f32 %v477, %v541
  %v545 = vmul.f32 %v482, %v541
  %v546 = vmul.f32 %v485, %v541
  %v547 = vmul.f32 %v490, %v541
  %v548 = vmul.f32 %v493, %v541
  %v549 = vmul.f32 %v498, %v541
  %v550 = vmul.f32 %v501, %v541
  %v551 = vmul.f32 %v506, %v541
  %v552 = vmul.f32 %v509, %v541
  %v553 = vmul.f32 %v514, %v541
  %v554 = vmul.f32 %v517, %v541
  %v555 = vmul.f32 %v522, %v541
  %v556 = vmul.f32 %v525, %v541
  %v557 = vmul.f32 %v530, %v541
  %v558 = vmul.f32 %v533, %v541
  %v559 = vld [vmem:[%s3] sm:$0x1]
  %v561 = vlaneseq
  %v562 = vshrl.u32 %v561, 7
  %v563 = vsub.s32 0, %v562
  %v564 = vrot.slane %v559, %v563
  %v566 = vadd.f32 %v543, %v564
  %v567 = vadd.f32 %v544, %v564
  %v568 = vadd.f32 %v545, %v564
  %v569 = vadd.f32 %v546, %v564
  %v570 = vadd.f32 %v547, %v564
  %v571 = vadd.f32 %v548, %v564
  %v572 = vadd.f32 %v549, %v564
  %v573 = vadd.f32 %v550, %v564
  %v574 = vadd.f32 %v551, %v564
  %v575 = vadd.f32 %v552, %v564
  %v576 = vadd.f32 %v553, %v564
  %v577 = vadd.f32 %v554, %v564
  %v578 = vadd.f32 %v555, %v564
  %v579 = vadd.f32 %v556, %v564
  %v580 = vadd.f32 %v557, %v564
  %v581 = vadd.f32 %v558, %v564
  %v582 = vld [vmem:[%s4] sm:$0xff]
  %v583 = vld [vmem:[%s4 + $0x8] sm:$0xff]
  %v584 = vld [vmem:[%s4 + $0x10] sm:$0xff]
  %v585 = vld [vmem:[%s4 + $0x18] sm:$0xff]
  %v586 = vld [vmem:[%s4 + $0x20] sm:$0xff]
  %v587 = vld [vmem:[%s4 + $0x28] sm:$0xff]
  %v588 = vld [vmem:[%s4 + $0x30] sm:$0xff]
  %v589 = vld [vmem:[%s4 + $0x38] sm:$0xff]
  %v590 = vld [vmem:[%s4 + $0x40] sm:$0xff]
  %v591 = vld [vmem:[%s4 + $0x48] sm:$0xff]
  %v592 = vld [vmem:[%s4 + $0x50] sm:$0xff]
  %v593 = vld [vmem:[%s4 + $0x58] sm:$0xff]
  %v594 = vld [vmem:[%s4 + $0x60] sm:$0xff]
  %v595 = vld [vmem:[%s4 + $0x68] sm:$0xff]
  %v596 = vld [vmem:[%s4 + $0x70] sm:$0xff]
  %v597 = vld [vmem:[%s4 + $0x78] sm:$0xff]
  %v598 = vadd.f32 %v566, %v582
  %v599 = vadd.f32 %v567, %v583
  %v600 = vadd.f32 %v568, %v584
  %v601 = vadd.f32 %v569, %v585
  %v602 = vadd.f32 %v570, %v586
  %v603 = vadd.f32 %v571, %v587
  %v604 = vadd.f32 %v572, %v588
  %v605 = vadd.f32 %v573, %v589
  %v606 = vadd.f32 %v574, %v590
  %v607 = vadd.f32 %v575, %v591
  %v608 = vadd.f32 %v576, %v592
  %v609 = vadd.f32 %v577, %v593
  %v610 = vadd.f32 %v578, %v594
  %v611 = vadd.f32 %v579, %v595
  %v612 = vadd.f32 %v580, %v596
  %v613 = vadd.f32 %v581, %v597
  %v614 = vmax.f32 %v598, 0.0
  %v615 = vmax.f32 %v599, 0.0
  %v616 = vmax.f32 %v600, 0.0
  %v617 = vmax.f32 %v601, 0.0
  %v618 = vmax.f32 %v602, 0.0
  %v619 = vmax.f32 %v603, 0.0
  %v620 = vmax.f32 %v604, 0.0
  %v621 = vmax.f32 %v605, 0.0
  %v622 = vmax.f32 %v606, 0.0
  %v623 = vmax.f32 %v607, 0.0
  %v624 = vmax.f32 %v608, 0.0
  %v625 = vmax.f32 %v609, 0.0
  %v626 = vmax.f32 %v610, 0.0
  %v627 = vmax.f32 %v611, 0.0
  %v628 = vmax.f32 %v612, 0.0
  %v629 = vmax.f32 %v613, 0.0
  %630 = vst [vmem:[%s5] sm:$0xff] %v614
  %631 = vst [vmem:[%s5 + $0x8] sm:$0xff] %v615
  %632 = vst [vmem:[%s5 + $0x10] sm:$0xff] %v616
  %633 = vst [vmem:[%s5 + $0x18] sm:$0xff] %v617
  %634 = vst [vmem:[%s5 + $0x20] sm:$0xff] %v618
  %635 = vst [vmem:[%s5 + $0x28] sm:$0xff] %v619
  %636 = vst [vmem:[%s5 + $0x30] sm:$0xff] %v620
  %637 = vst [vmem:[%s5 + $0x38] sm:$0xff] %v621
  %638 = vst [vmem:[%s5 + $0x40] sm:$0xff] %v622
  %639 = vst [vmem:[%s5 + $0x48] sm:$0xff] %v623
  %640 = vst [vmem:[%s5 + $0x50] sm:$0xff] %v624
  %641 = vst [vmem:[%s5 + $0x58] sm:$0xff] %v625
  %642 = vst [vmem:[%s5 + $0x60] sm:$0xff] %v626
  %643 = vst [vmem:[%s5 + $0x68] sm:$0xff] %v627
  %644 = vst [vmem:[%s5 + $0x70] sm:$0xff] %v628
  %645 = vst [vmem:[%s5 + $0x78] sm:$0xff] %v629
  // Predicated region
  $region22: #{_lambda_.32} parent=0 // pred_check
    _
  $region23: #{_lambda_.32} parent=0 // pred_check_branch
    %647 = sbr.rel (0) target = $region25
  $region24: #{_lambda_.32} parent=0 // pred_region
    _
  $region25: #{_lambda_.32} parent=0 // pred_fallthru
    _
  // Predicated region
  $region26: #{_lambda_.32} parent=0 // pred_check
    _
  $region27: #{_lambda_.32} parent=0 // pred_check_branch
    %649 = sbr.rel (0) target = $region29
  $region28: #{_lambda_.32} parent=0 // pred_region
    _
  $region29: #{_lambda_.32} parent=0 // pred_fallthru
    _

// kernel: _lambda_.33
$region0: #{_lambda_.33}
  #allocation0 [shape = 'u32[]', space=smem, size = 0x4, offset = 0x4, fixed_abs, tag = 'smem constant byte address 0x4 - core index']
  #allocation1 [shape = 'u32[144,128]{1,0:T(1,128)}', space=vmem, size = 0x12000, scoped, tag = 'internal scratch']
  %s0 = inlined_call_operand.vmem [shape: bf16[128,288], index: 0, kind: input, shape index: {}]
  %s1 = inlined_call_operand.vmem [shape: bf16[288,128], index: 1, kind: input, shape index: {}]
  %s2 = inlined_call_operand.vmem [shape: f32[1,128], index: 2, kind: input, shape index: {}]
  %s3 = inlined_call_operand.vmem [shape: f32[1,128], index: 3, kind: input, shape index: {}]
  %s4 = inlined_call_operand.vmem [shape: f32[128,128], index: 4, kind: output, shape index: {}]
  %s5 = sld [smem:[#allocation0]]
  $region26: #{_lambda_.33} parent=0
    _
  %s7 = ssub.s32 1, %s5
  %s8 = scalar_select 0, %s7, %s5
  // Predicated region
  $region2: #{_lambda_.33} parent=0 // pred_check
    _
  $region3: #{_lambda_.33} parent=0 // pred_check_branch
    %10 = sbr.rel (0) target = $region5
  $region4: #{_lambda_.33} parent=0 // pred_region
    _
  $region5: #{_lambda_.33} parent=0 // pred_fallthru
    _
  // Predicated region
  $region6: #{_lambda_.33} parent=0 // pred_check
    _
  $region7: #{_lambda_.33} parent=0 // pred_check_branch
    %12 = sbr.rel (0) target = $region9
  $region8: #{_lambda_.33} parent=0 // pred_region
    _
  $region9: #{_lambda_.33} parent=0 // pred_fallthru
    _
  // Predicated region
  $region10: #{_lambda_.33} parent=0 // pred_check
    _
  $region11: #{_lambda_.33} parent=0 // pred_check_branch
    %14 = sbr.rel (0) target = $region13
  $region12: #{_lambda_.33} parent=0 // pred_region
    _
  $region13: #{_lambda_.33} parent=0 // pred_fallthru
    _
  // Predicated region
  $region14: #{_lambda_.33} parent=0 // pred_check
    _
  $region15: #{_lambda_.33} parent=0 // pred_check_branch
    %16 = sbr.rel (0) target = $region17
  $region16: #{_lambda_.33} parent=0 // pred_region
    _
  $region17: #{_lambda_.33} parent=0 // pred_fallthru
    _
  %v18 = vld [vmem:[%s0] sm:$0xff]
  %v19 = vld [vmem:[%s0 + $0x8] sm:$0xf]
  %v20 = vld [vmem:[%s0 + $0xc] sm:$0xff]
  %v21 = vld [vmem:[%s0 + $0x14] sm:$0xf]
  %v22 = vld [vmem:[%s0 + $0x18] sm:$0xff]
  %v23 = vld [vmem:[%s0 + $0x20] sm:$0xf]
  %v24 = vld [vmem:[%s0 + $0x24] sm:$0xff]
  %v25 = vld [vmem:[%s0 + $0x2c] sm:$0xf]
  %v26 = vld [vmem:[%s0 + $0x30] sm:$0xff]
  %v27 = vld [vmem:[%s0 + $0x38] sm:$0xf]
  %v28 = vld [vmem:[%s0 + $0x3c] sm:$0xff]
  %v29 = vld [vmem:[%s0 + $0x44] sm:$0xf]
  %v30 = vld [vmem:[%s0 + $0x48] sm:$0xff]
  %v31 = vld [vmem:[%s0 + $0x50] sm:$0xf]
  %v32 = vld [vmem:[%s0 + $0x54] sm:$0xff]
  %v33 = vld [vmem:[%s0 + $0x5c] sm:$0xf]
  %v34 = vld [vmem:[%s0 + $0x60] sm:$0xff]
  %v35 = vld [vmem:[%s0 + $0x68] sm:$0xf]
  %v36 = vld [vmem:[%s0 + $0x6c] sm:$0xff]
  %v37 = vld [vmem:[%s0 + $0x74] sm:$0xf]
  %v38 = vld [vmem:[%s0 + $0x78] sm:$0xff]
  %v39 = vld [vmem:[%s0 + $0x80] sm:$0xf]
  %v40 = vld [vmem:[%s0 + $0x84] sm:$0xff]
  %v41 = vld [vmem:[%s0 + $0x8c] sm:$0xf]
  %v42 = vld [vmem:[%s0 + $0x90] sm:$0xff]
  %v43 = vld [vmem:[%s0 + $0x98] sm:$0xf]
  %v44 = vld [vmem:[%s0 + $0x9c] sm:$0xff]
  %v45 = vld [vmem:[%s0 + $0xa4] sm:$0xf]
  %v46 = vld [vmem:[%s0 + $0xa8] sm:$0xff]
  %v47 = vld [vmem:[%s0 + $0xb0] sm:$0xf]
  %v48 = vld [vmem:[%s0 + $0xb4] sm:$0xff]
  %v49 = vld [vmem:[%s0 + $0xbc] sm:$0xf]
  %v50 = vld [vmem:[%s1] sm:$0xf]
  %v51 = vld [vmem:[%s1 + $0x4] sm:$0xf]
  %v52 = vld [vmem:[%s1 + $0x8] sm:$0xf]
  %v53 = vld [vmem:[%s1 + $0xc] sm:$0xf]
  %v54 = vld [vmem:[%s1 + $0x10] sm:$0xf]
  %v55 = vld [vmem:[%s1 + $0x14] sm:$0xf]
  %v56 = vld [vmem:[%s1 + $0x18] sm:$0xf]
  %v57 = vld [vmem:[%s1 + $0x1c] sm:$0xf]
  %v58 = vld [vmem:[%s1 + $0x20] sm:$0xf]
  %v59 = vld [vmem:[%s1 + $0x24] sm:$0xf]
  %v60 = vld [vmem:[%s1 + $0x28] sm:$0xf]
  %v61 = vld [vmem:[%s1 + $0x2c] sm:$0xf]
  %v62 = vld [vmem:[%s1 + $0x30] sm:$0xf]
  %v63 = vld [vmem:[%s1 + $0x34] sm:$0xf]
  %v64 = vld [vmem:[%s1 + $0x38] sm:$0xf]
  %v65 = vld [vmem:[%s1 + $0x3c] sm:$0xf]
  %v66 = vld [vmem:[%s1 + $0x40] sm:$0xf]
  %v67 = vld [vmem:[%s1 + $0x44] sm:$0xf]
  %v68 = vld [vmem:[%s1 + $0x48] sm:$0xf]
  %v69 = vld [vmem:[%s1 + $0x4c] sm:$0xf]
  %v70 = vld [vmem:[%s1 + $0x50] sm:$0xf]
  %v71 = vld [vmem:[%s1 + $0x54] sm:$0xf]
  %v72 = vld [vmem:[%s1 + $0x58] sm:$0xf]
  %v73 = vld [vmem:[%s1 + $0x5c] sm:$0xf]
  %v74 = vld [vmem:[%s1 + $0x60] sm:$0xf]
  %v75 = vld [vmem:[%s1 + $0x64] sm:$0xf]
  %v76 = vld [vmem:[%s1 + $0x68] sm:$0xf]
  %v77 = vld [vmem:[%s1 + $0x6c] sm:$0xf]
  %v78 = vld [vmem:[%s1 + $0x70] sm:$0xf]
  %v79 = vld [vmem:[%s1 + $0x74] sm:$0xf]
  %v80 = vld [vmem:[%s1 + $0x78] sm:$0xf]
  %v81 = vld [vmem:[%s1 + $0x7c] sm:$0xf]
  %v82 = vld [vmem:[%s1 + $0x80] sm:$0xf]
  %v83 = vld [vmem:[%s1 + $0x84] sm:$0xf]
  %v84 = vld [vmem:[%s1 + $0x88] sm:$0xf]
  %v85 = vld [vmem:[%s1 + $0x8c] sm:$0xf]
  %v118 = vunpack.c.l.b16 %v18
  %v119 = vunpack.c.h.b16 %v18
  %v120 = vunpack.c.l.b16 %v19
  %v121 = vunpack.c.l.b16 %v20
  %v122 = vunpack.c.h.b16 %v20
  %v123 = vunpack.c.l.b16 %v21
  %v124 = vunpack.c.l.b16 %v22
  %v125 = vunpack.c.h.b16 %v22
  %v126 = vunpack.c.l.b16 %v23
  %v127 = vunpack.c.l.b16 %v24
  %v128 = vunpack.c.h.b16 %v24
  %v129 = vunpack.c.l.b16 %v25
  %v130 = vunpack.c.l.b16 %v26
  %v131 = vunpack.c.h.b16 %v26
  %v132 = vunpack.c.l.b16 %v27
  %v133 = vunpack.c.l.b16 %v28
  %v134 = vunpack.c.h.b16 %v28
  %v135 = vunpack.c.l.b16 %v29
  %v136 = vunpack.c.l.b16 %v30
  %v137 = vunpack.c.h.b16 %v30
  %v138 = vunpack.c.l.b16 %v31
  %v139 = vunpack.c.l.b16 %v32
  %v140 = vunpack.c.h.b16 %v32
  %v141 = vunpack.c.l.b16 %v33
  %v142 = vunpack.c.l.b16 %v34
  %v143 = vunpack.c.h.b16 %v34
  %v144 = vunpack.c.l.b16 %v35
  %v145 = vunpack.c.l.b16 %v36
  %v146 = vunpack.c.h.b16 %v36
  %v147 = vunpack.c.l.b16 %v37
  %v148 = vunpack.c.l.b16 %v38
  %v149 = vunpack.c.h.b16 %v38
  %v150 = vunpack.c.l.b16 %v39
  %v151 = vunpack.c.l.b16 %v40
  %v152 = vunpack.c.h.b16 %v40
  %v153 = vunpack.c.l.b16 %v41
  %v154 = vunpack.c.l.b16 %v42
  %v155 = vunpack.c.h.b16 %v42
  %v156 = vunpack.c.l.b16 %v43
  %v157 = vunpack.c.l.b16 %v44
  %v158 = vunpack.c.h.b16 %v44
  %v159 = vunpack.c.l.b16 %v45
  %v160 = vunpack.c.l.b16 %v46
  %v161 = vunpack.c.h.b16 %v46
  %v162 = vunpack.c.l.b16 %v47
  %v163 = vunpack.c.l.b16 %v48
  %v164 = vunpack.c.h.b16 %v48
  %v165 = vunpack.c.l.b16 %v49
  %v166 = vpack.c.b16 %v121, %v118
  %v167 = vpack.c.b16 %v122, %v119
  %v168 = vpack.c.b16 %v123, %v120
  %v169 = vpack.c.b16 %v127, %v124
  %v170 = vpack.c.b16 %v128, %v125
  %v171 = vpack.c.b16 %v129, %v126
  %v172 = vpack.c.b16 %v133, %v130
  %v173 = vpack.c.b16 %v134, %v131
  %v174 = vpack.c.b16 %v135, %v132
  %v175 = vpack.c.b16 %v139, %v136
  %v176 = vpack.c.b16 %v140, %v137
  %v177 = vpack.c.b16 %v141, %v138
  %v178 = vpack.c.b16 %v145, %v142
  %v179 = vpack.c.b16 %v146, %v143
  %v180 = vpack.c.b16 %v147, %v144
  %v181 = vpack.c.b16 %v151, %v148
  %v182 = vpack.c.b16 %v152, %v149
  %v183 = vpack.c.b16 %v153, %v150
  %v184 = vpack.c.b16 %v157, %v154
  %v185 = vpack.c.b16 %v158, %v155
  %v186 = vpack.c.b16 %v159, %v156
  %v187 = vpack.c.b16 %v163, %v160
  %v188 = vpack.c.b16 %v164, %v161
  %v189 = vpack.c.b16 %v165, %v162
  %v242 = vunpack.c.l.b16 %v50
  %v243 = vunpack.c.l.b16 %v51
  %v244 = vunpack.c.l.b16 %v52
  %v245 = vunpack.c.l.b16 %v53
  %v246 = vunpack.c.l.b16 %v54
  %v247 = vunpack.c.l.b16 %v55
  %v248 = vunpack.c.l.b16 %v56
  %v249 = vunpack.c.l.b16 %v57
  %v250 = vunpack.c.l.b16 %v58
  %v251 = vunpack.c.l.b16 %v59
  %v252 = vunpack.c.l.b16 %v60
  %v253 = vunpack.c.l.b16 %v61
  %v254 = vunpack.c.l.b16 %v62
  %v255 = vunpack.c.l.b16 %v63
  %v256 = vunpack.c.l.b16 %v64
  %v257 = vunpack.c.l.b16 %v65
  %v258 = vunpack.c.l.b16 %v66
  %v259 = vunpack.c.l.b16 %v67
  %v260 = vunpack.c.l.b16 %v68
  %v261 = vunpack.c.l.b16 %v69
  %v262 = vunpack.c.l.b16 %v70
  %v263 = vunpack.c.l.b16 %v71
  %v264 = vunpack.c.l.b16 %v72
  %v265 = vunpack.c.l.b16 %v73
  %v266 = vunpack.c.l.b16 %v74
  %v267 = vunpack.c.l.b16 %v75
  %v268 = vunpack.c.l.b16 %v76
  %v269 = vunpack.c.l.b16 %v77
  %v270 = vunpack.c.l.b16 %v78
  %v271 = vunpack.c.l.b16 %v79
  %v272 = vunpack.c.l.b16 %v80
  %v273 = vunpack.c.l.b16 %v81
  %v274 = vunpack.c.l.b16 %v82
  %v275 = vunpack.c.l.b16 %v83
  %v276 = vunpack.c.l.b16 %v84
  %v277 = vunpack.c.l.b16 %v85
  %v278 = vpack.c.b16 %v243, %v242
  %v279 = vpack.c.b16 %v245, %v244
  %v280 = vpack.c.b16 %v247, %v246
  %v281 = vpack.c.b16 %v249, %v248
  %v282 = vpack.c.b16 %v251, %v250
  %v283 = vpack.c.b16 %v253, %v252
  %v284 = vpack.c.b16 %v255, %v254
  %v285 = vpack.c.b16 %v257, %v256
  %v286 = vpack.c.b16 %v259, %v258
  %v287 = vpack.c.b16 %v261, %v260
  %v288 = vpack.c.b16 %v263, %v262
  %v289 = vpack.c.b16 %v265, %v264
  %v290 = vpack.c.b16 %v267, %v266
  %v291 = vpack.c.b16 %v269, %v268
  %v292 = vpack.c.b16 %v271, %v270
  %v293 = vpack.c.b16 %v273, %v272
  %v294 = vpack.c.b16 %v275, %v274
  %v295 = vpack.c.b16 %v277, %v276
  %vm314 = vcmask 261120
  %v316 = vsel %vm314, %v168, 0
  %v319 = vsel %vm314, %v171, 0
  %v322 = vsel %vm314, %v174, 0
  %v325 = vsel %vm314, %v177, 0
  %v328 = vsel %vm314, %v180, 0
  %v331 = vsel %vm314, %v183, 0
  %v334 = vsel %vm314, %v186, 0
  %v337 = vsel %vm314, %v189, 0
  %339 = vmatprep.subr.bf16.mxu0 0
  %340 = vmatpush1.bf16.msra.mxu0 %v278
  %341 = vmatprep.subr.bf16.mxu0 0
  %342 = vmatpush1.bf16.msra.mxu0 %v279
  %343 = vmatprep.subr.bf16.mxu0 0
  %344 = vmatpush1.bf16.msra.mxu0 %v280
  %345 = vmatprep.subr.bf16.mxu0 0
  %346 = vmatpush1.bf16.msra.mxu0 %v281
  %347 = vmatprep.subr.bf16.mxu0 0
  %348 = vmatpush1.bf16.msra.mxu0 %v282
  %349 = vmatprep.subr.bf16.mxu0 0
  %350 = vmatpush1.bf16.msra.mxu0 %v283
  %351 = vmatprep.subr.bf16.mxu0 0
  %352 = vmatpush1.bf16.msra.mxu0 %v284
  %353 = vmatprep.subr.bf16.mxu0 0
  %354 = vmatpush1.bf16.msra.mxu0 %v285
  %355 = vmatprep.subr.bf16.mxu0 0
  %356 = vmatpush1.bf16.msra.mxu0 %v286
  %357 = vmatprep.subr.bf16.mxu0 0
  %358 = vmatpush1.bf16.msra.mxu0 %v287
  %359 = vmatprep.subr.bf16.mxu0 0
  %360 = vmatpush1.bf16.msra.mxu0 %v288
  %361 = vmatprep.subr.bf16.mxu0 0
  %362 = vmatpush1.bf16.msra.mxu0 %v289
  %363 = vmatprep.subr.bf16.mxu0 0
  %364 = vmatpush1.bf16.msra.mxu0 %v290
  %365 = vmatprep.subr.bf16.mxu0 0
  %366 = vmatpush1.bf16.msra.mxu0 %v291
  %367 = vmatprep.subr.bf16.mxu0 0
  %368 = vmatpush1.bf16.msra.mxu0 %v292
  %369 = vmatprep.subr.bf16.mxu0 0
  %370 = vmatpush1.bf16.msra.mxu0 %v293
  %371 = vmatprep.mubr.bf16.mxu0 %v167
  %372 = vmatmul.mubr.bf16.gmra.mrb[0].mxu0 %v166
  %v373 = vpop.f32.mrb[0].mxu0
  %v374 = vadd.f32 0.0, %v373
  %v375 = vpop.f32.mrb[0].mxu0
  %v376 = vpop.f32.mrb[0].mxu0
  %v377 = vadd.f32 0.0, %v376
  %v378 = vpop.f32.mrb[0].mxu0
  %379 = vmatprep.mubr.bf16.mxu0 %v170
  %380 = vmatmul.mubr.bf16.gmra.mrb[0].mxu0 %v169
  %v381 = vpop.f32.mrb[0].mxu0
  %v382 = vadd.f32 0.0, %v381
  %v383 = vpop.f32.mrb[0].mxu0
  %v384 = vpop.f32.mrb[0].mxu0
  %v385 = vadd.f32 0.0, %v384
  %v386 = vpop.f32.mrb[0].mxu0
  %387 = vmatprep.mubr.bf16.mxu0 %v173
  %388 = vmatmul.mubr.bf16.gmra.mrb[0].mxu0 %v172
  %v389 = vpop.f32.mrb[0].mxu0
  %v390 = vadd.f32 0.0, %v389
  %v391 = vpop.f32.mrb[0].mxu0
  %v392 = vpop.f32.mrb[0].mxu0
  %v393 = vadd.f32 0.0, %v392
  %v394 = vpop.f32.mrb[0].mxu0
  %395 = vmatprep.mubr.bf16.mxu0 %v176
  %396 = vmatmul.mubr.bf16.gmra.mrb[0].mxu0 %v175
  %v397 = vpop.f32.mrb[0].mxu0
  %v398 = vadd.f32 0.0, %v397
  %v399 = vpop.f32.mrb[0].mxu0
  %v400 = vpop.f32.mrb[0].mxu0
  %v401 = vadd.f32 0.0, %v400
  %v402 = vpop.f32.mrb[0].mxu0
  %403 = vmatprep.mubr.bf16.mxu0 %v179
  %404 = vmatmul.mubr.bf16.gmra.mrb[0].mxu0 %v178
  %v405 = vpop.f32.mrb[0].mxu0
  %v406 = vadd.f32 0.0, %v405
  %v407 = vpop.f32.mrb[0].mxu0
  %v408 = vpop.f32.mrb[0].mxu0
  %v409 = vadd.f32 0.0, %v408
  %v410 = vpop.f32.mrb[0].mxu0
  %411 = vmatprep.mubr.bf16.mxu0 %v182
  %412 = vmatmul.mubr.bf16.gmra.mrb[0].mxu0 %v181
  %v413 = vpop.f32.mrb[0].mxu0
  %v414 = vadd.f32 0.0, %v413
  %v415 = vpop.f32.mrb[0].mxu0
  %v416 = vpop.f32.mrb[0].mxu0
  %v417 = vadd.f32 0.0, %v416
  %v418 = vpop.f32.mrb[0].mxu0
  %419 = vmatprep.mubr.bf16.mxu0 %v185
  %420 = vmatmul.mubr.bf16.gmra.mrb[0].mxu0 %v184
  %v421 = vpop.f32.mrb[0].mxu0
  %v422 = vadd.f32 0.0, %v421
  %v423 = vpop.f32.mrb[0].mxu0
  %v424 = vpop.f32.mrb[0].mxu0
  %v425 = vadd.f32 0.0, %v424
  %v426 = vpop.f32.mrb[0].mxu0
  %427 = vmatprep.mubr.bf16.mxu0 %v188
  %428 = vmatmul.mubr.bf16.gmra.mrb[0].mxu0 %v187
  %v429 = vpop.f32.mrb[0].mxu0
  %v430 = vadd.f32 0.0, %v429
  %v431 = vpop.f32.mrb[0].mxu0
  %v432 = vpop.f32.mrb[0].mxu0
  %v433 = vadd.f32 0.0, %v432
  %v434 = vpop.f32.mrb[0].mxu0
  %435 = vdwg.mxu0
  %436 = vmatprep.subr.bf16.mxu0 0
  %437 = vmatpush1.bf16.msra.mxu0 %v294
  %438 = vmatprep.subr.bf16.mxu0 0
  %439 = vmatpush1.bf16.msra.mxu0 %v295
  %440 = vmatprep.subr.bf16.mxu0 0
  %441 = vmatpush1.bf16.msra.mxu0 0
  %442 = vmatprep.subr.bf16.mxu0 0
  %443 = vmatpush1.bf16.msra.mxu0 0
  %444 = vmatprep.subr.bf16.mxu0 0
  %445 = vmatpush1.bf16.msra.mxu0 0
  %446 = vmatprep.subr.bf16.mxu0 0
  %447 = vmatpush1.bf16.msra.mxu0 0
  %448 = vmatprep.subr.bf16.mxu0 0
  %449 = vmatpush1.bf16.msra.mxu0 0
  %450 = vmatprep.subr.bf16.mxu0 0
  %451 = vmatpush1.bf16.msra.mxu0 0
  %452 = vmatprep.subr.bf16.mxu0 0
  %453 = vmatpush1.bf16.msra.mxu0 0
  %454 = vmatprep.subr.bf16.mxu0 0
  %455 = vmatpush1.bf16.msra.mxu0 0
  %456 = vmatprep.subr.bf16.mxu0 0
  %457 = vmatpush1.bf16.msra.mxu0 0
  %458 = vmatprep.subr.bf16.mxu0 0
  %459 = vmatpush1.bf16.msra.mxu0 0
  %460 = vmatprep.subr.bf16.mxu0 0
  %461 = vmatpush1.bf16.msra.mxu0 0
  %462 = vmatprep.subr.bf16.mxu0 0
  %463 = vmatpush1.bf16.msra.mxu0 0
  %464 = vmatprep.subr.bf16.mxu0 0
  %465 = vmatpush1.bf16.msra.mxu0 0
  %466 = vmatprep.subr.bf16.mxu0 0
  %467 = vmatpush1.bf16.msra.mxu0 0
  %468 = vmatprep.mubr.bf16.mxu0 0
  %469 = vmatmul.mubr.bf16.gmra.mrb[0].mxu0 %v316
  %v470 = vpop.f32.mrb[0].mxu0
  %v471 = vadd.f32 %v374, %v470
  %v472 = vpop.f32.mrb[0].mxu0
  %v473 = vpop.f32.mrb[0].mxu0
  %v474 = vadd.f32 %v377, %v473
  %v475 = vpop.f32.mrb[0].mxu0
  %476 = vmatprep.mubr.bf16.mxu0 0
  %477 = vmatmul.mubr.bf16.gmra.mrb[0].mxu0 %v319
  %v478 = vpop.f32.mrb[0].mxu0
  %v479 = vadd.f32 %v382, %v478
  %v480 = vpop.f32.mrb[0].mxu0
  %v481 = vpop.f32.mrb[0].mxu0
  %v482 = vadd.f32 %v385, %v481
  %v483 = vpop.f32.mrb[0].mxu0
  %484 = vmatprep.mubr.bf16.mxu0 0
  %485 = vmatmul.mubr.bf16.gmra.mrb[0].mxu0 %v322
  %v486 = vpop.f32.mrb[0].mxu0
  %v487 = vadd.f32 %v390, %v486
  %v488 = vpop.f32.mrb[0].mxu0
  %v489 = vpop.f32.mrb[0].mxu0
  %v490 = vadd.f32 %v393, %v489
  %v491 = vpop.f32.mrb[0].mxu0
  %492 = vmatprep.mubr.bf16.mxu0 0
  %493 = vmatmul.mubr.bf16.gmra.mrb[0].mxu0 %v325
  %v494 = vpop.f32.mrb[0].mxu0
  %v495 = vadd.f32 %v398, %v494
  %v496 = vpop.f32.mrb[0].mxu0
  %v497 = vpop.f32.mrb[0].mxu0
  %v498 = vadd.f32 %v401, %v497
  %v499 = vpop.f32.mrb[0].mxu0
  %500 = vmatprep.mubr.bf16.mxu0 0
  %501 = vmatmul.mubr.bf16.gmra.mrb[0].mxu0 %v328
  %v502 = vpop.f32.mrb[0].mxu0
  %v503 = vadd.f32 %v406, %v502
  %v504 = vpop.f32.mrb[0].mxu0
  %v505 = vpop.f32.mrb[0].mxu0
  %v506 = vadd.f32 %v409, %v505
  %v507 = vpop.f32.mrb[0].mxu0
  %508 = vmatprep.mubr.bf16.mxu0 0
  %509 = vmatmul.mubr.bf16.gmra.mrb[0].mxu0 %v331
  %v510 = vpop.f32.mrb[0].mxu0
  %v511 = vadd.f32 %v414, %v510
  %v512 = vpop.f32.mrb[0].mxu0
  %v513 = vpop.f32.mrb[0].mxu0
  %v514 = vadd.f32 %v417, %v513
  %v515 = vpop.f32.mrb[0].mxu0
  %516 = vmatprep.mubr.bf16.mxu0 0
  %517 = vmatmul.mubr.bf16.gmra.mrb[0].mxu0 %v334
  %v518 = vpop.f32.mrb[0].mxu0
  %v519 = vadd.f32 %v422, %v518
  %v520 = vpop.f32.mrb[0].mxu0
  %v521 = vpop.f32.mrb[0].mxu0
  %v522 = vadd.f32 %v425, %v521
  %v523 = vpop.f32.mrb[0].mxu0
  %524 = vmatprep.mubr.bf16.mxu0 0
  %525 = vmatmul.mubr.bf16.gmra.mrb[0].mxu0 %v337
  %v526 = vpop.f32.mrb[0].mxu0
  %v527 = vadd.f32 %v430, %v526
  %v528 = vpop.f32.mrb[0].mxu0
  %v529 = vpop.f32.mrb[0].mxu0
  %v530 = vadd.f32 %v433, %v529
  %v531 = vpop.f32.mrb[0].mxu0
  %532 = vdwg.mxu0
  %v533 = vld [vmem:[%s2] sm:$0x1]
  %v535 = vlaneseq
  %v536 = vshrl.u32 %v535, 7
  %v537 = vsub.s32 0, %v536
  %v538 = vrot.slane %v533, %v537
  %v540 = vmul.f32 %v471, %v538
  %v541 = vmul.f32 %v474, %v538
  %v542 = vmul.f32 %v479, %v538
  %v543 = vmul.f32 %v482, %v538
  %v544 = vmul.f32 %v487, %v538
  %v545 = vmul.f32 %v490, %v538
  %v546 = vmul.f32 %v495, %v538
  %v547 = vmul.f32 %v498, %v538
  %v548 = vmul.f32 %v503, %v538
  %v549 = vmul.f32 %v506, %v538
  %v550 = vmul.f32 %v511, %v538
  %v551 = vmul.f32 %v514, %v538
  %v552 = vmul.f32 %v519, %v538
  %v553 = vmul.f32 %v522, %v538
  %v554 = vmul.f32 %v527, %v538
  %v555 = vmul.f32 %v530, %v538
  %v556 = vld [vmem:[%s3] sm:$0x1]
  %v558 = vlaneseq
  %v559 = vshrl.u32 %v558, 7
  %v560 = vsub.s32 0, %v559
  %v561 = vrot.slane %v556, %v560
  %v563 = vadd.f32 %v540, %v561
  %v564 = vadd.f32 %v541, %v561
  %v565 = vadd.f32 %v542, %v561
  %v566 = vadd.f32 %v543, %v561
  %v567 = vadd.f32 %v544, %v561
  %v568 = vadd.f32 %v545, %v561
  %v569 = vadd.f32 %v546, %v561
  %v570 = vadd.f32 %v547, %v561
  %v571 = vadd.f32 %v548, %v561
  %v572 = vadd.f32 %v549, %v561
  %v573 = vadd.f32 %v550, %v561
  %v574 = vadd.f32 %v551, %v561
  %v575 = vadd.f32 %v552, %v561
  %v576 = vadd.f32 %v553, %v561
  %v577 = vadd.f32 %v554, %v561
  %v578 = vadd.f32 %v555, %v561
  %v579 = vmax.f32 %v563, 0.0
  %v580 = vmax.f32 %v564, 0.0
  %v581 = vmax.f32 %v565, 0.0
  %v582 = vmax.f32 %v566, 0.0
  %v583 = vmax.f32 %v567, 0.0
  %v584 = vmax.f32 %v568, 0.0
  %v585 = vmax.f32 %v569, 0.0
  %v586 = vmax.f32 %v570, 0.0
  %v587 = vmax.f32 %v571, 0.0
  %v588 = vmax.f32 %v572, 0.0
  %v589 = vmax.f32 %v573, 0.0
  %v590 = vmax.f32 %v574, 0.0
  %v591 = vmax.f32 %v575, 0.0
  %v592 = vmax.f32 %v576, 0.0
  %v593 = vmax.f32 %v577, 0.0
  %v594 = vmax.f32 %v578, 0.0
  %595 = vst [vmem:[%s4] sm:$0xff] %v579
  %596 = vst [vmem:[%s4 + $0x8] sm:$0xff] %v580
  %597 = vst [vmem:[%s4 + $0x10] sm:$0xff] %v581
  %598 = vst [vmem:[%s4 + $0x18] sm:$0xff] %v582
  %599 = vst [vmem:[%s4 + $0x20] sm:$0xff] %v583
  %600 = vst [vmem:[%s4 + $0x28] sm:$0xff] %v584
  %601 = vst [vmem:[%s4 + $0x30] sm:$0xff] %v585
  %602 = vst [vmem:[%s4 + $0x38] sm:$0xff] %v586
  %603 = vst [vmem:[%s4 + $0x40] sm:$0xff] %v587
  %604 = vst [vmem:[%s4 + $0x48] sm:$0xff] %v588
  %605 = vst [vmem:[%s4 + $0x50] sm:$0xff] %v589
  %606 = vst [vmem:[%s4 + $0x58] sm:$0xff] %v590
  %607 = vst [vmem:[%s4 + $0x60] sm:$0xff] %v591
  %608 = vst [vmem:[%s4 + $0x68] sm:$0xff] %v592
  %609 = vst [vmem:[%s4 + $0x70] sm:$0xff] %v593
  %610 = vst [vmem:[%s4 + $0x78] sm:$0xff] %v594
  // Predicated region
  $region18: #{_lambda_.33} parent=0 // pred_check
    _
  $region19: #{_lambda_.33} parent=0 // pred_check_branch
    %612 = sbr.rel (0) target = $region21
  $region20: #{_lambda_.33} parent=0 // pred_region
    _
  $region21: #{_lambda_.33} parent=0 // pred_fallthru
    _
  // Predicated region
  $region22: #{_lambda_.33} parent=0 // pred_check
    _
  $region23: #{_lambda_.33} parent=0 // pred_check_branch
    %614 = sbr.rel (0) target = $region25
  $region24: #{_lambda_.33} parent=0 // pred_region
    _
  $region25: #{_lambda_.33} parent=0 // pred_fallthru
    _

// kernel: _lambda_.37
$region0: #{_lambda_.37}
  #allocation0 [shape = 'u32[]', space=smem, size = 0x4, offset = 0x4, fixed_abs, tag = 'smem constant byte address 0x4 - core index']
  #allocation1 [shape = 'u32[144,128]{1,0:T(1,128)}', space=vmem, size = 0x12000, scoped, tag = 'internal scratch']
  %s0 = inlined_call_operand.vmem [shape: bf16[128,32], index: 0, kind: input, shape index: {}]
  %s1 = inlined_call_operand.vmem [shape: bf16[32,128], index: 1, kind: input, shape index: {}]
  %s2 = inlined_call_operand.vmem [shape: f32[1,128], index: 2, kind: input, shape index: {}]
  %s3 = inlined_call_operand.vmem [shape: f32[1,128], index: 3, kind: input, shape index: {}]
  %s4 = inlined_call_operand.vmem [shape: f32[128,128], index: 4, kind: output, shape index: {}]
  %s5 = sld [smem:[#allocation0]]
  $region26: #{_lambda_.37} parent=0
    _
  %s7 = ssub.s32 1, %s5
  %s8 = scalar_select 0, %s7, %s5
  // Predicated region
  $region2: #{_lambda_.37} parent=0 // pred_check
    _
  $region3: #{_lambda_.37} parent=0 // pred_check_branch
    %10 = sbr.rel (0) target = $region5
  $region4: #{_lambda_.37} parent=0 // pred_region
    _
  $region5: #{_lambda_.37} parent=0 // pred_fallthru
    _
  // Predicated region
  $region6: #{_lambda_.37} parent=0 // pred_check
    _
  $region7: #{_lambda_.37} parent=0 // pred_check_branch
    %12 = sbr.rel (0) target = $region9
  $region8: #{_lambda_.37} parent=0 // pred_region
    _
  $region9: #{_lambda_.37} parent=0 // pred_fallthru
    _
  // Predicated region
  $region10: #{_lambda_.37} parent=0 // pred_check
    _
  $region11: #{_lambda_.37} parent=0 // pred_check_branch
    %14 = sbr.rel (0) target = $region13
  $region12: #{_lambda_.37} parent=0 // pred_region
    _
  $region13: #{_lambda_.37} parent=0 // pred_fallthru
    _
  // Predicated region
  $region14: #{_lambda_.37} parent=0 // pred_check
    _
  $region15: #{_lambda_.37} parent=0 // pred_check_branch
    %16 = sbr.rel (0) target = $region17
  $region16: #{_lambda_.37} parent=0 // pred_region
    _
  $region17: #{_lambda_.37} parent=0 // pred_fallthru
    _
  %v18 = vld [vmem:[%s0] sm:$0xf]
  %v19 = vld [vmem:[%s0 + $0x4] sm:$0xf]
  %v20 = vld [vmem:[%s0 + $0x8] sm:$0xf]
  %v21 = vld [vmem:[%s0 + $0xc] sm:$0xf]
  %v22 = vld [vmem:[%s0 + $0x10] sm:$0xf]
  %v23 = vld [vmem:[%s0 + $0x14] sm:$0xf]
  %v24 = vld [vmem:[%s0 + $0x18] sm:$0xf]
  %v25 = vld [vmem:[%s0 + $0x1c] sm:$0xf]
  %v26 = vld [vmem:[%s0 + $0x20] sm:$0xf]
  %v27 = vld [vmem:[%s0 + $0x24] sm:$0xf]
  %v28 = vld [vmem:[%s0 + $0x28] sm:$0xf]
  %v29 = vld [vmem:[%s0 + $0x2c] sm:$0xf]
  %v30 = vld [vmem:[%s0 + $0x30] sm:$0xf]
  %v31 = vld [vmem:[%s0 + $0x34] sm:$0xf]
  %v32 = vld [vmem:[%s0 + $0x38] sm:$0xf]
  %v33 = vld [vmem:[%s0 + $0x3c] sm:$0xf]
  %v34 = vld [vmem:[%s1] sm:$0xf]
  %v35 = vld [vmem:[%s1 + $0x4] sm:$0xf]
  %v36 = vld [vmem:[%s1 + $0x8] sm:$0xf]
  %v37 = vld [vmem:[%s1 + $0xc] sm:$0xf]
  %v54 = vunpack.c.l.b16 %v18
  %v55 = vunpack.c.l.b16 %v19
  %v56 = vunpack.c.l.b16 %v20
  %v57 = vunpack.c.l.b16 %v21
  %v58 = vunpack.c.l.b16 %v22
  %v59 = vunpack.c.l.b16 %v23
  %v60 = vunpack.c.l.b16 %v24
  %v61 = vunpack.c.l.b16 %v25
  %v62 = vunpack.c.l.b16 %v26
  %v63 = vunpack.c.l.b16 %v27
  %v64 = vunpack.c.l.b16 %v28
  %v65 = vunpack.c.l.b16 %v29
  %v66 = vunpack.c.l.b16 %v30
  %v67 = vunpack.c.l.b16 %v31
  %v68 = vunpack.c.l.b16 %v32
  %v69 = vunpack.c.l.b16 %v33
  %v70 = vpack.c.b16 %v55, %v54
  %v71 = vpack.c.b16 %v57, %v56
  %v72 = vpack.c.b16 %v59, %v58
  %v73 = vpack.c.b16 %v61, %v60
  %v74 = vpack.c.b16 %v63, %v62
  %v75 = vpack.c.b16 %v65, %v64
  %v76 = vpack.c.b16 %v67, %v66
  %v77 = vpack.c.b16 %v69, %v68
  %v82 = vunpack.c.l.b16 %v34
  %v83 = vunpack.c.l.b16 %v35
  %v84 = vunpack.c.l.b16 %v36
  %v85 = vunpack.c.l.b16 %v37
  %v86 = vpack.c.b16 %v83, %v82
  %v87 = vpack.c.b16 %v85, %v84
  %vm90 = vcmask 261120
  %v92 = vsel %vm90, %v70, 0
  %v95 = vsel %vm90, %v71, 0
  %v98 = vsel %vm90, %v72, 0
  %v101 = vsel %vm90, %v73, 0
  %v104 = vsel %vm90, %v74, 0
  %v107 = vsel %vm90, %v75, 0
  %v110 = vsel %vm90, %v76, 0
  %v113 = vsel %vm90, %v77, 0
  %115 = vmatprep.subr.bf16.mxu0 0
  %116 = vmatpush1.bf16.msra.mxu0 %v86
  %117 = vmatprep.subr.bf16.mxu0 0
  %118 = vmatpush1.bf16.msra.mxu0 %v87
  %119 = vmatprep.subr.bf16.mxu0 0
  %120 = vmatpush1.bf16.msra.mxu0 0
  %121 = vmatprep.subr.bf16.mxu0 0
  %122 = vmatpush1.bf16.msra.mxu0 0
  %123 = vmatprep.subr.bf16.mxu0 0
  %124 = vmatpush1.bf16.msra.mxu0 0
  %125 = vmatprep.subr.bf16.mxu0 0
  %126 = vmatpush1.bf16.msra.mxu0 0
  %127 = vmatprep.subr.bf16.mxu0 0
  %128 = vmatpush1.bf16.msra.mxu0 0
  %129 = vmatprep.subr.bf16.mxu0 0
  %130 = vmatpush1.bf16.msra.mxu0 0
  %131 = vmatprep.subr.bf16.mxu0 0
  %132 = vmatpush1.bf16.msra.mxu0 0
  %133 = vmatprep.subr.bf16.mxu0 0
  %134 = vmatpush1.bf16.msra.mxu0 0
  %135 = vmatprep.subr.bf16.mxu0 0
  %136 = vmatpush1.bf16.msra.mxu0 0
  %137 = vmatprep.subr.bf16.mxu0 0
  %138 = vmatpush1.bf16.msra.mxu0 0
  %139 = vmatprep.subr.bf16.mxu0 0
  %140 = vmatpush1.bf16.msra.mxu0 0
  %141 = vmatprep.subr.bf16.mxu0 0
  %142 = vmatpush1.bf16.msra.mxu0 0
  %143 = vmatprep.subr.bf16.mxu0 0
  %144 = vmatpush1.bf16.msra.mxu0 0
  %145 = vmatprep.subr.bf16.mxu0 0
  %146 = vmatpush1.bf16.msra.mxu0 0
  %147 = vmatprep.mubr.bf16.mxu0 0
  %148 = vmatmul.mubr.bf16.gmra.mrb[0].mxu0 %v92
  %v149 = vpop.f32.mrb[0].mxu0
  %v150 = vadd.f32 0.0, %v149
  %v151 = vpop.f32.mrb[0].mxu0
  %v152 = vpop.f32.mrb[0].mxu0
  %v153 = vadd.f32 0.0, %v152
  %v154 = vpop.f32.mrb[0].mxu0
  %155 = vmatprep.mubr.bf16.mxu0 0
  %156 = vmatmul.mubr.bf16.gmra.mrb[0].mxu0 %v95
  %v157 = vpop.f32.mrb[0].mxu0
  %v158 = vadd.f32 0.0, %v157
  %v159 = vpop.f32.mrb[0].mxu0
  %v160 = vpop.f32.mrb[0].mxu0
  %v161 = vadd.f32 0.0, %v160
  %v162 = vpop.f32.mrb[0].mxu0
  %163 = vmatprep.mubr.bf16.mxu0 0
  %164 = vmatmul.mubr.bf16.gmra.mrb[0].mxu0 %v98
  %v165 = vpop.f32.mrb[0].mxu0
  %v166 = vadd.f32 0.0, %v165
  %v167 = vpop.f32.mrb[0].mxu0
  %v168 = vpop.f32.mrb[0].mxu0
  %v169 = vadd.f32 0.0, %v168
  %v170 = vpop.f32.mrb[0].mxu0
  %171 = vmatprep.mubr.bf16.mxu0 0
  %172 = vmatmul.mubr.bf16.gmra.mrb[0].mxu0 %v101
  %v173 = vpop.f32.mrb[0].mxu0
  %v174 = vadd.f32 0.0, %v173
  %v175 = vpop.f32.mrb[0].mxu0
  %v176 = vpop.f32.mrb[0].mxu0
  %v177 = vadd.f32 0.0, %v176
  %v178 = vpop.f32.mrb[0].mxu0
  %179 = vmatprep.mubr.bf16.mxu0 0
  %180 = vmatmul.mubr.bf16.gmra.mrb[0].mxu0 %v104
  %v181 = vpop.f32.mrb[0].mxu0
  %v182 = vadd.f32 0.0, %v181
  %v183 = vpop.f32.mrb[0].mxu0
  %v184 = vpop.f32.mrb[0].mxu0
  %v185 = vadd.f32 0.0, %v184
  %v186 = vpop.f32.mrb[0].mxu0
  %187 = vmatprep.mubr.bf16.mxu0 0
  %188 = vmatmul.mubr.bf16.gmra.mrb[0].mxu0 %v107
  %v189 = vpop.f32.mrb[0].mxu0
  %v190 = vadd.f32 0.0, %v189
  %v191 = vpop.f32.mrb[0].mxu0
  %v192 = vpop.f32.mrb[0].mxu0
  %v193 = vadd.f32 0.0, %v192
  %v194 = vpop.f32.mrb[0].mxu0
  %195 = vmatprep.mubr.bf16.mxu0 0
  %196 = vmatmul.mubr.bf16.gmra.mrb[0].mxu0 %v110
  %v197 = vpop.f32.mrb[0].mxu0
  %v198 = vadd.f32 0.0, %v197
  %v199 = vpop.f32.mrb[0].mxu0
  %v200 = vpop.f32.mrb[0].mxu0
  %v201 = vadd.f32 0.0, %v200
  %v202 = vpop.f32.mrb[0].mxu0
  %203 = vmatprep.mubr.bf16.mxu0 0
  %204 = vmatmul.mubr.bf16.gmra.mrb[0].mxu0 %v113
  %v205 = vpop.f32.mrb[0].mxu0
  %v206 = vadd.f32 0.0, %v205
  %v207 = vpop.f32.mrb[0].mxu0
  %v208 = vpop.f32.mrb[0].mxu0
  %v209 = vadd.f32 0.0, %v208
  %v210 = vpop.f32.mrb[0].mxu0
  %211 = vdwg.mxu0
  %v212 = vld [vmem:[%s2] sm:$0x1]
  %v214 = vlaneseq
  %v215 = vshrl.u32 %v214, 7
  %v216 = vsub.s32 0, %v215
  %v217 = vrot.slane %v212, %v216
  %v219 = vmul.f32 %v150, %v217
  %v220 = vmul.f32 %v153, %v217
  %v221 = vmul.f32 %v158, %v217
  %v222 = vmul.f32 %v161, %v217
  %v223 = vmul.f32 %v166, %v217
  %v224 = vmul.f32 %v169, %v217
  %v225 = vmul.f32 %v174, %v217
  %v226 = vmul.f32 %v177, %v217
  %v227 = vmul.f32 %v182, %v217
  %v228 = vmul.f32 %v185, %v217
  %v229 = vmul.f32 %v190, %v217
  %v230 = vmul.f32 %v193, %v217
  %v231 = vmul.f32 %v198, %v217
  %v232 = vmul.f32 %v201, %v217
  %v233 = vmul.f32 %v206, %v217
  %v234 = vmul.f32 %v209, %v217
  %v235 = vld [vmem:[%s3] sm:$0x1]
  %v237 = vlaneseq
  %v238 = vshrl.u32 %v237, 7
  %v239 = vsub.s32 0, %v238
  %v240 = vrot.slane %v235, %v239
  %v242 = vadd.f32 %v219, %v240
  %v243 = vadd.f32 %v220, %v240
  %v244 = vadd.f32 %v221, %v240
  %v245 = vadd.f32 %v222, %v240
  %v246 = vadd.f32 %v223, %v240
  %v247 = vadd.f32 %v224, %v240
  %v248 = vadd.f32 %v225, %v240
  %v249 = vadd.f32 %v226, %v240
  %v250 = vadd.f32 %v227, %v240
  %v251 = vadd.f32 %v228, %v240
  %v252 = vadd.f32 %v229, %v240
  %v253 = vadd.f32 %v230, %v240
  %v254 = vadd.f32 %v231, %v240
  %v255 = vadd.f32 %v232, %v240
  %v256 = vadd.f32 %v233, %v240
  %v257 = vadd.f32 %v234, %v240
  %258 = vst [vmem:[%s4] sm:$0xff] %v242
  %259 = vst [vmem:[%s4 + $0x8] sm:$0xff] %v243
  %260 = vst [vmem:[%s4 + $0x10] sm:$0xff] %v244
  %261 = vst [vmem:[%s4 + $0x18] sm:$0xff] %v245
  %262 = vst [vmem:[%s4 + $0x20] sm:$0xff] %v246
  %263 = vst [vmem:[%s4 + $0x28] sm:$0xff] %v247
  %264 = vst [vmem:[%s4 + $0x30] sm:$0xff] %v248
  %265 = vst [vmem:[%s4 + $0x38] sm:$0xff] %v249
  %266 = vst [vmem:[%s4 + $0x40] sm:$0xff] %v250
  %267 = vst [vmem:[%s4 + $0x48] sm:$0xff] %v251
  %268 = vst [vmem:[%s4 + $0x50] sm:$0xff] %v252
  %269 = vst [vmem:[%s4 + $0x58] sm:$0xff] %v253
  %270 = vst [vmem:[%s4 + $0x60] sm:$0xff] %v254
  %271 = vst [vmem:[%s4 + $0x68] sm:$0xff] %v255
  %272 = vst [vmem:[%s4 + $0x70] sm:$0xff] %v256
  %273 = vst [vmem:[%s4 + $0x78] sm:$0xff] %v257
  // Predicated region
  $region18: #{_lambda_.37} parent=0 // pred_check
    _
  $region19: #{_lambda_.37} parent=0 // pred_check_branch
    %275 = sbr.rel (0) target = $region21
  $region20: #{_lambda_.37} parent=0 // pred_region
    _
  $region21: #{_lambda_.37} parent=0 // pred_fallthru
    _
  // Predicated region
  $region22: #{_lambda_.37} parent=0 // pred_check
    _
  $region23: #{_lambda_.37} parent=0 // pred_check_branch
    %277 = sbr.rel (0) target = $region25
  $region24: #{_lambda_.37} parent=0 // pred_region
    _
  $region25: #{_lambda_.37} parent=0 // pred_fallthru
    _

// kernel: _lambda_.38
$region0: #{_lambda_.38}
  #allocation0 [shape = 'u32[]', space=smem, size = 0x4, offset = 0x4, fixed_abs, tag = 'smem constant byte address 0x4 - core index']
  #allocation1 [shape = 'u32[144,128]{1,0:T(1,128)}', space=vmem, size = 0x12000, scoped, tag = 'internal scratch']
  %s0 = inlined_call_operand.vmem [shape: bf16[128,576], index: 0, kind: input, shape index: {}]
  %s1 = inlined_call_operand.vmem [shape: bf16[576,128], index: 1, kind: input, shape index: {}]
  %s2 = inlined_call_operand.vmem [shape: f32[1,128], index: 2, kind: input, shape index: {}]
  %s3 = inlined_call_operand.vmem [shape: f32[1,128], index: 3, kind: input, shape index: {}]
  %s4 = inlined_call_operand.vmem [shape: f32[128,128], index: 4, kind: input, shape index: {}]
  %s5 = inlined_call_operand.vmem [shape: f32[128,128], index: 5, kind: output, shape index: {}]
  %s6 = sld [smem:[#allocation0]]
  $region30: #{_lambda_.38} parent=0
    _
  %s8 = ssub.s32 1, %s6
  %s9 = scalar_select 0, %s8, %s6
  // Predicated region
  $region2: #{_lambda_.38} parent=0 // pred_check
    _
  $region3: #{_lambda_.38} parent=0 // pred_check_branch
    %11 = sbr.rel (0) target = $region5
  $region4: #{_lambda_.38} parent=0 // pred_region
    _
  $region5: #{_lambda_.38} parent=0 // pred_fallthru
    _
  // Predicated region
  $region6: #{_lambda_.38} parent=0 // pred_check
    _
  $region7: #{_lambda_.38} parent=0 // pred_check_branch
    %13 = sbr.rel (0) target = $region9
  $region8: #{_lambda_.38} parent=0 // pred_region
    _
  $region9: #{_lambda_.38} parent=0 // pred_fallthru
    _
  // Predicated region
  $region10: #{_lambda_.38} parent=0 // pred_check
    _
  $region11: #{_lambda_.38} parent=0 // pred_check_branch
    %15 = sbr.rel (0) target = $region13
  $region12: #{_lambda_.38} parent=0 // pred_region
    _
  $region13: #{_lambda_.38} parent=0 // pred_fallthru
    _
  // Predicated region
  $region14: #{_lambda_.38} parent=0 // pred_check
    _
  $region15: #{_lambda_.38} parent=0 // pred_check_branch
    %17 = sbr.rel (0) target = $region17
  $region16: #{_lambda_.38} parent=0 // pred_region
    _
  $region17: #{_lambda_.38} parent=0 // pred_fallthru
    _
  // Predicated region
  $region18: #{_lambda_.38} parent=0 // pred_check
    _
  $region19: #{_lambda_.38} parent=0 // pred_check_branch
    %19 = sbr.rel (0) target = $region21
  $region20: #{_lambda_.38} parent=0 // pred_region
    _
  $region21: #{_lambda_.38} parent=0 // pred_fallthru
    _
  %v21 = vld [vmem:[%s0] sm:$0xff]
  %v22 = vld [vmem:[%s0 + $0x8] sm:$0xff]
  %v23 = vld [vmem:[%s0 + $0x10] sm:$0xf]
  %v24 = vld [vmem:[%s0 + $0x14] sm:$0xff]
  %v25 = vld [vmem:[%s0 + $0x1c] sm:$0xff]
  %v26 = vld [vmem:[%s0 + $0x24] sm:$0xf]
  %v27 = vld [vmem:[%s0 + $0x28] sm:$0xff]
  %v28 = vld [vmem:[%s0 + $0x30] sm:$0xff]
  %v29 = vld [vmem:[%s0 + $0x38] sm:$0xf]
  %v30 = vld [vmem:[%s0 + $0x3c] sm:$0xff]
  %v31 = vld [vmem:[%s0 + $0x44] sm:$0xff]
  %v32 = vld [vmem:[%s0 + $0x4c] sm:$0xf]
  %v33 = vld [vmem:[%s0 + $0x50] sm:$0xff]
  %v34 = vld [vmem:[%s0 + $0x58] sm:$0xff]
  %v35 = vld [vmem:[%s0 + $0x60] sm:$0xf]
  %v36 = vld [vmem:[%s0 + $0x64] sm:$0xff]
  %v37 = vld [vmem:[%s0 + $0x6c] sm:$0xff]
  %v38 = vld [vmem:[%s0 + $0x74] sm:$0xf]
  %v39 = vld [vmem:[%s0 + $0x78] sm:$0xff]
  %v40 = vld [vmem:[%s0 + $0x80] sm:$0xff]
  %v41 = vld [vmem:[%s0 + $0x88] sm:$0xf]
  %v42 = vld [vmem:[%s0 + $0x8c] sm:$0xff]
  %v43 = vld [vmem:[%s0 + $0x94] sm:$0xff]
  %v44 = vld [vmem:[%s0 + $0x9c] sm:$0xf]
  %v45 = vld [vmem:[%s0 + $0xa0] sm:$0xff]
  %v46 = vld [vmem:[%s0 + $0xa8] sm:$0xff]
  %v47 = vld [vmem:[%s0 + $0xb0] sm:$0xf]
  %v48 = vld [vmem:[%s0 + $0xb4] sm:$0xff]
  %v49 = vld [vmem:[%s0 + $0xbc] sm:$0xff]
  %v50 = vld [vmem:[%s0 + $0xc4] sm:$0xf]
  %v51 = vld [vmem:[%s0 + $0xc8] sm:$0xff]
  %v52 = vld [vmem:[%s0 + $0xd0] sm:$0xff]
  %v53 = vld [vmem:[%s0 + $0xd8] sm:$0xf]
  %v54 = vld [vmem:[%s0 + $0xdc] sm:$0xff]
  %v55 = vld [vmem:[%s0 + $0xe4] sm:$0xff]
  %v56 = vld [vmem:[%s0 + $0xec] sm:$0xf]
  %v57 = vld [vmem:[%s0 + $0xf0] sm:$0xff]
  %v58 = vld [vmem:[%s0 + $0xf8] sm:$0xff]
  %v59 = vld [vmem:[%s0 + $0x100] sm:$0xf]
  %v60 = vld [vmem:[%s0 + $0x104] sm:$0xff]
  %v61 = vld [vmem:[%s0 + $0x10c] sm:$0xff]
  %v62 = vld [vmem:[%s0 + $0x114] sm:$0xf]
  %v63 = vld [vmem:[%s0 + $0x118] sm:$0xff]
  %v64 = vld [vmem:[%s0 + $0x120] sm:$0xff]
  %v65 = vld [vmem:[%s0 + $0x128] sm:$0xf]
  %v66 = vld [vmem:[%s0 + $0x12c] sm:$0xff]
  %v67 = vld [vmem:[%s0 + $0x134] sm:$0xff]
  %v68 = vld [vmem:[%s0 + $0x13c] sm:$0xf]
  %v69 = vld [vmem:[%s1] sm:$0xf]
  %v70 = vld [vmem:[%s1 + $0x4] sm:$0xf]
  %v71 = vld [vmem:[%s1 + $0x8] sm:$0xf]
  %v72 = vld [vmem:[%s1 + $0xc] sm:$0xf]
  %v73 = vld [vmem:[%s1 + $0x10] sm:$0xf]
  %v74 = vld [vmem:[%s1 + $0x14] sm:$0xf]
  %v75 = vld [vmem:[%s1 + $0x18] sm:$0xf]
  %v76 = vld [vmem:[%s1 + $0x1c] sm:$0xf]
  %v77 = vld [vmem:[%s1 + $0x20] sm:$0xf]
  %v78 = vld [vmem:[%s1 + $0x24] sm:$0xf]
  %v79 = vld [vmem:[%s1 + $0x28] sm:$0xf]
  %v80 = vld [vmem:[%s1 + $0x2c] sm:$0xf]
  %v81 = vld [vmem:[%s1 + $0x30] sm:$0xf]
  %v82 = vld [vmem:[%s1 + $0x34] sm:$0xf]
  %v83 = vld [vmem:[%s1 + $0x38] sm:$0xf]
  %v84 = vld [vmem:[%s1 + $0x3c] sm:$0xf]
  %v85 = vld [vmem:[%s1 + $0x40] sm:$0xf]
  %v86 = vld [vmem:[%s1 + $0x44] sm:$0xf]
  %v87 = vld [vmem:[%s1 + $0x48] sm:$0xf]
  %v88 = vld [vmem:[%s1 + $0x4c] sm:$0xf]
  %v89 = vld [vmem:[%s1 + $0x50] sm:$0xf]
  %v90 = vld [vmem:[%s1 + $0x54] sm:$0xf]
  %v91 = vld [vmem:[%s1 + $0x58] sm:$0xf]
  %v92 = vld [vmem:[%s1 + $0x5c] sm:$0xf]
  %v93 = vld [vmem:[%s1 + $0x60] sm:$0xf]
  %v94 = vld [vmem:[%s1 + $0x64] sm:$0xf]
  %v95 = vld [vmem:[%s1 + $0x68] sm:$0xf]
  %v96 = vld [vmem:[%s1 + $0x6c] sm:$0xf]
  %v97 = vld [vmem:[%s1 + $0x70] sm:$0xf]
  %v98 = vld [vmem:[%s1 + $0x74] sm:$0xf]
  %v99 = vld [vmem:[%s1 + $0x78] sm:$0xf]
  %v100 = vld [vmem:[%s1 + $0x7c] sm:$0xf]
  %v101 = vld [vmem:[%s1 + $0x80] sm:$0xf]
  %v102 = vld [vmem:[%s1 + $0x84] sm:$0xf]
  %v103 = vld [vmem:[%s1 + $0x88] sm:$0xf]
  %v104 = vld [vmem:[%s1 + $0x8c] sm:$0xf]
  %v105 = vld [vmem:[%s1 + $0x90] sm:$0xf]
  %v106 = vld [vmem:[%s1 + $0x94] sm:$0xf]
  %v107 = vld [vmem:[%s1 + $0x98] sm:$0xf]
  %v108 = vld [vmem:[%s1 + $0x9c] sm:$0xf]
  %v109 = vld [vmem:[%s1 + $0xa0] sm:$0xf]
  %v110 = vld [vmem:[%s1 + $0xa4] sm:$0xf]
  %v111 = vld [vmem:[%s1 + $0xa8] sm:$0xf]
  %v112 = vld [vmem:[%s1 + $0xac] sm:$0xf]
  %v113 = vld [vmem:[%s1 + $0xb0] sm:$0xf]
  %v114 = vld [vmem:[%s1 + $0xb4] sm:$0xf]
  %v115 = vld [vmem:[%s1 + $0xb8] sm:$0xf]
  %v116 = vld [vmem:[%s1 + $0xbc] sm:$0xf]
  %v117 = vld [vmem:[%s1 + $0xc0] sm:$0xf]
  %v118 = vld [vmem:[%s1 + $0xc4] sm:$0xf]
  %v119 = vld [vmem:[%s1 + $0xc8] sm:$0xf]
  %v120 = vld [vmem:[%s1 + $0xcc] sm:$0xf]
  %v121 = vld [vmem:[%s1 + $0xd0] sm:$0xf]
  %v122 = vld [vmem:[%s1 + $0xd4] sm:$0xf]
  %v123 = vld [vmem:[%s1 + $0xd8] sm:$0xf]
  %v124 = vld [vmem:[%s1 + $0xdc] sm:$0xf]
  %v125 = vld [vmem:[%s1 + $0xe0] sm:$0xf]
  %v126 = vld [vmem:[%s1 + $0xe4] sm:$0xf]
  %v127 = vld [vmem:[%s1 + $0xe8] sm:$0xf]
  %v128 = vld [vmem:[%s1 + $0xec] sm:$0xf]
  %v129 = vld [vmem:[%s1 + $0xf0] sm:$0xf]
  %v130 = vld [vmem:[%s1 + $0xf4] sm:$0xf]
  %v131 = vld [vmem:[%s1 + $0xf8] sm:$0xf]
  %v132 = vld [vmem:[%s1 + $0xfc] sm:$0xf]
  %v133 = vld [vmem:[%s1 + $0x100] sm:$0xf]
  %v134 = vld [vmem:[%s1 + $0x104] sm:$0xf]
  %v135 = vld [vmem:[%s1 + $0x108] sm:$0xf]
  %v136 = vld [vmem:[%s1 + $0x10c] sm:$0xf]
  %v137 = vld [vmem:[%s1 + $0x110] sm:$0xf]
  %v138 = vld [vmem:[%s1 + $0x114] sm:$0xf]
  %v139 = vld [vmem:[%s1 + $0x118] sm:$0xf]
  %v140 = vld [vmem:[%s1 + $0x11c] sm:$0xf]
  %v189 = vunpack.c.l.b16 %v21
  %v190 = vunpack.c.h.b16 %v21
  %v191 = vunpack.c.l.b16 %v22
  %v192 = vunpack.c.h.b16 %v22
  %v193 = vunpack.c.l.b16 %v23
  %v194 = vunpack.c.l.b16 %v24
  %v195 = vunpack.c.h.b16 %v24
  %v196 = vunpack.c.l.b16 %v25
  %v197 = vunpack.c.h.b16 %v25
  %v198 = vunpack.c.l.b16 %v26
  %v199 = vunpack.c.l.b16 %v27
  %v200 = vunpack.c.h.b16 %v27
  %v201 = vunpack.c.l.b16 %v28
  %v202 = vunpack.c.h.b16 %v28
  %v203 = vunpack.c.l.b16 %v29
  %v204 = vunpack.c.l.b16 %v30
  %v205 = vunpack.c.h.b16 %v30
  %v206 = vunpack.c.l.b16 %v31
  %v207 = vunpack.c.h.b16 %v31
  %v208 = vunpack.c.l.b16 %v32
  %v209 = vunpack.c.l.b16 %v33
  %v210 = vunpack.c.h.b16 %v33
  %v211 = vunpack.c.l.b16 %v34
  %v212 = vunpack.c.h.b16 %v34
  %v213 = vunpack.c.l.b16 %v35
  %v214 = vunpack.c.l.b16 %v36
  %v215 = vunpack.c.h.b16 %v36
  %v216 = vunpack.c.l.b16 %v37
  %v217 = vunpack.c.h.b16 %v37
  %v218 = vunpack.c.l.b16 %v38
  %v219 = vunpack.c.l.b16 %v39
  %v220 = vunpack.c.h.b16 %v39
  %v221 = vunpack.c.l.b16 %v40
  %v222 = vunpack.c.h.b16 %v40
  %v223 = vunpack.c.l.b16 %v41
  %v224 = vunpack.c.l.b16 %v42
  %v225 = vunpack.c.h.b16 %v42
  %v226 = vunpack.c.l.b16 %v43
  %v227 = vunpack.c.h.b16 %v43
  %v228 = vunpack.c.l.b16 %v44
  %v229 = vunpack.c.l.b16 %v45
  %v230 = vunpack.c.h.b16 %v45
  %v231 = vunpack.c.l.b16 %v46
  %v232 = vunpack.c.h.b16 %v46
  %v233 = vunpack.c.l.b16 %v47
  %v234 = vunpack.c.l.b16 %v48
  %v235 = vunpack.c.h.b16 %v48
  %v236 = vunpack.c.l.b16 %v49
  %v237 = vunpack.c.h.b16 %v49
  %v238 = vunpack.c.l.b16 %v50
  %v239 = vunpack.c.l.b16 %v51
  %v240 = vunpack.c.h.b16 %v51
  %v241 = vunpack.c.l.b16 %v52
  %v242 = vunpack.c.h.b16 %v52
  %v243 = vunpack.c.l.b16 %v53
  %v244 = vunpack.c.l.b16 %v54
  %v245 = vunpack.c.h.b16 %v54
  %v246 = vunpack.c.l.b16 %v55
  %v247 = vunpack.c.h.b16 %v55
  %v248 = vunpack.c.l.b16 %v56
  %v249 = vunpack.c.l.b16 %v57
  %v250 = vunpack.c.h.b16 %v57
  %v251 = vunpack.c.l.b16 %v58
  %v252 = vunpack.c.h.b16 %v58
  %v253 = vunpack.c.l.b16 %v59
  %v254 = vunpack.c.l.b16 %v60
  %v255 = vunpack.c.h.b16 %v60
  %v256 = vunpack.c.l.b16 %v61
  %v257 = vunpack.c.h.b16 %v61
  %v258 = vunpack.c.l.b16 %v62
  %v259 = vunpack.c.l.b16 %v63
  %v260 = vunpack.c.h.b16 %v63
  %v261 = vunpack.c.l.b16 %v64
  %v262 = vunpack.c.h.b16 %v64
  %v263 = vunpack.c.l.b16 %v65
  %v264 = vunpack.c.l.b16 %v66
  %v265 = vunpack.c.h.b16 %v66
  %v266 = vunpack.c.l.b16 %v67
  %v267 = vunpack.c.h.b16 %v67
  %v268 = vunpack.c.l.b16 %v68
  %v269 = vpack.c.b16 %v194, %v189
  %v270 = vpack.c.b16 %v195, %v190
  %v271 = vpack.c.b16 %v196, %v191
  %v272 = vpack.c.b16 %v197, %v192
  %v273 = vpack.c.b16 %v198, %v193
  %v274 = vpack.c.b16 %v204, %v199
  %v275 = vpack.c.b16 %v205, %v200
  %v276 = vpack.c.b16 %v206, %v201
  %v277 = vpack.c.b16 %v207, %v202
  %v278 = vpack.c.b16 %v208, %v203
  %v279 = vpack.c.b16 %v214, %v209
  %v280 = vpack.c.b16 %v215, %v210
  %v281 = vpack.c.b16 %v216, %v211
  %v282 = vpack.c.b16 %v217, %v212
  %v283 = vpack.c.b16 %v218, %v213
  %v284 = vpack.c.b16 %v224, %v219
  %v285 = vpack.c.b16 %v225, %v220
  %v286 = vpack.c.b16 %v226, %v221
  %v287 = vpack.c.b16 %v227, %v222
  %v288 = vpack.c.b16 %v228, %v223
  %v289 = vpack.c.b16 %v234, %v229
  %v290 = vpack.c.b16 %v235, %v230
  %v291 = vpack.c.b16 %v236, %v231
  %v292 = vpack.c.b16 %v237, %v232
  %v293 = vpack.c.b16 %v238, %v233
  %v294 = vpack.c.b16 %v244, %v239
  %v295 = vpack.c.b16 %v245, %v240
  %v296 = vpack.c.b16 %v246, %v241
  %v297 = vpack.c.b16 %v247, %v242
  %v298 = vpack.c.b16 %v248, %v243
  %v299 = vpack.c.b16 %v254, %v249
  %v300 = vpack.c.b16 %v255, %v250
  %v301 = vpack.c.b16 %v256, %v251
  %v302 = vpack.c.b16 %v257, %v252
  %v303 = vpack.c.b16 %v258, %v253
  %v304 = vpack.c.b16 %v264, %v259
  %v305 = vpack.c.b16 %v265, %v260
  %v306 = vpack.c.b16 %v266, %v261
  %v307 = vpack.c.b16 %v267, %v262
  %v308 = vpack.c.b16 %v268, %v263
  %v413 = vunpack.c.l.b16 %v69
  %v414 = vunpack.c.l.b16 %v70
  %v415 = vunpack.c.l.b16 %v71
  %v416 = vunpack.c.l.b16 %v72
  %v417 = vunpack.c.l.b16 %v73
  %v418 = vunpack.c.l.b16 %v74
  %v419 = vunpack.c.l.b16 %v75
  %v420 = vunpack.c.l.b16 %v76
  %v421 = vunpack.c.l.b16 %v77
  %v422 = vunpack.c.l.b16 %v78
  %v423 = vunpack.c.l.b16 %v79
  %v424 = vunpack.c.l.b16 %v80
  %v425 = vunpack.c.l.b16 %v81
  %v426 = vunpack.c.l.b16 %v82
  %v427 = vunpack.c.l.b16 %v83
  %v428 = vunpack.c.l.b16 %v84
  %v429 = vunpack.c.l.b16 %v85
  %v430 = vunpack.c.l.b16 %v86
  %v431 = vunpack.c.l.b16 %v87
  %v432 = vunpack.c.l.b16 %v88
  %v433 = vunpack.c.l.b16 %v89
  %v434 = vunpack.c.l.b16 %v90
  %v435 = vunpack.c.l.b16 %v91
  %v436 = vunpack.c.l.b16 %v92
  %v437 = vunpack.c.l.b16 %v93
  %v438 = vunpack.c.l.b16 %v94
  %v439 = vunpack.c.l.b16 %v95
  %v440 = vunpack.c.l.b16 %v96
  %v441 = vunpack.c.l.b16 %v97
  %v442 = vunpack.c.l.b16 %v98
  %v443 = vunpack.c.l.b16 %v99
  %v444 = vunpack.c.l.b16 %v100
  %v445 = vunpack.c.l.b16 %v101
  %v446 = vunpack.c.l.b16 %v102
  %v447 = vunpack.c.l.b16 %v103
  %v448 = vunpack.c.l.b16 %v104
  %v449 = vunpack.c.l.b16 %v105
  %v450 = vunpack.c.l.b16 %v106
  %v451 = vunpack.c.l.b16 %v107
  %v452 = vunpack.c.l.b16 %v108
  %v453 = vunpack.c.l.b16 %v109
  %v454 = vunpack.c.l.b16 %v110
  %v455 = vunpack.c.l.b16 %v111
  %v456 = vunpack.c.l.b16 %v112
  %v457 = vunpack.c.l.b16 %v113
  %v458 = vunpack.c.l.b16 %v114
  %v459 = vunpack.c.l.b16 %v115
  %v460 = vunpack.c.l.b16 %v116
  %v461 = vunpack.c.l.b16 %v117
  %v462 = vunpack.c.l.b16 %v118
  %v463 = vunpack.c.l.b16 %v119
  %v464 = vunpack.c.l.b16 %v120
  %v465 = vunpack.c.l.b16 %v121
  %v466 = vunpack.c.l.b16 %v122
  %v467 = vunpack.c.l.b16 %v123
  %v468 = vunpack.c.l.b16 %v124
  %v469 = vunpack.c.l.b16 %v125
  %v470 = vunpack.c.l.b16 %v126
  %v471 = vunpack.c.l.b16 %v127
  %v472 = vunpack.c.l.b16 %v128
  %v473 = vunpack.c.l.b16 %v129
  %v474 = vunpack.c.l.b16 %v130
  %v475 = vunpack.c.l.b16 %v131
  %v476 = vunpack.c.l.b16 %v132
  %v477 = vunpack.c.l.b16 %v133
  %v478 = vunpack.c.l.b16 %v134
  %v479 = vunpack.c.l.b16 %v135
  %v480 = vunpack.c.l.b16 %v136
  %v481 = vunpack.c.l.b16 %v137
  %v482 = vunpack.c.l.b16 %v138
  %v483 = vunpack.c.l.b16 %v139
  %v484 = vunpack.c.l.b16 %v140
  %v485 = vpack.c.b16 %v414, %v413
  %v486 = vpack.c.b16 %v416, %v415
  %v487 = vpack.c.b16 %v418, %v417
  %v488 = vpack.c.b16 %v420, %v419
  %v489 = vpack.c.b16 %v422, %v421
  %v490 = vpack.c.b16 %v424, %v423
  %v491 = vpack.c.b16 %v426, %v425
  %v492 = vpack.c.b16 %v428, %v427
  %v493 = vpack.c.b16 %v430, %v429
  %v494 = vpack.c.b16 %v432, %v431
  %v495 = vpack.c.b16 %v434, %v433
  %v496 = vpack.c.b16 %v436, %v435
  %v497 = vpack.c.b16 %v438, %v437
  %v498 = vpack.c.b16 %v440, %v439
  %v499 = vpack.c.b16 %v442, %v441
  %v500 = vpack.c.b16 %v444, %v443
  %v501 = vpack.c.b16 %v446, %v445
  %v502 = vpack.c.b16 %v448, %v447
  %v503 = vpack.c.b16 %v450, %v449
  %v504 = vpack.c.b16 %v452, %v451
  %v505 = vpack.c.b16 %v454, %v453
  %v506 = vpack.c.b16 %v456, %v455
  %v507 = vpack.c.b16 %v458, %v457
  %v508 = vpack.c.b16 %v460, %v459
  %v509 = vpack.c.b16 %v462, %v461
  %v510 = vpack.c.b16 %v464, %v463
  %v511 = vpack.c.b16 %v466, %v465
  %v512 = vpack.c.b16 %v468, %v467
  %v513 = vpack.c.b16 %v470, %v469
  %v514 = vpack.c.b16 %v472, %v471
  %v515 = vpack.c.b16 %v474, %v473
  %v516 = vpack.c.b16 %v476, %v475
  %v517 = vpack.c.b16 %v478, %v477
  %v518 = vpack.c.b16 %v480, %v479
  %v519 = vpack.c.b16 %v482, %v481
  %v520 = vpack.c.b16 %v484, %v483
  %vm557 = vcmask 523264
  %v559 = vsel %vm557, %v273, 0
  %v562 = vsel %vm557, %v278, 0
  %v565 = vsel %vm557, %v283, 0
  %v568 = vsel %vm557, %v288, 0
  %v571 = vsel %vm557, %v293, 0
  %v574 = vsel %vm557, %v298, 0
  %v577 = vsel %vm557, %v303, 0
  %v580 = vsel %vm557, %v308, 0
  %582 = vmatprep.subr.bf16.mxu0 0
  %583 = vmatpush1.bf16.msra.mxu0 %v485
  %584 = vmatprep.subr.bf16.mxu0 0
  %585 = vmatpush1.bf16.msra.mxu0 %v486
  %586 = vmatprep.subr.bf16.mxu0 0
  %587 = vmatpush1.bf16.msra.mxu0 %v487
  %588 = vmatprep.subr.bf16.mxu0 0
  %589 = vmatpush1.bf16.msra.mxu0 %v488
  %590 = vmatprep.subr.bf16.mxu0 0
  %591 = vmatpush1.bf16.msra.mxu0 %v489
  %592 = vmatprep.subr.bf16.mxu0 0
  %593 = vmatpush1.bf16.msra.mxu0 %v490
  %594 = vmatprep.subr.bf16.mxu0 0
  %595 = vmatpush1.bf16.msra.mxu0 %v491
  %596 = vmatprep.subr.bf16.mxu0 0
  %597 = vmatpush1.bf16.msra.mxu0 %v492
  %598 = vmatprep.subr.bf16.mxu0 0
  %599 = vmatpush1.bf16.msra.mxu0 %v493
  %600 = vmatprep.subr.bf16.mxu0 0
  %601 = vmatpush1.bf16.msra.mxu0 %v494
  %602 = vmatprep.subr.bf16.mxu0 0
  %603 = vmatpush1.bf16.msra.mxu0 %v495
  %604 = vmatprep.subr.bf16.mxu0 0
  %605 = vmatpush1.bf16.msra.mxu0 %v496
  %606 = vmatprep.subr.bf16.mxu0 0
  %607 = vmatpush1.bf16.msra.mxu0 %v497
  %608 = vmatprep.subr.bf16.mxu0 0
  %609 = vmatpush1.bf16.msra.mxu0 %v498
  %610 = vmatprep.subr.bf16.mxu0 0
  %611 = vmatpush1.bf16.msra.mxu0 %v499
  %612 = vmatprep.subr.bf16.mxu0 0
  %613 = vmatpush1.bf16.msra.mxu0 %v500
  %614 = vmatprep.mubr.bf16.mxu0 %v270
  %615 = vmatmul.mubr.bf16.gmra.mrb[0].mxu0 %v269
  %v616 = vpop.f32.mrb[0].mxu0
  %v617 = vadd.f32 0.0, %v616
  %v618 = vpop.f32.mrb[0].mxu0
  %v619 = vpop.f32.mrb[0].mxu0
  %v620 = vadd.f32 0.0, %v619
  %v621 = vpop.f32.mrb[0].mxu0
  %622 = vmatprep.mubr.bf16.mxu0 %v275
  %623 = vmatmul.mubr.bf16.gmra.mrb[0].mxu0 %v274
  %v624 = vpop.f32.mrb[0].mxu0
  %v625 = vadd.f32 0.0, %v624
  %v626 = vpop.f32.mrb[0].mxu0
  %v627 = vpop.f32.mrb[0].mxu0
  %v628 = vadd.f32 0.0, %v627
  %v629 = vpop.f32.mrb[0].mxu0
  %630 = vmatprep.mubr.bf16.mxu0 %v280
  %631 = vmatmul.mubr.bf16.gmra.mrb[0].mxu0 %v279
  %v632 = vpop.f32.mrb[0].mxu0
  %v633 = vadd.f32 0.0, %v632
  %v634 = vpop.f32.mrb[0].mxu0
  %v635 = vpop.f32.mrb[0].mxu0
  %v636 = vadd.f32 0.0, %v635
  %v637 = vpop.f32.mrb[0].mxu0
  %638 = vmatprep.mubr.bf16.mxu0 %v285
  %639 = vmatmul.mubr.bf16.gmra.mrb[0].mxu0 %v284
  %v640 = vpop.f32.mrb[0].mxu0
  %v641 = vadd.f32 0.0, %v640
  %v642 = vpop.f32.mrb[0].mxu0
  %v643 = vpop.f32.mrb[0].mxu0
  %v644 = vadd.f32 0.0, %v643
  %v645 = vpop.f32.mrb[0].mxu0
  %646 = vmatprep.mubr.bf16.mxu0 %v290
  %647 = vmatmul.mubr.bf16.gmra.mrb[0].mxu0 %v289
  %v648 = vpop.f32.mrb[0].mxu0
  %v649 = vadd.f32 0.0, %v648
  %v650 = vpop.f32.mrb[0].mxu0
  %v651 = vpop.f32.mrb[0].mxu0
  %v652 = vadd.f32 0.0, %v651
  %v653 = vpop.f32.mrb[0].mxu0
  %654 = vmatprep.mubr.bf16.mxu0 %v295
  %655 = vmatmul.mubr.bf16.gmra.mrb[0].mxu0 %v294
  %v656 = vpop.f32.mrb[0].mxu0
  %v657 = vadd.f32 0.0, %v656
  %v658 = vpop.f32.mrb[0].mxu0
  %v659 = vpop.f32.mrb[0].mxu0
  %v660 = vadd.f32 0.0, %v659
  %v661 = vpop.f32.mrb[0].mxu0
  %662 = vmatprep.mubr.bf16.mxu0 %v300
  %663 = vmatmul.mubr.bf16.gmra.mrb[0].mxu0 %v299
  %v664 = vpop.f32.mrb[0].mxu0
  %v665 = vadd.f32 0.0, %v664
  %v666 = vpop.f32.mrb[0].mxu0
  %v667 = vpop.f32.mrb[0].mxu0
  %v668 = vadd.f32 0.0, %v667
  %v669 = vpop.f32.mrb[0].mxu0
  %670 = vmatprep.mubr.bf16.mxu0 %v305
  %671 = vmatmul.mubr.bf16.gmra.mrb[0].mxu0 %v304
  %v672 = vpop.f32.mrb[0].mxu0
  %v673 = vadd.f32 0.0, %v672
  %v674 = vpop.f32.mrb[0].mxu0
  %v675 = vpop.f32.mrb[0].mxu0
  %v676 = vadd.f32 0.0, %v675
  %v677 = vpop.f32.mrb[0].mxu0
  %678 = vdwg.mxu0
  %679 = vmatprep.subr.bf16.mxu0 0
  %680 = vmatpush1.bf16.msra.mxu0 %v501
  %681 = vmatprep.subr.bf16.mxu0 0
  %682 = vmatpush1.bf16.msra.mxu0 %v502
  %683 = vmatprep.subr.bf16.mxu0 0
  %684 = vmatpush1.bf16.msra.mxu0 %v503
  %685 = vmatprep.subr.bf16.mxu0 0
  %686 = vmatpush1.bf16.msra.mxu0 %v504
  %687 = vmatprep.subr.bf16.mxu0 0
  %688 = vmatpush1.bf16.msra.mxu0 %v505
  %689 = vmatprep.subr.bf16.mxu0 0
  %690 = vmatpush1.bf16.msra.mxu0 %v506
  %691 = vmatprep.subr.bf16.mxu0 0
  %692 = vmatpush1.bf16.msra.mxu0 %v507
  %693 = vmatprep.subr.bf16.mxu0 0
  %694 = vmatpush1.bf16.msra.mxu0 %v508
  %695 = vmatprep.subr.bf16.mxu0 0
  %696 = vmatpush1.bf16.msra.mxu0 %v509
  %697 = vmatprep.subr.bf16.mxu0 0
  %698 = vmatpush1.bf16.msra.mxu0 %v510
  %699 = vmatprep.subr.bf16.mxu0 0
  %700 = vmatpush1.bf16.msra.mxu0 %v511
  %701 = vmatprep.subr.bf16.mxu0 0
  %702 = vmatpush1.bf16.msra.mxu0 %v512
  %703 = vmatprep.subr.bf16.mxu0 0
  %704 = vmatpush1.bf16.msra.mxu0 %v513
  %705 = vmatprep.subr.bf16.mxu0 0
  %706 = vmatpush1.bf16.msra.mxu0 %v514
  %707 = vmatprep.subr.bf16.mxu0 0
  %708 = vmatpush1.bf16.msra.mxu0 %v515
  %709 = vmatprep.subr.bf16.mxu0 0
  %710 = vmatpush1.bf16.msra.mxu0 %v516
  %711 = vmatprep.mubr.bf16.mxu0 %v272
  %712 = vmatmul.mubr.bf16.gmra.mrb[0].mxu0 %v271
  %v713 = vpop.f32.mrb[0].mxu0
  %v714 = vadd.f32 %v617, %v713
  %v715 = vpop.f32.mrb[0].mxu0
  %v716 = vpop.f32.mrb[0].mxu0
  %v717 = vadd.f32 %v620, %v716
  %v718 = vpop.f32.mrb[0].mxu0
  %719 = vmatprep.mubr.bf16.mxu0 %v277
  %720 = vmatmul.mubr.bf16.gmra.mrb[0].mxu0 %v276
  %v721 = vpop.f32.mrb[0].mxu0
  %v722 = vadd.f32 %v625, %v721
  %v723 = vpop.f32.mrb[0].mxu0
  %v724 = vpop.f32.mrb[0].mxu0
  %v725 = vadd.f32 %v628, %v724
  %v726 = vpop.f32.mrb[0].mxu0
  %727 = vmatprep.mubr.bf16.mxu0 %v282
  %728 = vmatmul.mubr.bf16.gmra.mrb[0].mxu0 %v281
  %v729 = vpop.f32.mrb[0].mxu0
  %v730 = vadd.f32 %v633, %v729
  %v731 = vpop.f32.mrb[0].mxu0
  %v732 = vpop.f32.mrb[0].mxu0
  %v733 = vadd.f32 %v636, %v732
  %v734 = vpop.f32.mrb[0].mxu0
  %735 = vmatprep.mubr.bf16.mxu0 %v287
  %736 = vmatmul.mubr.bf16.gmra.mrb[0].mxu0 %v286
  %v737 = vpop.f32.mrb[0].mxu0
  %v738 = vadd.f32 %v641, %v737
  %v739 = vpop.f32.mrb[0].mxu0
  %v740 = vpop.f32.mrb[0].mxu0
  %v741 = vadd.f32 %v644, %v740
  %v742 = vpop.f32.mrb[0].mxu0
  %743 = vmatprep.mubr.bf16.mxu0 %v292
  %744 = vmatmul.mubr.bf16.gmra.mrb[0].mxu0 %v291
  %v745 = vpop.f32.mrb[0].mxu0
  %v746 = vadd.f32 %v649, %v745
  %v747 = vpop.f32.mrb[0].mxu0
  %v748 = vpop.f32.mrb[0].mxu0
  %v749 = vadd.f32 %v652, %v748
  %v750 = vpop.f32.mrb[0].mxu0
  %751 = vmatprep.mubr.bf16.mxu0 %v297
  %752 = vmatmul.mubr.bf16.gmra.mrb[0].mxu0 %v296
  %v753 = vpop.f32.mrb[0].mxu0
  %v754 = vadd.f32 %v657, %v753
  %v755 = vpop.f32.mrb[0].mxu0
  %v756 = vpop.f32.mrb[0].mxu0
  %v757 = vadd.f32 %v660, %v756
  %v758 = vpop.f32.mrb[0].mxu0
  %759 = vmatprep.mubr.bf16.mxu0 %v302
  %760 = vmatmul.mubr.bf16.gmra.mrb[0].mxu0 %v301
  %v761 = vpop.f32.mrb[0].mxu0
  %v762 = vadd.f32 %v665, %v761
  %v763 = vpop.f32.mrb[0].mxu0
  %v764 = vpop.f32.mrb[0].mxu0
  %v765 = vadd.f32 %v668, %v764
  %v766 = vpop.f32.mrb[0].mxu0
  %767 = vmatprep.mubr.bf16.mxu0 %v307
  %768 = vmatmul.mubr.bf16.gmra.mrb[0].mxu0 %v306
  %v769 = vpop.f32.mrb[0].mxu0
  %v770 = vadd.f32 %v673, %v769
  %v771 = vpop.f32.mrb[0].mxu0
  %v772 = vpop.f32.mrb[0].mxu0
  %v773 = vadd.f32 %v676, %v772
  %v774 = vpop.f32.mrb[0].mxu0
  %775 = vdwg.mxu0
  %776 = vmatprep.subr.bf16.mxu0 0
  %777 = vmatpush1.bf16.msra.mxu0 %v517
  %778 = vmatprep.subr.bf16.mxu0 0
  %779 = vmatpush1.bf16.msra.mxu0 %v518
  %780 = vmatprep.subr.bf16.mxu0 0
  %781 = vmatpush1.bf16.msra.mxu0 %v519
  %782 = vmatprep.subr.bf16.mxu0 0
  %783 = vmatpush1.bf16.msra.mxu0 %v520
  %784 = vmatprep.subr.bf16.mxu0 0
  %785 = vmatpush1.bf16.msra.mxu0 0
  %786 = vmatprep.subr.bf16.mxu0 0
  %787 = vmatpush1.bf16.msra.mxu0 0
  %788 = vmatprep.subr.bf16.mxu0 0
  %789 = vmatpush1.bf16.msra.mxu0 0
  %790 = vmatprep.subr.bf16.mxu0 0
  %791 = vmatpush1.bf16.msra.mxu0 0
  %792 = vmatprep.subr.bf16.mxu0 0
  %793 = vmatpush1.bf16.msra.mxu0 0
  %794 = vmatprep.subr.bf16.mxu0 0
  %795 = vmatpush1.bf16.msra.mxu0 0
  %796 = vmatprep.subr.bf16.mxu0 0
  %797 = vmatpush1.bf16.msra.mxu0 0
  %798 = vmatprep.subr.bf16.mxu0 0
  %799 = vmatpush1.bf16.msra.mxu0 0
  %800 = vmatprep.subr.bf16.mxu0 0
  %801 = vmatpush1.bf16.msra.mxu0 0
  %802 = vmatprep.subr.bf16.mxu0 0
  %803 = vmatpush1.bf16.msra.mxu0 0
  %804 = vmatprep.subr.bf16.mxu0 0
  %805 = vmatpush1.bf16.msra.mxu0 0
  %806 = vmatprep.subr.bf16.mxu0 0
  %807 = vmatpush1.bf16.msra.mxu0 0
  %808 = vmatprep.mubr.bf16.mxu0 0
  %809 = vmatmul.mubr.bf16.gmra.mrb[0].mxu0 %v559
  %v810 = vpop.f32.mrb[0].mxu0
  %v811 = vadd.f32 %v714, %v810
  %v812 = vpop.f32.mrb[0].mxu0
  %v813 = vpop.f32.mrb[0].mxu0
  %v814 = vadd.f32 %v717, %v813
  %v815 = vpop.f32.mrb[0].mxu0
  %816 = vmatprep.mubr.bf16.mxu0 0
  %817 = vmatmul.mubr.bf16.gmra.mrb[0].mxu0 %v562
  %v818 = vpop.f32.mrb[0].mxu0
  %v819 = vadd.f32 %v722, %v818
  %v820 = vpop.f32.mrb[0].mxu0
  %v821 = vpop.f32.mrb[0].mxu0
  %v822 = vadd.f32 %v725, %v821
  %v823 = vpop.f32.mrb[0].mxu0
  %824 = vmatprep.mubr.bf16.mxu0 0
  %825 = vmatmul.mubr.bf16.gmra.mrb[0].mxu0 %v565
  %v826 = vpop.f32.mrb[0].mxu0
  %v827 = vadd.f32 %v730, %v826
  %v828 = vpop.f32.mrb[0].mxu0
  %v829 = vpop.f32.mrb[0].mxu0
  %v830 = vadd.f32 %v733, %v829
  %v831 = vpop.f32.mrb[0].mxu0
  %832 = vmatprep.mubr.bf16.mxu0 0
  %833 = vmatmul.mubr.bf16.gmra.mrb[0].mxu0 %v568
  %v834 = vpop.f32.mrb[0].mxu0
  %v835 = vadd.f32 %v738, %v834
  %v836 = vpop.f32.mrb[0].mxu0
  %v837 = vpop.f32.mrb[0].mxu0
  %v838 = vadd.f32 %v741, %v837
  %v839 = vpop.f32.mrb[0].mxu0
  %840 = vmatprep.mubr.bf16.mxu0 0
  %841 = vmatmul.mubr.bf16.gmra.mrb[0].mxu0 %v571
  %v842 = vpop.f32.mrb[0].mxu0
  %v843 = vadd.f32 %v746, %v842
  %v844 = vpop.f32.mrb[0].mxu0
  %v845 = vpop.f32.mrb[0].mxu0
  %v846 = vadd.f32 %v749, %v845
  %v847 = vpop.f32.mrb[0].mxu0
  %848 = vmatprep.mubr.bf16.mxu0 0
  %849 = vmatmul.mubr.bf16.gmra.mrb[0].mxu0 %v574
  %v850 = vpop.f32.mrb[0].mxu0
  %v851 = vadd.f32 %v754, %v850
  %v852 = vpop.f32.mrb[0].mxu0
  %v853 = vpop.f32.mrb[0].mxu0
  %v854 = vadd.f32 %v757, %v853
  %v855 = vpop.f32.mrb[0].mxu0
  %856 = vmatprep.mubr.bf16.mxu0 0
  %857 = vmatmul.mubr.bf16.gmra.mrb[0].mxu0 %v577
  %v858 = vpop.f32.mrb[0].mxu0
  %v859 = vadd.f32 %v762, %v858
  %v860 = vpop.f32.mrb[0].mxu0
  %v861 = vpop.f32.mrb[0].mxu0
  %v862 = vadd.f32 %v765, %v861
  %v863 = vpop.f32.mrb[0].mxu0
  %864 = vmatprep.mubr.bf16.mxu0 0
  %865 = vmatmul.mubr.bf16.gmra.mrb[0].mxu0 %v580
  %v866 = vpop.f32.mrb[0].mxu0
  %v867 = vadd.f32 %v770, %v866
  %v868 = vpop.f32.mrb[0].mxu0
  %v869 = vpop.f32.mrb[0].mxu0
  %v870 = vadd.f32 %v773, %v869
  %v871 = vpop.f32.mrb[0].mxu0
  %872 = vdwg.mxu0
  %v873 = vld [vmem:[%s2] sm:$0x1]
  %v875 = vlaneseq
  %v876 = vshrl.u32 %v875, 7
  %v877 = vsub.s32 0, %v876
  %v878 = vrot.slane %v873, %v877
  %v880 = vmul.f32 %v811, %v878
  %v881 = vmul.f32 %v814, %v878
  %v882 = vmul.f32 %v819, %v878
  %v883 = vmul.f32 %v822, %v878
  %v884 = vmul.f32 %v827, %v878
  %v885 = vmul.f32 %v830, %v878
  %v886 = vmul.f32 %v835, %v878
  %v887 = vmul.f32 %v838, %v878
  %v888 = vmul.f32 %v843, %v878
  %v889 = vmul.f32 %v846, %v878
  %v890 = vmul.f32 %v851, %v878
  %v891 = vmul.f32 %v854, %v878
  %v892 = vmul.f32 %v859, %v878
  %v893 = vmul.f32 %v862, %v878
  %v894 = vmul.f32 %v867, %v878
  %v895 = vmul.f32 %v870, %v878
  %v896 = vld [vmem:[%s3] sm:$0x1]
  %v898 = vlaneseq
  %v899 = vshrl.u32 %v898, 7
  %v900 = vsub.s32 0, %v899
  %v901 = vrot.slane %v896, %v900
  %v903 = vadd.f32 %v880, %v901
  %v904 = vadd.f32 %v881, %v901
  %v905 = vadd.f32 %v882, %v901
  %v906 = vadd.f32 %v883, %v901
  %v907 = vadd.f32 %v884, %v901
  %v908 = vadd.f32 %v885, %v901
  %v909 = vadd.f32 %v886, %v901
  %v910 = vadd.f32 %v887, %v901
  %v911 = vadd.f32 %v888, %v901
  %v912 = vadd.f32 %v889, %v901
  %v913 = vadd.f32 %v890, %v901
  %v914 = vadd.f32 %v891, %v901
  %v915 = vadd.f32 %v892, %v901
  %v916 = vadd.f32 %v893, %v901
  %v917 = vadd.f32 %v894, %v901
  %v918 = vadd.f32 %v895, %v901
  %v919 = vld [vmem:[%s4] sm:$0xff]
  %v920 = vld [vmem:[%s4 + $0x8] sm:$0xff]
  %v921 = vld [vmem:[%s4 + $0x10] sm:$0xff]
  %v922 = vld [vmem:[%s4 + $0x18] sm:$0xff]
  %v923 = vld [vmem:[%s4 + $0x20] sm:$0xff]
  %v924 = vld [vmem:[%s4 + $0x28] sm:$0xff]
  %v925 = vld [vmem:[%s4 + $0x30] sm:$0xff]
  %v926 = vld [vmem:[%s4 + $0x38] sm:$0xff]
  %v927 = vld [vmem:[%s4 + $0x40] sm:$0xff]
  %v928 = vld [vmem:[%s4 + $0x48] sm:$0xff]
  %v929 = vld [vmem:[%s4 + $0x50] sm:$0xff]
  %v930 = vld [vmem:[%s4 + $0x58] sm:$0xff]
  %v931 = vld [vmem:[%s4 + $0x60] sm:$0xff]
  %v932 = vld [vmem:[%s4 + $0x68] sm:$0xff]
  %v933 = vld [vmem:[%s4 + $0x70] sm:$0xff]
  %v934 = vld [vmem:[%s4 + $0x78] sm:$0xff]
  %v935 = vadd.f32 %v903, %v919
  %v936 = vadd.f32 %v904, %v920
  %v937 = vadd.f32 %v905, %v921
  %v938 = vadd.f32 %v906, %v922
  %v939 = vadd.f32 %v907, %v923
  %v940 = vadd.f32 %v908, %v924
  %v941 = vadd.f32 %v909, %v925
  %v942 = vadd.f32 %v910, %v926
  %v943 = vadd.f32 %v911, %v927
  %v944 = vadd.f32 %v912, %v928
  %v945 = vadd.f32 %v913, %v929
  %v946 = vadd.f32 %v914, %v930
  %v947 = vadd.f32 %v915, %v931
  %v948 = vadd.f32 %v916, %v932
  %v949 = vadd.f32 %v917, %v933
  %v950 = vadd.f32 %v918, %v934
  %v951 = vmax.f32 %v935, 0.0
  %v952 = vmax.f32 %v936, 0.0
  %v953 = vmax.f32 %v937, 0.0
  %v954 = vmax.f32 %v938, 0.0
  %v955 = vmax.f32 %v939, 0.0
  %v956 = vmax.f32 %v940, 0.0
  %v957 = vmax.f32 %v941, 0.0
  %v958 = vmax.f32 %v942, 0.0
  %v959 = vmax.f32 %v943, 0.0
  %v960 = vmax.f32 %v944, 0.0
  %v961 = vmax.f32 %v945, 0.0
  %v962 = vmax.f32 %v946, 0.0
  %v963 = vmax.f32 %v947, 0.0
  %v964 = vmax.f32 %v948, 0.0
  %v965 = vmax.f32 %v949, 0.0
  %v966 = vmax.f32 %v950, 0.0
  %967 = vst [vmem:[%s5] sm:$0xff] %v951
  %968 = vst [vmem:[%s5 + $0x8] sm:$0xff] %v952
  %969 = vst [vmem:[%s5 + $0x10] sm:$0xff] %v953
  %970 = vst [vmem:[%s5 + $0x18] sm:$0xff] %v954
  %971 = vst [vmem:[%s5 + $0x20] sm:$0xff] %v955
  %972 = vst [vmem:[%s5 + $0x28] sm:$0xff] %v956
  %973 = vst [vmem:[%s5 + $0x30] sm:$0xff] %v957
  %974 = vst [vmem:[%s5 + $0x38] sm:$0xff] %v958
  %975 = vst [vmem:[%s5 + $0x40] sm:$0xff] %v959
  %976 = vst [vmem:[%s5 + $0x48] sm:$0xff] %v960
  %977 = vst [vmem:[%s5 + $0x50] sm:$0xff] %v961
  %978 = vst [vmem:[%s5 + $0x58] sm:$0xff] %v962
  %979 = vst [vmem:[%s5 + $0x60] sm:$0xff] %v963
  %980 = vst [vmem:[%s5 + $0x68] sm:$0xff] %v964
  %981 = vst [vmem:[%s5 + $0x70] sm:$0xff] %v965
  %982 = vst [vmem:[%s5 + $0x78] sm:$0xff] %v966
  // Predicated region
  $region22: #{_lambda_.38} parent=0 // pred_check
    _
  $region23: #{_lambda_.38} parent=0 // pred_check_branch
    %984 = sbr.rel (0) target = $region25
  $region24: #{_lambda_.38} parent=0 // pred_region
    _
  $region25: #{_lambda_.38} parent=0 // pred_fallthru
    _
  // Predicated region
  $region26: #{_lambda_.38} parent=0 // pred_check
    _
  $region27: #{_lambda_.38} parent=0 // pred_check_branch
    %986 = sbr.rel (0) target = $region29
  $region28: #{_lambda_.38} parent=0 // pred_region
    _
  $region29: #{_lambda_.38} parent=0 // pred_fallthru
    _

// kernel: _lambda_.39
$region0: #{_lambda_.39}
  #allocation0 [shape = 'u32[]', space=smem, size = 0x4, offset = 0x4, fixed_abs, tag = 'smem constant byte address 0x4 - core index']
  #allocation1 [shape = 'u32[144,128]{1,0:T(1,128)}', space=vmem, size = 0x12000, scoped, tag = 'internal scratch']
  %s0 = inlined_call_operand.vmem [shape: bf16[128,576], index: 0, kind: input, shape index: {}]
  %s1 = inlined_call_operand.vmem [shape: bf16[576,128], index: 1, kind: input, shape index: {}]
  %s2 = inlined_call_operand.vmem [shape: f32[1,128], index: 2, kind: input, shape index: {}]
  %s3 = inlined_call_operand.vmem [shape: f32[1,128], index: 3, kind: input, shape index: {}]
  %s4 = inlined_call_operand.vmem [shape: f32[128,128], index: 4, kind: output, shape index: {}]
  %s5 = sld [smem:[#allocation0]]
  $region26: #{_lambda_.39} parent=0
    _
  %s7 = ssub.s32 1, %s5
  %s8 = scalar_select 0, %s7, %s5
  // Predicated region
  $region2: #{_lambda_.39} parent=0 // pred_check
    _
  $region3: #{_lambda_.39} parent=0 // pred_check_branch
    %10 = sbr.rel (0) target = $region5
  $region4: #{_lambda_.39} parent=0 // pred_region
    _
  $region5: #{_lambda_.39} parent=0 // pred_fallthru
    _
  // Predicated region
  $region6: #{_lambda_.39} parent=0 // pred_check
    _
  $region7: #{_lambda_.39} parent=0 // pred_check_branch
    %12 = sbr.rel (0) target = $region9
  $region8: #{_lambda_.39} parent=0 // pred_region
    _
  $region9: #{_lambda_.39} parent=0 // pred_fallthru
    _
  // Predicated region
  $region10: #{_lambda_.39} parent=0 // pred_check
    _
  $region11: #{_lambda_.39} parent=0 // pred_check_branch
    %14 = sbr.rel (0) target = $region13
  $region12: #{_lambda_.39} parent=0 // pred_region
    _
  $region13: #{_lambda_.39} parent=0 // pred_fallthru
    _
  // Predicated region
  $region14: #{_lambda_.39} parent=0 // pred_check
    _
  $region15: #{_lambda_.39} parent=0 // pred_check_branch
    %16 = sbr.rel (0) target = $region17
  $region16: #{_lambda_.39} parent=0 // pred_region
    _
  $region17: #{_lambda_.39} parent=0 // pred_fallthru
    _
  %v18 = vld [vmem:[%s0] sm:$0xff]
  %v19 = vld [vmem:[%s0 + $0x8] sm:$0xff]
  %v20 = vld [vmem:[%s0 + $0x10] sm:$0xf]
  %v21 = vld [vmem:[%s0 + $0x14] sm:$0xff]
  %v22 = vld [vmem:[%s0 + $0x1c] sm:$0xff]
  %v23 = vld [vmem:[%s0 + $0x24] sm:$0xf]
  %v24 = vld [vmem:[%s0 + $0x28] sm:$0xff]
  %v25 = vld [vmem:[%s0 + $0x30] sm:$0xff]
  %v26 = vld [vmem:[%s0 + $0x38] sm:$0xf]
  %v27 = vld [vmem:[%s0 + $0x3c] sm:$0xff]
  %v28 = vld [vmem:[%s0 + $0x44] sm:$0xff]
  %v29 = vld [vmem:[%s0 + $0x4c] sm:$0xf]
  %v30 = vld [vmem:[%s0 + $0x50] sm:$0xff]
  %v31 = vld [vmem:[%s0 + $0x58] sm:$0xff]
  %v32 = vld [vmem:[%s0 + $0x60] sm:$0xf]
  %v33 = vld [vmem:[%s0 + $0x64] sm:$0xff]
  %v34 = vld [vmem:[%s0 + $0x6c] sm:$0xff]
  %v35 = vld [vmem:[%s0 + $0x74] sm:$0xf]
  %v36 = vld [vmem:[%s0 + $0x78] sm:$0xff]
  %v37 = vld [vmem:[%s0 + $0x80] sm:$0xff]
  %v38 = vld [vmem:[%s0 + $0x88] sm:$0xf]
  %v39 = vld [vmem:[%s0 + $0x8c] sm:$0xff]
  %v40 = vld [vmem:[%s0 + $0x94] sm:$0xff]
  %v41 = vld [vmem:[%s0 + $0x9c] sm:$0xf]
  %v42 = vld [vmem:[%s0 + $0xa0] sm:$0xff]
  %v43 = vld [vmem:[%s0 + $0xa8] sm:$0xff]
  %v44 = vld [vmem:[%s0 + $0xb0] sm:$0xf]
  %v45 = vld [vmem:[%s0 + $0xb4] sm:$0xff]
  %v46 = vld [vmem:[%s0 + $0xbc] sm:$0xff]
  %v47 = vld [vmem:[%s0 + $0xc4] sm:$0xf]
  %v48 = vld [vmem:[%s0 + $0xc8] sm:$0xff]
  %v49 = vld [vmem:[%s0 + $0xd0] sm:$0xff]
  %v50 = vld [vmem:[%s0 + $0xd8] sm:$0xf]
  %v51 = vld [vmem:[%s0 + $0xdc] sm:$0xff]
  %v52 = vld [vmem:[%s0 + $0xe4] sm:$0xff]
  %v53 = vld [vmem:[%s0 + $0xec] sm:$0xf]
  %v54 = vld [vmem:[%s0 + $0xf0] sm:$0xff]
  %v55 = vld [vmem:[%s0 + $0xf8] sm:$0xff]
  %v56 = vld [vmem:[%s0 + $0x100] sm:$0xf]
  %v57 = vld [vmem:[%s0 + $0x104] sm:$0xff]
  %v58 = vld [vmem:[%s0 + $0x10c] sm:$0xff]
  %v59 = vld [vmem:[%s0 + $0x114] sm:$0xf]
  %v60 = vld [vmem:[%s0 + $0x118] sm:$0xff]
  %v61 = vld [vmem:[%s0 + $0x120] sm:$0xff]
  %v62 = vld [vmem:[%s0 + $0x128] sm:$0xf]
  %v63 = vld [vmem:[%s0 + $0x12c] sm:$0xff]
  %v64 = vld [vmem:[%s0 + $0x134] sm:$0xff]
  %v65 = vld [vmem:[%s0 + $0x13c] sm:$0xf]
  %v66 = vld [vmem:[%s1] sm:$0xf]
  %v67 = vld [vmem:[%s1 + $0x4] sm:$0xf]
  %v68 = vld [vmem:[%s1 + $0x8] sm:$0xf]
  %v69 = vld [vmem:[%s1 + $0xc] sm:$0xf]
  %v70 = vld [vmem:[%s1 + $0x10] sm:$0xf]
  %v71 = vld [vmem:[%s1 + $0x14] sm:$0xf]
  %v72 = vld [vmem:[%s1 + $0x18] sm:$0xf]
  %v73 = vld [vmem:[%s1 + $0x1c] sm:$0xf]
  %v74 = vld [vmem:[%s1 + $0x20] sm:$0xf]
  %v75 = vld [vmem:[%s1 + $0x24] sm:$0xf]
  %v76 = vld [vmem:[%s1 + $0x28] sm:$0xf]
  %v77 = vld [vmem:[%s1 + $0x2c] sm:$0xf]
  %v78 = vld [vmem:[%s1 + $0x30] sm:$0xf]
  %v79 = vld [vmem:[%s1 + $0x34] sm:$0xf]
  %v80 = vld [vmem:[%s1 + $0x38] sm:$0xf]
  %v81 = vld [vmem:[%s1 + $0x3c] sm:$0xf]
  %v82 = vld [vmem:[%s1 + $0x40] sm:$0xf]
  %v83 = vld [vmem:[%s1 + $0x44] sm:$0xf]
  %v84 = vld [vmem:[%s1 + $0x48] sm:$0xf]
  %v85 = vld [vmem:[%s1 + $0x4c] sm:$0xf]
  %v86 = vld [vmem:[%s1 + $0x50] sm:$0xf]
  %v87 = vld [vmem:[%s1 + $0x54] sm:$0xf]
  %v88 = vld [vmem:[%s1 + $0x58] sm:$0xf]
  %v89 = vld [vmem:[%s1 + $0x5c] sm:$0xf]
  %v90 = vld [vmem:[%s1 + $0x60] sm:$0xf]
  %v91 = vld [vmem:[%s1 + $0x64] sm:$0xf]
  %v92 = vld [vmem:[%s1 + $0x68] sm:$0xf]
  %v93 = vld [vmem:[%s1 + $0x6c] sm:$0xf]
  %v94 = vld [vmem:[%s1 + $0x70] sm:$0xf]
  %v95 = vld [vmem:[%s1 + $0x74] sm:$0xf]
  %v96 = vld [vmem:[%s1 + $0x78] sm:$0xf]
  %v97 = vld [vmem:[%s1 + $0x7c] sm:$0xf]
  %v98 = vld [vmem:[%s1 + $0x80] sm:$0xf]
  %v99 = vld [vmem:[%s1 + $0x84] sm:$0xf]
  %v100 = vld [vmem:[%s1 + $0x88] sm:$0xf]
  %v101 = vld [vmem:[%s1 + $0x8c] sm:$0xf]
  %v102 = vld [vmem:[%s1 + $0x90] sm:$0xf]
  %v103 = vld [vmem:[%s1 + $0x94] sm:$0xf]
  %v104 = vld [vmem:[%s1 + $0x98] sm:$0xf]
  %v105 = vld [vmem:[%s1 + $0x9c] sm:$0xf]
  %v106 = vld [vmem:[%s1 + $0xa0] sm:$0xf]
  %v107 = vld [vmem:[%s1 + $0xa4] sm:$0xf]
  %v108 = vld [vmem:[%s1 + $0xa8] sm:$0xf]
  %v109 = vld [vmem:[%s1 + $0xac] sm:$0xf]
  %v110 = vld [vmem:[%s1 + $0xb0] sm:$0xf]
  %v111 = vld [vmem:[%s1 + $0xb4] sm:$0xf]
  %v112 = vld [vmem:[%s1 + $0xb8] sm:$0xf]
  %v113 = vld [vmem:[%s1 + $0xbc] sm:$0xf]
  %v114 = vld [vmem:[%s1 + $0xc0] sm:$0xf]
  %v115 = vld [vmem:[%s1 + $0xc4] sm:$0xf]
  %v116 = vld [vmem:[%s1 + $0xc8] sm:$0xf]
  %v117 = vld [vmem:[%s1 + $0xcc] sm:$0xf]
  %v118 = vld [vmem:[%s1 + $0xd0] sm:$0xf]
  %v119 = vld [vmem:[%s1 + $0xd4] sm:$0xf]
  %v120 = vld [vmem:[%s1 + $0xd8] sm:$0xf]
  %v121 = vld [vmem:[%s1 + $0xdc] sm:$0xf]
  %v122 = vld [vmem:[%s1 + $0xe0] sm:$0xf]
  %v123 = vld [vmem:[%s1 + $0xe4] sm:$0xf]
  %v124 = vld [vmem:[%s1 + $0xe8] sm:$0xf]
  %v125 = vld [vmem:[%s1 + $0xec] sm:$0xf]
  %v126 = vld [vmem:[%s1 + $0xf0] sm:$0xf]
  %v127 = vld [vmem:[%s1 + $0xf4] sm:$0xf]
  %v128 = vld [vmem:[%s1 + $0xf8] sm:$0xf]
  %v129 = vld [vmem:[%s1 + $0xfc] sm:$0xf]
  %v130 = vld [vmem:[%s1 + $0x100] sm:$0xf]
  %v131 = vld [vmem:[%s1 + $0x104] sm:$0xf]
  %v132 = vld [vmem:[%s1 + $0x108] sm:$0xf]
  %v133 = vld [vmem:[%s1 + $0x10c] sm:$0xf]
  %v134 = vld [vmem:[%s1 + $0x110] sm:$0xf]
  %v135 = vld [vmem:[%s1 + $0x114] sm:$0xf]
  %v136 = vld [vmem:[%s1 + $0x118] sm:$0xf]
  %v137 = vld [vmem:[%s1 + $0x11c] sm:$0xf]
  %v186 = vunpack.c.l.b16 %v18
  %v187 = vunpack.c.h.b16 %v18
  %v188 = vunpack.c.l.b16 %v19
  %v189 = vunpack.c.h.b16 %v19
  %v190 = vunpack.c.l.b16 %v20
  %v191 = vunpack.c.l.b16 %v21
  %v192 = vunpack.c.h.b16 %v21
  %v193 = vunpack.c.l.b16 %v22
  %v194 = vunpack.c.h.b16 %v22
  %v195 = vunpack.c.l.b16 %v23
  %v196 = vunpack.c.l.b16 %v24
  %v197 = vunpack.c.h.b16 %v24
  %v198 = vunpack.c.l.b16 %v25
  %v199 = vunpack.c.h.b16 %v25
  %v200 = vunpack.c.l.b16 %v26
  %v201 = vunpack.c.l.b16 %v27
  %v202 = vunpack.c.h.b16 %v27
  %v203 = vunpack.c.l.b16 %v28
  %v204 = vunpack.c.h.b16 %v28
  %v205 = vunpack.c.l.b16 %v29
  %v206 = vunpack.c.l.b16 %v30
  %v207 = vunpack.c.h.b16 %v30
  %v208 = vunpack.c.l.b16 %v31
  %v209 = vunpack.c.h.b16 %v31
  %v210 = vunpack.c.l.b16 %v32
  %v211 = vunpack.c.l.b16 %v33
  %v212 = vunpack.c.h.b16 %v33
  %v213 = vunpack.c.l.b16 %v34
  %v214 = vunpack.c.h.b16 %v34
  %v215 = vunpack.c.l.b16 %v35
  %v216 = vunpack.c.l.b16 %v36
  %v217 = vunpack.c.h.b16 %v36
  %v218 = vunpack.c.l.b16 %v37
  %v219 = vunpack.c.h.b16 %v37
  %v220 = vunpack.c.l.b16 %v38
  %v221 = vunpack.c.l.b16 %v39
  %v222 = vunpack.c.h.b16 %v39
  %v223 = vunpack.c.l.b16 %v40
  %v224 = vunpack.c.h.b16 %v40
  %v225 = vunpack.c.l.b16 %v41
  %v226 = vunpack.c.l.b16 %v42
  %v227 = vunpack.c.h.b16 %v42
  %v228 = vunpack.c.l.b16 %v43
  %v229 = vunpack.c.h.b16 %v43
  %v230 = vunpack.c.l.b16 %v44
  %v231 = vunpack.c.l.b16 %v45
  %v232 = vunpack.c.h.b16 %v45
  %v233 = vunpack.c.l.b16 %v46
  %v234 = vunpack.c.h.b16 %v46
  %v235 = vunpack.c.l.b16 %v47
  %v236 = vunpack.c.l.b16 %v48
  %v237 = vunpack.c.h.b16 %v48
  %v238 = vunpack.c.l.b16 %v49
  %v239 = vunpack.c.h.b16 %v49
  %v240 = vunpack.c.l.b16 %v50
  %v241 = vunpack.c.l.b16 %v51
  %v242 = vunpack.c.h.b16 %v51
  %v243 = vunpack.c.l.b16 %v52
  %v244 = vunpack.c.h.b16 %v52
  %v245 = vunpack.c.l.b16 %v53
  %v246 = vunpack.c.l.b16 %v54
  %v247 = vunpack.c.h.b16 %v54
  %v248 = vunpack.c.l.b16 %v55
  %v249 = vunpack.c.h.b16 %v55
  %v250 = vunpack.c.l.b16 %v56
  %v251 = vunpack.c.l.b16 %v57
  %v252 = vunpack.c.h.b16 %v57
  %v253 = vunpack.c.l.b16 %v58
  %v254 = vunpack.c.h.b16 %v58
  %v255 = vunpack.c.l.b16 %v59
  %v256 = vunpack.c.l.b16 %v60
  %v257 = vunpack.c.h.b16 %v60
  %v258 = vunpack.c.l.b16 %v61
  %v259 = vunpack.c.h.b16 %v61
  %v260 = vunpack.c.l.b16 %v62
  %v261 = vunpack.c.l.b16 %v63
  %v262 = vunpack.c.h.b16 %v63
  %v263 = vunpack.c.l.b16 %v64
  %v264 = vunpack.c.h.b16 %v64
  %v265 = vunpack.c.l.b16 %v65
  %v266 = vpack.c.b16 %v191, %v186
  %v267 = vpack.c.b16 %v192, %v187
  %v268 = vpack.c.b16 %v193, %v188
  %v269 = vpack.c.b16 %v194, %v189
  %v270 = vpack.c.b16 %v195, %v190
  %v271 = vpack.c.b16 %v201, %v196
  %v272 = vpack.c.b16 %v202, %v197
  %v273 = vpack.c.b16 %v203, %v198
  %v274 = vpack.c.b16 %v204, %v199
  %v275 = vpack.c.b16 %v205, %v200
  %v276 = vpack.c.b16 %v211, %v206
  %v277 = vpack.c.b16 %v212, %v207
  %v278 = vpack.c.b16 %v213, %v208
  %v279 = vpack.c.b16 %v214, %v209
  %v280 = vpack.c.b16 %v215, %v210
  %v281 = vpack.c.b16 %v221, %v216
  %v282 = vpack.c.b16 %v222, %v217
  %v283 = vpack.c.b16 %v223, %v218
  %v284 = vpack.c.b16 %v224, %v219
  %v285 = vpack.c.b16 %v225, %v220
  %v286 = vpack.c.b16 %v231, %v226
  %v287 = vpack.c.b16 %v232, %v227
  %v288 = vpack.c.b16 %v233, %v228
  %v289 = vpack.c.b16 %v234, %v229
  %v290 = vpack.c.b16 %v235, %v230
  %v291 = vpack.c.b16 %v241, %v236
  %v292 = vpack.c.b16 %v242, %v237
  %v293 = vpack.c.b16 %v243, %v238
  %v294 = vpack.c.b16 %v244, %v239
  %v295 = vpack.c.b16 %v245, %v240
  %v296 = vpack.c.b16 %v251, %v246
  %v297 = vpack.c.b16 %v252, %v247
  %v298 = vpack.c.b16 %v253, %v248
  %v299 = vpack.c.b16 %v254, %v249
  %v300 = vpack.c.b16 %v255, %v250
  %v301 = vpack.c.b16 %v261, %v256
  %v302 = vpack.c.b16 %v262, %v257
  %v303 = vpack.c.b16 %v263, %v258
  %v304 = vpack.c.b16 %v264, %v259
  %v305 = vpack.c.b16 %v265, %v260
  %v410 = vunpack.c.l.b16 %v66
  %v411 = vunpack.c.l.b16 %v67
  %v412 = vunpack.c.l.b16 %v68
  %v413 = vunpack.c.l.b16 %v69
  %v414 = vunpack.c.l.b16 %v70
  %v415 = vunpack.c.l.b16 %v71
  %v416 = vunpack.c.l.b16 %v72
  %v417 = vunpack.c.l.b16 %v73
  %v418 = vunpack.c.l.b16 %v74
  %v419 = vunpack.c.l.b16 %v75
  %v420 = vunpack.c.l.b16 %v76
  %v421 = vunpack.c.l.b16 %v77
  %v422 = vunpack.c.l.b16 %v78
  %v423 = vunpack.c.l.b16 %v79
  %v424 = vunpack.c.l.b16 %v80
  %v425 = vunpack.c.l.b16 %v81
  %v426 = vunpack.c.l.b16 %v82
  %v427 = vunpack.c.l.b16 %v83
  %v428 = vunpack.c.l.b16 %v84
  %v429 = vunpack.c.l.b16 %v85
  %v430 = vunpack.c.l.b16 %v86
  %v431 = vunpack.c.l.b16 %v87
  %v432 = vunpack.c.l.b16 %v88
  %v433 = vunpack.c.l.b16 %v89
  %v434 = vunpack.c.l.b16 %v90
  %v435 = vunpack.c.l.b16 %v91
  %v436 = vunpack.c.l.b16 %v92
  %v437 = vunpack.c.l.b16 %v93
  %v438 = vunpack.c.l.b16 %v94
  %v439 = vunpack.c.l.b16 %v95
  %v440 = vunpack.c.l.b16 %v96
  %v441 = vunpack.c.l.b16 %v97
  %v442 = vunpack.c.l.b16 %v98
  %v443 = vunpack.c.l.b16 %v99
  %v444 = vunpack.c.l.b16 %v100
  %v445 = vunpack.c.l.b16 %v101
  %v446 = vunpack.c.l.b16 %v102
  %v447 = vunpack.c.l.b16 %v103
  %v448 = vunpack.c.l.b16 %v104
  %v449 = vunpack.c.l.b16 %v105
  %v450 = vunpack.c.l.b16 %v106
  %v451 = vunpack.c.l.b16 %v107
  %v452 = vunpack.c.l.b16 %v108
  %v453 = vunpack.c.l.b16 %v109
  %v454 = vunpack.c.l.b16 %v110
  %v455 = vunpack.c.l.b16 %v111
  %v456 = vunpack.c.l.b16 %v112
  %v457 = vunpack.c.l.b16 %v113
  %v458 = vunpack.c.l.b16 %v114
  %v459 = vunpack.c.l.b16 %v115
  %v460 = vunpack.c.l.b16 %v116
  %v461 = vunpack.c.l.b16 %v117
  %v462 = vunpack.c.l.b16 %v118
  %v463 = vunpack.c.l.b16 %v119
  %v464 = vunpack.c.l.b16 %v120
  %v465 = vunpack.c.l.b16 %v121
  %v466 = vunpack.c.l.b16 %v122
  %v467 = vunpack.c.l.b16 %v123
  %v468 = vunpack.c.l.b16 %v124
  %v469 = vunpack.c.l.b16 %v125
  %v470 = vunpack.c.l.b16 %v126
  %v471 = vunpack.c.l.b16 %v127
  %v472 = vunpack.c.l.b16 %v128
  %v473 = vunpack.c.l.b16 %v129
  %v474 = vunpack.c.l.b16 %v130
  %v475 = vunpack.c.l.b16 %v131
  %v476 = vunpack.c.l.b16 %v132
  %v477 = vunpack.c.l.b16 %v133
  %v478 = vunpack.c.l.b16 %v134
  %v479 = vunpack.c.l.b16 %v135
  %v480 = vunpack.c.l.b16 %v136
  %v481 = vunpack.c.l.b16 %v137
  %v482 = vpack.c.b16 %v411, %v410
  %v483 = vpack.c.b16 %v413, %v412
  %v484 = vpack.c.b16 %v415, %v414
  %v485 = vpack.c.b16 %v417, %v416
  %v486 = vpack.c.b16 %v419, %v418
  %v487 = vpack.c.b16 %v421, %v420
  %v488 = vpack.c.b16 %v423, %v422
  %v489 = vpack.c.b16 %v425, %v424
  %v490 = vpack.c.b16 %v427, %v426
  %v491 = vpack.c.b16 %v429, %v428
  %v492 = vpack.c.b16 %v431, %v430
  %v493 = vpack.c.b16 %v433, %v432
  %v494 = vpack.c.b16 %v435, %v434
  %v495 = vpack.c.b16 %v437, %v436
  %v496 = vpack.c.b16 %v439, %v438
  %v497 = vpack.c.b16 %v441, %v440
  %v498 = vpack.c.b16 %v443, %v442
  %v499 = vpack.c.b16 %v445, %v444
  %v500 = vpack.c.b16 %v447, %v446
  %v501 = vpack.c.b16 %v449, %v448
  %v502 = vpack.c.b16 %v451, %v450
  %v503 = vpack.c.b16 %v453, %v452
  %v504 = vpack.c.b16 %v455, %v454
  %v505 = vpack.c.b16 %v457, %v456
  %v506 = vpack.c.b16 %v459, %v458
  %v507 = vpack.c.b16 %v461, %v460
  %v508 = vpack.c.b16 %v463, %v462
  %v509 = vpack.c.b16 %v465, %v464
  %v510 = vpack.c.b16 %v467, %v466
  %v511 = vpack.c.b16 %v469, %v468
  %v512 = vpack.c.b16 %v471, %v470
  %v513 = vpack.c.b16 %v473, %v472
  %v514 = vpack.c.b16 %v475, %v474
  %v515 = vpack.c.b16 %v477, %v476
  %v516 = vpack.c.b16 %v479, %v478
  %v517 = vpack.c.b16 %v481, %v480
  %vm554 = vcmask 523264
  %v556 = vsel %vm554, %v270, 0
  %v559 = vsel %vm554, %v275, 0
  %v562 = vsel %vm554, %v280, 0
  %v565 = vsel %vm554, %v285, 0
  %v568 = vsel %vm554, %v290, 0
  %v571 = vsel %vm554, %v295, 0
  %v574 = vsel %vm554, %v300, 0
  %v577 = vsel %vm554, %v305, 0
  %579 = vmatprep.subr.bf16.mxu0 0
  %580 = vmatpush1.bf16.msra.mxu0 %v482
  %581 = vmatprep.subr.bf16.mxu0 0
  %582 = vmatpush1.bf16.msra.mxu0 %v483
  %583 = vmatprep.subr.bf16.mxu0 0
  %584 = vmatpush1.bf16.msra.mxu0 %v484
  %585 = vmatprep.subr.bf16.mxu0 0
  %586 = vmatpush1.bf16.msra.mxu0 %v485
  %587 = vmatprep.subr.bf16.mxu0 0
  %588 = vmatpush1.bf16.msra.mxu0 %v486
  %589 = vmatprep.subr.bf16.mxu0 0
  %590 = vmatpush1.bf16.msra.mxu0 %v487
  %591 = vmatprep.subr.bf16.mxu0 0
  %592 = vmatpush1.bf16.msra.mxu0 %v488
  %593 = vmatprep.subr.bf16.mxu0 0
  %594 = vmatpush1.bf16.msra.mxu0 %v489
  %595 = vmatprep.subr.bf16.mxu0 0
  %596 = vmatpush1.bf16.msra.mxu0 %v490
  %597 = vmatprep.subr.bf16.mxu0 0
  %598 = vmatpush1.bf16.msra.mxu0 %v491
  %599 = vmatprep.subr.bf16.mxu0 0
  %600 = vmatpush1.bf16.msra.mxu0 %v492
  %601 = vmatprep.subr.bf16.mxu0 0
  %602 = vmatpush1.bf16.msra.mxu0 %v493
  %603 = vmatprep.subr.bf16.mxu0 0
  %604 = vmatpush1.bf16.msra.mxu0 %v494
  %605 = vmatprep.subr.bf16.mxu0 0
  %606 = vmatpush1.bf16.msra.mxu0 %v495
  %607 = vmatprep.subr.bf16.mxu0 0
  %608 = vmatpush1.bf16.msra.mxu0 %v496
  %609 = vmatprep.subr.bf16.mxu0 0
  %610 = vmatpush1.bf16.msra.mxu0 %v497
  %611 = vmatprep.mubr.bf16.mxu0 %v267
  %612 = vmatmul.mubr.bf16.gmra.mrb[0].mxu0 %v266
  %v613 = vpop.f32.mrb[0].mxu0
  %v614 = vadd.f32 0.0, %v613
  %v615 = vpop.f32.mrb[0].mxu0
  %v616 = vpop.f32.mrb[0].mxu0
  %v617 = vadd.f32 0.0, %v616
  %v618 = vpop.f32.mrb[0].mxu0
  %619 = vmatprep.mubr.bf16.mxu0 %v272
  %620 = vmatmul.mubr.bf16.gmra.mrb[0].mxu0 %v271
  %v621 = vpop.f32.mrb[0].mxu0
  %v622 = vadd.f32 0.0, %v621
  %v623 = vpop.f32.mrb[0].mxu0
  %v624 = vpop.f32.mrb[0].mxu0
  %v625 = vadd.f32 0.0, %v624
  %v626 = vpop.f32.mrb[0].mxu0
  %627 = vmatprep.mubr.bf16.mxu0 %v277
  %628 = vmatmul.mubr.bf16.gmra.mrb[0].mxu0 %v276
  %v629 = vpop.f32.mrb[0].mxu0
  %v630 = vadd.f32 0.0, %v629
  %v631 = vpop.f32.mrb[0].mxu0
  %v632 = vpop.f32.mrb[0].mxu0
  %v633 = vadd.f32 0.0, %v632
  %v634 = vpop.f32.mrb[0].mxu0
  %635 = vmatprep.mubr.bf16.mxu0 %v282
  %636 = vmatmul.mubr.bf16.gmra.mrb[0].mxu0 %v281
  %v637 = vpop.f32.mrb[0].mxu0
  %v638 = vadd.f32 0.0, %v637
  %v639 = vpop.f32.mrb[0].mxu0
  %v640 = vpop.f32.mrb[0].mxu0
  %v641 = vadd.f32 0.0, %v640
  %v642 = vpop.f32.mrb[0].mxu0
  %643 = vmatprep.mubr.bf16.mxu0 %v287
  %644 = vmatmul.mubr.bf16.gmra.mrb[0].mxu0 %v286
  %v645 = vpop.f32.mrb[0].mxu0
  %v646 = vadd.f32 0.0, %v645
  %v647 = vpop.f32.mrb[0].mxu0
  %v648 = vpop.f32.mrb[0].mxu0
  %v649 = vadd.f32 0.0, %v648
  %v650 = vpop.f32.mrb[0].mxu0
  %651 = vmatprep.mubr.bf16.mxu0 %v292
  %652 = vmatmul.mubr.bf16.gmra.mrb[0].mxu0 %v291
  %v653 = vpop.f32.mrb[0].mxu0
  %v654 = vadd.f32 0.0, %v653
  %v655 = vpop.f32.mrb[0].mxu0
  %v656 = vpop.f32.mrb[0].mxu0
  %v657 = vadd.f32 0.0, %v656
  %v658 = vpop.f32.mrb[0].mxu0
  %659 = vmatprep.mubr.bf16.mxu0 %v297
  %660 = vmatmul.mubr.bf16.gmra.mrb[0].mxu0 %v296
  %v661 = vpop.f32.mrb[0].mxu0
  %v662 = vadd.f32 0.0, %v661
  %v663 = vpop.f32.mrb[0].mxu0
  %v664 = vpop.f32.mrb[0].mxu0
  %v665 = vadd.f32 0.0, %v664
  %v666 = vpop.f32.mrb[0].mxu0
  %667 = vmatprep.mubr.bf16.mxu0 %v302
  %668 = vmatmul.mubr.bf16.gmra.mrb[0].mxu0 %v301
  %v669 = vpop.f32.mrb[0].mxu0
  %v670 = vadd.f32 0.0, %v669
  %v671 = vpop.f32.mrb[0].mxu0
  %v672 = vpop.f32.mrb[0].mxu0
  %v673 = vadd.f32 0.0, %v672
  %v674 = vpop.f32.mrb[0].mxu0
  %675 = vdwg.mxu0
  %676 = vmatprep.subr.bf16.mxu0 0
  %677 = vmatpush1.bf16.msra.mxu0 %v498
  %678 = vmatprep.subr.bf16.mxu0 0
  %679 = vmatpush1.bf16.msra.mxu0 %v499
  %680 = vmatprep.subr.bf16.mxu0 0
  %681 = vmatpush1.bf16.msra.mxu0 %v500
  %682 = vmatprep.subr.bf16.mxu0 0
  %683 = vmatpush1.bf16.msra.mxu0 %v501
  %684 = vmatprep.subr.bf16.mxu0 0
  %685 = vmatpush1.bf16.msra.mxu0 %v502
  %686 = vmatprep.subr.bf16.mxu0 0
  %687 = vmatpush1.bf16.msra.mxu0 %v503
  %688 = vmatprep.subr.bf16.mxu0 0
  %689 = vmatpush1.bf16.msra.mxu0 %v504
  %690 = vmatprep.subr.bf16.mxu0 0
  %691 = vmatpush1.bf16.msra.mxu0 %v505
  %692 = vmatprep.subr.bf16.mxu0 0
  %693 = vmatpush1.bf16.msra.mxu0 %v506
  %694 = vmatprep.subr.bf16.mxu0 0
  %695 = vmatpush1.bf16.msra.mxu0 %v507
  %696 = vmatprep.subr.bf16.mxu0 0
  %697 = vmatpush1.bf16.msra.mxu0 %v508
  %698 = vmatprep.subr.bf16.mxu0 0
  %699 = vmatpush1.bf16.msra.mxu0 %v509
  %700 = vmatprep.subr.bf16.mxu0 0
  %701 = vmatpush1.bf16.msra.mxu0 %v510
  %702 = vmatprep.subr.bf16.mxu0 0
  %703 = vmatpush1.bf16.msra.mxu0 %v511
  %704 = vmatprep.subr.bf16.mxu0 0
  %705 = vmatpush1.bf16.msra.mxu0 %v512
  %706 = vmatprep.subr.bf16.mxu0 0
  %707 = vmatpush1.bf16.msra.mxu0 %v513
  %708 = vmatprep.mubr.bf16.mxu0 %v269
  %709 = vmatmul.mubr.bf16.gmra.mrb[0].mxu0 %v268
  %v710 = vpop.f32.mrb[0].mxu0
  %v711 = vadd.f32 %v614, %v710
  %v712 = vpop.f32.mrb[0].mxu0
  %v713 = vpop.f32.mrb[0].mxu0
  %v714 = vadd.f32 %v617, %v713
  %v715 = vpop.f32.mrb[0].mxu0
  %716 = vmatprep.mubr.bf16.mxu0 %v274
  %717 = vmatmul.mubr.bf16.gmra.mrb[0].mxu0 %v273
  %v718 = vpop.f32.mrb[0].mxu0
  %v719 = vadd.f32 %v622, %v718
  %v720 = vpop.f32.mrb[0].mxu0
  %v721 = vpop.f32.mrb[0].mxu0
  %v722 = vadd.f32 %v625, %v721
  %v723 = vpop.f32.mrb[0].mxu0
  %724 = vmatprep.mubr.bf16.mxu0 %v279
  %725 = vmatmul.mubr.bf16.gmra.mrb[0].mxu0 %v278
  %v726 = vpop.f32.mrb[0].mxu0
  %v727 = vadd.f32 %v630, %v726
  %v728 = vpop.f32.mrb[0].mxu0
  %v729 = vpop.f32.mrb[0].mxu0
  %v730 = vadd.f32 %v633, %v729
  %v731 = vpop.f32.mrb[0].mxu0
  %732 = vmatprep.mubr.bf16.mxu0 %v284
  %733 = vmatmul.mubr.bf16.gmra.mrb[0].mxu0 %v283
  %v734 = vpop.f32.mrb[0].mxu0
  %v735 = vadd.f32 %v638, %v734
  %v736 = vpop.f32.mrb[0].mxu0
  %v737 = vpop.f32.mrb[0].mxu0
  %v738 = vadd.f32 %v641, %v737
  %v739 = vpop.f32.mrb[0].mxu0
  %740 = vmatprep.mubr.bf16.mxu0 %v289
  %741 = vmatmul.mubr.bf16.gmra.mrb[0].mxu0 %v288
  %v742 = vpop.f32.mrb[0].mxu0
  %v743 = vadd.f32 %v646, %v742
  %v744 = vpop.f32.mrb[0].mxu0
  %v745 = vpop.f32.mrb[0].mxu0
  %v746 = vadd.f32 %v649, %v745
  %v747 = vpop.f32.mrb[0].mxu0
  %748 = vmatprep.mubr.bf16.mxu0 %v294
  %749 = vmatmul.mubr.bf16.gmra.mrb[0].mxu0 %v293
  %v750 = vpop.f32.mrb[0].mxu0
  %v751 = vadd.f32 %v654, %v750
  %v752 = vpop.f32.mrb[0].mxu0
  %v753 = vpop.f32.mrb[0].mxu0
  %v754 = vadd.f32 %v657, %v753
  %v755 = vpop.f32.mrb[0].mxu0
  %756 = vmatprep.mubr.bf16.mxu0 %v299
  %757 = vmatmul.mubr.bf16.gmra.mrb[0].mxu0 %v298
  %v758 = vpop.f32.mrb[0].mxu0
  %v759 = vadd.f32 %v662, %v758
  %v760 = vpop.f32.mrb[0].mxu0
  %v761 = vpop.f32.mrb[0].mxu0
  %v762 = vadd.f32 %v665, %v761
  %v763 = vpop.f32.mrb[0].mxu0
  %764 = vmatprep.mubr.bf16.mxu0 %v304
  %765 = vmatmul.mubr.bf16.gmra.mrb[0].mxu0 %v303
  %v766 = vpop.f32.mrb[0].mxu0
  %v767 = vadd.f32 %v670, %v766
  %v768 = vpop.f32.mrb[0].mxu0
  %v769 = vpop.f32.mrb[0].mxu0
  %v770 = vadd.f32 %v673, %v769
  %v771 = vpop.f32.mrb[0].mxu0
  %772 = vdwg.mxu0
  %773 = vmatprep.subr.bf16.mxu0 0
  %774 = vmatpush1.bf16.msra.mxu0 %v514
  %775 = vmatprep.subr.bf16.mxu0 0
  %776 = vmatpush1.bf16.msra.mxu0 %v515
  %777 = vmatprep.subr.bf16.mxu0 0
  %778 = vmatpush1.bf16.msra.mxu0 %v516
  %779 = vmatprep.subr.bf16.mxu0 0
  %780 = vmatpush1.bf16.msra.mxu0 %v517
  %781 = vmatprep.subr.bf16.mxu0 0
  %782 = vmatpush1.bf16.msra.mxu0 0
  %783 = vmatprep.subr.bf16.mxu0 0
  %784 = vmatpush1.bf16.msra.mxu0 0
  %785 = vmatprep.subr.bf16.mxu0 0
  %786 = vmatpush1.bf16.msra.mxu0 0
  %787 = vmatprep.subr.bf16.mxu0 0
  %788 = vmatpush1.bf16.msra.mxu0 0
  %789 = vmatprep.subr.bf16.mxu0 0
  %790 = vmatpush1.bf16.msra.mxu0 0
  %791 = vmatprep.subr.bf16.mxu0 0
  %792 = vmatpush1.bf16.msra.mxu0 0
  %793 = vmatprep.subr.bf16.mxu0 0
  %794 = vmatpush1.bf16.msra.mxu0 0
  %795 = vmatprep.subr.bf16.mxu0 0
  %796 = vmatpush1.bf16.msra.mxu0 0
  %797 = vmatprep.subr.bf16.mxu0 0
  %798 = vmatpush1.bf16.msra.mxu0 0
  %799 = vmatprep.subr.bf16.mxu0 0
  %800 = vmatpush1.bf16.msra.mxu0 0
  %801 = vmatprep.subr.bf16.mxu0 0
  %802 = vmatpush1.bf16.msra.mxu0 0
  %803 = vmatprep.subr.bf16.mxu0 0
  %804 = vmatpush1.bf16.msra.mxu0 0
  %805 = vmatprep.mubr.bf16.mxu0 0
  %806 = vmatmul.mubr.bf16.gmra.mrb[0].mxu0 %v556
  %v807 = vpop.f32.mrb[0].mxu0
  %v808 = vadd.f32 %v711, %v807
  %v809 = vpop.f32.mrb[0].mxu0
  %v810 = vpop.f32.mrb[0].mxu0
  %v811 = vadd.f32 %v714, %v810
  %v812 = vpop.f32.mrb[0].mxu0
  %813 = vmatprep.mubr.bf16.mxu0 0
  %814 = vmatmul.mubr.bf16.gmra.mrb[0].mxu0 %v559
  %v815 = vpop.f32.mrb[0].mxu0
  %v816 = vadd.f32 %v719, %v815
  %v817 = vpop.f32.mrb[0].mxu0
  %v818 = vpop.f32.mrb[0].mxu0
  %v819 = vadd.f32 %v722, %v818
  %v820 = vpop.f32.mrb[0].mxu0
  %821 = vmatprep.mubr.bf16.mxu0 0
  %822 = vmatmul.mubr.bf16.gmra.mrb[0].mxu0 %v562
  %v823 = vpop.f32.mrb[0].mxu0
  %v824 = vadd.f32 %v727, %v823
  %v825 = vpop.f32.mrb[0].mxu0
  %v826 = vpop.f32.mrb[0].mxu0
  %v827 = vadd.f32 %v730, %v826
  %v828 = vpop.f32.mrb[0].mxu0
  %829 = vmatprep.mubr.bf16.mxu0 0
  %830 = vmatmul.mubr.bf16.gmra.mrb[0].mxu0 %v565
  %v831 = vpop.f32.mrb[0].mxu0
  %v832 = vadd.f32 %v735, %v831
  %v833 = vpop.f32.mrb[0].mxu0
  %v834 = vpop.f32.mrb[0].mxu0
  %v835 = vadd.f32 %v738, %v834
  %v836 = vpop.f32.mrb[0].mxu0
  %837 = vmatprep.mubr.bf16.mxu0 0
  %838 = vmatmul.mubr.bf16.gmra.mrb[0].mxu0 %v568
  %v839 = vpop.f32.mrb[0].mxu0
  %v840 = vadd.f32 %v743, %v839
  %v841 = vpop.f32.mrb[0].mxu0
  %v842 = vpop.f32.mrb[0].mxu0
  %v843 = vadd.f32 %v746, %v842
  %v844 = vpop.f32.mrb[0].mxu0
  %845 = vmatprep.mubr.bf16.mxu0 0
  %846 = vmatmul.mubr.bf16.gmra.mrb[0].mxu0 %v571
  %v847 = vpop.f32.mrb[0].mxu0
  %v848 = vadd.f32 %v751, %v847
  %v849 = vpop.f32.mrb[0].mxu0
  %v850 = vpop.f32.mrb[0].mxu0
  %v851 = vadd.f32 %v754, %v850
  %v852 = vpop.f32.mrb[0].mxu0
  %853 = vmatprep.mubr.bf16.mxu0 0
  %854 = vmatmul.mubr.bf16.gmra.mrb[0].mxu0 %v574
  %v855 = vpop.f32.mrb[0].mxu0
  %v856 = vadd.f32 %v759, %v855
  %v857 = vpop.f32.mrb[0].mxu0
  %v858 = vpop.f32.mrb[0].mxu0
  %v859 = vadd.f32 %v762, %v858
  %v860 = vpop.f32.mrb[0].mxu0
  %861 = vmatprep.mubr.bf16.mxu0 0
  %862 = vmatmul.mubr.bf16.gmra.mrb[0].mxu0 %v577
  %v863 = vpop.f32.mrb[0].mxu0
  %v864 = vadd.f32 %v767, %v863
  %v865 = vpop.f32.mrb[0].mxu0
  %v866 = vpop.f32.mrb[0].mxu0
  %v867 = vadd.f32 %v770, %v866
  %v868 = vpop.f32.mrb[0].mxu0
  %869 = vdwg.mxu0
  %v870 = vld [vmem:[%s2] sm:$0x1]
  %v872 = vlaneseq
  %v873 = vshrl.u32 %v872, 7
  %v874 = vsub.s32 0, %v873
  %v875 = vrot.slane %v870, %v874
  %v877 = vmul.f32 %v808, %v875
  %v878 = vmul.f32 %v811, %v875
  %v879 = vmul.f32 %v816, %v875
  %v880 = vmul.f32 %v819, %v875
  %v881 = vmul.f32 %v824, %v875
  %v882 = vmul.f32 %v827, %v875
  %v883 = vmul.f32 %v832, %v875
  %v884 = vmul.f32 %v835, %v875
  %v885 = vmul.f32 %v840, %v875
  %v886 = vmul.f32 %v843, %v875
  %v887 = vmul.f32 %v848, %v875
  %v888 = vmul.f32 %v851, %v875
  %v889 = vmul.f32 %v856, %v875
  %v890 = vmul.f32 %v859, %v875
  %v891 = vmul.f32 %v864, %v875
  %v892 = vmul.f32 %v867, %v875
  %v893 = vld [vmem:[%s3] sm:$0x1]
  %v895 = vlaneseq
  %v896 = vshrl.u32 %v895, 7
  %v897 = vsub.s32 0, %v896
  %v898 = vrot.slane %v893, %v897
  %v900 = vadd.f32 %v877, %v898
  %v901 = vadd.f32 %v878, %v898
  %v902 = vadd.f32 %v879, %v898
  %v903 = vadd.f32 %v880, %v898
  %v904 = vadd.f32 %v881, %v898
  %v905 = vadd.f32 %v882, %v898
  %v906 = vadd.f32 %v883, %v898
  %v907 = vadd.f32 %v884, %v898
  %v908 = vadd.f32 %v885, %v898
  %v909 = vadd.f32 %v886, %v898
  %v910 = vadd.f32 %v887, %v898
  %v911 = vadd.f32 %v888, %v898
  %v912 = vadd.f32 %v889, %v898
  %v913 = vadd.f32 %v890, %v898
  %v914 = vadd.f32 %v891, %v898
  %v915 = vadd.f32 %v892, %v898
  %v916 = vmax.f32 %v900, 0.0
  %v917 = vmax.f32 %v901, 0.0
  %v918 = vmax.f32 %v902, 0.0
  %v919 = vmax.f32 %v903, 0.0
  %v920 = vmax.f32 %v904, 0.0
  %v921 = vmax.f32 %v905, 0.0
  %v922 = vmax.f32 %v906, 0.0
  %v923 = vmax.f32 %v907, 0.0
  %v924 = vmax.f32 %v908, 0.0
  %v925 = vmax.f32 %v909, 0.0
  %v926 = vmax.f32 %v910, 0.0
  %v927 = vmax.f32 %v911, 0.0
  %v928 = vmax.f32 %v912, 0.0
  %v929 = vmax.f32 %v913, 0.0
  %v930 = vmax.f32 %v914, 0.0
  %v931 = vmax.f32 %v915, 0.0
  %932 = vst [vmem:[%s4] sm:$0xff] %v916
  %933 = vst [vmem:[%s4 + $0x8] sm:$0xff] %v917
  %934 = vst [vmem:[%s4 + $0x10] sm:$0xff] %v918
  %935 = vst [vmem:[%s4 + $0x18] sm:$0xff] %v919
  %936 = vst [vmem:[%s4 + $0x20] sm:$0xff] %v920
  %937 = vst [vmem:[%s4 + $0x28] sm:$0xff] %v921
  %938 = vst [vmem:[%s4 + $0x30] sm:$0xff] %v922
  %939 = vst [vmem:[%s4 + $0x38] sm:$0xff] %v923
  %940 = vst [vmem:[%s4 + $0x40] sm:$0xff] %v924
  %941 = vst [vmem:[%s4 + $0x48] sm:$0xff] %v925
  %942 = vst [vmem:[%s4 + $0x50] sm:$0xff] %v926
  %943 = vst [vmem:[%s4 + $0x58] sm:$0xff] %v927
  %944 = vst [vmem:[%s4 + $0x60] sm:$0xff] %v928
  %945 = vst [vmem:[%s4 + $0x68] sm:$0xff] %v929
  %946 = vst [vmem:[%s4 + $0x70] sm:$0xff] %v930
  %947 = vst [vmem:[%s4 + $0x78] sm:$0xff] %v931
  // Predicated region
  $region18: #{_lambda_.39} parent=0 // pred_check
    _
  $region19: #{_lambda_.39} parent=0 // pred_check_branch
    %949 = sbr.rel (0) target = $region21
  $region20: #{_lambda_.39} parent=0 // pred_region
    _
  $region21: #{_lambda_.39} parent=0 // pred_fallthru
    _
  // Predicated region
  $region22: #{_lambda_.39} parent=0 // pred_check
    _
  $region23: #{_lambda_.39} parent=0 // pred_check_branch
    %951 = sbr.rel (0) target = $region25
  $region24: #{_lambda_.39} parent=0 // pred_region
    _
  $region25: #{_lambda_.39} parent=0 // pred_fallthru
    _

// kernel: _lambda_.43
$region0: #{_lambda_.43}
  #allocation0 [shape = 'u32[]', space=smem, size = 0x4, offset = 0x4, fixed_abs, tag = 'smem constant byte address 0x4 - core index']
  #allocation1 [shape = 'u32[144,128]{1,0:T(1,128)}', space=vmem, size = 0x12000, scoped, tag = 'internal scratch']
  %s0 = inlined_call_operand.vmem [shape: bf16[128,64], index: 0, kind: input, shape index: {}]
  %s1 = inlined_call_operand.vmem [shape: bf16[64,128], index: 1, kind: input, shape index: {}]
  %s2 = inlined_call_operand.vmem [shape: f32[1,128], index: 2, kind: input, shape index: {}]
  %s3 = inlined_call_operand.vmem [shape: f32[1,128], index: 3, kind: input, shape index: {}]
  %s4 = inlined_call_operand.vmem [shape: f32[128,128], index: 4, kind: output, shape index: {}]
  %s5 = sld [smem:[#allocation0]]
  $region26: #{_lambda_.43} parent=0
    _
  %s7 = ssub.s32 1, %s5
  %s8 = scalar_select 0, %s7, %s5
  // Predicated region
  $region2: #{_lambda_.43} parent=0 // pred_check
    _
  $region3: #{_lambda_.43} parent=0 // pred_check_branch
    %10 = sbr.rel (0) target = $region5
  $region4: #{_lambda_.43} parent=0 // pred_region
    _
  $region5: #{_lambda_.43} parent=0 // pred_fallthru
    _
  // Predicated region
  $region6: #{_lambda_.43} parent=0 // pred_check
    _
  $region7: #{_lambda_.43} parent=0 // pred_check_branch
    %12 = sbr.rel (0) target = $region9
  $region8: #{_lambda_.43} parent=0 // pred_region
    _
  $region9: #{_lambda_.43} parent=0 // pred_fallthru
    _
  // Predicated region
  $region10: #{_lambda_.43} parent=0 // pred_check
    _
  $region11: #{_lambda_.43} parent=0 // pred_check_branch
    %14 = sbr.rel (0) target = $region13
  $region12: #{_lambda_.43} parent=0 // pred_region
    _
  $region13: #{_lambda_.43} parent=0 // pred_fallthru
    _
  // Predicated region
  $region14: #{_lambda_.43} parent=0 // pred_check
    _
  $region15: #{_lambda_.43} parent=0 // pred_check_branch
    %16 = sbr.rel (0) target = $region17
  $region16: #{_lambda_.43} parent=0 // pred_region
    _
  $region17: #{_lambda_.43} parent=0 // pred_fallthru
    _
  %v18 = vld [vmem:[%s0] sm:$0xf]
  %v19 = vld [vmem:[%s0 + $0x4] sm:$0xf]
  %v20 = vld [vmem:[%s0 + $0x8] sm:$0xf]
  %v21 = vld [vmem:[%s0 + $0xc] sm:$0xf]
  %v22 = vld [vmem:[%s0 + $0x10] sm:$0xf]
  %v23 = vld [vmem:[%s0 + $0x14] sm:$0xf]
  %v24 = vld [vmem:[%s0 + $0x18] sm:$0xf]
  %v25 = vld [vmem:[%s0 + $0x1c] sm:$0xf]
  %v26 = vld [vmem:[%s0 + $0x20] sm:$0xf]
  %v27 = vld [vmem:[%s0 + $0x24] sm:$0xf]
  %v28 = vld [vmem:[%s0 + $0x28] sm:$0xf]
  %v29 = vld [vmem:[%s0 + $0x2c] sm:$0xf]
  %v30 = vld [vmem:[%s0 + $0x30] sm:$0xf]
  %v31 = vld [vmem:[%s0 + $0x34] sm:$0xf]
  %v32 = vld [vmem:[%s0 + $0x38] sm:$0xf]
  %v33 = vld [vmem:[%s0 + $0x3c] sm:$0xf]
  %v34 = vld [vmem:[%s1] sm:$0xf]
  %v35 = vld [vmem:[%s1 + $0x4] sm:$0xf]
  %v36 = vld [vmem:[%s1 + $0x8] sm:$0xf]
  %v37 = vld [vmem:[%s1 + $0xc] sm:$0xf]
  %v38 = vld [vmem:[%s1 + $0x10] sm:$0xf]
  %v39 = vld [vmem:[%s1 + $0x14] sm:$0xf]
  %v40 = vld [vmem:[%s1 + $0x18] sm:$0xf]
  %v41 = vld [vmem:[%s1 + $0x1c] sm:$0xf]
  %v58 = vunpack.c.l.b16 %v18
  %v59 = vunpack.c.l.b16 %v19
  %v60 = vunpack.c.l.b16 %v20
  %v61 = vunpack.c.l.b16 %v21
  %v62 = vunpack.c.l.b16 %v22
  %v63 = vunpack.c.l.b16 %v23
  %v64 = vunpack.c.l.b16 %v24
  %v65 = vunpack.c.l.b16 %v25
  %v66 = vunpack.c.l.b16 %v26
  %v67 = vunpack.c.l.b16 %v27
  %v68 = vunpack.c.l.b16 %v28
  %v69 = vunpack.c.l.b16 %v29
  %v70 = vunpack.c.l.b16 %v30
  %v71 = vunpack.c.l.b16 %v31
  %v72 = vunpack.c.l.b16 %v32
  %v73 = vunpack.c.l.b16 %v33
  %v74 = vpack.c.b16 %v59, %v58
  %v75 = vpack.c.b16 %v61, %v60
  %v76 = vpack.c.b16 %v63, %v62
  %v77 = vpack.c.b16 %v65, %v64
  %v78 = vpack.c.b16 %v67, %v66
  %v79 = vpack.c.b16 %v69, %v68
  %v80 = vpack.c.b16 %v71, %v70
  %v81 = vpack.c.b16 %v73, %v72
  %v90 = vunpack.c.l.b16 %v34
  %v91 = vunpack.c.l.b16 %v35
  %v92 = vunpack.c.l.b16 %v36
  %v93 = vunpack.c.l.b16 %v37
  %v94 = vunpack.c.l.b16 %v38
  %v95 = vunpack.c.l.b16 %v39
  %v96 = vunpack.c.l.b16 %v40
  %v97 = vunpack.c.l.b16 %v41
  %v98 = vpack.c.b16 %v91, %v90
  %v99 = vpack.c.b16 %v93, %v92
  %v100 = vpack.c.b16 %v95, %v94
  %v101 = vpack.c.b16 %v97, %v96
  %vm106 = vcmask 523264
  %v108 = vsel %vm106, %v74, 0
  %v111 = vsel %vm106, %v75, 0
  %v114 = vsel %vm106, %v76, 0
  %v117 = vsel %vm106, %v77, 0
  %v120 = vsel %vm106, %v78, 0
  %v123 = vsel %vm106, %v79, 0
  %v126 = vsel %vm106, %v80, 0
  %v129 = vsel %vm106, %v81, 0
  %131 = vmatprep.subr.bf16.mxu0 0
  %132 = vmatpush1.bf16.msra.mxu0 %v98
  %133 = vmatprep.subr.bf16.mxu0 0
  %134 = vmatpush1.bf16.msra.mxu0 %v99
  %135 = vmatprep.subr.bf16.mxu0 0
  %136 = vmatpush1.bf16.msra.mxu0 %v100
  %137 = vmatprep.subr.bf16.mxu0 0
  %138 = vmatpush1.bf16.msra.mxu0 %v101
  %139 = vmatprep.subr.bf16.mxu0 0
  %140 = vmatpush1.bf16.msra.mxu0 0
  %141 = vmatprep.subr.bf16.mxu0 0
  %142 = vmatpush1.bf16.msra.mxu0 0
  %143 = vmatprep.subr.bf16.mxu0 0
  %144 = vmatpush1.bf16.msra.mxu0 0
  %145 = vmatprep.subr.bf16.mxu0 0
  %146 = vmatpush1.bf16.msra.mxu0 0
  %147 = vmatprep.subr.bf16.mxu0 0
  %148 = vmatpush1.bf16.msra.mxu0 0
  %149 = vmatprep.subr.bf16.mxu0 0
  %150 = vmatpush1.bf16.msra.mxu0 0
  %151 = vmatprep.subr.bf16.mxu0 0
  %152 = vmatpush1.bf16.msra.mxu0 0
  %153 = vmatprep.subr.bf16.mxu0 0
  %154 = vmatpush1.bf16.msra.mxu0 0
  %155 = vmatprep.subr.bf16.mxu0 0
  %156 = vmatpush1.bf16.msra.mxu0 0
  %157 = vmatprep.subr.bf16.mxu0 0
  %158 = vmatpush1.bf16.msra.mxu0 0
  %159 = vmatprep.subr.bf16.mxu0 0
  %160 = vmatpush1.bf16.msra.mxu0 0
  %161 = vmatprep.subr.bf16.mxu0 0
  %162 = vmatpush1.bf16.msra.mxu0 0
  %163 = vmatprep.mubr.bf16.mxu0 0
  %164 = vmatmul.mubr.bf16.gmra.mrb[0].mxu0 %v108
  %v165 = vpop.f32.mrb[0].mxu0
  %v166 = vadd.f32 0.0, %v165
  %v167 = vpop.f32.mrb[0].mxu0
  %v168 = vpop.f32.mrb[0].mxu0
  %v169 = vadd.f32 0.0, %v168
  %v170 = vpop.f32.mrb[0].mxu0
  %171 = vmatprep.mubr.bf16.mxu0 0
  %172 = vmatmul.mubr.bf16.gmra.mrb[0].mxu0 %v111
  %v173 = vpop.f32.mrb[0].mxu0
  %v174 = vadd.f32 0.0, %v173
  %v175 = vpop.f32.mrb[0].mxu0
  %v176 = vpop.f32.mrb[0].mxu0
  %v177 = vadd.f32 0.0, %v176
  %v178 = vpop.f32.mrb[0].mxu0
  %179 = vmatprep.mubr.bf16.mxu0 0
  %180 = vmatmul.mubr.bf16.gmra.mrb[0].mxu0 %v114
  %v181 = vpop.f32.mrb[0].mxu0
  %v182 = vadd.f32 0.0, %v181
  %v183 = vpop.f32.mrb[0].mxu0
  %v184 = vpop.f32.mrb[0].mxu0
  %v185 = vadd.f32 0.0, %v184
  %v186 = vpop.f32.mrb[0].mxu0
  %187 = vmatprep.mubr.bf16.mxu0 0
  %188 = vmatmul.mubr.bf16.gmra.mrb[0].mxu0 %v117
  %v189 = vpop.f32.mrb[0].mxu0
  %v190 = vadd.f32 0.0, %v189
  %v191 = vpop.f32.mrb[0].mxu0
  %v192 = vpop.f32.mrb[0].mxu0
  %v193 = vadd.f32 0.0, %v192
  %v194 = vpop.f32.mrb[0].mxu0
  %195 = vmatprep.mubr.bf16.mxu0 0
  %196 = vmatmul.mubr.bf16.gmra.mrb[0].mxu0 %v120
  %v197 = vpop.f32.mrb[0].mxu0
  %v198 = vadd.f32 0.0, %v197
  %v199 = vpop.f32.mrb[0].mxu0
  %v200 = vpop.f32.mrb[0].mxu0
  %v201 = vadd.f32 0.0, %v200
  %v202 = vpop.f32.mrb[0].mxu0
  %203 = vmatprep.mubr.bf16.mxu0 0
  %204 = vmatmul.mubr.bf16.gmra.mrb[0].mxu0 %v123
  %v205 = vpop.f32.mrb[0].mxu0
  %v206 = vadd.f32 0.0, %v205
  %v207 = vpop.f32.mrb[0].mxu0
  %v208 = vpop.f32.mrb[0].mxu0
  %v209 = vadd.f32 0.0, %v208
  %v210 = vpop.f32.mrb[0].mxu0
  %211 = vmatprep.mubr.bf16.mxu0 0
  %212 = vmatmul.mubr.bf16.gmra.mrb[0].mxu0 %v126
  %v213 = vpop.f32.mrb[0].mxu0
  %v214 = vadd.f32 0.0, %v213
  %v215 = vpop.f32.mrb[0].mxu0
  %v216 = vpop.f32.mrb[0].mxu0
  %v217 = vadd.f32 0.0, %v216
  %v218 = vpop.f32.mrb[0].mxu0
  %219 = vmatprep.mubr.bf16.mxu0 0
  %220 = vmatmul.mubr.bf16.gmra.mrb[0].mxu0 %v129
  %v221 = vpop.f32.mrb[0].mxu0
  %v222 = vadd.f32 0.0, %v221
  %v223 = vpop.f32.mrb[0].mxu0
  %v224 = vpop.f32.mrb[0].mxu0
  %v225 = vadd.f32 0.0, %v224
  %v226 = vpop.f32.mrb[0].mxu0
  %227 = vdwg.mxu0
  %v228 = vld [vmem:[%s2] sm:$0x1]
  %v230 = vlaneseq
  %v231 = vshrl.u32 %v230, 7
  %v232 = vsub.s32 0, %v231
  %v233 = vrot.slane %v228, %v232
  %v235 = vmul.f32 %v166, %v233
  %v236 = vmul.f32 %v169, %v233
  %v237 = vmul.f32 %v174, %v233
  %v238 = vmul.f32 %v177, %v233
  %v239 = vmul.f32 %v182, %v233
  %v240 = vmul.f32 %v185, %v233
  %v241 = vmul.f32 %v190, %v233
  %v242 = vmul.f32 %v193, %v233
  %v243 = vmul.f32 %v198, %v233
  %v244 = vmul.f32 %v201, %v233
  %v245 = vmul.f32 %v206, %v233
  %v246 = vmul.f32 %v209, %v233
  %v247 = vmul.f32 %v214, %v233
  %v248 = vmul.f32 %v217, %v233
  %v249 = vmul.f32 %v222, %v233
  %v250 = vmul.f32 %v225, %v233
  %v251 = vld [vmem:[%s3] sm:$0x1]
  %v253 = vlaneseq
  %v254 = vshrl.u32 %v253, 7
  %v255 = vsub.s32 0, %v254
  %v256 = vrot.slane %v251, %v255
  %v258 = vadd.f32 %v235, %v256
  %v259 = vadd.f32 %v236, %v256
  %v260 = vadd.f32 %v237, %v256
  %v261 = vadd.f32 %v238, %v256
  %v262 = vadd.f32 %v239, %v256
  %v263 = vadd.f32 %v240, %v256
  %v264 = vadd.f32 %v241, %v256
  %v265 = vadd.f32 %v242, %v256
  %v266 = vadd.f32 %v243, %v256
  %v267 = vadd.f32 %v244, %v256
  %v268 = vadd.f32 %v245, %v256
  %v269 = vadd.f32 %v246, %v256
  %v270 = vadd.f32 %v247, %v256
  %v271 = vadd.f32 %v248, %v256
  %v272 = vadd.f32 %v249, %v256
  %v273 = vadd.f32 %v250, %v256
  %274 = vst [vmem:[%s4] sm:$0xff] %v258
  %275 = vst [vmem:[%s4 + $0x8] sm:$0xff] %v259
  %276 = vst [vmem:[%s4 + $0x10] sm:$0xff] %v260
  %277 = vst [vmem:[%s4 + $0x18] sm:$0xff] %v261
  %278 = vst [vmem:[%s4 + $0x20] sm:$0xff] %v262
  %279 = vst [vmem:[%s4 + $0x28] sm:$0xff] %v263
  %280 = vst [vmem:[%s4 + $0x30] sm:$0xff] %v264
  %281 = vst [vmem:[%s4 + $0x38] sm:$0xff] %v265
  %282 = vst [vmem:[%s4 + $0x40] sm:$0xff] %v266
  %283 = vst [vmem:[%s4 + $0x48] sm:$0xff] %v267
  %284 = vst [vmem:[%s4 + $0x50] sm:$0xff] %v268
  %285 = vst [vmem:[%s4 + $0x58] sm:$0xff] %v269
  %286 = vst [vmem:[%s4 + $0x60] sm:$0xff] %v270
  %287 = vst [vmem:[%s4 + $0x68] sm:$0xff] %v271
  %288 = vst [vmem:[%s4 + $0x70] sm:$0xff] %v272
  %289 = vst [vmem:[%s4 + $0x78] sm:$0xff] %v273
  // Predicated region
  $region18: #{_lambda_.43} parent=0 // pred_check
    _
  $region19: #{_lambda_.43} parent=0 // pred_check_branch
    %291 = sbr.rel (0) target = $region21
  $region20: #{_lambda_.43} parent=0 // pred_region
    _
  $region21: #{_lambda_.43} parent=0 // pred_fallthru
    _
  // Predicated region
  $region22: #{_lambda_.43} parent=0 // pred_check
    _
  $region23: #{_lambda_.43} parent=0 // pred_check_branch
    %293 = sbr.rel (0) target = $region25
  $region24: #{_lambda_.43} parent=0 // pred_region
    _
  $region25: #{_lambda_.43} parent=0 // pred_fallthru
    _

// kernel: _lambda_.47
$region0: #{_lambda_.47}
  #allocation0 [shape = 'u32[]', space=smem, size = 0x4, offset = 0x4, fixed_abs, tag = 'smem constant byte address 0x4 - core index']
  #allocation1 [shape = 'u32[144,128]{1,0:T(1,128)}', space=vmem, size = 0x12000, scoped, tag = 'internal scratch']
  #allocation2 [shape = 'f32[8,128]{1,0:T(8,128)}', space=vmem, size = 0x1000, scoped, tag = 'scratch operand']
  %s0 = inlined_call_operand.vmem [shape: f32[8,128], index: 0, kind: input, shape index: {}]
  %s1 = inlined_call_operand.vmem [shape: f32[8,128], index: 1, kind: input, shape index: {}]
  %s2 = inlined_call_operand.hbm [shape: f32[1,1], index: 2, kind: output, shape index: {}]
  %s3 = sld [smem:[#allocation0]]
  $region26: #{_lambda_.47} parent=0
    _
  %s5 = ssub.s32 1, %s3
  %s6 = scalar_select 0, %s5, %s3
  $region1: #{_lambda_.47} parent=0
    #allocation3 [shape = 'u8[512]{0}', space=vmem, size = 0x400, scoped, tag = 'output window, operand 0, single buffered']
    #allocation4 [shape = 's32[1]{0}', space=sflag, size = 0x4, scoped, tag = 'scoped memory for _lambda_.47']
    %7 = vsyncpa [#allocation4], 0
    // Predicated region
    $region2: #{_lambda_.47} parent=1 // pred_check
      _
    $region3: #{_lambda_.47} parent=1 // pred_check_branch
      %9 = sbr.rel (0) target = $region5
    $region4: #{_lambda_.47} parent=1 // pred_region
      _
    $region5: #{_lambda_.47} parent=1 // pred_fallthru
      _
    // Predicated region
    $region6: #{_lambda_.47} parent=1 // pred_check
      _
    $region7: #{_lambda_.47} parent=1 // pred_check_branch
      %11 = sbr.rel (0) target = $region9
    $region8: #{_lambda_.47} parent=1 // pred_region
      _
    $region9: #{_lambda_.47} parent=1 // pred_fallthru
      _
    %p12 = scmp.eq.s32.totalorder 0, 0
    // Predicated region
    $region10: #{_lambda_.47} parent=1 // pred_check
      %p13 = pneg %p12
    $region11: #{_lambda_.47} parent=1 // pred_check_branch
      %15 = sbr.rel (%p13) target = $region13
    $region12: #{_lambda_.47} parent=1 // pred_region
      %16 = vst [vmem:[#allocation2] sm:$0xff] 0.0
    $region13: #{_lambda_.47} parent=1 // pred_fallthru
      _
    %v17 = vld [vmem:[%s0] sm:$0xff]
    %v18 = vld [vmem:[%s1] sm:$0xff]
    %v19 = vsub.f32 %v17, %v18
    %v20 = vand.u32 2147483647, %v19
    %v21 = vld [vmem:[#allocation2] sm:$0xff]
    %v22 = vadd.f32 %v20, 0.0
    %v23 = vadd.f32 %v21, %v22
    %24 = vst [vmem:[#allocation2] sm:$0xff] %v23
    // Predicated region
    $region14: #{_lambda_.47} parent=1 // pred_check
      %p25 = pneg %p12
    $region15: #{_lambda_.47} parent=1 // pred_check_branch
      %27 = sbr.rel (%p25) target = $region17
    $region16: #{_lambda_.47} parent=1 // pred_region
      %v28 = vld [vmem:[#allocation2] sm:$0xff]
      %29 = vadd.xlane.f32.xlu0 %v28
      %v30 = vpop.xlane.xlu0 %29
      %v31 = vrot.slane %v30, 4
      %v32 = vadd.f32 %v30, %v31
      %v33 = vrot.slane %v32, 2
      %v34 = vadd.f32 %v32, %v33
      %v35 = vrot.slane %v34, 1
      %v36 = vadd.f32 %v34, %v35
      %s37 = vtos %v36
      %v38 = vstv %s37
      %vm39 = vcmask 0
      %40 = vst.msk [vmem:[#allocation3] sm:$0x1] %vm39, %v38
    $region17: #{_lambda_.47} parent=1 // pred_fallthru
      _
    // Predicated region
    $region18: #{_lambda_.47} parent=1 // pred_check
      _
    $region19: #{_lambda_.47} parent=1 // pred_check_branch
      %42 = sbr.rel (0) target = $region21
    $region20: #{_lambda_.47} parent=1 // pred_region
      %s44 = ssub.s32 16, 16
      %45 = vsyncadd [#allocation4], %s44
      %s47 = sshll.u32 [#allocation3], 4
      %s48 = int_to_ptr.vmem [resolvable:$true] %s47
      %50 = dma.vmem_to_hbm [thread:$0]  %s48, 16, %s2, [#allocation4]
    $region21: #{_lambda_.47} parent=1 // pred_fallthru
      _
    // Predicated region
    $region22: #{_lambda_.47} parent=1 // pred_check
      _
    $region23: #{_lambda_.47} parent=1 // pred_check_branch
      %52 = sbr.rel (0) target = $region25
    $region24: #{_lambda_.47} parent=1 // pred_region
      %53 = dma.done [#allocation4], 16
    $region25: #{_lambda_.47} parent=1 // pred_fallthru
      _
    %54 = vsyncpa [#allocation4], 1

// kernel: _lambda_.35
$region0: #{_lambda_.35}
  #allocation0 [shape = 'u32[]', space=smem, size = 0x4, offset = 0x4, fixed_abs, tag = 'smem constant byte address 0x4 - core index']
  #allocation1 [shape = 'u32[144,128]{1,0:T(1,128)}', space=vmem, size = 0x12000, scoped, tag = 'internal scratch']
  #allocation2 [shape = 'f32[8,128]{1,0:T(8,128)}', space=vmem, size = 0x1000, scoped, tag = 'scratch operand']
  %s0 = inlined_call_operand.vmem [shape: f32[32,128], index: 0, kind: input, shape index: {}]
  %s1 = inlined_call_operand.vmem [shape: f32[32,128], index: 1, kind: input, shape index: {}]
  %s2 = inlined_call_operand.hbm [shape: f32[1,1], index: 2, kind: output, shape index: {}]
  %s3 = sld [smem:[#allocation0]]
  $region26: #{_lambda_.35} parent=0
    _
  %s5 = ssub.s32 1, %s3
  %s6 = scalar_select 0, %s5, %s3
  $region1: #{_lambda_.35} parent=0
    #allocation3 [shape = 'u8[512]{0}', space=vmem, size = 0x400, scoped, tag = 'output window, operand 0, single buffered']
    #allocation4 [shape = 's32[1]{0}', space=sflag, size = 0x4, scoped, tag = 'scoped memory for _lambda_.35']
    %7 = vsyncpa [#allocation4], 0
    // Predicated region
    $region2: #{_lambda_.35} parent=1 // pred_check
      _
    $region3: #{_lambda_.35} parent=1 // pred_check_branch
      %9 = sbr.rel (0) target = $region5
    $region4: #{_lambda_.35} parent=1 // pred_region
      _
    $region5: #{_lambda_.35} parent=1 // pred_fallthru
      _
    // Predicated region
    $region6: #{_lambda_.35} parent=1 // pred_check
      _
    $region7: #{_lambda_.35} parent=1 // pred_check_branch
      %11 = sbr.rel (0) target = $region9
    $region8: #{_lambda_.35} parent=1 // pred_region
      _
    $region9: #{_lambda_.35} parent=1 // pred_fallthru
      _
    %p12 = scmp.eq.s32.totalorder 0, 0
    // Predicated region
    $region10: #{_lambda_.35} parent=1 // pred_check
      %p13 = pneg %p12
    $region11: #{_lambda_.35} parent=1 // pred_check_branch
      %15 = sbr.rel (%p13) target = $region13
    $region12: #{_lambda_.35} parent=1 // pred_region
      %16 = vst [vmem:[#allocation2] sm:$0xff] 0.0
    $region13: #{_lambda_.35} parent=1 // pred_fallthru
      _
    %v17 = vld [vmem:[%s0] sm:$0xff]
    %v18 = vld [vmem:[%s0 + $0x8] sm:$0xff]
    %v19 = vld [vmem:[%s0 + $0x10] sm:$0xff]
    %v20 = vld [vmem:[%s0 + $0x18] sm:$0xff]
    %v21 = vld [vmem:[%s1] sm:$0xff]
    %v22 = vld [vmem:[%s1 + $0x8] sm:$0xff]
    %v23 = vld [vmem:[%s1 + $0x10] sm:$0xff]
    %v24 = vld [vmem:[%s1 + $0x18] sm:$0xff]
    %v25 = vsub.f32 %v17, %v21
    %v26 = vsub.f32 %v18, %v22
    %v27 = vsub.f32 %v19, %v23
    %v28 = vsub.f32 %v20, %v24
    %v29 = vand.u32 2147483647, %v25
    %v30 = vand.u32 2147483647, %v26
    %v31 = vand.u32 2147483647, %v27
    %v32 = vand.u32 2147483647, %v28
    %v33 = vld [vmem:[#allocation2] sm:$0xff]
    %v34 = vadd.f32 %v29, %v30
    %v35 = vadd.f32 %v34, %v31
    %v36 = vadd.f32 %v35, %v32
    %v37 = vadd.f32 %v33, %v36
    %38 = vst [vmem:[#allocation2] sm:$0xff] %v37
    // Predicated region
    $region14: #{_lambda_.35} parent=1 // pred_check
      %p39 = pneg %p12
    $region15: #{_lambda_.35} parent=1 // pred_check_branch
      %41 = sbr.rel (%p39) target = $region17
    $region16: #{_lambda_.35} parent=1 // pred_region
      %v42 = vld [vmem:[#allocation2] sm:$0xff]
      %43 = vadd.xlane.f32.xlu0 %v42
      %v44 = vpop.xlane.xlu0 %43
      %v45 = vrot.slane %v44, 4
      %v46 = vadd.f32 %v44, %v45
      %v47 = vrot.slane %v46, 2
      %v48 = vadd.f32 %v46, %v47
      %v49 = vrot.slane %v48, 1
      %v50 = vadd.f32 %v48, %v49
      %s51 = vtos %v50
      %v52 = vstv %s51
      %vm53 = vcmask 0
      %54 = vst.msk [vmem:[#allocation3] sm:$0x1] %vm53, %v52
    $region17: #{_lambda_.35} parent=1 // pred_fallthru
      _
    // Predicated region
    $region18: #{_lambda_.35} parent=1 // pred_check
      _
    $region19: #{_lambda_.35} parent=1 // pred_check_branch
      %56 = sbr.rel (0) target = $region21
    $region20: #{_lambda_.35} parent=1 // pred_region
      %s58 = ssub.s32 16, 16
      %59 = vsyncadd [#allocation4], %s58
      %s61 = sshll.u32 [#allocation3], 4
      %s62 = int_to_ptr.vmem [resolvable:$true] %s61
      %64 = dma.vmem_to_hbm [thread:$0]  %s62, 16, %s2, [#allocation4]
    $region21: #{_lambda_.35} parent=1 // pred_fallthru
      _
    // Predicated region
    $region22: #{_lambda_.35} parent=1 // pred_check
      _
    $region23: #{_lambda_.35} parent=1 // pred_check_branch
      %66 = sbr.rel (0) target = $region25
    $region24: #{_lambda_.35} parent=1 // pred_region
      %67 = dma.done [#allocation4], 16
    $region25: #{_lambda_.35} parent=1 // pred_fallthru
      _
    %68 = vsyncpa [#allocation4], 1

// kernel: _lambda_.44
$region0: #{_lambda_.44}
  #allocation0 [shape = 'u32[]', space=smem, size = 0x4, offset = 0x4, fixed_abs, tag = 'smem constant byte address 0x4 - core index']
  #allocation1 [shape = 'u32[144,128]{1,0:T(1,128)}', space=vmem, size = 0x12000, scoped, tag = 'internal scratch']
  %s0 = inlined_call_operand.vmem [shape: bf16[128,1152], index: 0, kind: input, shape index: {}]
  %s1 = inlined_call_operand.vmem [shape: bf16[1152,128], index: 1, kind: input, shape index: {}]
  %s2 = inlined_call_operand.vmem [shape: f32[1,128], index: 2, kind: input, shape index: {}]
  %s3 = inlined_call_operand.vmem [shape: f32[1,128], index: 3, kind: input, shape index: {}]
  %s4 = inlined_call_operand.vmem [shape: f32[128,128], index: 4, kind: input, shape index: {}]
  %s5 = inlined_call_operand.vmem [shape: f32[128,128], index: 5, kind: output, shape index: {}]
  %s6 = sld [smem:[#allocation0]]
  $region30: #{_lambda_.44} parent=0
    _
  %s8 = ssub.s32 1, %s6
  %s9 = scalar_select 0, %s8, %s6
  // Predicated region
  $region2: #{_lambda_.44} parent=0 // pred_check
    _
  $region3: #{_lambda_.44} parent=0 // pred_check_branch
    %11 = sbr.rel (0) target = $region5
  $region4: #{_lambda_.44} parent=0 // pred_region
    _
  $region5: #{_lambda_.44} parent=0 // pred_fallthru
    _
  // Predicated region
  $region6: #{_lambda_.44} parent=0 // pred_check
    _
  $region7: #{_lambda_.44} parent=0 // pred_check_branch
    %13 = sbr.rel (0) target = $region9
  $region8: #{_lambda_.44} parent=0 // pred_region
    _
  $region9: #{_lambda_.44} parent=0 // pred_fallthru
    _
  // Predicated region
  $region10: #{_lambda_.44} parent=0 // pred_check
    _
  $region11: #{_lambda_.44} parent=0 // pred_check_branch
    %15 = sbr.rel (0) target = $region13
  $region12: #{_lambda_.44} parent=0 // pred_region
    _
  $region13: #{_lambda_.44} parent=0 // pred_fallthru
    _
  // Predicated region
  $region14: #{_lambda_.44} parent=0 // pred_check
    _
  $region15: #{_lambda_.44} parent=0 // pred_check_branch
    %17 = sbr.rel (0) target = $region17
  $region16: #{_lambda_.44} parent=0 // pred_region
    _
  $region17: #{_lambda_.44} parent=0 // pred_fallthru
    _
  // Predicated region
  $region18: #{_lambda_.44} parent=0 // pred_check
    _
  $region19: #{_lambda_.44} parent=0 // pred_check_branch
    %19 = sbr.rel (0) target = $region21
  $region20: #{_lambda_.44} parent=0 // pred_region
    _
  $region21: #{_lambda_.44} parent=0 // pred_fallthru
    _
  %v21 = vld [vmem:[%s0] sm:$0xff]
  %v22 = vld [vmem:[%s0 + $0x8] sm:$0xff]
  %v23 = vld [vmem:[%s0 + $0x10] sm:$0xff]
  %v24 = vld [vmem:[%s0 + $0x18] sm:$0xff]
  %v25 = vld [vmem:[%s0 + $0x20] sm:$0xf]
  %v26 = vld [vmem:[%s0 + $0x24] sm:$0xff]
  %v27 = vld [vmem:[%s0 + $0x2c] sm:$0xff]
  %v28 = vld [vmem:[%s0 + $0x34] sm:$0xff]
  %v29 = vld [vmem:[%s0 + $0x3c] sm:$0xff]
  %v30 = vld [vmem:[%s0 + $0x44] sm:$0xf]
  %v31 = vld [vmem:[%s0 + $0x48] sm:$0xff]
  %v32 = vld [vmem:[%s0 + $0x50] sm:$0xff]
  %v33 = vld [vmem:[%s0 + $0x58] sm:$0xff]
  %v34 = vld [vmem:[%s0 + $0x60] sm:$0xff]
  %v35 = vld [vmem:[%s0 + $0x68] sm:$0xf]
  %v36 = vld [vmem:[%s0 + $0x6c] sm:$0xff]
  %v37 = vld [vmem:[%s0 + $0x74] sm:$0xff]
  %v38 = vld [vmem:[%s0 + $0x7c] sm:$0xff]
  %v39 = vld [vmem:[%s0 + $0x84] sm:$0xff]
  %v40 = vld [vmem:[%s0 + $0x8c] sm:$0xf]
  %v41 = vld [vmem:[%s0 + $0x90] sm:$0xff]
  %v42 = vld [vmem:[%s0 + $0x98] sm:$0xff]
  %v43 = vld [vmem:[%s0 + $0xa0] sm:$0xff]
  %v44 = vld [vmem:[%s0 + $0xa8] sm:$0xff]
  %v45 = vld [vmem:[%s0 + $0xb0] sm:$0xf]
  %v46 = vld [vmem:[%s0 + $0xb4] sm:$0xff]
  %v47 = vld [vmem:[%s0 + $0xbc] sm:$0xff]
  %v48 = vld [vmem:[%s0 + $0xc4] sm:$0xff]
  %v49 = vld [vmem:[%s0 + $0xcc] sm:$0xff]
  %v50 = vld [vmem:[%s0 + $0xd4] sm:$0xf]
  %v51 = vld [vmem:[%s0 + $0xd8] sm:$0xff]
  %v52 = vld [vmem:[%s0 + $0xe0] sm:$0xff]
  %v53 = vld [vmem:[%s0 + $0xe8] sm:$0xff]
  %v54 = vld [vmem:[%s0 + $0xf0] sm:$0xff]
  %v55 = vld [vmem:[%s0 + $0xf8] sm:$0xf]
  %v56 = vld [vmem:[%s0 + $0xfc] sm:$0xff]
  %v57 = vld [vmem:[%s0 + $0x104] sm:$0xff]
  %v58 = vld [vmem:[%s0 + $0x10c] sm:$0xff]
  %v59 = vld [vmem:[%s0 + $0x114] sm:$0xff]
  %v60 = vld [vmem:[%s0 + $0x11c] sm:$0xf]
  %v61 = vld [vmem:[%s0 + $0x120] sm:$0xff]
  %v62 = vld [vmem:[%s0 + $0x128] sm:$0xff]
  %v63 = vld [vmem:[%s0 + $0x130] sm:$0xff]
  %v64 = vld [vmem:[%s0 + $0x138] sm:$0xff]
  %v65 = vld [vmem:[%s0 + $0x140] sm:$0xf]
  %v66 = vld [vmem:[%s0 + $0x144] sm:$0xff]
  %v67 = vld [vmem:[%s0 + $0x14c] sm:$0xff]
  %v68 = vld [vmem:[%s0 + $0x154] sm:$0xff]
  %v69 = vld [vmem:[%s0 + $0x15c] sm:$0xff]
  %v70 = vld [vmem:[%s0 + $0x164] sm:$0xf]
  %v71 = vld [vmem:[%s0 + $0x168] sm:$0xff]
  %v72 = vld [vmem:[%s0 + $0x170] sm:$0xff]
  %v73 = vld [vmem:[%s0 + $0x178] sm:$0xff]
  %v74 = vld [vmem:[%s0 + $0x180] sm:$0xff]
  %v75 = vld [vmem:[%s0 + $0x188] sm:$0xf]
  %v76 = vld [vmem:[%s0 + $0x18c] sm:$0xff]
  %v77 = vld [vmem:[%s0 + $0x194] sm:$0xff]
  %v78 = vld [vmem:[%s0 + $0x19c] sm:$0xff]
  %v79 = vld [vmem:[%s0 + $0x1a4] sm:$0xff]
  %v80 = vld [vmem:[%s0 + $0x1ac] sm:$0xf]
  %v81 = vld [vmem:[%s0 + $0x1b0] sm:$0xff]
  %v82 = vld [vmem:[%s0 + $0x1b8] sm:$0xff]
  %v83 = vld [vmem:[%s0 + $0x1c0] sm:$0xff]
  %v84 = vld [vmem:[%s0 + $0x1c8] sm:$0xff]
  %v85 = vld [vmem:[%s0 + $0x1d0] sm:$0xf]
  %v86 = vld [vmem:[%s0 + $0x1d4] sm:$0xff]
  %v87 = vld [vmem:[%s0 + $0x1dc] sm:$0xff]
  %v88 = vld [vmem:[%s0 + $0x1e4] sm:$0xff]
  %v89 = vld [vmem:[%s0 + $0x1ec] sm:$0xff]
  %v90 = vld [vmem:[%s0 + $0x1f4] sm:$0xf]
  %v91 = vld [vmem:[%s0 + $0x1f8] sm:$0xff]
  %v92 = vld [vmem:[%s0 + $0x200] sm:$0xff]
  %v93 = vld [vmem:[%s0 + $0x208] sm:$0xff]
  %v94 = vld [vmem:[%s0 + $0x210] sm:$0xff]
  %v95 = vld [vmem:[%s0 + $0x218] sm:$0xf]
  %v96 = vld [vmem:[%s0 + $0x21c] sm:$0xff]
  %v97 = vld [vmem:[%s0 + $0x224] sm:$0xff]
  %v98 = vld [vmem:[%s0 + $0x22c] sm:$0xff]
  %v99 = vld [vmem:[%s0 + $0x234] sm:$0xff]
  %v100 = vld [vmem:[%s0 + $0x23c] sm:$0xf]
  %v101 = vld [vmem:[%s1] sm:$0xf]
  %v102 = vld [vmem:[%s1 + $0x4] sm:$0xf]
  %v103 = vld [vmem:[%s1 + $0x8] sm:$0xf]
  %v104 = vld [vmem:[%s1 + $0xc] sm:$0xf]
  %v105 = vld [vmem:[%s1 + $0x10] sm:$0xf]
  %v106 = vld [vmem:[%s1 + $0x14] sm:$0xf]
  %v107 = vld [vmem:[%s1 + $0x18] sm:$0xf]
  %v108 = vld [vmem:[%s1 + $0x1c] sm:$0xf]
  %v109 = vld [vmem:[%s1 + $0x20] sm:$0xf]
  %v110 = vld [vmem:[%s1 + $0x24] sm:$0xf]
  %v111 = vld [vmem:[%s1 + $0x28] sm:$0xf]
  %v112 = vld [vmem:[%s1 + $0x2c] sm:$0xf]
  %v113 = vld [vmem:[%s1 + $0x30] sm:$0xf]
  %v114 = vld [vmem:[%s1 + $0x34] sm:$0xf]
  %v115 = vld [vmem:[%s1 + $0x38] sm:$0xf]
  %v116 = vld [vmem:[%s1 + $0x3c] sm:$0xf]
  %v117 = vld [vmem:[%s1 + $0x40] sm:$0xf]
  %v118 = vld [vmem:[%s1 + $0x44] sm:$0xf]
  %v119 = vld [vmem:[%s1 + $0x48] sm:$0xf]
  %v120 = vld [vmem:[%s1 + $0x4c] sm:$0xf]
  %v121 = vld [vmem:[%s1 + $0x50] sm:$0xf]
  %v122 = vld [vmem:[%s1 + $0x54] sm:$0xf]
  %v123 = vld [vmem:[%s1 + $0x58] sm:$0xf]
  %v124 = vld [vmem:[%s1 + $0x5c] sm:$0xf]
  %v125 = vld [vmem:[%s1 + $0x60] sm:$0xf]
  %v126 = vld [vmem:[%s1 + $0x64] sm:$0xf]
  %v127 = vld [vmem:[%s1 + $0x68] sm:$0xf]
  %v128 = vld [vmem:[%s1 + $0x6c] sm:$0xf]
  %v129 = vld [vmem:[%s1 + $0x70] sm:$0xf]
  %v130 = vld [vmem:[%s1 + $0x74] sm:$0xf]
  %v131 = vld [vmem:[%s1 + $0x78] sm:$0xf]
  %v132 = vld [vmem:[%s1 + $0x7c] sm:$0xf]
  %v133 = vld [vmem:[%s1 + $0x80] sm:$0xf]
  %v134 = vld [vmem:[%s1 + $0x84] sm:$0xf]
  %v135 = vld [vmem:[%s1 + $0x88] sm:$0xf]
  %v136 = vld [vmem:[%s1 + $0x8c] sm:$0xf]
  %v137 = vld [vmem:[%s1 + $0x90] sm:$0xf]
  %v138 = vld [vmem:[%s1 + $0x94] sm:$0xf]
  %v139 = vld [vmem:[%s1 + $0x98] sm:$0xf]
  %v140 = vld [vmem:[%s1 + $0x9c] sm:$0xf]
  %v141 = vld [vmem:[%s1 + $0xa0] sm:$0xf]
  %v142 = vld [vmem:[%s1 + $0xa4] sm:$0xf]
  %v143 = vld [vmem:[%s1 + $0xa8] sm:$0xf]
  %v144 = vld [vmem:[%s1 + $0xac] sm:$0xf]
  %v145 = vld [vmem:[%s1 + $0xb0] sm:$0xf]
  %v146 = vld [vmem:[%s1 + $0xb4] sm:$0xf]
  %v147 = vld [vmem:[%s1 + $0xb8] sm:$0xf]
  %v148 = vld [vmem:[%s1 + $0xbc] sm:$0xf]
  %v149 = vld [vmem:[%s1 + $0xc0] sm:$0xf]
  %v150 = vld [vmem:[%s1 + $0xc4] sm:$0xf]
  %v151 = vld [vmem:[%s1 + $0xc8] sm:$0xf]
  %v152 = vld [vmem:[%s1 + $0xcc] sm:$0xf]
  %v153 = vld [vmem:[%s1 + $0xd0] sm:$0xf]
  %v154 = vld [vmem:[%s1 + $0xd4] sm:$0xf]
  %v155 = vld [vmem:[%s1 + $0xd8] sm:$0xf]
  %v156 = vld [vmem:[%s1 + $0xdc] sm:$0xf]
  %v157 = vld [vmem:[%s1 + $0xe0] sm:$0xf]
  %v158 = vld [vmem:[%s1 + $0xe4] sm:$0xf]
  %v159 = vld [vmem:[%s1 + $0xe8] sm:$0xf]
  %v160 = vld [vmem:[%s1 + $0xec] sm:$0xf]
  %v161 = vld [vmem:[%s1 + $0xf0] sm:$0xf]
  %v162 = vld [vmem:[%s1 + $0xf4] sm:$0xf]
  %v163 = vld [vmem:[%s1 + $0xf8] sm:$0xf]
  %v164 = vld [vmem:[%s1 + $0xfc] sm:$0xf]
  %v165 = vld [vmem:[%s1 + $0x100] sm:$0xf]
  %v166 = vld [vmem:[%s1 + $0x104] sm:$0xf]
  %v167 = vld [vmem:[%s1 + $0x108] sm:$0xf]
  %v168 = vld [vmem:[%s1 + $0x10c] sm:$0xf]
  %v169 = vld [vmem:[%s1 + $0x110] sm:$0xf]
  %v170 = vld [vmem:[%s1 + $0x114] sm:$0xf]
  %v171 = vld [vmem:[%s1 + $0x118] sm:$0xf]
  %v172 = vld [vmem:[%s1 + $0x11c] sm:$0xf]
  %v173 = vld [vmem:[%s1 + $0x120] sm:$0xf]
  %v174 = vld [vmem:[%s1 + $0x124] sm:$0xf]
  %v175 = vld [vmem:[%s1 + $0x128] sm:$0xf]
  %v176 = vld [vmem:[%s1 + $0x12c] sm:$0xf]
  %v177 = vld [vmem:[%s1 + $0x130] sm:$0xf]
  %v178 = vld [vmem:[%s1 + $0x134] sm:$0xf]
  %v179 = vld [vmem:[%s1 + $0x138] sm:$0xf]
  %v180 = vld [vmem:[%s1 + $0x13c] sm:$0xf]
  %v181 = vld [vmem:[%s1 + $0x140] sm:$0xf]
  %v182 = vld [vmem:[%s1 + $0x144] sm:$0xf]
  %v183 = vld [vmem:[%s1 + $0x148] sm:$0xf]
  %v184 = vld [vmem:[%s1 + $0x14c] sm:$0xf]
  %v185 = vld [vmem:[%s1 + $0x150] sm:$0xf]
  %v186 = vld [vmem:[%s1 + $0x154] sm:$0xf]
  %v187 = vld [vmem:[%s1 + $0x158] sm:$0xf]
  %v188 = vld [vmem:[%s1 + $0x15c] sm:$0xf]
  %v189 = vld [vmem:[%s1 + $0x160] sm:$0xf]
  %v190 = vld [vmem:[%s1 + $0x164] sm:$0xf]
  %v191 = vld [vmem:[%s1 + $0x168] sm:$0xf]
  %v192 = vld [vmem:[%s1 + $0x16c] sm:$0xf]
  %v193 = vld [vmem:[%s1 + $0x170] sm:$0xf]
  %v194 = vld [vmem:[%s1 + $0x174] sm:$0xf]
  %v195 = vld [vmem:[%s1 + $0x178] sm:$0xf]
  %v196 = vld [vmem:[%s1 + $0x17c] sm:$0xf]
  %v197 = vld [vmem:[%s1 + $0x180] sm:$0xf]
  %v198 = vld [vmem:[%s1 + $0x184] sm:$0xf]
  %v199 = vld [vmem:[%s1 + $0x188] sm:$0xf]
  %v200 = vld [vmem:[%s1 + $0x18c] sm:$0xf]
  %v201 = vld [vmem:[%s1 + $0x190] sm:$0xf]
  %v202 = vld [vmem:[%s1 + $0x194] sm:$0xf]
  %v203 = vld [vmem:[%s1 + $0x198] sm:$0xf]
  %v204 = vld [vmem:[%s1 + $0x19c] sm:$0xf]
  %v205 = vld [vmem:[%s1 + $0x1a0] sm:$0xf]
  %v206 = vld [vmem:[%s1 + $0x1a4] sm:$0xf]
  %v207 = vld [vmem:[%s1 + $0x1a8] sm:$0xf]
  %v208 = vld [vmem:[%s1 + $0x1ac] sm:$0xf]
  %v209 = vld [vmem:[%s1 + $0x1b0] sm:$0xf]
  %v210 = vld [vmem:[%s1 + $0x1b4] sm:$0xf]
  %v211 = vld [vmem:[%s1 + $0x1b8] sm:$0xf]
  %v212 = vld [vmem:[%s1 + $0x1bc] sm:$0xf]
  %v213 = vld [vmem:[%s1 + $0x1c0] sm:$0xf]
  %v214 = vld [vmem:[%s1 + $0x1c4] sm:$0xf]
  %v215 = vld [vmem:[%s1 + $0x1c8] sm:$0xf]
  %v216 = vld [vmem:[%s1 + $0x1cc] sm:$0xf]
  %v217 = vld [vmem:[%s1 + $0x1d0] sm:$0xf]
  %v218 = vld [vmem:[%s1 + $0x1d4] sm:$0xf]
  %v219 = vld [vmem:[%s1 + $0x1d8] sm:$0xf]
  %v220 = vld [vmem:[%s1 + $0x1dc] sm:$0xf]
  %v221 = vld [vmem:[%s1 + $0x1e0] sm:$0xf]
  %v222 = vld [vmem:[%s1 + $0x1e4] sm:$0xf]
  %v223 = vld [vmem:[%s1 + $0x1e8] sm:$0xf]
  %v224 = vld [vmem:[%s1 + $0x1ec] sm:$0xf]
  %v225 = vld [vmem:[%s1 + $0x1f0] sm:$0xf]
  %v226 = vld [vmem:[%s1 + $0x1f4] sm:$0xf]
  %v227 = vld [vmem:[%s1 + $0x1f8] sm:$0xf]
  %v228 = vld [vmem:[%s1 + $0x1fc] sm:$0xf]
  %v229 = vld [vmem:[%s1 + $0x200] sm:$0xf]
  %v230 = vld [vmem:[%s1 + $0x204] sm:$0xf]
  %v231 = vld [vmem:[%s1 + $0x208] sm:$0xf]
  %v232 = vld [vmem:[%s1 + $0x20c] sm:$0xf]
  %v233 = vld [vmem:[%s1 + $0x210] sm:$0xf]
  %v234 = vld [vmem:[%s1 + $0x214] sm:$0xf]
  %v235 = vld [vmem:[%s1 + $0x218] sm:$0xf]
  %v236 = vld [vmem:[%s1 + $0x21c] sm:$0xf]
  %v237 = vld [vmem:[%s1 + $0x220] sm:$0xf]
  %v238 = vld [vmem:[%s1 + $0x224] sm:$0xf]
  %v239 = vld [vmem:[%s1 + $0x228] sm:$0xf]
  %v240 = vld [vmem:[%s1 + $0x22c] sm:$0xf]
  %v241 = vld [vmem:[%s1 + $0x230] sm:$0xf]
  %v242 = vld [vmem:[%s1 + $0x234] sm:$0xf]
  %v243 = vld [vmem:[%s1 + $0x238] sm:$0xf]
  %v244 = vld [vmem:[%s1 + $0x23c] sm:$0xf]
  %v325 = vunpack.c.l.b16 %v21
  %v326 = vunpack.c.h.b16 %v21
  %v327 = vunpack.c.l.b16 %v22
  %v328 = vunpack.c.h.b16 %v22
  %v329 = vunpack.c.l.b16 %v23
  %v330 = vunpack.c.h.b16 %v23
  %v331 = vunpack.c.l.b16 %v24
  %v332 = vunpack.c.h.b16 %v24
  %v333 = vunpack.c.l.b16 %v25
  %v334 = vunpack.c.l.b16 %v26
  %v335 = vunpack.c.h.b16 %v26
  %v336 = vunpack.c.l.b16 %v27
  %v337 = vunpack.c.h.b16 %v27
  %v338 = vunpack.c.l.b16 %v28
  %v339 = vunpack.c.h.b16 %v28
  %v340 = vunpack.c.l.b16 %v29
  %v341 = vunpack.c.h.b16 %v29
  %v342 = vunpack.c.l.b16 %v30
  %v343 = vunpack.c.l.b16 %v31
  %v344 = vunpack.c.h.b16 %v31
  %v345 = vunpack.c.l.b16 %v32
  %v346 = vunpack.c.h.b16 %v32
  %v347 = vunpack.c.l.b16 %v33
  %v348 = vunpack.c.h.b16 %v33
  %v349 = vunpack.c.l.b16 %v34
  %v350 = vunpack.c.h.b16 %v34
  %v351 = vunpack.c.l.b16 %v35
  %v352 = vunpack.c.l.b16 %v36
  %v353 = vunpack.c.h.b16 %v36
  %v354 = vunpack.c.l.b16 %v37
  %v355 = vunpack.c.h.b16 %v37
  %v356 = vunpack.c.l.b16 %v38
  %v357 = vunpack.c.h.b16 %v38
  %v358 = vunpack.c.l.b16 %v39
  %v359 = vunpack.c.h.b16 %v39
  %v360 = vunpack.c.l.b16 %v40
  %v361 = vunpack.c.l.b16 %v41
  %v362 = vunpack.c.h.b16 %v41
  %v363 = vunpack.c.l.b16 %v42
  %v364 = vunpack.c.h.b16 %v42
  %v365 = vunpack.c.l.b16 %v43
  %v366 = vunpack.c.h.b16 %v43
  %v367 = vunpack.c.l.b16 %v44
  %v368 = vunpack.c.h.b16 %v44
  %v369 = vunpack.c.l.b16 %v45
  %v370 = vunpack.c.l.b16 %v46
  %v371 = vunpack.c.h.b16 %v46
  %v372 = vunpack.c.l.b16 %v47
  %v373 = vunpack.c.h.b16 %v47
  %v374 = vunpack.c.l.b16 %v48
  %v375 = vunpack.c.h.b16 %v48
  %v376 = vunpack.c.l.b16 %v49
  %v377 = vunpack.c.h.b16 %v49
  %v378 = vunpack.c.l.b16 %v50
  %v379 = vunpack.c.l.b16 %v51
  %v380 = vunpack.c.h.b16 %v51
  %v381 = vunpack.c.l.b16 %v52
  %v382 = vunpack.c.h.b16 %v52
  %v383 = vunpack.c.l.b16 %v53
  %v384 = vunpack.c.h.b16 %v53
  %v385 = vunpack.c.l.b16 %v54
  %v386 = vunpack.c.h.b16 %v54
  %v387 = vunpack.c.l.b16 %v55
  %v388 = vunpack.c.l.b16 %v56
  %v389 = vunpack.c.h.b16 %v56
  %v390 = vunpack.c.l.b16 %v57
  %v391 = vunpack.c.h.b16 %v57
  %v392 = vunpack.c.l.b16 %v58
  %v393 = vunpack.c.h.b16 %v58
  %v394 = vunpack.c.l.b16 %v59
  %v395 = vunpack.c.h.b16 %v59
  %v396 = vunpack.c.l.b16 %v60
  %v397 = vunpack.c.l.b16 %v61
  %v398 = vunpack.c.h.b16 %v61
  %v399 = vunpack.c.l.b16 %v62
  %v400 = vunpack.c.h.b16 %v62
  %v401 = vunpack.c.l.b16 %v63
  %v402 = vunpack.c.h.b16 %v63
  %v403 = vunpack.c.l.b16 %v64
  %v404 = vunpack.c.h.b16 %v64
  %v405 = vunpack.c.l.b16 %v65
  %v406 = vunpack.c.l.b16 %v66
  %v407 = vunpack.c.h.b16 %v66
  %v408 = vunpack.c.l.b16 %v67
  %v409 = vunpack.c.h.b16 %v67
  %v410 = vunpack.c.l.b16 %v68
  %v411 = vunpack.c.h.b16 %v68
  %v412 = vunpack.c.l.b16 %v69
  %v413 = vunpack.c.h.b16 %v69
  %v414 = vunpack.c.l.b16 %v70
  %v415 = vunpack.c.l.b16 %v71
  %v416 = vunpack.c.h.b16 %v71
  %v417 = vunpack.c.l.b16 %v72
  %v418 = vunpack.c.h.b16 %v72
  %v419 = vunpack.c.l.b16 %v73
  %v420 = vunpack.c.h.b16 %v73
  %v421 = vunpack.c.l.b16 %v74
  %v422 = vunpack.c.h.b16 %v74
  %v423 = vunpack.c.l.b16 %v75
  %v424 = vunpack.c.l.b16 %v76
  %v425 = vunpack.c.h.b16 %v76
  %v426 = vunpack.c.l.b16 %v77
  %v427 = vunpack.c.h.b16 %v77
  %v428 = vunpack.c.l.b16 %v78
  %v429 = vunpack.c.h.b16 %v78
  %v430 = vunpack.c.l.b16 %v79
  %v431 = vunpack.c.h.b16 %v79
  %v432 = vunpack.c.l.b16 %v80
  %v433 = vunpack.c.l.b16 %v81
  %v434 = vunpack.c.h.b16 %v81
  %v435 = vunpack.c.l.b16 %v82
  %v436 = vunpack.c.h.b16 %v82
  %v437 = vunpack.c.l.b16 %v83
  %v438 = vunpack.c.h.b16 %v83
  %v439 = vunpack.c.l.b16 %v84
  %v440 = vunpack.c.h.b16 %v84
  %v441 = vunpack.c.l.b16 %v85
  %v442 = vunpack.c.l.b16 %v86
  %v443 = vunpack.c.h.b16 %v86
  %v444 = vunpack.c.l.b16 %v87
  %v445 = vunpack.c.h.b16 %v87
  %v446 = vunpack.c.l.b16 %v88
  %v447 = vunpack.c.h.b16 %v88
  %v448 = vunpack.c.l.b16 %v89
  %v449 = vunpack.c.h.b16 %v89
  %v450 = vunpack.c.l.b16 %v90
  %v451 = vunpack.c.l.b16 %v91
  %v452 = vunpack.c.h.b16 %v91
  %v453 = vunpack.c.l.b16 %v92
  %v454 = vunpack.c.h.b16 %v92
  %v455 = vunpack.c.l.b16 %v93
  %v456 = vunpack.c.h.b16 %v93
  %v457 = vunpack.c.l.b16 %v94
  %v458 = vunpack.c.h.b16 %v94
  %v459 = vunpack.c.l.b16 %v95
  %v460 = vunpack.c.l.b16 %v96
  %v461 = vunpack.c.h.b16 %v96
  %v462 = vunpack.c.l.b16 %v97
  %v463 = vunpack.c.h.b16 %v97
  %v464 = vunpack.c.l.b16 %v98
  %v465 = vunpack.c.h.b16 %v98
  %v466 = vunpack.c.l.b16 %v99
  %v467 = vunpack.c.h.b16 %v99
  %v468 = vunpack.c.l.b16 %v100
  %v469 = vpack.c.b16 %v334, %v325
  %v470 = vpack.c.b16 %v335, %v326
  %v471 = vpack.c.b16 %v336, %v327
  %v472 = vpack.c.b16 %v337, %v328
  %v473 = vpack.c.b16 %v338, %v329
  %v474 = vpack.c.b16 %v339, %v330
  %v475 = vpack.c.b16 %v340, %v331
  %v476 = vpack.c.b16 %v341, %v332
  %v477 = vpack.c.b16 %v342, %v333
  %v478 = vpack.c.b16 %v352, %v343
  %v479 = vpack.c.b16 %v353, %v344
  %v480 = vpack.c.b16 %v354, %v345
  %v481 = vpack.c.b16 %v355, %v346
  %v482 = vpack.c.b16 %v356, %v347
  %v483 = vpack.c.b16 %v357, %v348
  %v484 = vpack.c.b16 %v358, %v349
  %v485 = vpack.c.b16 %v359, %v350
  %v486 = vpack.c.b16 %v360, %v351
  %v487 = vpack.c.b16 %v370, %v361
  %v488 = vpack.c.b16 %v371, %v362
  %v489 = vpack.c.b16 %v372, %v363
  %v490 = vpack.c.b16 %v373, %v364
  %v491 = vpack.c.b16 %v374, %v365
  %v492 = vpack.c.b16 %v375, %v366
  %v493 = vpack.c.b16 %v376, %v367
  %v494 = vpack.c.b16 %v377, %v368
  %v495 = vpack.c.b16 %v378, %v369
  %v496 = vpack.c.b16 %v388, %v379
  %v497 = vpack.c.b16 %v389, %v380
  %v498 = vpack.c.b16 %v390, %v381
  %v499 = vpack.c.b16 %v391, %v382
  %v500 = vpack.c.b16 %v392, %v383
  %v501 = vpack.c.b16 %v393, %v384
  %v502 = vpack.c.b16 %v394, %v385
  %v503 = vpack.c.b16 %v395, %v386
  %v504 = vpack.c.b16 %v396, %v387
  %v505 = vpack.c.b16 %v406, %v397
  %v506 = vpack.c.b16 %v407, %v398
  %v507 = vpack.c.b16 %v408, %v399
  %v508 = vpack.c.b16 %v409, %v400
  %v509 = vpack.c.b16 %v410, %v401
  %v510 = vpack.c.b16 %v411, %v402
  %v511 = vpack.c.b16 %v412, %v403
  %v512 = vpack.c.b16 %v413, %v404
  %v513 = vpack.c.b16 %v414, %v405
  %v514 = vpack.c.b16 %v424, %v415
  %v515 = vpack.c.b16 %v425, %v416
  %v516 = vpack.c.b16 %v426, %v417
  %v517 = vpack.c.b16 %v427, %v418
  %v518 = vpack.c.b16 %v428, %v419
  %v519 = vpack.c.b16 %v429, %v420
  %v520 = vpack.c.b16 %v430, %v421
  %v521 = vpack.c.b16 %v431, %v422
  %v522 = vpack.c.b16 %v432, %v423
  %v523 = vpack.c.b16 %v442, %v433
  %v524 = vpack.c.b16 %v443, %v434
  %v525 = vpack.c.b16 %v444, %v435
  %v526 = vpack.c.b16 %v445, %v436
  %v527 = vpack.c.b16 %v446, %v437
  %v528 = vpack.c.b16 %v447, %v438
  %v529 = vpack.c.b16 %v448, %v439
  %v530 = vpack.c.b16 %v449, %v440
  %v531 = vpack.c.b16 %v450, %v441
  %v532 = vpack.c.b16 %v460, %v451
  %v533 = vpack.c.b16 %v461, %v452
  %v534 = vpack.c.b16 %v462, %v453
  %v535 = vpack.c.b16 %v463, %v454
  %v536 = vpack.c.b16 %v464, %v455
  %v537 = vpack.c.b16 %v465, %v456
  %v538 = vpack.c.b16 %v466, %v457
  %v539 = vpack.c.b16 %v467, %v458
  %v540 = vpack.c.b16 %v468, %v459
  %v757 = vunpack.c.l.b16 %v101
  %v758 = vunpack.c.l.b16 %v102
  %v759 = vunpack.c.l.b16 %v103
  %v760 = vunpack.c.l.b16 %v104
  %v761 = vunpack.c.l.b16 %v105
  %v762 = vunpack.c.l.b16 %v106
  %v763 = vunpack.c.l.b16 %v107
  %v764 = vunpack.c.l.b16 %v108
  %v765 = vunpack.c.l.b16 %v109
  %v766 = vunpack.c.l.b16 %v110
  %v767 = vunpack.c.l.b16 %v111
  %v768 = vunpack.c.l.b16 %v112
  %v769 = vunpack.c.l.b16 %v113
  %v770 = vunpack.c.l.b16 %v114
  %v771 = vunpack.c.l.b16 %v115
  %v772 = vunpack.c.l.b16 %v116
  %v773 = vunpack.c.l.b16 %v117
  %v774 = vunpack.c.l.b16 %v118
  %v775 = vunpack.c.l.b16 %v119
  %v776 = vunpack.c.l.b16 %v120
  %v777 = vunpack.c.l.b16 %v121
  %v778 = vunpack.c.l.b16 %v122
  %v779 = vunpack.c.l.b16 %v123
  %v780 = vunpack.c.l.b16 %v124
  %v781 = vunpack.c.l.b16 %v125
  %v782 = vunpack.c.l.b16 %v126
  %v783 = vunpack.c.l.b16 %v127
  %v784 = vunpack.c.l.b16 %v128
  %v785 = vunpack.c.l.b16 %v129
  %v786 = vunpack.c.l.b16 %v130
  %v787 = vunpack.c.l.b16 %v131
  %v788 = vunpack.c.l.b16 %v132
  %v789 = vunpack.c.l.b16 %v133
  %v790 = vunpack.c.l.b16 %v134
  %v791 = vunpack.c.l.b16 %v135
  %v792 = vunpack.c.l.b16 %v136
  %v793 = vunpack.c.l.b16 %v137
  %v794 = vunpack.c.l.b16 %v138
  %v795 = vunpack.c.l.b16 %v139
  %v796 = vunpack.c.l.b16 %v140
  %v797 = vunpack.c.l.b16 %v141
  %v798 = vunpack.c.l.b16 %v142
  %v799 = vunpack.c.l.b16 %v143
  %v800 = vunpack.c.l.b16 %v144
  %v801 = vunpack.c.l.b16 %v145
  %v802 = vunpack.c.l.b16 %v146
  %v803 = vunpack.c.l.b16 %v147
  %v804 = vunpack.c.l.b16 %v148
  %v805 = vunpack.c.l.b16 %v149
  %v806 = vunpack.c.l.b16 %v150
  %v807 = vunpack.c.l.b16 %v151
  %v808 = vunpack.c.l.b16 %v152
  %v809 = vunpack.c.l.b16 %v153
  %v810 = vunpack.c.l.b16 %v154
  %v811 = vunpack.c.l.b16 %v155
  %v812 = vunpack.c.l.b16 %v156
  %v813 = vunpack.c.l.b16 %v157
  %v814 = vunpack.c.l.b16 %v158
  %v815 = vunpack.c.l.b16 %v159
  %v816 = vunpack.c.l.b16 %v160
  %v817 = vunpack.c.l.b16 %v161
  %v818 = vunpack.c.l.b16 %v162
  %v819 = vunpack.c.l.b16 %v163
  %v820 = vunpack.c.l.b16 %v164
  %v821 = vunpack.c.l.b16 %v165
  %v822 = vunpack.c.l.b16 %v166
  %v823 = vunpack.c.l.b16 %v167
  %v824 = vunpack.c.l.b16 %v168
  %v825 = vunpack.c.l.b16 %v169
  %v826 = vunpack.c.l.b16 %v170
  %v827 = vunpack.c.l.b16 %v171
  %v828 = vunpack.c.l.b16 %v172
  %v829 = vunpack.c.l.b16 %v173
  %v830 = vunpack.c.l.b16 %v174
  %v831 = vunpack.c.l.b16 %v175
  %v832 = vunpack.c.l.b16 %v176
  %v833 = vunpack.c.l.b16 %v177
  %v834 = vunpack.c.l.b16 %v178
  %v835 = vunpack.c.l.b16 %v179
  %v836 = vunpack.c.l.b16 %v180
  %v837 = vunpack.c.l.b16 %v181
  %v838 = vunpack.c.l.b16 %v182
  %v839 = vunpack.c.l.b16 %v183
  %v840 = vunpack.c.l.b16 %v184
  %v841 = vunpack.c.l.b16 %v185
  %v842 = vunpack.c.l.b16 %v186
  %v843 = vunpack.c.l.b16 %v187
  %v844 = vunpack.c.l.b16 %v188
  %v845 = vunpack.c.l.b16 %v189
  %v846 = vunpack.c.l.b16 %v190
  %v847 = vunpack.c.l.b16 %v191
  %v848 = vunpack.c.l.b16 %v192
  %v849 = vunpack.c.l.b16 %v193
  %v850 = vunpack.c.l.b16 %v194
  %v851 = vunpack.c.l.b16 %v195
  %v852 = vunpack.c.l.b16 %v196
  %v853 = vunpack.c.l.b16 %v197
  %v854 = vunpack.c.l.b16 %v198
  %v855 = vunpack.c.l.b16 %v199
  %v856 = vunpack.c.l.b16 %v200
  %v857 = vunpack.c.l.b16 %v201
  %v858 = vunpack.c.l.b16 %v202
  %v859 = vunpack.c.l.b16 %v203
  %v860 = vunpack.c.l.b16 %v204
  %v861 = vunpack.c.l.b16 %v205
  %v862 = vunpack.c.l.b16 %v206
  %v863 = vunpack.c.l.b16 %v207
  %v864 = vunpack.c.l.b16 %v208
  %v865 = vunpack.c.l.b16 %v209
  %v866 = vunpack.c.l.b16 %v210
  %v867 = vunpack.c.l.b16 %v211
  %v868 = vunpack.c.l.b16 %v212
  %v869 = vunpack.c.l.b16 %v213
  %v870 = vunpack.c.l.b16 %v214
  %v871 = vunpack.c.l.b16 %v215
  %v872 = vunpack.c.l.b16 %v216
  %v873 = vunpack.c.l.b16 %v217
  %v874 = vunpack.c.l.b16 %v218
  %v875 = vunpack.c.l.b16 %v219
  %v876 = vunpack.c.l.b16 %v220
  %v877 = vunpack.c.l.b16 %v221
  %v878 = vunpack.c.l.b16 %v222
  %v879 = vunpack.c.l.b16 %v223
  %v880 = vunpack.c.l.b16 %v224
  %v881 = vunpack.c.l.b16 %v225
  %v882 = vunpack.c.l.b16 %v226
  %v883 = vunpack.c.l.b16 %v227
  %v884 = vunpack.c.l.b16 %v228
  %v885 = vunpack.c.l.b16 %v229
  %v886 = vunpack.c.l.b16 %v230
  %v887 = vunpack.c.l.b16 %v231
  %v888 = vunpack.c.l.b16 %v232
  %v889 = vunpack.c.l.b16 %v233
  %v890 = vunpack.c.l.b16 %v234
  %v891 = vunpack.c.l.b16 %v235
  %v892 = vunpack.c.l.b16 %v236
  %v893 = vunpack.c.l.b16 %v237
  %v894 = vunpack.c.l.b16 %v238
  %v895 = vunpack.c.l.b16 %v239
  %v896 = vunpack.c.l.b16 %v240
  %v897 = vunpack.c.l.b16 %v241
  %v898 = vunpack.c.l.b16 %v242
  %v899 = vunpack.c.l.b16 %v243
  %v900 = vunpack.c.l.b16 %v244
  %v901 = vpack.c.b16 %v758, %v757
  %v902 = vpack.c.b16 %v760, %v759
  %v903 = vpack.c.b16 %v762, %v761
  %v904 = vpack.c.b16 %v764, %v763
  %v905 = vpack.c.b16 %v766, %v765
  %v906 = vpack.c.b16 %v768, %v767
  %v907 = vpack.c.b16 %v770, %v769
  %v908 = vpack.c.b16 %v772, %v771
  %v909 = vpack.c.b16 %v774, %v773
  %v910 = vpack.c.b16 %v776, %v775
  %v911 = vpack.c.b16 %v778, %v777
  %v912 = vpack.c.b16 %v780, %v779
  %v913 = vpack.c.b16 %v782, %v781
  %v914 = vpack.c.b16 %v784, %v783
  %v915 = vpack.c.b16 %v786, %v785
  %v916 = vpack.c.b16 %v788, %v787
  %v917 = vpack.c.b16 %v790, %v789
  %v918 = vpack.c.b16 %v792, %v791
  %v919 = vpack.c.b16 %v794, %v793
  %v920 = vpack.c.b16 %v796, %v795
  %v921 = vpack.c.b16 %v798, %v797
  %v922 = vpack.c.b16 %v800, %v799
  %v923 = vpack.c.b16 %v802, %v801
  %v924 = vpack.c.b16 %v804, %v803
  %v925 = vpack.c.b16 %v806, %v805
  %v926 = vpack.c.b16 %v808, %v807
  %v927 = vpack.c.b16 %v810, %v809
  %v928 = vpack.c.b16 %v812, %v811
  %v929 = vpack.c.b16 %v814, %v813
  %v930 = vpack.c.b16 %v816, %v815
  %v931 = vpack.c.b16 %v818, %v817
  %v932 = vpack.c.b16 %v820, %v819
  %v933 = vpack.c.b16 %v822, %v821
  %v934 = vpack.c.b16 %v824, %v823
  %v935 = vpack.c.b16 %v826, %v825
  %v936 = vpack.c.b16 %v828, %v827
  %v937 = vpack.c.b16 %v830, %v829
  %v938 = vpack.c.b16 %v832, %v831
  %v939 = vpack.c.b16 %v834, %v833
  %v940 = vpack.c.b16 %v836, %v835
  %v941 = vpack.c.b16 %v838, %v837
  %v942 = vpack.c.b16 %v840, %v839
  %v943 = vpack.c.b16 %v842, %v841
  %v944 = vpack.c.b16 %v844, %v843
  %v945 = vpack.c.b16 %v846, %v845
  %v946 = vpack.c.b16 %v848, %v847
  %v947 = vpack.c.b16 %v850, %v849
  %v948 = vpack.c.b16 %v852, %v851
  %v949 = vpack.c.b16 %v854, %v853
  %v950 = vpack.c.b16 %v856, %v855
  %v951 = vpack.c.b16 %v858, %v857
  %v952 = vpack.c.b16 %v860, %v859
  %v953 = vpack.c.b16 %v862, %v861
  %v954 = vpack.c.b16 %v864, %v863
  %v955 = vpack.c.b16 %v866, %v865
  %v956 = vpack.c.b16 %v868, %v867
  %v957 = vpack.c.b16 %v870, %v869
  %v958 = vpack.c.b16 %v872, %v871
  %v959 = vpack.c.b16 %v874, %v873
  %v960 = vpack.c.b16 %v876, %v875
  %v961 = vpack.c.b16 %v878, %v877
  %v962 = vpack.c.b16 %v880, %v879
  %v963 = vpack.c.b16 %v882, %v881
  %v964 = vpack.c.b16 %v884, %v883
  %v965 = vpack.c.b16 %v886, %v885
  %v966 = vpack.c.b16 %v888, %v887
  %v967 = vpack.c.b16 %v890, %v889
  %v968 = vpack.c.b16 %v892, %v891
  %v969 = vpack.c.b16 %v894, %v893
  %v970 = vpack.c.b16 %v896, %v895
  %v971 = vpack.c.b16 %v898, %v897
  %v972 = vpack.c.b16 %v900, %v899
  %1045 = vmatprep.subr.bf16.mxu0 0
  %1046 = vmatpush1.bf16.msra.mxu0 %v901
  %1047 = vmatprep.subr.bf16.mxu0 0
  %1048 = vmatpush1.bf16.msra.mxu0 %v902
  %1049 = vmatprep.subr.bf16.mxu0 0
  %1050 = vmatpush1.bf16.msra.mxu0 %v903
  %1051 = vmatprep.subr.bf16.mxu0 0
  %1052 = vmatpush1.bf16.msra.mxu0 %v904
  %1053 = vmatprep.subr.bf16.mxu0 0
  %1054 = vmatpush1.bf16.msra.mxu0 %v905
  %1055 = vmatprep.subr.bf16.mxu0 0
  %1056 = vmatpush1.bf16.msra.mxu0 %v906
  %1057 = vmatprep.subr.bf16.mxu0 0
  %1058 = vmatpush1.bf16.msra.mxu0 %v907
  %1059 = vmatprep.subr.bf16.mxu0 0
  %1060 = vmatpush1.bf16.msra.mxu0 %v908
  %1061 = vmatprep.subr.bf16.mxu0 0
  %1062 = vmatpush1.bf16.msra.mxu0 %v909
  %1063 = vmatprep.subr.bf16.mxu0 0
  %1064 = vmatpush1.bf16.msra.mxu0 %v910
  %1065 = vmatprep.subr.bf16.mxu0 0
  %1066 = vmatpush1.bf16.msra.mxu0 %v911
  %1067 = vmatprep.subr.bf16.mxu0 0
  %1068 = vmatpush1.bf16.msra.mxu0 %v912
  %1069 = vmatprep.subr.bf16.mxu0 0
  %1070 = vmatpush1.bf16.msra.mxu0 %v913
  %1071 = vmatprep.subr.bf16.mxu0 0
  %1072 = vmatpush1.bf16.msra.mxu0 %v914
  %1073 = vmatprep.subr.bf16.mxu0 0
  %1074 = vmatpush1.bf16.msra.mxu0 %v915
  %1075 = vmatprep.subr.bf16.mxu0 0
  %1076 = vmatpush1.bf16.msra.mxu0 %v916
  %1077 = vmatprep.mubr.bf16.mxu0 %v470
  %1078 = vmatmul.mubr.bf16.gmra.mrb[0].mxu0 %v469
  %v1079 = vpop.f32.mrb[0].mxu0
  %v1080 = vadd.f32 0.0, %v1079
  %v1081 = vpop.f32.mrb[0].mxu0
  %v1082 = vpop.f32.mrb[0].mxu0
  %v1083 = vadd.f32 0.0, %v1082
  %v1084 = vpop.f32.mrb[0].mxu0
  %1085 = vmatprep.mubr.bf16.mxu0 %v479
  %1086 = vmatmul.mubr.bf16.gmra.mrb[0].mxu0 %v478
  %v1087 = vpop.f32.mrb[0].mxu0
  %v1088 = vadd.f32 0.0, %v1087
  %v1089 = vpop.f32.mrb[0].mxu0
  %v1090 = vpop.f32.mrb[0].mxu0
  %v1091 = vadd.f32 0.0, %v1090
  %v1092 = vpop.f32.mrb[0].mxu0
  %1093 = vmatprep.mubr.bf16.mxu0 %v488
  %1094 = vmatmul.mubr.bf16.gmra.mrb[0].mxu0 %v487
  %v1095 = vpop.f32.mrb[0].mxu0
  %v1096 = vadd.f32 0.0, %v1095
  %v1097 = vpop.f32.mrb[0].mxu0
  %v1098 = vpop.f32.mrb[0].mxu0
  %v1099 = vadd.f32 0.0, %v1098
  %v1100 = vpop.f32.mrb[0].mxu0
  %1101 = vmatprep.mubr.bf16.mxu0 %v497
  %1102 = vmatmul.mubr.bf16.gmra.mrb[0].mxu0 %v496
  %v1103 = vpop.f32.mrb[0].mxu0
  %v1104 = vadd.f32 0.0, %v1103
  %v1105 = vpop.f32.mrb[0].mxu0
  %v1106 = vpop.f32.mrb[0].mxu0
  %v1107 = vadd.f32 0.0, %v1106
  %v1108 = vpop.f32.mrb[0].mxu0
  %1109 = vmatprep.mubr.bf16.mxu0 %v506
  %1110 = vmatmul.mubr.bf16.gmra.mrb[0].mxu0 %v505
  %v1111 = vpop.f32.mrb[0].mxu0
  %v1112 = vadd.f32 0.0, %v1111
  %v1113 = vpop.f32.mrb[0].mxu0
  %v1114 = vpop.f32.mrb[0].mxu0
  %v1115 = vadd.f32 0.0, %v1114
  %v1116 = vpop.f32.mrb[0].mxu0
  %1117 = vmatprep.mubr.bf16.mxu0 %v515
  %1118 = vmatmul.mubr.bf16.gmra.mrb[0].mxu0 %v514
  %v1119 = vpop.f32.mrb[0].mxu0
  %v1120 = vadd.f32 0.0, %v1119
  %v1121 = vpop.f32.mrb[0].mxu0
  %v1122 = vpop.f32.mrb[0].mxu0
  %v1123 = vadd.f32 0.0, %v1122
  %v1124 = vpop.f32.mrb[0].mxu0
  %1125 = vmatprep.mubr.bf16.mxu0 %v524
  %1126 = vmatmul.mubr.bf16.gmra.mrb[0].mxu0 %v523
  %v1127 = vpop.f32.mrb[0].mxu0
  %v1128 = vadd.f32 0.0, %v1127
  %v1129 = vpop.f32.mrb[0].mxu0
  %v1130 = vpop.f32.mrb[0].mxu0
  %v1131 = vadd.f32 0.0, %v1130
  %v1132 = vpop.f32.mrb[0].mxu0
  %1133 = vmatprep.mubr.bf16.mxu0 %v533
  %1134 = vmatmul.mubr.bf16.gmra.mrb[0].mxu0 %v532
  %v1135 = vpop.f32.mrb[0].mxu0
  %v1136 = vadd.f32 0.0, %v1135
  %v1137 = vpop.f32.mrb[0].mxu0
  %v1138 = vpop.f32.mrb[0].mxu0
  %v1139 = vadd.f32 0.0, %v1138
  %v1140 = vpop.f32.mrb[0].mxu0
  %1141 = vdwg.mxu0
  %1142 = vmatprep.subr.bf16.mxu0 0
  %1143 = vmatpush1.bf16.msra.mxu0 %v917
  %1144 = vmatprep.subr.bf16.mxu0 0
  %1145 = vmatpush1.bf16.msra.mxu0 %v918
  %1146 = vmatprep.subr.bf16.mxu0 0
  %1147 = vmatpush1.bf16.msra.mxu0 %v919
  %1148 = vmatprep.subr.bf16.mxu0 0
  %1149 = vmatpush1.bf16.msra.mxu0 %v920
  %1150 = vmatprep.subr.bf16.mxu0 0
  %1151 = vmatpush1.bf16.msra.mxu0 %v921
  %1152 = vmatprep.subr.bf16.mxu0 0
  %1153 = vmatpush1.bf16.msra.mxu0 %v922
  %1154 = vmatprep.subr.bf16.mxu0 0
  %1155 = vmatpush1.bf16.msra.mxu0 %v923
  %1156 = vmatprep.subr.bf16.mxu0 0
  %1157 = vmatpush1.bf16.msra.mxu0 %v924
  %1158 = vmatprep.subr.bf16.mxu0 0
  %1159 = vmatpush1.bf16.msra.mxu0 %v925
  %1160 = vmatprep.subr.bf16.mxu0 0
  %1161 = vmatpush1.bf16.msra.mxu0 %v926
  %1162 = vmatprep.subr.bf16.mxu0 0
  %1163 = vmatpush1.bf16.msra.mxu0 %v927
  %1164 = vmatprep.subr.bf16.mxu0 0
  %1165 = vmatpush1.bf16.msra.mxu0 %v928
  %1166 = vmatprep.subr.bf16.mxu0 0
  %1167 = vmatpush1.bf16.msra.mxu0 %v929
  %1168 = vmatprep.subr.bf16.mxu0 0
  %1169 = vmatpush1.bf16.msra.mxu0 %v930
  %1170 = vmatprep.subr.bf16.mxu0 0
  %1171 = vmatpush1.bf16.msra.mxu0 %v931
  %1172 = vmatprep.subr.bf16.mxu0 0
  %1173 = vmatpush1.bf16.msra.mxu0 %v932
  %1174 = vmatprep.mubr.bf16.mxu0 %v472
  %1175 = vmatmul.mubr.bf16.gmra.mrb[0].mxu0 %v471
  %v1176 = vpop.f32.mrb[0].mxu0
  %v1177 = vadd.f32 %v1080, %v1176
  %v1178 = vpop.f32.mrb[0].mxu0
  %v1179 = vpop.f32.mrb[0].mxu0
  %v1180 = vadd.f32 %v1083, %v1179
  %v1181 = vpop.f32.mrb[0].mxu0
  %1182 = vmatprep.mubr.bf16.mxu0 %v481
  %1183 = vmatmul.mubr.bf16.gmra.mrb[0].mxu0 %v480
  %v1184 = vpop.f32.mrb[0].mxu0
  %v1185 = vadd.f32 %v1088, %v1184
  %v1186 = vpop.f32.mrb[0].mxu0
  %v1187 = vpop.f32.mrb[0].mxu0
  %v1188 = vadd.f32 %v1091, %v1187
  %v1189 = vpop.f32.mrb[0].mxu0
  %1190 = vmatprep.mubr.bf16.mxu0 %v490
  %1191 = vmatmul.mubr.bf16.gmra.mrb[0].mxu0 %v489
  %v1192 = vpop.f32.mrb[0].mxu0
  %v1193 = vadd.f32 %v1096, %v1192
  %v1194 = vpop.f32.mrb[0].mxu0
  %v1195 = vpop.f32.mrb[0].mxu0
  %v1196 = vadd.f32 %v1099, %v1195
  %v1197 = vpop.f32.mrb[0].mxu0
  %1198 = vmatprep.mubr.bf16.mxu0 %v499
  %1199 = vmatmul.mubr.bf16.gmra.mrb[0].mxu0 %v498
  %v1200 = vpop.f32.mrb[0].mxu0
  %v1201 = vadd.f32 %v1104, %v1200
  %v1202 = vpop.f32.mrb[0].mxu0
  %v1203 = vpop.f32.mrb[0].mxu0
  %v1204 = vadd.f32 %v1107, %v1203
  %v1205 = vpop.f32.mrb[0].mxu0
  %1206 = vmatprep.mubr.bf16.mxu0 %v508
  %1207 = vmatmul.mubr.bf16.gmra.mrb[0].mxu0 %v507
  %v1208 = vpop.f32.mrb[0].mxu0
  %v1209 = vadd.f32 %v1112, %v1208
  %v1210 = vpop.f32.mrb[0].mxu0
  %v1211 = vpop.f32.mrb[0].mxu0
  %v1212 = vadd.f32 %v1115, %v1211
  %v1213 = vpop.f32.mrb[0].mxu0
  %1214 = vmatprep.mubr.bf16.mxu0 %v517
  %1215 = vmatmul.mubr.bf16.gmra.mrb[0].mxu0 %v516
  %v1216 = vpop.f32.mrb[0].mxu0
  %v1217 = vadd.f32 %v1120, %v1216
  %v1218 = vpop.f32.mrb[0].mxu0
  %v1219 = vpop.f32.mrb[0].mxu0
  %v1220 = vadd.f32 %v1123, %v1219
  %v1221 = vpop.f32.mrb[0].mxu0
  %1222 = vmatprep.mubr.bf16.mxu0 %v526
  %1223 = vmatmul.mubr.bf16.gmra.mrb[0].mxu0 %v525
  %v1224 = vpop.f32.mrb[0].mxu0
  %v1225 = vadd.f32 %v1128, %v1224
  %v1226 = vpop.f32.mrb[0].mxu0
  %v1227 = vpop.f32.mrb[0].mxu0
  %v1228 = vadd.f32 %v1131, %v1227
  %v1229 = vpop.f32.mrb[0].mxu0
  %1230 = vmatprep.mubr.bf16.mxu0 %v535
  %1231 = vmatmul.mubr.bf16.gmra.mrb[0].mxu0 %v534
  %v1232 = vpop.f32.mrb[0].mxu0
  %v1233 = vadd.f32 %v1136, %v1232
  %v1234 = vpop.f32.mrb[0].mxu0
  %v1235 = vpop.f32.mrb[0].mxu0
  %v1236 = vadd.f32 %v1139, %v1235
  %v1237 = vpop.f32.mrb[0].mxu0
  %1238 = vdwg.mxu0
  %1239 = vmatprep.subr.bf16.mxu0 0
  %1240 = vmatpush1.bf16.msra.mxu0 %v933
  %1241 = vmatprep.subr.bf16.mxu0 0
  %1242 = vmatpush1.bf16.msra.mxu0 %v934
  %1243 = vmatprep.subr.bf16.mxu0 0
  %1244 = vmatpush1.bf16.msra.mxu0 %v935
  %1245 = vmatprep.subr.bf16.mxu0 0
  %1246 = vmatpush1.bf16.msra.mxu0 %v936
  %1247 = vmatprep.subr.bf16.mxu0 0
  %1248 = vmatpush1.bf16.msra.mxu0 %v937
  %1249 = vmatprep.subr.bf16.mxu0 0
  %1250 = vmatpush1.bf16.msra.mxu0 %v938
  %1251 = vmatprep.subr.bf16.mxu0 0
  %1252 = vmatpush1.bf16.msra.mxu0 %v939
  %1253 = vmatprep.subr.bf16.mxu0 0
  %1254 = vmatpush1.bf16.msra.mxu0 %v940
  %1255 = vmatprep.subr.bf16.mxu0 0
  %1256 = vmatpush1.bf16.msra.mxu0 %v941
  %1257 = vmatprep.subr.bf16.mxu0 0
  %1258 = vmatpush1.bf16.msra.mxu0 %v942
  %1259 = vmatprep.subr.bf16.mxu0 0
  %1260 = vmatpush1.bf16.msra.mxu0 %v943
  %1261 = vmatprep.subr.bf16.mxu0 0
  %1262 = vmatpush1.bf16.msra.mxu0 %v944
  %1263 = vmatprep.subr.bf16.mxu0 0
  %1264 = vmatpush1.bf16.msra.mxu0 %v945
  %1265 = vmatprep.subr.bf16.mxu0 0
  %1266 = vmatpush1.bf16.msra.mxu0 %v946
  %1267 = vmatprep.subr.bf16.mxu0 0
  %1268 = vmatpush1.bf16.msra.mxu0 %v947
  %1269 = vmatprep.subr.bf16.mxu0 0
  %1270 = vmatpush1.bf16.msra.mxu0 %v948
  %1271 = vmatprep.mubr.bf16.mxu0 %v474
  %1272 = vmatmul.mubr.bf16.gmra.mrb[0].mxu0 %v473
  %v1273 = vpop.f32.mrb[0].mxu0
  %v1274 = vadd.f32 %v1177, %v1273
  %v1275 = vpop.f32.mrb[0].mxu0
  %v1276 = vpop.f32.mrb[0].mxu0
  %v1277 = vadd.f32 %v1180, %v1276
  %v1278 = vpop.f32.mrb[0].mxu0
  %1279 = vmatprep.mubr.bf16.mxu0 %v483
  %1280 = vmatmul.mubr.bf16.gmra.mrb[0].mxu0 %v482
  %v1281 = vpop.f32.mrb[0].mxu0
  %v1282 = vadd.f32 %v1185, %v1281
  %v1283 = vpop.f32.mrb[0].mxu0
  %v1284 = vpop.f32.mrb[0].mxu0
  %v1285 = vadd.f32 %v1188, %v1284
  %v1286 = vpop.f32.mrb[0].mxu0
  %1287 = vmatprep.mubr.bf16.mxu0 %v492
  %1288 = vmatmul.mubr.bf16.gmra.mrb[0].mxu0 %v491
  %v1289 = vpop.f32.mrb[0].mxu0
  %v1290 = vadd.f32 %v1193, %v1289
  %v1291 = vpop.f32.mrb[0].mxu0
  %v1292 = vpop.f32.mrb[0].mxu0
  %v1293 = vadd.f32 %v1196, %v1292
  %v1294 = vpop.f32.mrb[0].mxu0
  %1295 = vmatprep.mubr.bf16.mxu0 %v501
  %1296 = vmatmul.mubr.bf16.gmra.mrb[0].mxu0 %v500
  %v1297 = vpop.f32.mrb[0].mxu0
  %v1298 = vadd.f32 %v1201, %v1297
  %v1299 = vpop.f32.mrb[0].mxu0
  %v1300 = vpop.f32.mrb[0].mxu0
  %v1301 = vadd.f32 %v1204, %v1300
  %v1302 = vpop.f32.mrb[0].mxu0
  %1303 = vmatprep.mubr.bf16.mxu0 %v510
  %1304 = vmatmul.mubr.bf16.gmra.mrb[0].mxu0 %v509
  %v1305 = vpop.f32.mrb[0].mxu0
  %v1306 = vadd.f32 %v1209, %v1305
  %v1307 = vpop.f32.mrb[0].mxu0
  %v1308 = vpop.f32.mrb[0].mxu0
  %v1309 = vadd.f32 %v1212, %v1308
  %v1310 = vpop.f32.mrb[0].mxu0
  %1311 = vmatprep.mubr.bf16.mxu0 %v519
  %1312 = vmatmul.mubr.bf16.gmra.mrb[0].mxu0 %v518
  %v1313 = vpop.f32.mrb[0].mxu0
  %v1314 = vadd.f32 %v1217, %v1313
  %v1315 = vpop.f32.mrb[0].mxu0
  %v1316 = vpop.f32.mrb[0].mxu0
  %v1317 = vadd.f32 %v1220, %v1316
  %v1318 = vpop.f32.mrb[0].mxu0
  %1319 = vmatprep.mubr.bf16.mxu0 %v528
  %1320 = vmatmul.mubr.bf16.gmra.mrb[0].mxu0 %v527
  %v1321 = vpop.f32.mrb[0].mxu0
  %v1322 = vadd.f32 %v1225, %v1321
  %v1323 = vpop.f32.mrb[0].mxu0
  %v1324 = vpop.f32.mrb[0].mxu0
  %v1325 = vadd.f32 %v1228, %v1324
  %v1326 = vpop.f32.mrb[0].mxu0
  %1327 = vmatprep.mubr.bf16.mxu0 %v537
  %1328 = vmatmul.mubr.bf16.gmra.mrb[0].mxu0 %v536
  %v1329 = vpop.f32.mrb[0].mxu0
  %v1330 = vadd.f32 %v1233, %v1329
  %v1331 = vpop.f32.mrb[0].mxu0
  %v1332 = vpop.f32.mrb[0].mxu0
  %v1333 = vadd.f32 %v1236, %v1332
  %v1334 = vpop.f32.mrb[0].mxu0
  %1335 = vdwg.mxu0
  %1336 = vmatprep.subr.bf16.mxu0 0
  %1337 = vmatpush1.bf16.msra.mxu0 %v949
  %1338 = vmatprep.subr.bf16.mxu0 0
  %1339 = vmatpush1.bf16.msra.mxu0 %v950
  %1340 = vmatprep.subr.bf16.mxu0 0
  %1341 = vmatpush1.bf16.msra.mxu0 %v951
  %1342 = vmatprep.subr.bf16.mxu0 0
  %1343 = vmatpush1.bf16.msra.mxu0 %v952
  %1344 = vmatprep.subr.bf16.mxu0 0
  %1345 = vmatpush1.bf16.msra.mxu0 %v953
  %1346 = vmatprep.subr.bf16.mxu0 0
  %1347 = vmatpush1.bf16.msra.mxu0 %v954
  %1348 = vmatprep.subr.bf16.mxu0 0
  %1349 = vmatpush1.bf16.msra.mxu0 %v955
  %1350 = vmatprep.subr.bf16.mxu0 0
  %1351 = vmatpush1.bf16.msra.mxu0 %v956
  %1352 = vmatprep.subr.bf16.mxu0 0
  %1353 = vmatpush1.bf16.msra.mxu0 %v957
  %1354 = vmatprep.subr.bf16.mxu0 0
  %1355 = vmatpush1.bf16.msra.mxu0 %v958
  %1356 = vmatprep.subr.bf16.mxu0 0
  %1357 = vmatpush1.bf16.msra.mxu0 %v959
  %1358 = vmatprep.subr.bf16.mxu0 0
  %1359 = vmatpush1.bf16.msra.mxu0 %v960
  %1360 = vmatprep.subr.bf16.mxu0 0
  %1361 = vmatpush1.bf16.msra.mxu0 %v961
  %1362 = vmatprep.subr.bf16.mxu0 0
  %1363 = vmatpush1.bf16.msra.mxu0 %v962
  %1364 = vmatprep.subr.bf16.mxu0 0
  %1365 = vmatpush1.bf16.msra.mxu0 %v963
  %1366 = vmatprep.subr.bf16.mxu0 0
  %1367 = vmatpush1.bf16.msra.mxu0 %v964
  %1368 = vmatprep.mubr.bf16.mxu0 %v476
  %1369 = vmatmul.mubr.bf16.gmra.mrb[0].mxu0 %v475
  %v1370 = vpop.f32.mrb[0].mxu0
  %v1371 = vadd.f32 %v1274, %v1370
  %v1372 = vpop.f32.mrb[0].mxu0
  %v1373 = vpop.f32.mrb[0].mxu0
  %v1374 = vadd.f32 %v1277, %v1373
  %v1375 = vpop.f32.mrb[0].mxu0
  %1376 = vmatprep.mubr.bf16.mxu0 %v485
  %1377 = vmatmul.mubr.bf16.gmra.mrb[0].mxu0 %v484
  %v1378 = vpop.f32.mrb[0].mxu0
  %v1379 = vadd.f32 %v1282, %v1378
  %v1380 = vpop.f32.mrb[0].mxu0
  %v1381 = vpop.f32.mrb[0].mxu0
  %v1382 = vadd.f32 %v1285, %v1381
  %v1383 = vpop.f32.mrb[0].mxu0
  %1384 = vmatprep.mubr.bf16.mxu0 %v494
  %1385 = vmatmul.mubr.bf16.gmra.mrb[0].mxu0 %v493
  %v1386 = vpop.f32.mrb[0].mxu0
  %v1387 = vadd.f32 %v1290, %v1386
  %v1388 = vpop.f32.mrb[0].mxu0
  %v1389 = vpop.f32.mrb[0].mxu0
  %v1390 = vadd.f32 %v1293, %v1389
  %v1391 = vpop.f32.mrb[0].mxu0
  %1392 = vmatprep.mubr.bf16.mxu0 %v503
  %1393 = vmatmul.mubr.bf16.gmra.mrb[0].mxu0 %v502
  %v1394 = vpop.f32.mrb[0].mxu0
  %v1395 = vadd.f32 %v1298, %v1394
  %v1396 = vpop.f32.mrb[0].mxu0
  %v1397 = vpop.f32.mrb[0].mxu0
  %v1398 = vadd.f32 %v1301, %v1397
  %v1399 = vpop.f32.mrb[0].mxu0
  %1400 = vmatprep.mubr.bf16.mxu0 %v512
  %1401 = vmatmul.mubr.bf16.gmra.mrb[0].mxu0 %v511
  %v1402 = vpop.f32.mrb[0].mxu0
  %v1403 = vadd.f32 %v1306, %v1402
  %v1404 = vpop.f32.mrb[0].mxu0
  %v1405 = vpop.f32.mrb[0].mxu0
  %v1406 = vadd.f32 %v1309, %v1405
  %v1407 = vpop.f32.mrb[0].mxu0
  %1408 = vmatprep.mubr.bf16.mxu0 %v521
  %1409 = vmatmul.mubr.bf16.gmra.mrb[0].mxu0 %v520
  %v1410 = vpop.f32.mrb[0].mxu0
  %v1411 = vadd.f32 %v1314, %v1410
  %v1412 = vpop.f32.mrb[0].mxu0
  %v1413 = vpop.f32.mrb[0].mxu0
  %v1414 = vadd.f32 %v1317, %v1413
  %v1415 = vpop.f32.mrb[0].mxu0
  %1416 = vmatprep.mubr.bf16.mxu0 %v530
  %1417 = vmatmul.mubr.bf16.gmra.mrb[0].mxu0 %v529
  %v1418 = vpop.f32.mrb[0].mxu0
  %v1419 = vadd.f32 %v1322, %v1418
  %v1420 = vpop.f32.mrb[0].mxu0
  %v1421 = vpop.f32.mrb[0].mxu0
  %v1422 = vadd.f32 %v1325, %v1421
  %v1423 = vpop.f32.mrb[0].mxu0
  %1424 = vmatprep.mubr.bf16.mxu0 %v539
  %1425 = vmatmul.mubr.bf16.gmra.mrb[0].mxu0 %v538
  %v1426 = vpop.f32.mrb[0].mxu0
  %v1427 = vadd.f32 %v1330, %v1426
  %v1428 = vpop.f32.mrb[0].mxu0
  %v1429 = vpop.f32.mrb[0].mxu0
  %v1430 = vadd.f32 %v1333, %v1429
  %v1431 = vpop.f32.mrb[0].mxu0
  %1432 = vdwg.mxu0
  %1433 = vmatprep.subr.bf16.mxu0 0
  %1434 = vmatpush1.bf16.msra.mxu0 %v965
  %1435 = vmatprep.subr.bf16.mxu0 0
  %1436 = vmatpush1.bf16.msra.mxu0 %v966
  %1437 = vmatprep.subr.bf16.mxu0 0
  %1438 = vmatpush1.bf16.msra.mxu0 %v967
  %1439 = vmatprep.subr.bf16.mxu0 0
  %1440 = vmatpush1.bf16.msra.mxu0 %v968
  %1441 = vmatprep.subr.bf16.mxu0 0
  %1442 = vmatpush1.bf16.msra.mxu0 %v969
  %1443 = vmatprep.subr.bf16.mxu0 0
  %1444 = vmatpush1.bf16.msra.mxu0 %v970
  %1445 = vmatprep.subr.bf16.mxu0 0
  %1446 = vmatpush1.bf16.msra.mxu0 %v971
  %1447 = vmatprep.subr.bf16.mxu0 0
  %1448 = vmatpush1.bf16.msra.mxu0 %v972
  %1449 = vmatprep.subr.bf16.mxu0 0
  %1450 = vmatpush1.bf16.msra.mxu0 0
  %1451 = vmatprep.subr.bf16.mxu0 0
  %1452 = vmatpush1.bf16.msra.mxu0 0
  %1453 = vmatprep.subr.bf16.mxu0 0
  %1454 = vmatpush1.bf16.msra.mxu0 0
  %1455 = vmatprep.subr.bf16.mxu0 0
  %1456 = vmatpush1.bf16.msra.mxu0 0
  %1457 = vmatprep.subr.bf16.mxu0 0
  %1458 = vmatpush1.bf16.msra.mxu0 0
  %1459 = vmatprep.subr.bf16.mxu0 0
  %1460 = vmatpush1.bf16.msra.mxu0 0
  %1461 = vmatprep.subr.bf16.mxu0 0
  %1462 = vmatpush1.bf16.msra.mxu0 0
  %1463 = vmatprep.subr.bf16.mxu0 0
  %1464 = vmatpush1.bf16.msra.mxu0 0
  %1465 = vmatprep.mubr.bf16.mxu0 0
  %1466 = vmatmul.mubr.bf16.gmra.mrb[0].mxu0 %v477
  %v1467 = vpop.f32.mrb[0].mxu0
  %v1468 = vadd.f32 %v1371, %v1467
  %v1469 = vpop.f32.mrb[0].mxu0
  %v1470 = vpop.f32.mrb[0].mxu0
  %v1471 = vadd.f32 %v1374, %v1470
  %v1472 = vpop.f32.mrb[0].mxu0
  %1473 = vmatprep.mubr.bf16.mxu0 0
  %1474 = vmatmul.mubr.bf16.gmra.mrb[0].mxu0 %v486
  %v1475 = vpop.f32.mrb[0].mxu0
  %v1476 = vadd.f32 %v1379, %v1475
  %v1477 = vpop.f32.mrb[0].mxu0
  %v1478 = vpop.f32.mrb[0].mxu0
  %v1479 = vadd.f32 %v1382, %v1478
  %v1480 = vpop.f32.mrb[0].mxu0
  %1481 = vmatprep.mubr.bf16.mxu0 0
  %1482 = vmatmul.mubr.bf16.gmra.mrb[0].mxu0 %v495
  %v1483 = vpop.f32.mrb[0].mxu0
  %v1484 = vadd.f32 %v1387, %v1483
  %v1485 = vpop.f32.mrb[0].mxu0
  %v1486 = vpop.f32.mrb[0].mxu0
  %v1487 = vadd.f32 %v1390, %v1486
  %v1488 = vpop.f32.mrb[0].mxu0
  %1489 = vmatprep.mubr.bf16.mxu0 0
  %1490 = vmatmul.mubr.bf16.gmra.mrb[0].mxu0 %v504
  %v1491 = vpop.f32.mrb[0].mxu0
  %v1492 = vadd.f32 %v1395, %v1491
  %v1493 = vpop.f32.mrb[0].mxu0
  %v1494 = vpop.f32.mrb[0].mxu0
  %v1495 = vadd.f32 %v1398, %v1494
  %v1496 = vpop.f32.mrb[0].mxu0
  %1497 = vmatprep.mubr.bf16.mxu0 0
  %1498 = vmatmul.mubr.bf16.gmra.mrb[0].mxu0 %v513
  %v1499 = vpop.f32.mrb[0].mxu0
  %v1500 = vadd.f32 %v1403, %v1499
  %v1501 = vpop.f32.mrb[0].mxu0
  %v1502 = vpop.f32.mrb[0].mxu0
  %v1503 = vadd.f32 %v1406, %v1502
  %v1504 = vpop.f32.mrb[0].mxu0
  %1505 = vmatprep.mubr.bf16.mxu0 0
  %1506 = vmatmul.mubr.bf16.gmra.mrb[0].mxu0 %v522
  %v1507 = vpop.f32.mrb[0].mxu0
  %v1508 = vadd.f32 %v1411, %v1507
  %v1509 = vpop.f32.mrb[0].mxu0
  %v1510 = vpop.f32.mrb[0].mxu0
  %v1511 = vadd.f32 %v1414, %v1510
  %v1512 = vpop.f32.mrb[0].mxu0
  %1513 = vmatprep.mubr.bf16.mxu0 0
  %1514 = vmatmul.mubr.bf16.gmra.mrb[0].mxu0 %v531
  %v1515 = vpop.f32.mrb[0].mxu0
  %v1516 = vadd.f32 %v1419, %v1515
  %v1517 = vpop.f32.mrb[0].mxu0
  %v1518 = vpop.f32.mrb[0].mxu0
  %v1519 = vadd.f32 %v1422, %v1518
  %v1520 = vpop.f32.mrb[0].mxu0
  %1521 = vmatprep.mubr.bf16.mxu0 0
  %1522 = vmatmul.mubr.bf16.gmra.mrb[0].mxu0 %v540
  %v1523 = vpop.f32.mrb[0].mxu0
  %v1524 = vadd.f32 %v1427, %v1523
  %v1525 = vpop.f32.mrb[0].mxu0
  %v1526 = vpop.f32.mrb[0].mxu0
  %v1527 = vadd.f32 %v1430, %v1526
  %v1528 = vpop.f32.mrb[0].mxu0
  %1529 = vdwg.mxu0
  %v1530 = vld [vmem:[%s2] sm:$0x1]
  %v1532 = vlaneseq
  %v1533 = vshrl.u32 %v1532, 7
  %v1534 = vsub.s32 0, %v1533
  %v1535 = vrot.slane %v1530, %v1534
  %v1537 = vmul.f32 %v1468, %v1535
  %v1538 = vmul.f32 %v1471, %v1535
  %v1539 = vmul.f32 %v1476, %v1535
  %v1540 = vmul.f32 %v1479, %v1535
  %v1541 = vmul.f32 %v1484, %v1535
  %v1542 = vmul.f32 %v1487, %v1535
  %v1543 = vmul.f32 %v1492, %v1535
  %v1544 = vmul.f32 %v1495, %v1535
  %v1545 = vmul.f32 %v1500, %v1535
  %v1546 = vmul.f32 %v1503, %v1535
  %v1547 = vmul.f32 %v1508, %v1535
  %v1548 = vmul.f32 %v1511, %v1535
  %v1549 = vmul.f32 %v1516, %v1535
  %v1550 = vmul.f32 %v1519, %v1535
  %v1551 = vmul.f32 %v1524, %v1535
  %v1552 = vmul.f32 %v1527, %v1535
  %v1553 = vld [vmem:[%s3] sm:$0x1]
  %v1555 = vlaneseq
  %v1556 = vshrl.u32 %v1555, 7
  %v1557 = vsub.s32 0, %v1556
  %v1558 = vrot.slane %v1553, %v1557
  %v1560 = vadd.f32 %v1537, %v1558
  %v1561 = vadd.f32 %v1538, %v1558
  %v1562 = vadd.f32 %v1539, %v1558
  %v1563 = vadd.f32 %v1540, %v1558
  %v1564 = vadd.f32 %v1541, %v1558
  %v1565 = vadd.f32 %v1542, %v1558
  %v1566 = vadd.f32 %v1543, %v1558
  %v1567 = vadd.f32 %v1544, %v1558
  %v1568 = vadd.f32 %v1545, %v1558
  %v1569 = vadd.f32 %v1546, %v1558
  %v1570 = vadd.f32 %v1547, %v1558
  %v1571 = vadd.f32 %v1548, %v1558
  %v1572 = vadd.f32 %v1549, %v1558
  %v1573 = vadd.f32 %v1550, %v1558
  %v1574 = vadd.f32 %v1551, %v1558
  %v1575 = vadd.f32 %v1552, %v1558
  %v1576 = vld [vmem:[%s4] sm:$0xff]
  %v1577 = vld [vmem:[%s4 + $0x8] sm:$0xff]
  %v1578 = vld [vmem:[%s4 + $0x10] sm:$0xff]
  %v1579 = vld [vmem:[%s4 + $0x18] sm:$0xff]
  %v1580 = vld [vmem:[%s4 + $0x20] sm:$0xff]
  %v1581 = vld [vmem:[%s4 + $0x28] sm:$0xff]
  %v1582 = vld [vmem:[%s4 + $0x30] sm:$0xff]
  %v1583 = vld [vmem:[%s4 + $0x38] sm:$0xff]
  %v1584 = vld [vmem:[%s4 + $0x40] sm:$0xff]
  %v1585 = vld [vmem:[%s4 + $0x48] sm:$0xff]
  %v1586 = vld [vmem:[%s4 + $0x50] sm:$0xff]
  %v1587 = vld [vmem:[%s4 + $0x58] sm:$0xff]
  %v1588 = vld [vmem:[%s4 + $0x60] sm:$0xff]
  %v1589 = vld [vmem:[%s4 + $0x68] sm:$0xff]
  %v1590 = vld [vmem:[%s4 + $0x70] sm:$0xff]
  %v1591 = vld [vmem:[%s4 + $0x78] sm:$0xff]
  %v1592 = vadd.f32 %v1560, %v1576
  %v1593 = vadd.f32 %v1561, %v1577
  %v1594 = vadd.f32 %v1562, %v1578
  %v1595 = vadd.f32 %v1563, %v1579
  %v1596 = vadd.f32 %v1564, %v1580
  %v1597 = vadd.f32 %v1565, %v1581
  %v1598 = vadd.f32 %v1566, %v1582
  %v1599 = vadd.f32 %v1567, %v1583
  %v1600 = vadd.f32 %v1568, %v1584
  %v1601 = vadd.f32 %v1569, %v1585
  %v1602 = vadd.f32 %v1570, %v1586
  %v1603 = vadd.f32 %v1571, %v1587
  %v1604 = vadd.f32 %v1572, %v1588
  %v1605 = vadd.f32 %v1573, %v1589
  %v1606 = vadd.f32 %v1574, %v1590
  %v1607 = vadd.f32 %v1575, %v1591
  %v1608 = vmax.f32 %v1592, 0.0
  %v1609 = vmax.f32 %v1593, 0.0
  %v1610 = vmax.f32 %v1594, 0.0
  %v1611 = vmax.f32 %v1595, 0.0
  %v1612 = vmax.f32 %v1596, 0.0
  %v1613 = vmax.f32 %v1597, 0.0
  %v1614 = vmax.f32 %v1598, 0.0
  %v1615 = vmax.f32 %v1599, 0.0
  %v1616 = vmax.f32 %v1600, 0.0
  %v1617 = vmax.f32 %v1601, 0.0
  %v1618 = vmax.f32 %v1602, 0.0
  %v1619 = vmax.f32 %v1603, 0.0
  %v1620 = vmax.f32 %v1604, 0.0
  %v1621 = vmax.f32 %v1605, 0.0
  %v1622 = vmax.f32 %v1606, 0.0
  %v1623 = vmax.f32 %v1607, 0.0
  %1624 = vst [vmem:[%s5] sm:$0xff] %v1608
  %1625 = vst [vmem:[%s5 + $0x8] sm:$0xff] %v1609
  %1626 = vst [vmem:[%s5 + $0x10] sm:$0xff] %v1610
  %1627 = vst [vmem:[%s5 + $0x18] sm:$0xff] %v1611
  %1628 = vst [vmem:[%s5 + $0x20] sm:$0xff] %v1612
  %1629 = vst [vmem:[%s5 + $0x28] sm:$0xff] %v1613
  %1630 = vst [vmem:[%s5 + $0x30] sm:$0xff] %v1614
  %1631 = vst [vmem:[%s5 + $0x38] sm:$0xff] %v1615
  %1632 = vst [vmem:[%s5 + $0x40] sm:$0xff] %v1616
  %1633 = vst [vmem:[%s5 + $0x48] sm:$0xff] %v1617
  %1634 = vst [vmem:[%s5 + $0x50] sm:$0xff] %v1618
  %1635 = vst [vmem:[%s5 + $0x58] sm:$0xff] %v1619
  %1636 = vst [vmem:[%s5 + $0x60] sm:$0xff] %v1620
  %1637 = vst [vmem:[%s5 + $0x68] sm:$0xff] %v1621
  %1638 = vst [vmem:[%s5 + $0x70] sm:$0xff] %v1622
  %1639 = vst [vmem:[%s5 + $0x78] sm:$0xff] %v1623
  // Predicated region
  $region22: #{_lambda_.44} parent=0 // pred_check
    _
  $region23: #{_lambda_.44} parent=0 // pred_check_branch
    %1641 = sbr.rel (0) target = $region25
  $region24: #{_lambda_.44} parent=0 // pred_region
    _
  $region25: #{_lambda_.44} parent=0 // pred_fallthru
    _
  // Predicated region
  $region26: #{_lambda_.44} parent=0 // pred_check
    _
  $region27: #{_lambda_.44} parent=0 // pred_check_branch
    %1643 = sbr.rel (0) target = $region29
  $region28: #{_lambda_.44} parent=0 // pred_region
    _
  $region29: #{_lambda_.44} parent=0 // pred_fallthru
    _

// kernel: _lambda_.29
$region0: #{_lambda_.29}
  #allocation0 [shape = 'u32[]', space=smem, size = 0x4, offset = 0x4, fixed_abs, tag = 'smem constant byte address 0x4 - core index']
  #allocation1 [shape = 'u32[144,128]{1,0:T(1,128)}', space=vmem, size = 0x12000, scoped, tag = 'internal scratch']
  #allocation2 [shape = 'f32[8,128]{1,0:T(8,128)}', space=vmem, size = 0x1000, scoped, tag = 'scratch operand']
  %s0 = inlined_call_operand.vmem [shape: f32[128,128], index: 0, kind: input, shape index: {}]
  %s1 = inlined_call_operand.vmem [shape: f32[128,128], index: 1, kind: input, shape index: {}]
  %s2 = inlined_call_operand.hbm [shape: f32[1,1], index: 2, kind: output, shape index: {}]
  %s3 = sld [smem:[#allocation0]]
  $region26: #{_lambda_.29} parent=0
    _
  %s5 = ssub.s32 1, %s3
  %s6 = scalar_select 0, %s5, %s3
  $region1: #{_lambda_.29} parent=0
    #allocation3 [shape = 'u8[512]{0}', space=vmem, size = 0x400, scoped, tag = 'output window, operand 0, single buffered']
    #allocation4 [shape = 's32[1]{0}', space=sflag, size = 0x4, scoped, tag = 'scoped memory for _lambda_.29']
    %7 = vsyncpa [#allocation4], 0
    // Predicated region
    $region2: #{_lambda_.29} parent=1 // pred_check
      _
    $region3: #{_lambda_.29} parent=1 // pred_check_branch
      %9 = sbr.rel (0) target = $region5
    $region4: #{_lambda_.29} parent=1 // pred_region
      _
    $region5: #{_lambda_.29} parent=1 // pred_fallthru
      _
    // Predicated region
    $region6: #{_lambda_.29} parent=1 // pred_check
      _
    $region7: #{_lambda_.29} parent=1 // pred_check_branch
      %11 = sbr.rel (0) target = $region9
    $region8: #{_lambda_.29} parent=1 // pred_region
      _
    $region9: #{_lambda_.29} parent=1 // pred_fallthru
      _
    %p12 = scmp.eq.s32.totalorder 0, 0
    // Predicated region
    $region10: #{_lambda_.29} parent=1 // pred_check
      %p13 = pneg %p12
    $region11: #{_lambda_.29} parent=1 // pred_check_branch
      %15 = sbr.rel (%p13) target = $region13
    $region12: #{_lambda_.29} parent=1 // pred_region
      %16 = vst [vmem:[#allocation2] sm:$0xff] 0.0
    $region13: #{_lambda_.29} parent=1 // pred_fallthru
      _
    %v17 = vld [vmem:[%s0] sm:$0xff]
    %v18 = vld [vmem:[%s0 + $0x8] sm:$0xff]
    %v19 = vld [vmem:[%s0 + $0x10] sm:$0xff]
    %v20 = vld [vmem:[%s0 + $0x18] sm:$0xff]
    %v21 = vld [vmem:[%s0 + $0x20] sm:$0xff]
    %v22 = vld [vmem:[%s0 + $0x28] sm:$0xff]
    %v23 = vld [vmem:[%s0 + $0x30] sm:$0xff]
    %v24 = vld [vmem:[%s0 + $0x38] sm:$0xff]
    %v25 = vld [vmem:[%s0 + $0x40] sm:$0xff]
    %v26 = vld [vmem:[%s0 + $0x48] sm:$0xff]
    %v27 = vld [vmem:[%s0 + $0x50] sm:$0xff]
    %v28 = vld [vmem:[%s0 + $0x58] sm:$0xff]
    %v29 = vld [vmem:[%s0 + $0x60] sm:$0xff]
    %v30 = vld [vmem:[%s0 + $0x68] sm:$0xff]
    %v31 = vld [vmem:[%s0 + $0x70] sm:$0xff]
    %v32 = vld [vmem:[%s0 + $0x78] sm:$0xff]
    %v33 = vld [vmem:[%s1] sm:$0xff]
    %v34 = vld [vmem:[%s1 + $0x8] sm:$0xff]
    %v35 = vld [vmem:[%s1 + $0x10] sm:$0xff]
    %v36 = vld [vmem:[%s1 + $0x18] sm:$0xff]
    %v37 = vld [vmem:[%s1 + $0x20] sm:$0xff]
    %v38 = vld [vmem:[%s1 + $0x28] sm:$0xff]
    %v39 = vld [vmem:[%s1 + $0x30] sm:$0xff]
    %v40 = vld [vmem:[%s1 + $0x38] sm:$0xff]
    %v41 = vld [vmem:[%s1 + $0x40] sm:$0xff]
    %v42 = vld [vmem:[%s1 + $0x48] sm:$0xff]
    %v43 = vld [vmem:[%s1 + $0x50] sm:$0xff]
    %v44 = vld [vmem:[%s1 + $0x58] sm:$0xff]
    %v45 = vld [vmem:[%s1 + $0x60] sm:$0xff]
    %v46 = vld [vmem:[%s1 + $0x68] sm:$0xff]
    %v47 = vld [vmem:[%s1 + $0x70] sm:$0xff]
    %v48 = vld [vmem:[%s1 + $0x78] sm:$0xff]
    %v49 = vsub.f32 %v17, %v33
    %v50 = vsub.f32 %v18, %v34
    %v51 = vsub.f32 %v19, %v35
    %v52 = vsub.f32 %v20, %v36
    %v53 = vsub.f32 %v21, %v37
    %v54 = vsub.f32 %v22, %v38
    %v55 = vsub.f32 %v23, %v39
    %v56 = vsub.f32 %v24, %v40
    %v57 = vsub.f32 %v25, %v41
    %v58 = vsub.f32 %v26, %v42
    %v59 = vsub.f32 %v27, %v43
    %v60 = vsub.f32 %v28, %v44
    %v61 = vsub.f32 %v29, %v45
    %v62 = vsub.f32 %v30, %v46
    %v63 = vsub.f32 %v31, %v47
    %v64 = vsub.f32 %v32, %v48
    %v65 = vand.u32 2147483647, %v49
    %v66 = vand.u32 2147483647, %v50
    %v67 = vand.u32 2147483647, %v51
    %v68 = vand.u32 2147483647, %v52
    %v69 = vand.u32 2147483647, %v53
    %v70 = vand.u32 2147483647, %v54
    %v71 = vand.u32 2147483647, %v55
    %v72 = vand.u32 2147483647, %v56
    %v73 = vand.u32 2147483647, %v57
    %v74 = vand.u32 2147483647, %v58
    %v75 = vand.u32 2147483647, %v59
    %v76 = vand.u32 2147483647, %v60
    %v77 = vand.u32 2147483647, %v61
    %v78 = vand.u32 2147483647, %v62
    %v79 = vand.u32 2147483647, %v63
    %v80 = vand.u32 2147483647, %v64
    %v81 = vld [vmem:[#allocation2] sm:$0xff]
    %v82 = vadd.f32 %v65, %v66
    %v83 = vadd.f32 %v82, %v67
    %v84 = vadd.f32 %v83, %v68
    %v85 = vadd.f32 %v84, %v69
    %v86 = vadd.f32 %v85, %v70
    %v87 = vadd.f32 %v86, %v71
    %v88 = vadd.f32 %v87, %v72
    %v89 = vadd.f32 %v88, %v73
    %v90 = vadd.f32 %v89, %v74
    %v91 = vadd.f32 %v90, %v75
    %v92 = vadd.f32 %v91, %v76
    %v93 = vadd.f32 %v92, %v77
    %v94 = vadd.f32 %v93, %v78
    %v95 = vadd.f32 %v94, %v79
    %v96 = vadd.f32 %v95, %v80
    %v97 = vadd.f32 %v81, %v96
    %98 = vst [vmem:[#allocation2] sm:$0xff] %v97
    // Predicated region
    $region14: #{_lambda_.29} parent=1 // pred_check
      %p99 = pneg %p12
    $region15: #{_lambda_.29} parent=1 // pred_check_branch
      %101 = sbr.rel (%p99) target = $region17
    $region16: #{_lambda_.29} parent=1 // pred_region
      %v102 = vld [vmem:[#allocation2] sm:$0xff]
      %103 = vadd.xlane.f32.xlu0 %v102
      %v104 = vpop.xlane.xlu0 %103
      %v105 = vrot.slane %v104, 4
      %v106 = vadd.f32 %v104, %v105
      %v107 = vrot.slane %v106, 2
      %v108 = vadd.f32 %v106, %v107
      %v109 = vrot.slane %v108, 1
      %v110 = vadd.f32 %v108, %v109
      %s111 = vtos %v110
      %v112 = vstv %s111
      %vm113 = vcmask 0
      %114 = vst.msk [vmem:[#allocation3] sm:$0x1] %vm113, %v112
    $region17: #{_lambda_.29} parent=1 // pred_fallthru
      _
    // Predicated region
    $region18: #{_lambda_.29} parent=1 // pred_check
      _
    $region19: #{_lambda_.29} parent=1 // pred_check_branch
      %116 = sbr.rel (0) target = $region21
    $region20: #{_lambda_.29} parent=1 // pred_region
      %s118 = ssub.s32 16, 16
      %119 = vsyncadd [#allocation4], %s118
      %s121 = sshll.u32 [#allocation3], 4
      %s122 = int_to_ptr.vmem [resolvable:$true] %s121
      %124 = dma.vmem_to_hbm [thread:$0]  %s122, 16, %s2, [#allocation4]
    $region21: #{_lambda_.29} parent=1 // pred_fallthru
      _
    // Predicated region
    $region22: #{_lambda_.29} parent=1 // pred_check
      _
    $region23: #{_lambda_.29} parent=1 // pred_check_branch
      %126 = sbr.rel (0) target = $region25
    $region24: #{_lambda_.29} parent=1 // pred_region
      %127 = dma.done [#allocation4], 16
    $region25: #{_lambda_.29} parent=1 // pred_fallthru
      _
    %128 = vsyncpa [#allocation4], 1

// kernel: _lambda_.45
$region0: #{_lambda_.45}
  #allocation0 [shape = 'u32[]', space=smem, size = 0x4, offset = 0x4, fixed_abs, tag = 'smem constant byte address 0x4 - core index']
  #allocation1 [shape = 'u32[144,128]{1,0:T(1,128)}', space=vmem, size = 0x12000, scoped, tag = 'internal scratch']
  %s0 = inlined_call_operand.vmem [shape: bf16[128,1152], index: 0, kind: input, shape index: {}]
  %s1 = inlined_call_operand.vmem [shape: bf16[1152,128], index: 1, kind: input, shape index: {}]
  %s2 = inlined_call_operand.vmem [shape: f32[1,128], index: 2, kind: input, shape index: {}]
  %s3 = inlined_call_operand.vmem [shape: f32[1,128], index: 3, kind: input, shape index: {}]
  %s4 = inlined_call_operand.vmem [shape: f32[128,128], index: 4, kind: output, shape index: {}]
  %s5 = sld [smem:[#allocation0]]
  $region26: #{_lambda_.45} parent=0
    _
  %s7 = ssub.s32 1, %s5
  %s8 = scalar_select 0, %s7, %s5
  // Predicated region
  $region2: #{_lambda_.45} parent=0 // pred_check
    _
  $region3: #{_lambda_.45} parent=0 // pred_check_branch
    %10 = sbr.rel (0) target = $region5
  $region4: #{_lambda_.45} parent=0 // pred_region
    _
  $region5: #{_lambda_.45} parent=0 // pred_fallthru
    _
  // Predicated region
  $region6: #{_lambda_.45} parent=0 // pred_check
    _
  $region7: #{_lambda_.45} parent=0 // pred_check_branch
    %12 = sbr.rel (0) target = $region9
  $region8: #{_lambda_.45} parent=0 // pred_region
    _
  $region9: #{_lambda_.45} parent=0 // pred_fallthru
    _
  // Predicated region
  $region10: #{_lambda_.45} parent=0 // pred_check
    _
  $region11: #{_lambda_.45} parent=0 // pred_check_branch
    %14 = sbr.rel (0) target = $region13
  $region12: #{_lambda_.45} parent=0 // pred_region
    _
  $region13: #{_lambda_.45} parent=0 // pred_fallthru
    _
  // Predicated region
  $region14: #{_lambda_.45} parent=0 // pred_check
    _
  $region15: #{_lambda_.45} parent=0 // pred_check_branch
    %16 = sbr.rel (0) target = $region17
  $region16: #{_lambda_.45} parent=0 // pred_region
    _
  $region17: #{_lambda_.45} parent=0 // pred_fallthru
    _
  %v18 = vld [vmem:[%s0] sm:$0xff]
  %v19 = vld [vmem:[%s0 + $0x8] sm:$0xff]
  %v20 = vld [vmem:[%s0 + $0x10] sm:$0xff]
  %v21 = vld [vmem:[%s0 + $0x18] sm:$0xff]
  %v22 = vld [vmem:[%s0 + $0x20] sm:$0xf]
  %v23 = vld [vmem:[%s0 + $0x24] sm:$0xff]
  %v24 = vld [vmem:[%s0 + $0x2c] sm:$0xff]
  %v25 = vld [vmem:[%s0 + $0x34] sm:$0xff]
  %v26 = vld [vmem:[%s0 + $0x3c] sm:$0xff]
  %v27 = vld [vmem:[%s0 + $0x44] sm:$0xf]
  %v28 = vld [vmem:[%s0 + $0x48] sm:$0xff]
  %v29 = vld [vmem:[%s0 + $0x50] sm:$0xff]
  %v30 = vld [vmem:[%s0 + $0x58] sm:$0xff]
  %v31 = vld [vmem:[%s0 + $0x60] sm:$0xff]
  %v32 = vld [vmem:[%s0 + $0x68] sm:$0xf]
  %v33 = vld [vmem:[%s0 + $0x6c] sm:$0xff]
  %v34 = vld [vmem:[%s0 + $0x74] sm:$0xff]
  %v35 = vld [vmem:[%s0 + $0x7c] sm:$0xff]
  %v36 = vld [vmem:[%s0 + $0x84] sm:$0xff]
  %v37 = vld [vmem:[%s0 + $0x8c] sm:$0xf]
  %v38 = vld [vmem:[%s0 + $0x90] sm:$0xff]
  %v39 = vld [vmem:[%s0 + $0x98] sm:$0xff]
  %v40 = vld [vmem:[%s0 + $0xa0] sm:$0xff]
  %v41 = vld [vmem:[%s0 + $0xa8] sm:$0xff]
  %v42 = vld [vmem:[%s0 + $0xb0] sm:$0xf]
  %v43 = vld [vmem:[%s0 + $0xb4] sm:$0xff]
  %v44 = vld [vmem:[%s0 + $0xbc] sm:$0xff]
  %v45 = vld [vmem:[%s0 + $0xc4] sm:$0xff]
  %v46 = vld [vmem:[%s0 + $0xcc] sm:$0xff]
  %v47 = vld [vmem:[%s0 + $0xd4] sm:$0xf]
  %v48 = vld [vmem:[%s0 + $0xd8] sm:$0xff]
  %v49 = vld [vmem:[%s0 + $0xe0] sm:$0xff]
  %v50 = vld [vmem:[%s0 + $0xe8] sm:$0xff]
  %v51 = vld [vmem:[%s0 + $0xf0] sm:$0xff]
  %v52 = vld [vmem:[%s0 + $0xf8] sm:$0xf]
  %v53 = vld [vmem:[%s0 + $0xfc] sm:$0xff]
  %v54 = vld [vmem:[%s0 + $0x104] sm:$0xff]
  %v55 = vld [vmem:[%s0 + $0x10c] sm:$0xff]
  %v56 = vld [vmem:[%s0 + $0x114] sm:$0xff]
  %v57 = vld [vmem:[%s0 + $0x11c] sm:$0xf]
  %v58 = vld [vmem:[%s0 + $0x120] sm:$0xff]
  %v59 = vld [vmem:[%s0 + $0x128] sm:$0xff]
  %v60 = vld [vmem:[%s0 + $0x130] sm:$0xff]
  %v61 = vld [vmem:[%s0 + $0x138] sm:$0xff]
  %v62 = vld [vmem:[%s0 + $0x140] sm:$0xf]
  %v63 = vld [vmem:[%s0 + $0x144] sm:$0xff]
  %v64 = vld [vmem:[%s0 + $0x14c] sm:$0xff]
  %v65 = vld [vmem:[%s0 + $0x154] sm:$0xff]
  %v66 = vld [vmem:[%s0 + $0x15c] sm:$0xff]
  %v67 = vld [vmem:[%s0 + $0x164] sm:$0xf]
  %v68 = vld [vmem:[%s0 + $0x168] sm:$0xff]
  %v69 = vld [vmem:[%s0 + $0x170] sm:$0xff]
  %v70 = vld [vmem:[%s0 + $0x178] sm:$0xff]
  %v71 = vld [vmem:[%s0 + $0x180] sm:$0xff]
  %v72 = vld [vmem:[%s0 + $0x188] sm:$0xf]
  %v73 = vld [vmem:[%s0 + $0x18c] sm:$0xff]
  %v74 = vld [vmem:[%s0 + $0x194] sm:$0xff]
  %v75 = vld [vmem:[%s0 + $0x19c] sm:$0xff]
  %v76 = vld [vmem:[%s0 + $0x1a4] sm:$0xff]
  %v77 = vld [vmem:[%s0 + $0x1ac] sm:$0xf]
  %v78 = vld [vmem:[%s0 + $0x1b0] sm:$0xff]
  %v79 = vld [vmem:[%s0 + $0x1b8] sm:$0xff]
  %v80 = vld [vmem:[%s0 + $0x1c0] sm:$0xff]
  %v81 = vld [vmem:[%s0 + $0x1c8] sm:$0xff]
  %v82 = vld [vmem:[%s0 + $0x1d0] sm:$0xf]
  %v83 = vld [vmem:[%s0 + $0x1d4] sm:$0xff]
  %v84 = vld [vmem:[%s0 + $0x1dc] sm:$0xff]
  %v85 = vld [vmem:[%s0 + $0x1e4] sm:$0xff]
  %v86 = vld [vmem:[%s0 + $0x1ec] sm:$0xff]
  %v87 = vld [vmem:[%s0 + $0x1f4] sm:$0xf]
  %v88 = vld [vmem:[%s0 + $0x1f8] sm:$0xff]
  %v89 = vld [vmem:[%s0 + $0x200] sm:$0xff]
  %v90 = vld [vmem:[%s0 + $0x208] sm:$0xff]
  %v91 = vld [vmem:[%s0 + $0x210] sm:$0xff]
  %v92 = vld [vmem:[%s0 + $0x218] sm:$0xf]
  %v93 = vld [vmem:[%s0 + $0x21c] sm:$0xff]
  %v94 = vld [vmem:[%s0 + $0x224] sm:$0xff]
  %v95 = vld [vmem:[%s0 + $0x22c] sm:$0xff]
  %v96 = vld [vmem:[%s0 + $0x234] sm:$0xff]
  %v97 = vld [vmem:[%s0 + $0x23c] sm:$0xf]
  %v98 = vld [vmem:[%s1] sm:$0xf]
  %v99 = vld [vmem:[%s1 + $0x4] sm:$0xf]
  %v100 = vld [vmem:[%s1 + $0x8] sm:$0xf]
  %v101 = vld [vmem:[%s1 + $0xc] sm:$0xf]
  %v102 = vld [vmem:[%s1 + $0x10] sm:$0xf]
  %v103 = vld [vmem:[%s1 + $0x14] sm:$0xf]
  %v104 = vld [vmem:[%s1 + $0x18] sm:$0xf]
  %v105 = vld [vmem:[%s1 + $0x1c] sm:$0xf]
  %v106 = vld [vmem:[%s1 + $0x20] sm:$0xf]
  %v107 = vld [vmem:[%s1 + $0x24] sm:$0xf]
  %v108 = vld [vmem:[%s1 + $0x28] sm:$0xf]
  %v109 = vld [vmem:[%s1 + $0x2c] sm:$0xf]
  %v110 = vld [vmem:[%s1 + $0x30] sm:$0xf]
  %v111 = vld [vmem:[%s1 + $0x34] sm:$0xf]
  %v112 = vld [vmem:[%s1 + $0x38] sm:$0xf]
  %v113 = vld [vmem:[%s1 + $0x3c] sm:$0xf]
  %v114 = vld [vmem:[%s1 + $0x40] sm:$0xf]
  %v115 = vld [vmem:[%s1 + $0x44] sm:$0xf]
  %v116 = vld [vmem:[%s1 + $0x48] sm:$0xf]
  %v117 = vld [vmem:[%s1 + $0x4c] sm:$0xf]
  %v118 = vld [vmem:[%s1 + $0x50] sm:$0xf]
  %v119 = vld [vmem:[%s1 + $0x54] sm:$0xf]
  %v120 = vld [vmem:[%s1 + $0x58] sm:$0xf]
  %v121 = vld [vmem:[%s1 + $0x5c] sm:$0xf]
  %v122 = vld [vmem:[%s1 + $0x60] sm:$0xf]
  %v123 = vld [vmem:[%s1 + $0x64] sm:$0xf]
  %v124 = vld [vmem:[%s1 + $0x68] sm:$0xf]
  %v125 = vld [vmem:[%s1 + $0x6c] sm:$0xf]
  %v126 = vld [vmem:[%s1 + $0x70] sm:$0xf]
  %v127 = vld [vmem:[%s1 + $0x74] sm:$0xf]
  %v128 = vld [vmem:[%s1 + $0x78] sm:$0xf]
  %v129 = vld [vmem:[%s1 + $0x7c] sm:$0xf]
  %v130 = vld [vmem:[%s1 + $0x80] sm:$0xf]
  %v131 = vld [vmem:[%s1 + $0x84] sm:$0xf]
  %v132 = vld [vmem:[%s1 + $0x88] sm:$0xf]
  %v133 = vld [vmem:[%s1 + $0x8c] sm:$0xf]
  %v134 = vld [vmem:[%s1 + $0x90] sm:$0xf]
  %v135 = vld [vmem:[%s1 + $0x94] sm:$0xf]
  %v136 = vld [vmem:[%s1 + $0x98] sm:$0xf]
  %v137 = vld [vmem:[%s1 + $0x9c] sm:$0xf]
  %v138 = vld [vmem:[%s1 + $0xa0] sm:$0xf]
  %v139 = vld [vmem:[%s1 + $0xa4] sm:$0xf]
  %v140 = vld [vmem:[%s1 + $0xa8] sm:$0xf]
  %v141 = vld [vmem:[%s1 + $0xac] sm:$0xf]
  %v142 = vld [vmem:[%s1 + $0xb0] sm:$0xf]
  %v143 = vld [vmem:[%s1 + $0xb4] sm:$0xf]
  %v144 = vld [vmem:[%s1 + $0xb8] sm:$0xf]
  %v145 = vld [vmem:[%s1 + $0xbc] sm:$0xf]
  %v146 = vld [vmem:[%s1 + $0xc0] sm:$0xf]
  %v147 = vld [vmem:[%s1 + $0xc4] sm:$0xf]
  %v148 = vld [vmem:[%s1 + $0xc8] sm:$0xf]
  %v149 = vld [vmem:[%s1 + $0xcc] sm:$0xf]
  %v150 = vld [vmem:[%s1 + $0xd0] sm:$0xf]
  %v151 = vld [vmem:[%s1 + $0xd4] sm:$0xf]
  %v152 = vld [vmem:[%s1 + $0xd8] sm:$0xf]
  %v153 = vld [vmem:[%s1 + $0xdc] sm:$0xf]
  %v154 = vld [vmem:[%s1 + $0xe0] sm:$0xf]
  %v155 = vld [vmem:[%s1 + $0xe4] sm:$0xf]
  %v156 = vld [vmem:[%s1 + $0xe8] sm:$0xf]
  %v157 = vld [vmem:[%s1 + $0xec] sm:$0xf]
  %v158 = vld [vmem:[%s1 + $0xf0] sm:$0xf]
  %v159 = vld [vmem:[%s1 + $0xf4] sm:$0xf]
  %v160 = vld [vmem:[%s1 + $0xf8] sm:$0xf]
  %v161 = vld [vmem:[%s1 + $0xfc] sm:$0xf]
  %v162 = vld [vmem:[%s1 + $0x100] sm:$0xf]
  %v163 = vld [vmem:[%s1 + $0x104] sm:$0xf]
  %v164 = vld [vmem:[%s1 + $0x108] sm:$0xf]
  %v165 = vld [vmem:[%s1 + $0x10c] sm:$0xf]
  %v166 = vld [vmem:[%s1 + $0x110] sm:$0xf]
  %v167 = vld [vmem:[%s1 + $0x114] sm:$0xf]
  %v168 = vld [vmem:[%s1 + $0x118] sm:$0xf]
  %v169 = vld [vmem:[%s1 + $0x11c] sm:$0xf]
  %v170 = vld [vmem:[%s1 + $0x120] sm:$0xf]
  %v171 = vld [vmem:[%s1 + $0x124] sm:$0xf]
  %v172 = vld [vmem:[%s1 + $0x128] sm:$0xf]
  %v173 = vld [vmem:[%s1 + $0x12c] sm:$0xf]
  %v174 = vld [vmem:[%s1 + $0x130] sm:$0xf]
  %v175 = vld [vmem:[%s1 + $0x134] sm:$0xf]
  %v176 = vld [vmem:[%s1 + $0x138] sm:$0xf]
  %v177 = vld [vmem:[%s1 + $0x13c] sm:$0xf]
  %v178 = vld [vmem:[%s1 + $0x140] sm:$0xf]
  %v179 = vld [vmem:[%s1 + $0x144] sm:$0xf]
  %v180 = vld [vmem:[%s1 + $0x148] sm:$0xf]
  %v181 = vld [vmem:[%s1 + $0x14c] sm:$0xf]
  %v182 = vld [vmem:[%s1 + $0x150] sm:$0xf]
  %v183 = vld [vmem:[%s1 + $0x154] sm:$0xf]
  %v184 = vld [vmem:[%s1 + $0x158] sm:$0xf]
  %v185 = vld [vmem:[%s1 + $0x15c] sm:$0xf]
  %v186 = vld [vmem:[%s1 + $0x160] sm:$0xf]
  %v187 = vld [vmem:[%s1 + $0x164] sm:$0xf]
  %v188 = vld [vmem:[%s1 + $0x168] sm:$0xf]
  %v189 = vld [vmem:[%s1 + $0x16c] sm:$0xf]
  %v190 = vld [vmem:[%s1 + $0x170] sm:$0xf]
  %v191 = vld [vmem:[%s1 + $0x174] sm:$0xf]
  %v192 = vld [vmem:[%s1 + $0x178] sm:$0xf]
  %v193 = vld [vmem:[%s1 + $0x17c] sm:$0xf]
  %v194 = vld [vmem:[%s1 + $0x180] sm:$0xf]
  %v195 = vld [vmem:[%s1 + $0x184] sm:$0xf]
  %v196 = vld [vmem:[%s1 + $0x188] sm:$0xf]
  %v197 = vld [vmem:[%s1 + $0x18c] sm:$0xf]
  %v198 = vld [vmem:[%s1 + $0x190] sm:$0xf]
  %v199 = vld [vmem:[%s1 + $0x194] sm:$0xf]
  %v200 = vld [vmem:[%s1 + $0x198] sm:$0xf]
  %v201 = vld [vmem:[%s1 + $0x19c] sm:$0xf]
  %v202 = vld [vmem:[%s1 + $0x1a0] sm:$0xf]
  %v203 = vld [vmem:[%s1 + $0x1a4] sm:$0xf]
  %v204 = vld [vmem:[%s1 + $0x1a8] sm:$0xf]
  %v205 = vld [vmem:[%s1 + $0x1ac] sm:$0xf]
  %v206 = vld [vmem:[%s1 + $0x1b0] sm:$0xf]
  %v207 = vld [vmem:[%s1 + $0x1b4] sm:$0xf]
  %v208 = vld [vmem:[%s1 + $0x1b8] sm:$0xf]
  %v209 = vld [vmem:[%s1 + $0x1bc] sm:$0xf]
  %v210 = vld [vmem:[%s1 + $0x1c0] sm:$0xf]
  %v211 = vld [vmem:[%s1 + $0x1c4] sm:$0xf]
  %v212 = vld [vmem:[%s1 + $0x1c8] sm:$0xf]
  %v213 = vld [vmem:[%s1 + $0x1cc] sm:$0xf]
  %v214 = vld [vmem:[%s1 + $0x1d0] sm:$0xf]
  %v215 = vld [vmem:[%s1 + $0x1d4] sm:$0xf]
  %v216 = vld [vmem:[%s1 + $0x1d8] sm:$0xf]
  %v217 = vld [vmem:[%s1 + $0x1dc] sm:$0xf]
  %v218 = vld [vmem:[%s1 + $0x1e0] sm:$0xf]
  %v219 = vld [vmem:[%s1 + $0x1e4] sm:$0xf]
  %v220 = vld [vmem:[%s1 + $0x1e8] sm:$0xf]
  %v221 = vld [vmem:[%s1 + $0x1ec] sm:$0xf]
  %v222 = vld [vmem:[%s1 + $0x1f0] sm:$0xf]
  %v223 = vld [vmem:[%s1 + $0x1f4] sm:$0xf]
  %v224 = vld [vmem:[%s1 + $0x1f8] sm:$0xf]
  %v225 = vld [vmem:[%s1 + $0x1fc] sm:$0xf]
  %v226 = vld [vmem:[%s1 + $0x200] sm:$0xf]
  %v227 = vld [vmem:[%s1 + $0x204] sm:$0xf]
  %v228 = vld [vmem:[%s1 + $0x208] sm:$0xf]
  %v229 = vld [vmem:[%s1 + $0x20c] sm:$0xf]
  %v230 = vld [vmem:[%s1 + $0x210] sm:$0xf]
  %v231 = vld [vmem:[%s1 + $0x214] sm:$0xf]
  %v232 = vld [vmem:[%s1 + $0x218] sm:$0xf]
  %v233 = vld [vmem:[%s1 + $0x21c] sm:$0xf]
  %v234 = vld [vmem:[%s1 + $0x220] sm:$0xf]
  %v235 = vld [vmem:[%s1 + $0x224] sm:$0xf]
  %v236 = vld [vmem:[%s1 + $0x228] sm:$0xf]
  %v237 = vld [vmem:[%s1 + $0x22c] sm:$0xf]
  %v238 = vld [vmem:[%s1 + $0x230] sm:$0xf]
  %v239 = vld [vmem:[%s1 + $0x234] sm:$0xf]
  %v240 = vld [vmem:[%s1 + $0x238] sm:$0xf]
  %v241 = vld [vmem:[%s1 + $0x23c] sm:$0xf]
  %v322 = vunpack.c.l.b16 %v18
  %v323 = vunpack.c.h.b16 %v18
  %v324 = vunpack.c.l.b16 %v19
  %v325 = vunpack.c.h.b16 %v19
  %v326 = vunpack.c.l.b16 %v20
  %v327 = vunpack.c.h.b16 %v20
  %v328 = vunpack.c.l.b16 %v21
  %v329 = vunpack.c.h.b16 %v21
  %v330 = vunpack.c.l.b16 %v22
  %v331 = vunpack.c.l.b16 %v23
  %v332 = vunpack.c.h.b16 %v23
  %v333 = vunpack.c.l.b16 %v24
  %v334 = vunpack.c.h.b16 %v24
  %v335 = vunpack.c.l.b16 %v25
  %v336 = vunpack.c.h.b16 %v25
  %v337 = vunpack.c.l.b16 %v26
  %v338 = vunpack.c.h.b16 %v26
  %v339 = vunpack.c.l.b16 %v27
  %v340 = vunpack.c.l.b16 %v28
  %v341 = vunpack.c.h.b16 %v28
  %v342 = vunpack.c.l.b16 %v29
  %v343 = vunpack.c.h.b16 %v29
  %v344 = vunpack.c.l.b16 %v30
  %v345 = vunpack.c.h.b16 %v30
  %v346 = vunpack.c.l.b16 %v31
  %v347 = vunpack.c.h.b16 %v31
  %v348 = vunpack.c.l.b16 %v32
  %v349 = vunpack.c.l.b16 %v33
  %v350 = vunpack.c.h.b16 %v33
  %v351 = vunpack.c.l.b16 %v34
  %v352 = vunpack.c.h.b16 %v34
  %v353 = vunpack.c.l.b16 %v35
  %v354 = vunpack.c.h.b16 %v35
  %v355 = vunpack.c.l.b16 %v36
  %v356 = vunpack.c.h.b16 %v36
  %v357 = vunpack.c.l.b16 %v37
  %v358 = vunpack.c.l.b16 %v38
  %v359 = vunpack.c.h.b16 %v38
  %v360 = vunpack.c.l.b16 %v39
  %v361 = vunpack.c.h.b16 %v39
  %v362 = vunpack.c.l.b16 %v40
  %v363 = vunpack.c.h.b16 %v40
  %v364 = vunpack.c.l.b16 %v41
  %v365 = vunpack.c.h.b16 %v41
  %v366 = vunpack.c.l.b16 %v42
  %v367 = vunpack.c.l.b16 %v43
  %v368 = vunpack.c.h.b16 %v43
  %v369 = vunpack.c.l.b16 %v44
  %v370 = vunpack.c.h.b16 %v44
  %v371 = vunpack.c.l.b16 %v45
  %v372 = vunpack.c.h.b16 %v45
  %v373 = vunpack.c.l.b16 %v46
  %v374 = vunpack.c.h.b16 %v46
  %v375 = vunpack.c.l.b16 %v47
  %v376 = vunpack.c.l.b16 %v48
  %v377 = vunpack.c.h.b16 %v48
  %v378 = vunpack.c.l.b16 %v49
  %v379 = vunpack.c.h.b16 %v49
  %v380 = vunpack.c.l.b16 %v50
  %v381 = vunpack.c.h.b16 %v50
  %v382 = vunpack.c.l.b16 %v51
  %v383 = vunpack.c.h.b16 %v51
  %v384 = vunpack.c.l.b16 %v52
  %v385 = vunpack.c.l.b16 %v53
  %v386 = vunpack.c.h.b16 %v53
  %v387 = vunpack.c.l.b16 %v54
  %v388 = vunpack.c.h.b16 %v54
  %v389 = vunpack.c.l.b16 %v55
  %v390 = vunpack.c.h.b16 %v55
  %v391 = vunpack.c.l.b16 %v56
  %v392 = vunpack.c.h.b16 %v56
  %v393 = vunpack.c.l.b16 %v57
  %v394 = vunpack.c.l.b16 %v58
  %v395 = vunpack.c.h.b16 %v58
  %v396 = vunpack.c.l.b16 %v59
  %v397 = vunpack.c.h.b16 %v59
  %v398 = vunpack.c.l.b16 %v60
  %v399 = vunpack.c.h.b16 %v60
  %v400 = vunpack.c.l.b16 %v61
  %v401 = vunpack.c.h.b16 %v61
  %v402 = vunpack.c.l.b16 %v62
  %v403 = vunpack.c.l.b16 %v63
  %v404 = vunpack.c.h.b16 %v63
  %v405 = vunpack.c.l.b16 %v64
  %v406 = vunpack.c.h.b16 %v64
  %v407 = vunpack.c.l.b16 %v65
  %v408 = vunpack.c.h.b16 %v65
  %v409 = vunpack.c.l.b16 %v66
  %v410 = vunpack.c.h.b16 %v66
  %v411 = vunpack.c.l.b16 %v67
  %v412 = vunpack.c.l.b16 %v68
  %v413 = vunpack.c.h.b16 %v68
  %v414 = vunpack.c.l.b16 %v69
  %v415 = vunpack.c.h.b16 %v69
  %v416 = vunpack.c.l.b16 %v70
  %v417 = vunpack.c.h.b16 %v70
  %v418 = vunpack.c.l.b16 %v71
  %v419 = vunpack.c.h.b16 %v71
  %v420 = vunpack.c.l.b16 %v72
  %v421 = vunpack.c.l.b16 %v73
  %v422 = vunpack.c.h.b16 %v73
  %v423 = vunpack.c.l.b16 %v74
  %v424 = vunpack.c.h.b16 %v74
  %v425 = vunpack.c.l.b16 %v75
  %v426 = vunpack.c.h.b16 %v75
  %v427 = vunpack.c.l.b16 %v76
  %v428 = vunpack.c.h.b16 %v76
  %v429 = vunpack.c.l.b16 %v77
  %v430 = vunpack.c.l.b16 %v78
  %v431 = vunpack.c.h.b16 %v78
  %v432 = vunpack.c.l.b16 %v79
  %v433 = vunpack.c.h.b16 %v79
  %v434 = vunpack.c.l.b16 %v80
  %v435 = vunpack.c.h.b16 %v80
  %v436 = vunpack.c.l.b16 %v81
  %v437 = vunpack.c.h.b16 %v81
  %v438 = vunpack.c.l.b16 %v82
  %v439 = vunpack.c.l.b16 %v83
  %v440 = vunpack.c.h.b16 %v83
  %v441 = vunpack.c.l.b16 %v84
  %v442 = vunpack.c.h.b16 %v84
  %v443 = vunpack.c.l.b16 %v85
  %v444 = vunpack.c.h.b16 %v85
  %v445 = vunpack.c.l.b16 %v86
  %v446 = vunpack.c.h.b16 %v86
  %v447 = vunpack.c.l.b16 %v87
  %v448 = vunpack.c.l.b16 %v88
  %v449 = vunpack.c.h.b16 %v88
  %v450 = vunpack.c.l.b16 %v89
  %v451 = vunpack.c.h.b16 %v89
  %v452 = vunpack.c.l.b16 %v90
  %v453 = vunpack.c.h.b16 %v90
  %v454 = vunpack.c.l.b16 %v91
  %v455 = vunpack.c.h.b16 %v91
  %v456 = vunpack.c.l.b16 %v92
  %v457 = vunpack.c.l.b16 %v93
  %v458 = vunpack.c.h.b16 %v93
  %v459 = vunpack.c.l.b16 %v94
  %v460 = vunpack.c.h.b16 %v94
  %v461 = vunpack.c.l.b16 %v95
  %v462 = vunpack.c.h.b16 %v95
  %v463 = vunpack.c.l.b16 %v96
  %v464 = vunpack.c.h.b16 %v96
  %v465 = vunpack.c.l.b16 %v97
  %v466 = vpack.c.b16 %v331, %v322
  %v467 = vpack.c.b16 %v332, %v323
  %v468 = vpack.c.b16 %v333, %v324
  %v469 = vpack.c.b16 %v334, %v325
  %v470 = vpack.c.b16 %v335, %v326
  %v471 = vpack.c.b16 %v336, %v327
  %v472 = vpack.c.b16 %v337, %v328
  %v473 = vpack.c.b16 %v338, %v329
  %v474 = vpack.c.b16 %v339, %v330
  %v475 = vpack.c.b16 %v349, %v340
  %v476 = vpack.c.b16 %v350, %v341
  %v477 = vpack.c.b16 %v351, %v342
  %v478 = vpack.c.b16 %v352, %v343
  %v479 = vpack.c.b16 %v353, %v344
  %v480 = vpack.c.b16 %v354, %v345
  %v481 = vpack.c.b16 %v355, %v346
  %v482 = vpack.c.b16 %v356, %v347
  %v483 = vpack.c.b16 %v357, %v348
  %v484 = vpack.c.b16 %v367, %v358
  %v485 = vpack.c.b16 %v368, %v359
  %v486 = vpack.c.b16 %v369, %v360
  %v487 = vpack.c.b16 %v370, %v361
  %v488 = vpack.c.b16 %v371, %v362
  %v489 = vpack.c.b16 %v372, %v363
  %v490 = vpack.c.b16 %v373, %v364
  %v491 = vpack.c.b16 %v374, %v365
  %v492 = vpack.c.b16 %v375, %v366
  %v493 = vpack.c.b16 %v385, %v376
  %v494 = vpack.c.b16 %v386, %v377
  %v495 = vpack.c.b16 %v387, %v378
  %v496 = vpack.c.b16 %v388, %v379
  %v497 = vpack.c.b16 %v389, %v380
  %v498 = vpack.c.b16 %v390, %v381
  %v499 = vpack.c.b16 %v391, %v382
  %v500 = vpack.c.b16 %v392, %v383
  %v501 = vpack.c.b16 %v393, %v384
  %v502 = vpack.c.b16 %v403, %v394
  %v503 = vpack.c.b16 %v404, %v395
  %v504 = vpack.c.b16 %v405, %v396
  %v505 = vpack.c.b16 %v406, %v397
  %v506 = vpack.c.b16 %v407, %v398
  %v507 = vpack.c.b16 %v408, %v399
  %v508 = vpack.c.b16 %v409, %v400
  %v509 = vpack.c.b16 %v410, %v401
  %v510 = vpack.c.b16 %v411, %v402
  %v511 = vpack.c.b16 %v421, %v412
  %v512 = vpack.c.b16 %v422, %v413
  %v513 = vpack.c.b16 %v423, %v414
  %v514 = vpack.c.b16 %v424, %v415
  %v515 = vpack.c.b16 %v425, %v416
  %v516 = vpack.c.b16 %v426, %v417
  %v517 = vpack.c.b16 %v427, %v418
  %v518 = vpack.c.b16 %v428, %v419
  %v519 = vpack.c.b16 %v429, %v420
  %v520 = vpack.c.b16 %v439, %v430
  %v521 = vpack.c.b16 %v440, %v431
  %v522 = vpack.c.b16 %v441, %v432
  %v523 = vpack.c.b16 %v442, %v433
  %v524 = vpack.c.b16 %v443, %v434
  %v525 = vpack.c.b16 %v444, %v435
  %v526 = vpack.c.b16 %v445, %v436
  %v527 = vpack.c.b16 %v446, %v437
  %v528 = vpack.c.b16 %v447, %v438
  %v529 = vpack.c.b16 %v457, %v448
  %v530 = vpack.c.b16 %v458, %v449
  %v531 = vpack.c.b16 %v459, %v450
  %v532 = vpack.c.b16 %v460, %v451
  %v533 = vpack.c.b16 %v461, %v452
  %v534 = vpack.c.b16 %v462, %v453
  %v535 = vpack.c.b16 %v463, %v454
  %v536 = vpack.c.b16 %v464, %v455
  %v537 = vpack.c.b16 %v465, %v456
  %v754 = vunpack.c.l.b16 %v98
  %v755 = vunpack.c.l.b16 %v99
  %v756 = vunpack.c.l.b16 %v100
  %v757 = vunpack.c.l.b16 %v101
  %v758 = vunpack.c.l.b16 %v102
  %v759 = vunpack.c.l.b16 %v103
  %v760 = vunpack.c.l.b16 %v104
  %v761 = vunpack.c.l.b16 %v105
  %v762 = vunpack.c.l.b16 %v106
  %v763 = vunpack.c.l.b16 %v107
  %v764 = vunpack.c.l.b16 %v108
  %v765 = vunpack.c.l.b16 %v109
  %v766 = vunpack.c.l.b16 %v110
  %v767 = vunpack.c.l.b16 %v111
  %v768 = vunpack.c.l.b16 %v112
  %v769 = vunpack.c.l.b16 %v113
  %v770 = vunpack.c.l.b16 %v114
  %v771 = vunpack.c.l.b16 %v115
  %v772 = vunpack.c.l.b16 %v116
  %v773 = vunpack.c.l.b16 %v117
  %v774 = vunpack.c.l.b16 %v118
  %v775 = vunpack.c.l.b16 %v119
  %v776 = vunpack.c.l.b16 %v120
  %v777 = vunpack.c.l.b16 %v121
  %v778 = vunpack.c.l.b16 %v122
  %v779 = vunpack.c.l.b16 %v123
  %v780 = vunpack.c.l.b16 %v124
  %v781 = vunpack.c.l.b16 %v125
  %v782 = vunpack.c.l.b16 %v126
  %v783 = vunpack.c.l.b16 %v127
  %v784 = vunpack.c.l.b16 %v128
  %v785 = vunpack.c.l.b16 %v129
  %v786 = vunpack.c.l.b16 %v130
  %v787 = vunpack.c.l.b16 %v131
  %v788 = vunpack.c.l.b16 %v132
  %v789 = vunpack.c.l.b16 %v133
  %v790 = vunpack.c.l.b16 %v134
  %v791 = vunpack.c.l.b16 %v135
  %v792 = vunpack.c.l.b16 %v136
  %v793 = vunpack.c.l.b16 %v137
  %v794 = vunpack.c.l.b16 %v138
  %v795 = vunpack.c.l.b16 %v139
  %v796 = vunpack.c.l.b16 %v140
  %v797 = vunpack.c.l.b16 %v141
  %v798 = vunpack.c.l.b16 %v142
  %v799 = vunpack.c.l.b16 %v143
  %v800 = vunpack.c.l.b16 %v144
  %v801 = vunpack.c.l.b16 %v145
  %v802 = vunpack.c.l.b16 %v146
  %v803 = vunpack.c.l.b16 %v147
  %v804 = vunpack.c.l.b16 %v148
  %v805 = vunpack.c.l.b16 %v149
  %v806 = vunpack.c.l.b16 %v150
  %v807 = vunpack.c.l.b16 %v151
  %v808 = vunpack.c.l.b16 %v152
  %v809 = vunpack.c.l.b16 %v153
  %v810 = vunpack.c.l.b16 %v154
  %v811 = vunpack.c.l.b16 %v155
  %v812 = vunpack.c.l.b16 %v156
  %v813 = vunpack.c.l.b16 %v157
  %v814 = vunpack.c.l.b16 %v158
  %v815 = vunpack.c.l.b16 %v159
  %v816 = vunpack.c.l.b16 %v160
  %v817 = vunpack.c.l.b16 %v161
  %v818 = vunpack.c.l.b16 %v162
  %v819 = vunpack.c.l.b16 %v163
  %v820 = vunpack.c.l.b16 %v164
  %v821 = vunpack.c.l.b16 %v165
  %v822 = vunpack.c.l.b16 %v166
  %v823 = vunpack.c.l.b16 %v167
  %v824 = vunpack.c.l.b16 %v168
  %v825 = vunpack.c.l.b16 %v169
  %v826 = vunpack.c.l.b16 %v170
  %v827 = vunpack.c.l.b16 %v171
  %v828 = vunpack.c.l.b16 %v172
  %v829 = vunpack.c.l.b16 %v173
  %v830 = vunpack.c.l.b16 %v174
  %v831 = vunpack.c.l.b16 %v175
  %v832 = vunpack.c.l.b16 %v176
  %v833 = vunpack.c.l.b16 %v177
  %v834 = vunpack.c.l.b16 %v178
  %v835 = vunpack.c.l.b16 %v179
  %v836 = vunpack.c.l.b16 %v180
  %v837 = vunpack.c.l.b16 %v181
  %v838 = vunpack.c.l.b16 %v182
  %v839 = vunpack.c.l.b16 %v183
  %v840 = vunpack.c.l.b16 %v184
  %v841 = vunpack.c.l.b16 %v185
  %v842 = vunpack.c.l.b16 %v186
  %v843 = vunpack.c.l.b16 %v187
  %v844 = vunpack.c.l.b16 %v188
  %v845 = vunpack.c.l.b16 %v189
  %v846 = vunpack.c.l.b16 %v190
  %v847 = vunpack.c.l.b16 %v191
  %v848 = vunpack.c.l.b16 %v192
  %v849 = vunpack.c.l.b16 %v193
  %v850 = vunpack.c.l.b16 %v194
  %v851 = vunpack.c.l.b16 %v195
  %v852 = vunpack.c.l.b16 %v196
  %v853 = vunpack.c.l.b16 %v197
  %v854 = vunpack.c.l.b16 %v198
  %v855 = vunpack.c.l.b16 %v199
  %v856 = vunpack.c.l.b16 %v200
  %v857 = vunpack.c.l.b16 %v201
  %v858 = vunpack.c.l.b16 %v202
  %v859 = vunpack.c.l.b16 %v203
  %v860 = vunpack.c.l.b16 %v204
  %v861 = vunpack.c.l.b16 %v205
  %v862 = vunpack.c.l.b16 %v206
  %v863 = vunpack.c.l.b16 %v207
  %v864 = vunpack.c.l.b16 %v208
  %v865 = vunpack.c.l.b16 %v209
  %v866 = vunpack.c.l.b16 %v210
  %v867 = vunpack.c.l.b16 %v211
  %v868 = vunpack.c.l.b16 %v212
  %v869 = vunpack.c.l.b16 %v213
  %v870 = vunpack.c.l.b16 %v214
  %v871 = vunpack.c.l.b16 %v215
  %v872 = vunpack.c.l.b16 %v216
  %v873 = vunpack.c.l.b16 %v217
  %v874 = vunpack.c.l.b16 %v218
  %v875 = vunpack.c.l.b16 %v219
  %v876 = vunpack.c.l.b16 %v220
  %v877 = vunpack.c.l.b16 %v221
  %v878 = vunpack.c.l.b16 %v222
  %v879 = vunpack.c.l.b16 %v223
  %v880 = vunpack.c.l.b16 %v224
  %v881 = vunpack.c.l.b16 %v225
  %v882 = vunpack.c.l.b16 %v226
  %v883 = vunpack.c.l.b16 %v227
  %v884 = vunpack.c.l.b16 %v228
  %v885 = vunpack.c.l.b16 %v229
  %v886 = vunpack.c.l.b16 %v230
  %v887 = vunpack.c.l.b16 %v231
  %v888 = vunpack.c.l.b16 %v232
  %v889 = vunpack.c.l.b16 %v233
  %v890 = vunpack.c.l.b16 %v234
  %v891 = vunpack.c.l.b16 %v235
  %v892 = vunpack.c.l.b16 %v236
  %v893 = vunpack.c.l.b16 %v237
  %v894 = vunpack.c.l.b16 %v238
  %v895 = vunpack.c.l.b16 %v239
  %v896 = vunpack.c.l.b16 %v240
  %v897 = vunpack.c.l.b16 %v241
  %v898 = vpack.c.b16 %v755, %v754
  %v899 = vpack.c.b16 %v757, %v756
  %v900 = vpack.c.b16 %v759, %v758
  %v901 = vpack.c.b16 %v761, %v760
  %v902 = vpack.c.b16 %v763, %v762
  %v903 = vpack.c.b16 %v765, %v764
  %v904 = vpack.c.b16 %v767, %v766
  %v905 = vpack.c.b16 %v769, %v768
  %v906 = vpack.c.b16 %v771, %v770
  %v907 = vpack.c.b16 %v773, %v772
  %v908 = vpack.c.b16 %v775, %v774
  %v909 = vpack.c.b16 %v777, %v776
  %v910 = vpack.c.b16 %v779, %v778
  %v911 = vpack.c.b16 %v781, %v780
  %v912 = vpack.c.b16 %v783, %v782
  %v913 = vpack.c.b16 %v785, %v784
  %v914 = vpack.c.b16 %v787, %v786
  %v915 = vpack.c.b16 %v789, %v788
  %v916 = vpack.c.b16 %v791, %v790
  %v917 = vpack.c.b16 %v793, %v792
  %v918 = vpack.c.b16 %v795, %v794
  %v919 = vpack.c.b16 %v797, %v796
  %v920 = vpack.c.b16 %v799, %v798
  %v921 = vpack.c.b16 %v801, %v800
  %v922 = vpack.c.b16 %v803, %v802
  %v923 = vpack.c.b16 %v805, %v804
  %v924 = vpack.c.b16 %v807, %v806
  %v925 = vpack.c.b16 %v809, %v808
  %v926 = vpack.c.b16 %v811, %v810
  %v927 = vpack.c.b16 %v813, %v812
  %v928 = vpack.c.b16 %v815, %v814
  %v929 = vpack.c.b16 %v817, %v816
  %v930 = vpack.c.b16 %v819, %v818
  %v931 = vpack.c.b16 %v821, %v820
  %v932 = vpack.c.b16 %v823, %v822
  %v933 = vpack.c.b16 %v825, %v824
  %v934 = vpack.c.b16 %v827, %v826
  %v935 = vpack.c.b16 %v829, %v828
  %v936 = vpack.c.b16 %v831, %v830
  %v937 = vpack.c.b16 %v833, %v832
  %v938 = vpack.c.b16 %v835, %v834
  %v939 = vpack.c.b16 %v837, %v836
  %v940 = vpack.c.b16 %v839, %v838
  %v941 = vpack.c.b16 %v841, %v840
  %v942 = vpack.c.b16 %v843, %v842
  %v943 = vpack.c.b16 %v845, %v844
  %v944 = vpack.c.b16 %v847, %v846
  %v945 = vpack.c.b16 %v849, %v848
  %v946 = vpack.c.b16 %v851, %v850
  %v947 = vpack.c.b16 %v853, %v852
  %v948 = vpack.c.b16 %v855, %v854
  %v949 = vpack.c.b16 %v857, %v856
  %v950 = vpack.c.b16 %v859, %v858
  %v951 = vpack.c.b16 %v861, %v860
  %v952 = vpack.c.b16 %v863, %v862
  %v953 = vpack.c.b16 %v865, %v864
  %v954 = vpack.c.b16 %v867, %v866
  %v955 = vpack.c.b16 %v869, %v868
  %v956 = vpack.c.b16 %v871, %v870
  %v957 = vpack.c.b16 %v873, %v872
  %v958 = vpack.c.b16 %v875, %v874
  %v959 = vpack.c.b16 %v877, %v876
  %v960 = vpack.c.b16 %v879, %v878
  %v961 = vpack.c.b16 %v881, %v880
  %v962 = vpack.c.b16 %v883, %v882
  %v963 = vpack.c.b16 %v885, %v884
  %v964 = vpack.c.b16 %v887, %v886
  %v965 = vpack.c.b16 %v889, %v888
  %v966 = vpack.c.b16 %v891, %v890
  %v967 = vpack.c.b16 %v893, %v892
  %v968 = vpack.c.b16 %v895, %v894
  %v969 = vpack.c.b16 %v897, %v896
  %1042 = vmatprep.subr.bf16.mxu0 0
  %1043 = vmatpush1.bf16.msra.mxu0 %v898
  %1044 = vmatprep.subr.bf16.mxu0 0
  %1045 = vmatpush1.bf16.msra.mxu0 %v899
  %1046 = vmatprep.subr.bf16.mxu0 0
  %1047 = vmatpush1.bf16.msra.mxu0 %v900
  %1048 = vmatprep.subr.bf16.mxu0 0
  %1049 = vmatpush1.bf16.msra.mxu0 %v901
  %1050 = vmatprep.subr.bf16.mxu0 0
  %1051 = vmatpush1.bf16.msra.mxu0 %v902
  %1052 = vmatprep.subr.bf16.mxu0 0
  %1053 = vmatpush1.bf16.msra.mxu0 %v903
  %1054 = vmatprep.subr.bf16.mxu0 0
  %1055 = vmatpush1.bf16.msra.mxu0 %v904
  %1056 = vmatprep.subr.bf16.mxu0 0
  %1057 = vmatpush1.bf16.msra.mxu0 %v905
  %1058 = vmatprep.subr.bf16.mxu0 0
  %1059 = vmatpush1.bf16.msra.mxu0 %v906
  %1060 = vmatprep.subr.bf16.mxu0 0
  %1061 = vmatpush1.bf16.msra.mxu0 %v907
  %1062 = vmatprep.subr.bf16.mxu0 0
  %1063 = vmatpush1.bf16.msra.mxu0 %v908
  %1064 = vmatprep.subr.bf16.mxu0 0
  %1065 = vmatpush1.bf16.msra.mxu0 %v909
  %1066 = vmatprep.subr.bf16.mxu0 0
  %1067 = vmatpush1.bf16.msra.mxu0 %v910
  %1068 = vmatprep.subr.bf16.mxu0 0
  %1069 = vmatpush1.bf16.msra.mxu0 %v911
  %1070 = vmatprep.subr.bf16.mxu0 0
  %1071 = vmatpush1.bf16.msra.mxu0 %v912
  %1072 = vmatprep.subr.bf16.mxu0 0
  %1073 = vmatpush1.bf16.msra.mxu0 %v913
  %1074 = vmatprep.mubr.bf16.mxu0 %v467
  %1075 = vmatmul.mubr.bf16.gmra.mrb[0].mxu0 %v466
  %v1076 = vpop.f32.mrb[0].mxu0
  %v1077 = vadd.f32 0.0, %v1076
  %v1078 = vpop.f32.mrb[0].mxu0
  %v1079 = vpop.f32.mrb[0].mxu0
  %v1080 = vadd.f32 0.0, %v1079
  %v1081 = vpop.f32.mrb[0].mxu0
  %1082 = vmatprep.mubr.bf16.mxu0 %v476
  %1083 = vmatmul.mubr.bf16.gmra.mrb[0].mxu0 %v475
  %v1084 = vpop.f32.mrb[0].mxu0
  %v1085 = vadd.f32 0.0, %v1084
  %v1086 = vpop.f32.mrb[0].mxu0
  %v1087 = vpop.f32.mrb[0].mxu0
  %v1088 = vadd.f32 0.0, %v1087
  %v1089 = vpop.f32.mrb[0].mxu0
  %1090 = vmatprep.mubr.bf16.mxu0 %v485
  %1091 = vmatmul.mubr.bf16.gmra.mrb[0].mxu0 %v484
  %v1092 = vpop.f32.mrb[0].mxu0
  %v1093 = vadd.f32 0.0, %v1092
  %v1094 = vpop.f32.mrb[0].mxu0
  %v1095 = vpop.f32.mrb[0].mxu0
  %v1096 = vadd.f32 0.0, %v1095
  %v1097 = vpop.f32.mrb[0].mxu0
  %1098 = vmatprep.mubr.bf16.mxu0 %v494
  %1099 = vmatmul.mubr.bf16.gmra.mrb[0].mxu0 %v493
  %v1100 = vpop.f32.mrb[0].mxu0
  %v1101 = vadd.f32 0.0, %v1100
  %v1102 = vpop.f32.mrb[0].mxu0
  %v1103 = vpop.f32.mrb[0].mxu0
  %v1104 = vadd.f32 0.0, %v1103
  %v1105 = vpop.f32.mrb[0].mxu0
  %1106 = vmatprep.mubr.bf16.mxu0 %v503
  %1107 = vmatmul.mubr.bf16.gmra.mrb[0].mxu0 %v502
  %v1108 = vpop.f32.mrb[0].mxu0
  %v1109 = vadd.f32 0.0, %v1108
  %v1110 = vpop.f32.mrb[0].mxu0
  %v1111 = vpop.f32.mrb[0].mxu0
  %v1112 = vadd.f32 0.0, %v1111
  %v1113 = vpop.f32.mrb[0].mxu0
  %1114 = vmatprep.mubr.bf16.mxu0 %v512
  %1115 = vmatmul.mubr.bf16.gmra.mrb[0].mxu0 %v511
  %v1116 = vpop.f32.mrb[0].mxu0
  %v1117 = vadd.f32 0.0, %v1116
  %v1118 = vpop.f32.mrb[0].mxu0
  %v1119 = vpop.f32.mrb[0].mxu0
  %v1120 = vadd.f32 0.0, %v1119
  %v1121 = vpop.f32.mrb[0].mxu0
  %1122 = vmatprep.mubr.bf16.mxu0 %v521
  %1123 = vmatmul.mubr.bf16.gmra.mrb[0].mxu0 %v520
  %v1124 = vpop.f32.mrb[0].mxu0
  %v1125 = vadd.f32 0.0, %v1124
  %v1126 = vpop.f32.mrb[0].mxu0
  %v1127 = vpop.f32.mrb[0].mxu0
  %v1128 = vadd.f32 0.0, %v1127
  %v1129 = vpop.f32.mrb[0].mxu0
  %1130 = vmatprep.mubr.bf16.mxu0 %v530
  %1131 = vmatmul.mubr.bf16.gmra.mrb[0].mxu0 %v529
  %v1132 = vpop.f32.mrb[0].mxu0
  %v1133 = vadd.f32 0.0, %v1132
  %v1134 = vpop.f32.mrb[0].mxu0
  %v1135 = vpop.f32.mrb[0].mxu0
  %v1136 = vadd.f32 0.0, %v1135
  %v1137 = vpop.f32.mrb[0].mxu0
  %1138 = vdwg.mxu0
  %1139 = vmatprep.subr.bf16.mxu0 0
  %1140 = vmatpush1.bf16.msra.mxu0 %v914
  %1141 = vmatprep.subr.bf16.mxu0 0
  %1142 = vmatpush1.bf16.msra.mxu0 %v915
  %1143 = vmatprep.subr.bf16.mxu0 0
  %1144 = vmatpush1.bf16.msra.mxu0 %v916
  %1145 = vmatprep.subr.bf16.mxu0 0
  %1146 = vmatpush1.bf16.msra.mxu0 %v917
  %1147 = vmatprep.subr.bf16.mxu0 0
  %1148 = vmatpush1.bf16.msra.mxu0 %v918
  %1149 = vmatprep.subr.bf16.mxu0 0
  %1150 = vmatpush1.bf16.msra.mxu0 %v919
  %1151 = vmatprep.subr.bf16.mxu0 0
  %1152 = vmatpush1.bf16.msra.mxu0 %v920
  %1153 = vmatprep.subr.bf16.mxu0 0
  %1154 = vmatpush1.bf16.msra.mxu0 %v921
  %1155 = vmatprep.subr.bf16.mxu0 0
  %1156 = vmatpush1.bf16.msra.mxu0 %v922
  %1157 = vmatprep.subr.bf16.mxu0 0
  %1158 = vmatpush1.bf16.msra.mxu0 %v923
  %1159 = vmatprep.subr.bf16.mxu0 0
  %1160 = vmatpush1.bf16.msra.mxu0 %v924
  %1161 = vmatprep.subr.bf16.mxu0 0
  %1162 = vmatpush1.bf16.msra.mxu0 %v925
  %1163 = vmatprep.subr.bf16.mxu0 0
  %1164 = vmatpush1.bf16.msra.mxu0 %v926
  %1165 = vmatprep.subr.bf16.mxu0 0
  %1166 = vmatpush1.bf16.msra.mxu0 %v927
  %1167 = vmatprep.subr.bf16.mxu0 0
  %1168 = vmatpush1.bf16.msra.mxu0 %v928
  %1169 = vmatprep.subr.bf16.mxu0 0
  %1170 = vmatpush1.bf16.msra.mxu0 %v929
  %1171 = vmatprep.mubr.bf16.mxu0 %v469
  %1172 = vmatmul.mubr.bf16.gmra.mrb[0].mxu0 %v468
  %v1173 = vpop.f32.mrb[0].mxu0
  %v1174 = vadd.f32 %v1077, %v1173
  %v1175 = vpop.f32.mrb[0].mxu0
  %v1176 = vpop.f32.mrb[0].mxu0
  %v1177 = vadd.f32 %v1080, %v1176
  %v1178 = vpop.f32.mrb[0].mxu0
  %1179 = vmatprep.mubr.bf16.mxu0 %v478
  %1180 = vmatmul.mubr.bf16.gmra.mrb[0].mxu0 %v477
  %v1181 = vpop.f32.mrb[0].mxu0
  %v1182 = vadd.f32 %v1085, %v1181
  %v1183 = vpop.f32.mrb[0].mxu0
  %v1184 = vpop.f32.mrb[0].mxu0
  %v1185 = vadd.f32 %v1088, %v1184
  %v1186 = vpop.f32.mrb[0].mxu0
  %1187 = vmatprep.mubr.bf16.mxu0 %v487
  %1188 = vmatmul.mubr.bf16.gmra.mrb[0].mxu0 %v486
  %v1189 = vpop.f32.mrb[0].mxu0
  %v1190 = vadd.f32 %v1093, %v1189
  %v1191 = vpop.f32.mrb[0].mxu0
  %v1192 = vpop.f32.mrb[0].mxu0
  %v1193 = vadd.f32 %v1096, %v1192
  %v1194 = vpop.f32.mrb[0].mxu0
  %1195 = vmatprep.mubr.bf16.mxu0 %v496
  %1196 = vmatmul.mubr.bf16.gmra.mrb[0].mxu0 %v495
  %v1197 = vpop.f32.mrb[0].mxu0
  %v1198 = vadd.f32 %v1101, %v1197
  %v1199 = vpop.f32.mrb[0].mxu0
  %v1200 = vpop.f32.mrb[0].mxu0
  %v1201 = vadd.f32 %v1104, %v1200
  %v1202 = vpop.f32.mrb[0].mxu0
  %1203 = vmatprep.mubr.bf16.mxu0 %v505
  %1204 = vmatmul.mubr.bf16.gmra.mrb[0].mxu0 %v504
  %v1205 = vpop.f32.mrb[0].mxu0
  %v1206 = vadd.f32 %v1109, %v1205
  %v1207 = vpop.f32.mrb[0].mxu0
  %v1208 = vpop.f32.mrb[0].mxu0
  %v1209 = vadd.f32 %v1112, %v1208
  %v1210 = vpop.f32.mrb[0].mxu0
  %1211 = vmatprep.mubr.bf16.mxu0 %v514
  %1212 = vmatmul.mubr.bf16.gmra.mrb[0].mxu0 %v513
  %v1213 = vpop.f32.mrb[0].mxu0
  %v1214 = vadd.f32 %v1117, %v1213
  %v1215 = vpop.f32.mrb[0].mxu0
  %v1216 = vpop.f32.mrb[0].mxu0
  %v1217 = vadd.f32 %v1120, %v1216
  %v1218 = vpop.f32.mrb[0].mxu0
  %1219 = vmatprep.mubr.bf16.mxu0 %v523
  %1220 = vmatmul.mubr.bf16.gmra.mrb[0].mxu0 %v522
  %v1221 = vpop.f32.mrb[0].mxu0
  %v1222 = vadd.f32 %v1125, %v1221
  %v1223 = vpop.f32.mrb[0].mxu0
  %v1224 = vpop.f32.mrb[0].mxu0
  %v1225 = vadd.f32 %v1128, %v1224
  %v1226 = vpop.f32.mrb[0].mxu0
  %1227 = vmatprep.mubr.bf16.mxu0 %v532
  %1228 = vmatmul.mubr.bf16.gmra.mrb[0].mxu0 %v531
  %v1229 = vpop.f32.mrb[0].mxu0
  %v1230 = vadd.f32 %v1133, %v1229
  %v1231 = vpop.f32.mrb[0].mxu0
  %v1232 = vpop.f32.mrb[0].mxu0
  %v1233 = vadd.f32 %v1136, %v1232
  %v1234 = vpop.f32.mrb[0].mxu0
  %1235 = vdwg.mxu0
  %1236 = vmatprep.subr.bf16.mxu0 0
  %1237 = vmatpush1.bf16.msra.mxu0 %v930
  %1238 = vmatprep.subr.bf16.mxu0 0
  %1239 = vmatpush1.bf16.msra.mxu0 %v931
  %1240 = vmatprep.subr.bf16.mxu0 0
  %1241 = vmatpush1.bf16.msra.mxu0 %v932
  %1242 = vmatprep.subr.bf16.mxu0 0
  %1243 = vmatpush1.bf16.msra.mxu0 %v933
  %1244 = vmatprep.subr.bf16.mxu0 0
  %1245 = vmatpush1.bf16.msra.mxu0 %v934
  %1246 = vmatprep.subr.bf16.mxu0 0
  %1247 = vmatpush1.bf16.msra.mxu0 %v935
  %1248 = vmatprep.subr.bf16.mxu0 0
  %1249 = vmatpush1.bf16.msra.mxu0 %v936
  %1250 = vmatprep.subr.bf16.mxu0 0
  %1251 = vmatpush1.bf16.msra.mxu0 %v937
  %1252 = vmatprep.subr.bf16.mxu0 0
  %1253 = vmatpush1.bf16.msra.mxu0 %v938
  %1254 = vmatprep.subr.bf16.mxu0 0
  %1255 = vmatpush1.bf16.msra.mxu0 %v939
  %1256 = vmatprep.subr.bf16.mxu0 0
  %1257 = vmatpush1.bf16.msra.mxu0 %v940
  %1258 = vmatprep.subr.bf16.mxu0 0
  %1259 = vmatpush1.bf16.msra.mxu0 %v941
  %1260 = vmatprep.subr.bf16.mxu0 0
  %1261 = vmatpush1.bf16.msra.mxu0 %v942
  %1262 = vmatprep.subr.bf16.mxu0 0
  %1263 = vmatpush1.bf16.msra.mxu0 %v943
  %1264 = vmatprep.subr.bf16.mxu0 0
  %1265 = vmatpush1.bf16.msra.mxu0 %v944
  %1266 = vmatprep.subr.bf16.mxu0 0
  %1267 = vmatpush1.bf16.msra.mxu0 %v945
  %1268 = vmatprep.mubr.bf16.mxu0 %v471
  %1269 = vmatmul.mubr.bf16.gmra.mrb[0].mxu0 %v470
  %v1270 = vpop.f32.mrb[0].mxu0
  %v1271 = vadd.f32 %v1174, %v1270
  %v1272 = vpop.f32.mrb[0].mxu0
  %v1273 = vpop.f32.mrb[0].mxu0
  %v1274 = vadd.f32 %v1177, %v1273
  %v1275 = vpop.f32.mrb[0].mxu0
  %1276 = vmatprep.mubr.bf16.mxu0 %v480
  %1277 = vmatmul.mubr.bf16.gmra.mrb[0].mxu0 %v479
  %v1278 = vpop.f32.mrb[0].mxu0
  %v1279 = vadd.f32 %v1182, %v1278
  %v1280 = vpop.f32.mrb[0].mxu0
  %v1281 = vpop.f32.mrb[0].mxu0
  %v1282 = vadd.f32 %v1185, %v1281
  %v1283 = vpop.f32.mrb[0].mxu0
  %1284 = vmatprep.mubr.bf16.mxu0 %v489
  %1285 = vmatmul.mubr.bf16.gmra.mrb[0].mxu0 %v488
  %v1286 = vpop.f32.mrb[0].mxu0
  %v1287 = vadd.f32 %v1190, %v1286
  %v1288 = vpop.f32.mrb[0].mxu0
  %v1289 = vpop.f32.mrb[0].mxu0
  %v1290 = vadd.f32 %v1193, %v1289
  %v1291 = vpop.f32.mrb[0].mxu0
  %1292 = vmatprep.mubr.bf16.mxu0 %v498
  %1293 = vmatmul.mubr.bf16.gmra.mrb[0].mxu0 %v497
  %v1294 = vpop.f32.mrb[0].mxu0
  %v1295 = vadd.f32 %v1198, %v1294
  %v1296 = vpop.f32.mrb[0].mxu0
  %v1297 = vpop.f32.mrb[0].mxu0
  %v1298 = vadd.f32 %v1201, %v1297
  %v1299 = vpop.f32.mrb[0].mxu0
  %1300 = vmatprep.mubr.bf16.mxu0 %v507
  %1301 = vmatmul.mubr.bf16.gmra.mrb[0].mxu0 %v506
  %v1302 = vpop.f32.mrb[0].mxu0
  %v1303 = vadd.f32 %v1206, %v1302
  %v1304 = vpop.f32.mrb[0].mxu0
  %v1305 = vpop.f32.mrb[0].mxu0
  %v1306 = vadd.f32 %v1209, %v1305
  %v1307 = vpop.f32.mrb[0].mxu0
  %1308 = vmatprep.mubr.bf16.mxu0 %v516
  %1309 = vmatmul.mubr.bf16.gmra.mrb[0].mxu0 %v515
  %v1310 = vpop.f32.mrb[0].mxu0
  %v1311 = vadd.f32 %v1214, %v1310
  %v1312 = vpop.f32.mrb[0].mxu0
  %v1313 = vpop.f32.mrb[0].mxu0
  %v1314 = vadd.f32 %v1217, %v1313
  %v1315 = vpop.f32.mrb[0].mxu0
  %1316 = vmatprep.mubr.bf16.mxu0 %v525
  %1317 = vmatmul.mubr.bf16.gmra.mrb[0].mxu0 %v524
  %v1318 = vpop.f32.mrb[0].mxu0
  %v1319 = vadd.f32 %v1222, %v1318
  %v1320 = vpop.f32.mrb[0].mxu0
  %v1321 = vpop.f32.mrb[0].mxu0
  %v1322 = vadd.f32 %v1225, %v1321
  %v1323 = vpop.f32.mrb[0].mxu0
  %1324 = vmatprep.mubr.bf16.mxu0 %v534
  %1325 = vmatmul.mubr.bf16.gmra.mrb[0].mxu0 %v533
  %v1326 = vpop.f32.mrb[0].mxu0
  %v1327 = vadd.f32 %v1230, %v1326
  %v1328 = vpop.f32.mrb[0].mxu0
  %v1329 = vpop.f32.mrb[0].mxu0
  %v1330 = vadd.f32 %v1233, %v1329
  %v1331 = vpop.f32.mrb[0].mxu0
  %1332 = vdwg.mxu0
  %1333 = vmatprep.subr.bf16.mxu0 0
  %1334 = vmatpush1.bf16.msra.mxu0 %v946
  %1335 = vmatprep.subr.bf16.mxu0 0
  %1336 = vmatpush1.bf16.msra.mxu0 %v947
  %1337 = vmatprep.subr.bf16.mxu0 0
  %1338 = vmatpush1.bf16.msra.mxu0 %v948
  %1339 = vmatprep.subr.bf16.mxu0 0
  %1340 = vmatpush1.bf16.msra.mxu0 %v949
  %1341 = vmatprep.subr.bf16.mxu0 0
  %1342 = vmatpush1.bf16.msra.mxu0 %v950
  %1343 = vmatprep.subr.bf16.mxu0 0
  %1344 = vmatpush1.bf16.msra.mxu0 %v951
  %1345 = vmatprep.subr.bf16.mxu0 0
  %1346 = vmatpush1.bf16.msra.mxu0 %v952
  %1347 = vmatprep.subr.bf16.mxu0 0
  %1348 = vmatpush1.bf16.msra.mxu0 %v953
  %1349 = vmatprep.subr.bf16.mxu0 0
  %1350 = vmatpush1.bf16.msra.mxu0 %v954
  %1351 = vmatprep.subr.bf16.mxu0 0
  %1352 = vmatpush1.bf16.msra.mxu0 %v955
  %1353 = vmatprep.subr.bf16.mxu0 0
  %1354 = vmatpush1.bf16.msra.mxu0 %v956
  %1355 = vmatprep.subr.bf16.mxu0 0
  %1356 = vmatpush1.bf16.msra.mxu0 %v957
  %1357 = vmatprep.subr.bf16.mxu0 0
  %1358 = vmatpush1.bf16.msra.mxu0 %v958
  %1359 = vmatprep.subr.bf16.mxu0 0
  %1360 = vmatpush1.bf16.msra.mxu0 %v959
  %1361 = vmatprep.subr.bf16.mxu0 0
  %1362 = vmatpush1.bf16.msra.mxu0 %v960
  %1363 = vmatprep.subr.bf16.mxu0 0
  %1364 = vmatpush1.bf16.msra.mxu0 %v961
  %1365 = vmatprep.mubr.bf16.mxu0 %v473
  %1366 = vmatmul.mubr.bf16.gmra.mrb[0].mxu0 %v472
  %v1367 = vpop.f32.mrb[0].mxu0
  %v1368 = vadd.f32 %v1271, %v1367
  %v1369 = vpop.f32.mrb[0].mxu0
  %v1370 = vpop.f32.mrb[0].mxu0
  %v1371 = vadd.f32 %v1274, %v1370
  %v1372 = vpop.f32.mrb[0].mxu0
  %1373 = vmatprep.mubr.bf16.mxu0 %v482
  %1374 = vmatmul.mubr.bf16.gmra.mrb[0].mxu0 %v481
  %v1375 = vpop.f32.mrb[0].mxu0
  %v1376 = vadd.f32 %v1279, %v1375
  %v1377 = vpop.f32.mrb[0].mxu0
  %v1378 = vpop.f32.mrb[0].mxu0
  %v1379 = vadd.f32 %v1282, %v1378
  %v1380 = vpop.f32.mrb[0].mxu0
  %1381 = vmatprep.mubr.bf16.mxu0 %v491
  %1382 = vmatmul.mubr.bf16.gmra.mrb[0].mxu0 %v490
  %v1383 = vpop.f32.mrb[0].mxu0
  %v1384 = vadd.f32 %v1287, %v1383
  %v1385 = vpop.f32.mrb[0].mxu0
  %v1386 = vpop.f32.mrb[0].mxu0
  %v1387 = vadd.f32 %v1290, %v1386
  %v1388 = vpop.f32.mrb[0].mxu0
  %1389 = vmatprep.mubr.bf16.mxu0 %v500
  %1390 = vmatmul.mubr.bf16.gmra.mrb[0].mxu0 %v499
  %v1391 = vpop.f32.mrb[0].mxu0
  %v1392 = vadd.f32 %v1295, %v1391
  %v1393 = vpop.f32.mrb[0].mxu0
  %v1394 = vpop.f32.mrb[0].mxu0
  %v1395 = vadd.f32 %v1298, %v1394
  %v1396 = vpop.f32.mrb[0].mxu0
  %1397 = vmatprep.mubr.bf16.mxu0 %v509
  %1398 = vmatmul.mubr.bf16.gmra.mrb[0].mxu0 %v508
  %v1399 = vpop.f32.mrb[0].mxu0
  %v1400 = vadd.f32 %v1303, %v1399
  %v1401 = vpop.f32.mrb[0].mxu0
  %v1402 = vpop.f32.mrb[0].mxu0
  %v1403 = vadd.f32 %v1306, %v1402
  %v1404 = vpop.f32.mrb[0].mxu0
  %1405 = vmatprep.mubr.bf16.mxu0 %v518
  %1406 = vmatmul.mubr.bf16.gmra.mrb[0].mxu0 %v517
  %v1407 = vpop.f32.mrb[0].mxu0
  %v1408 = vadd.f32 %v1311, %v1407
  %v1409 = vpop.f32.mrb[0].mxu0
  %v1410 = vpop.f32.mrb[0].mxu0
  %v1411 = vadd.f32 %v1314, %v1410
  %v1412 = vpop.f32.mrb[0].mxu0
  %1413 = vmatprep.mubr.bf16.mxu0 %v527
  %1414 = vmatmul.mubr.bf16.gmra.mrb[0].mxu0 %v526
  %v1415 = vpop.f32.mrb[0].mxu0
  %v1416 = vadd.f32 %v1319, %v1415
  %v1417 = vpop.f32.mrb[0].mxu0
  %v1418 = vpop.f32.mrb[0].mxu0
  %v1419 = vadd.f32 %v1322, %v1418
  %v1420 = vpop.f32.mrb[0].mxu0
  %1421 = vmatprep.mubr.bf16.mxu0 %v536
  %1422 = vmatmul.mubr.bf16.gmra.mrb[0].mxu0 %v535
  %v1423 = vpop.f32.mrb[0].mxu0
  %v1424 = vadd.f32 %v1327, %v1423
  %v1425 = vpop.f32.mrb[0].mxu0
  %v1426 = vpop.f32.mrb[0].mxu0
  %v1427 = vadd.f32 %v1330, %v1426
  %v1428 = vpop.f32.mrb[0].mxu0
  %1429 = vdwg.mxu0
  %1430 = vmatprep.subr.bf16.mxu0 0
  %1431 = vmatpush1.bf16.msra.mxu0 %v962
  %1432 = vmatprep.subr.bf16.mxu0 0
  %1433 = vmatpush1.bf16.msra.mxu0 %v963
  %1434 = vmatprep.subr.bf16.mxu0 0
  %1435 = vmatpush1.bf16.msra.mxu0 %v964
  %1436 = vmatprep.subr.bf16.mxu0 0
  %1437 = vmatpush1.bf16.msra.mxu0 %v965
  %1438 = vmatprep.subr.bf16.mxu0 0
  %1439 = vmatpush1.bf16.msra.mxu0 %v966
  %1440 = vmatprep.subr.bf16.mxu0 0
  %1441 = vmatpush1.bf16.msra.mxu0 %v967
  %1442 = vmatprep.subr.bf16.mxu0 0
  %1443 = vmatpush1.bf16.msra.mxu0 %v968
  %1444 = vmatprep.subr.bf16.mxu0 0
  %1445 = vmatpush1.bf16.msra.mxu0 %v969
  %1446 = vmatprep.subr.bf16.mxu0 0
  %1447 = vmatpush1.bf16.msra.mxu0 0
  %1448 = vmatprep.subr.bf16.mxu0 0
  %1449 = vmatpush1.bf16.msra.mxu0 0
  %1450 = vmatprep.subr.bf16.mxu0 0
  %1451 = vmatpush1.bf16.msra.mxu0 0
  %1452 = vmatprep.subr.bf16.mxu0 0
  %1453 = vmatpush1.bf16.msra.mxu0 0
  %1454 = vmatprep.subr.bf16.mxu0 0
  %1455 = vmatpush1.bf16.msra.mxu0 0
  %1456 = vmatprep.subr.bf16.mxu0 0
  %1457 = vmatpush1.bf16.msra.mxu0 0
  %1458 = vmatprep.subr.bf16.mxu0 0
  %1459 = vmatpush1.bf16.msra.mxu0 0
  %1460 = vmatprep.subr.bf16.mxu0 0
  %1461 = vmatpush1.bf16.msra.mxu0 0
  %1462 = vmatprep.mubr.bf16.mxu0 0
  %1463 = vmatmul.mubr.bf16.gmra.mrb[0].mxu0 %v474
  %v1464 = vpop.f32.mrb[0].mxu0
  %v1465 = vadd.f32 %v1368, %v1464
  %v1466 = vpop.f32.mrb[0].mxu0
  %v1467 = vpop.f32.mrb[0].mxu0
  %v1468 = vadd.f32 %v1371, %v1467
  %v1469 = vpop.f32.mrb[0].mxu0
  %1470 = vmatprep.mubr.bf16.mxu0 0
  %1471 = vmatmul.mubr.bf16.gmra.mrb[0].mxu0 %v483
  %v1472 = vpop.f32.mrb[0].mxu0
  %v1473 = vadd.f32 %v1376, %v1472
  %v1474 = vpop.f32.mrb[0].mxu0
  %v1475 = vpop.f32.mrb[0].mxu0
  %v1476 = vadd.f32 %v1379, %v1475
  %v1477 = vpop.f32.mrb[0].mxu0
  %1478 = vmatprep.mubr.bf16.mxu0 0
  %1479 = vmatmul.mubr.bf16.gmra.mrb[0].mxu0 %v492
  %v1480 = vpop.f32.mrb[0].mxu0
  %v1481 = vadd.f32 %v1384, %v1480
  %v1482 = vpop.f32.mrb[0].mxu0
  %v1483 = vpop.f32.mrb[0].mxu0
  %v1484 = vadd.f32 %v1387, %v1483
  %v1485 = vpop.f32.mrb[0].mxu0
  %1486 = vmatprep.mubr.bf16.mxu0 0
  %1487 = vmatmul.mubr.bf16.gmra.mrb[0].mxu0 %v501
  %v1488 = vpop.f32.mrb[0].mxu0
  %v1489 = vadd.f32 %v1392, %v1488
  %v1490 = vpop.f32.mrb[0].mxu0
  %v1491 = vpop.f32.mrb[0].mxu0
  %v1492 = vadd.f32 %v1395, %v1491
  %v1493 = vpop.f32.mrb[0].mxu0
  %1494 = vmatprep.mubr.bf16.mxu0 0
  %1495 = vmatmul.mubr.bf16.gmra.mrb[0].mxu0 %v510
  %v1496 = vpop.f32.mrb[0].mxu0
  %v1497 = vadd.f32 %v1400, %v1496
  %v1498 = vpop.f32.mrb[0].mxu0
  %v1499 = vpop.f32.mrb[0].mxu0
  %v1500 = vadd.f32 %v1403, %v1499
  %v1501 = vpop.f32.mrb[0].mxu0
  %1502 = vmatprep.mubr.bf16.mxu0 0
  %1503 = vmatmul.mubr.bf16.gmra.mrb[0].mxu0 %v519
  %v1504 = vpop.f32.mrb[0].mxu0
  %v1505 = vadd.f32 %v1408, %v1504
  %v1506 = vpop.f32.mrb[0].mxu0
  %v1507 = vpop.f32.mrb[0].mxu0
  %v1508 = vadd.f32 %v1411, %v1507
  %v1509 = vpop.f32.mrb[0].mxu0
  %1510 = vmatprep.mubr.bf16.mxu0 0
  %1511 = vmatmul.mubr.bf16.gmra.mrb[0].mxu0 %v528
  %v1512 = vpop.f32.mrb[0].mxu0
  %v1513 = vadd.f32 %v1416, %v1512
  %v1514 = vpop.f32.mrb[0].mxu0
  %v1515 = vpop.f32.mrb[0].mxu0
  %v1516 = vadd.f32 %v1419, %v1515
  %v1517 = vpop.f32.mrb[0].mxu0
  %1518 = vmatprep.mubr.bf16.mxu0 0
  %1519 = vmatmul.mubr.bf16.gmra.mrb[0].mxu0 %v537
  %v1520 = vpop.f32.mrb[0].mxu0
  %v1521 = vadd.f32 %v1424, %v1520
  %v1522 = vpop.f32.mrb[0].mxu0
  %v1523 = vpop.f32.mrb[0].mxu0
  %v1524 = vadd.f32 %v1427, %v1523
  %v1525 = vpop.f32.mrb[0].mxu0
  %1526 = vdwg.mxu0
  %v1527 = vld [vmem:[%s2] sm:$0x1]
  %v1529 = vlaneseq
  %v1530 = vshrl.u32 %v1529, 7
  %v1531 = vsub.s32 0, %v1530
  %v1532 = vrot.slane %v1527, %v1531
  %v1534 = vmul.f32 %v1465, %v1532
  %v1535 = vmul.f32 %v1468, %v1532
  %v1536 = vmul.f32 %v1473, %v1532
  %v1537 = vmul.f32 %v1476, %v1532
  %v1538 = vmul.f32 %v1481, %v1532
  %v1539 = vmul.f32 %v1484, %v1532
  %v1540 = vmul.f32 %v1489, %v1532
  %v1541 = vmul.f32 %v1492, %v1532
  %v1542 = vmul.f32 %v1497, %v1532
  %v1543 = vmul.f32 %v1500, %v1532
  %v1544 = vmul.f32 %v1505, %v1532
  %v1545 = vmul.f32 %v1508, %v1532
  %v1546 = vmul.f32 %v1513, %v1532
  %v1547 = vmul.f32 %v1516, %v1532
  %v1548 = vmul.f32 %v1521, %v1532
  %v1549 = vmul.f32 %v1524, %v1532
  %v1550 = vld [vmem:[%s3] sm:$0x1]
  %v1552 = vlaneseq
  %v1553 = vshrl.u32 %v1552, 7
  %v1554 = vsub.s32 0, %v1553
  %v1555 = vrot.slane %v1550, %v1554
  %v1557 = vadd.f32 %v1534, %v1555
  %v1558 = vadd.f32 %v1535, %v1555
  %v1559 = vadd.f32 %v1536, %v1555
  %v1560 = vadd.f32 %v1537, %v1555
  %v1561 = vadd.f32 %v1538, %v1555
  %v1562 = vadd.f32 %v1539, %v1555
  %v1563 = vadd.f32 %v1540, %v1555
  %v1564 = vadd.f32 %v1541, %v1555
  %v1565 = vadd.f32 %v1542, %v1555
  %v1566 = vadd.f32 %v1543, %v1555
  %v1567 = vadd.f32 %v1544, %v1555
  %v1568 = vadd.f32 %v1545, %v1555
  %v1569 = vadd.f32 %v1546, %v1555
  %v1570 = vadd.f32 %v1547, %v1555
  %v1571 = vadd.f32 %v1548, %v1555
  %v1572 = vadd.f32 %v1549, %v1555
  %v1573 = vmax.f32 %v1557, 0.0
  %v1574 = vmax.f32 %v1558, 0.0
  %v1575 = vmax.f32 %v1559, 0.0
  %v1576 = vmax.f32 %v1560, 0.0
  %v1577 = vmax.f32 %v1561, 0.0
  %v1578 = vmax.f32 %v1562, 0.0
  %v1579 = vmax.f32 %v1563, 0.0
  %v1580 = vmax.f32 %v1564, 0.0
  %v1581 = vmax.f32 %v1565, 0.0
  %v1582 = vmax.f32 %v1566, 0.0
  %v1583 = vmax.f32 %v1567, 0.0
  %v1584 = vmax.f32 %v1568, 0.0
  %v1585 = vmax.f32 %v1569, 0.0
  %v1586 = vmax.f32 %v1570, 0.0
  %v1587 = vmax.f32 %v1571, 0.0
  %v1588 = vmax.f32 %v1572, 0.0
  %1589 = vst [vmem:[%s4] sm:$0xff] %v1573
  %1590 = vst [vmem:[%s4 + $0x8] sm:$0xff] %v1574
  %1591 = vst [vmem:[%s4 + $0x10] sm:$0xff] %v1575
  %1592 = vst [vmem:[%s4 + $0x18] sm:$0xff] %v1576
  %1593 = vst [vmem:[%s4 + $0x20] sm:$0xff] %v1577
  %1594 = vst [vmem:[%s4 + $0x28] sm:$0xff] %v1578
  %1595 = vst [vmem:[%s4 + $0x30] sm:$0xff] %v1579
  %1596 = vst [vmem:[%s4 + $0x38] sm:$0xff] %v1580
  %1597 = vst [vmem:[%s4 + $0x40] sm:$0xff] %v1581
  %1598 = vst [vmem:[%s4 + $0x48] sm:$0xff] %v1582
  %1599 = vst [vmem:[%s4 + $0x50] sm:$0xff] %v1583
  %1600 = vst [vmem:[%s4 + $0x58] sm:$0xff] %v1584
  %1601 = vst [vmem:[%s4 + $0x60] sm:$0xff] %v1585
  %1602 = vst [vmem:[%s4 + $0x68] sm:$0xff] %v1586
  %1603 = vst [vmem:[%s4 + $0x70] sm:$0xff] %v1587
  %1604 = vst [vmem:[%s4 + $0x78] sm:$0xff] %v1588
  // Predicated region
  $region18: #{_lambda_.45} parent=0 // pred_check
    _
  $region19: #{_lambda_.45} parent=0 // pred_check_branch
    %1606 = sbr.rel (0) target = $region21
  $region20: #{_lambda_.45} parent=0 // pred_region
    _
  $region21: #{_lambda_.45} parent=0 // pred_fallthru
    _
  // Predicated region
  $region22: #{_lambda_.45} parent=0 // pred_check
    _
  $region23: #{_lambda_.45} parent=0 // pred_check_branch
    %1608 = sbr.rel (0) target = $region25
  $region24: #{_lambda_.45} parent=0 // pred_region
    _
  $region25: #{_lambda_.45} parent=0 // pred_fallthru
    _

</llo_original>
